<compile_context>
chip_gen: v6e
topology: v6e:2x2x1
jax: 0.10.0
libtpu: 0.0.40
codegen_flags: <defaults>
</compile_context>

<pallas_src>
import functools

import numpy as np
import jax
import jax.numpy as jnp
from jax import lax
from jax.experimental import pallas as pl
from jax.experimental.pallas import tpu as pltpu

NEG_SLOPE = 0.2

# Geometry implied by the module (16x16 input, two stride-2 3x3 convs, .view(-1, 2048)).
H_IN = W_IN = 16
H1 = W1 = 8
H2 = W2 = 4
C_IN = 4
CG1, CL1 = 32, 64            # conv1 output channels (global / local branch)
K1 = C_IN * 9                # 36  (conv1 im2col reduction)
K1_PAD = 128                 # zero-padded so cols1 / w1 are lane-dense
C2 = 128                     # conv2 output channels per branch
D_HID = 128                  # dense hidden units per branch
NECK_PAD = 128               # neck output (1 real logit) padded to a full lane width


# ---------------------------------------------------------------------------
# Fused Pallas kernel: conv1 -> conv2 -> dense -> neck (both branches), all in VMEM.
# ---------------------------------------------------------------------------
def _discriminator_kernel(cols1_ref, w1g_ref, w1l_ref, b1g_ref, b1l_ref,
                          w2g_ref, w2l_ref, b2g_ref, b2l_ref,
                          wdg_ref, wdl_ref, bdg_ref, bdl_ref,
                          wng_ref, wnl_ref, bn_ref, out_ref, *, tb):
    f32 = jnp.float32
    bf16 = jnp.bfloat16

    def lrelu(v):
        return jnp.where(v >= 0.0, v, NEG_SLOPE * v)

    cols1 = cols1_ref[...]                                    # (tb*64, 128) bf16

    # ---- conv1 (3x3 / stride 2 / pad 1) + LeakyReLU: one matmul per branch ------
    a1g = lrelu(jnp.dot(cols1, w1g_ref[...], preferred_element_type=f32)
                + b1g_ref[...])                               # (tb*64, 32) f32
    a1l = lrelu(jnp.dot(cols1, w1l_ref[...], preferred_element_type=f32)
                + b1l_ref[...])                               # (tb*64, 64) f32

    # ---- conv2 im2col done with free major-dim selection (rows = (ih, iw, n)) ---
    def im2col_s2(a, c):
        a4 = a.reshape(H1, W1, tb, c)                         # (8, 8, tb, c)
        ah = a4.reshape(H2, 2, W1, tb, c)                     # split ih parity
        even_h, odd_h = ah[:, 0], ah[:, 1]                    # ih = 2*oh / 2*oh+1
        zrow = jnp.zeros((1, W1, tb, c), f32)
        h_taps = (jnp.concatenate([zrow, odd_h[:H2 - 1]], axis=0),   # di = 0 (ih=2oh-1)
                  even_h,                                            # di = 1
                  odd_h)                                             # di = 2
        zcol = jnp.zeros((H2, 1, tb, c), f32)
        parts = []
        for hs in h_taps:
            hw = hs.reshape(H2, W2, 2, tb, c)                 # split iw parity
            even_w, odd_w = hw[:, :, 0], hw[:, :, 1]
            w_taps = (jnp.concatenate([zcol, odd_w[:, :W2 - 1]], axis=1),  # dj = 0
                      even_w,                                              # dj = 1
                      odd_w)                                               # dj = 2
            parts.extend(t.reshape(H2 * W2 * tb, c) for t in w_taps)
        # columns ordered (tap, cin) -> single long-K MXU contraction per branch
        return jnp.concatenate(parts, axis=-1)                # (16*tb, 9*c)

    cols2_g = im2col_s2(a1g, CG1).astype(bf16)                # (16*tb, 288)
    cols2_l = im2col_s2(a1l, CL1).astype(bf16)                # (16*tb, 576)

    a2g = lrelu(jnp.dot(cols2_g, w2g_ref[...], preferred_element_type=f32)
                + b2g_ref[...])                               # (16*tb, 128)
    a2l = lrelu(jnp.dot(cols2_l, w2l_ref[...], preferred_element_type=f32)
                + b2l_ref[...])                               # (16*tb, 128)

    # ---- dense layers: NCHW .view(-1, 2048) folded into per-position weights;
    # rows for spatial position p are a free major-dim slice of the (16, tb, 128)
    # view (replaces the old `sd` selection matmuls). ------------------------------
    a2g3 = a2g.reshape(H2 * W2, tb, C2)
    a2l3 = a2l.reshape(H2 * W2, tb, C2)
    accg = jnp.zeros((tb, D_HID), f32)
    accl = jnp.zeros((tb, D_HID), f32)
    for p in range(H2 * W2):
        accg = accg + jnp.dot(a2g3[p].astype(bf16), wdg_ref[p],
                              preferred_element_type=f32)
        accl = accl + jnp.dot(a2l3[p].astype(bf16), wdl_ref[p],
                              preferred_element_type=f32)
    dg = lrelu(accg + bdg_ref[...])                           # (tb, 128)
    dl = lrelu(accl + bdl_ref[...])                           # (tb, 128)

    # ---- neck on concat([dg, dl]) as a split matmul (no activation) --------------
    o = (jnp.dot(dg.astype(bf16), wng_ref[...], preferred_element_type=f32)
         + jnp.dot(dl.astype(bf16), wnl_ref[...], preferred_element_type=f32)
         + bn_ref[...])
    out_ref[...] = o.astype(out_ref.dtype)


# ---------------------------------------------------------------------------
# XLA-side preprocessing: one shared im2col of the raw input for conv1.
# ---------------------------------------------------------------------------
def _batch_tile(n):
    if n <= 8:
        return 8
    if n <= 16:
        return 16
    return 32


def _im2col_conv1(x, tb):
    """x: (N_pad, C_IN, 16, 16) NCHW -> (N_pad*64, K1_PAD) bf16.

    Rows ordered (batch_tile, ih, iw, n_in_tile); columns (c, di, dj), padded 36->128.
    """
    n = x.shape[0]
    nt = n // tb
    xp = jnp.pad(x, ((0, 0), (0, 0), (1, 1), (1, 1)))
    patches = [xp[:, :, di:di + 2 * H1:2, dj:dj + 2 * W1:2]
               for di in range(3) for dj in range(3)]          # each (N, C, 8, 8)
    cols = jnp.stack(patches, axis=-1)                         # (N, C, 8, 8, 9)
    cols = cols.reshape(nt, tb, C_IN, H1, W1, 9)
    cols = cols.transpose(0, 3, 4, 1, 2, 5)                    # (tile, ih, iw, n, c, k)
    cols = cols.reshape(nt * H1 * W1 * tb, K1)
    cols = jnp.pad(cols, ((0, 0), (0, K1_PAD - K1)))
    # TODO(synk): the conv1 im2col could itself be folded into the kernel to drop
    #             this XLA op / HBM round trip; left outside (small absolute cost).
    return cols.astype(jnp.bfloat16)


# ---------------------------------------------------------------------------
# Parameter construction (deterministic, synthetic) and one-time packing.
# ---------------------------------------------------------------------------
def make_params(key):
    def conv_p(key, cout, cin, k=3, scale=0.05):
        kw_, kb_ = jax.random.split(key)
        return {
            "w": scale * jax.random.normal(kw_, (cout, cin, k, k), jnp.float32),
            "b": scale * jax.random.normal(kb_, (cout,), jnp.float32),
        }

    def dense_p(key, kin, kout, scale=0.05):
        kw_, kb_ = jax.random.split(key)
        return {
            "w": scale * jax.random.normal(kw_, (kin, kout), jnp.float32),
            "b": scale * jax.random.normal(kb_, (kout,), jnp.float32),
        }

    keys = jax.random.split(key, 7)
    return {
        # global branch: 4 -> 32 (16->8), 32 -> 128 (8->4)  => 128*4*4 = 2048
        "global_branch": [conv_p(keys[0], CG1, C_IN), conv_p(keys[1], C2, CG1)],
        # local branch:  4 -> 64 (16->8), 64 -> 128 (8->4)  => 128*4*4 = 2048
        "local_branch": [conv_p(keys[2], CL1, C_IN), conv_p(keys[3], C2, CL1)],
        "dense_global_branch": dense_p(keys[4], 2048, D_HID),
        "dense_local_branch": dense_p(keys[5], 2048, D_HID),
        "neck": dense_p(keys[6], 2 * D_HID, 1),
    }


def pack_params(params):
    """Hoist every weight reshape/transpose/padding out of the forward (batch-free)."""
    bf16 = jnp.bfloat16

    def conv1_w(p):
        w = p["w"].reshape(p["w"].shape[0], -1).T              # (36, Cout), rows (c, k)
        return jnp.pad(w, ((0, K1_PAD - K1), (0, 0))).astype(bf16)

    def conv2_w(p, cin):
        # (C2, cin, 3, 3) -> rows ordered (tap, cin): compact per-branch long-K weight
        return jnp.transpose(p["w"], (2, 3, 1, 0)).reshape(9 * cin, C2).astype(bf16)

    def dense_w(p):
        # (2048, D_HID) with input index c*16+p -> per-position stack (16, 128, D_HID)
        return p["w"].reshape(C2, H2 * W2, D_HID).transpose(1, 0, 2).astype(bf16)

    wn = jnp.pad(params["neck"]["w"], ((0, 0), (0, NECK_PAD - 1)))      # (256, 128)

    return dict(
        w1g=conv1_w(params["global_branch"][0]),
        w1l=conv1_w(params["local_branch"][0]),
        b1g=params["global_branch"][0]["b"].reshape(1, CG1),
        b1l=params["local_branch"][0]["b"].reshape(1, CL1),
        w2g=conv2_w(params["global_branch"][1], CG1),
        w2l=conv2_w(params["local_branch"][1], CL1),
        b2g=params["global_branch"][1]["b"].reshape(1, C2),
        b2l=params["local_branch"][1]["b"].reshape(1, C2),
        wdg=dense_w(params["dense_global_branch"]),
        wdl=dense_w(params["dense_local_branch"]),
        bdg=params["dense_global_branch"]["b"].reshape(1, D_HID),
        bdl=params["dense_local_branch"]["b"].reshape(1, D_HID),
        wng=wn[:D_HID].astype(bf16),
        wnl=wn[D_HID:].astype(bf16),
        bn=jnp.pad(params["neck"]["b"], (0, NECK_PAD - 1)).reshape(1, NECK_PAD),
    )


# ---------------------------------------------------------------------------
# Forward: one pallas_call, gridded over the batch with resident weights.
# ---------------------------------------------------------------------------
def discriminator_forward_packed(packed, x):
    n = x.shape[0]
    tb = _batch_tile(n)
    n_pad = ((n + tb - 1) // tb) * tb
    if n_pad != n:
        x = jnp.pad(x, ((0, n_pad - n), (0, 0), (0, 0), (0, 0)))

    cols1 = _im2col_conv1(x, tb)                               # (n_pad*64, 128) bf16

    operands = (cols1, packed["w1g"], packed["w1l"], packed["b1g"], packed["b1l"],
                packed["w2g"], packed["w2l"], packed["b2g"], packed["b2l"],
                packed["wdg"], packed["wdl"], packed["bdg"], packed["bdl"],
                packed["wng"], packed["wnl"], packed["bn"])

    def resident(a):                       # full-array block, constant index map
        nd = a.ndim
        return pl.BlockSpec(a.shape, lambda b, _nd=nd: (0,) * _nd)

    in_specs = [pl.BlockSpec((tb * H1 * W1, K1_PAD), lambda b: (b, 0))]
    in_specs += [resident(a) for a in operands[1:]]

    # Advisory cost estimate for XLA scheduling.
    conv1_macs = n_pad * H1 * W1 * K1_PAD * (CG1 + CL1)
    conv2_macs = n_pad * H2 * W2 * 9 * (CG1 + CL1) * C2
    dense_macs = n_pad * H2 * W2 * C2 * D_HID * 2
    neck_macs = n_pad * 2 * D_HID * NECK_PAD
    flops = 2 * (conv1_macs + conv2_macs + dense_macs + neck_macs)
    bytes_accessed = sum(int(np.prod(a.shape)) * a.dtype.itemsize for a in operands)
    bytes_accessed += n_pad * NECK_PAD * 4

    out_padded = pl.pallas_call(
        functools.partial(_discriminator_kernel, tb=tb),
        out_shape=jax.ShapeDtypeStruct((n_pad, NECK_PAD), jnp.float32),
        grid=(n_pad // tb,),
        in_specs=in_specs,
        out_specs=pl.BlockSpec((tb, NECK_PAD), lambda b: (b, 0)),
        compiler_params=pltpu.CompilerParams(
            dimension_semantics=("parallel",),          # shard batch tiles on v7x TCs
            vmem_limit_bytes=32 * 1024 * 1024,
        ),
        cost_estimate=pl.CostEstimate(flops=flops, transcendentals=0,
                                      bytes_accessed=bytes_accessed),
    )(*operands)
    return out_padded[:n, :1]                                  # (N, 1) logits


# ---------------------------------------------------------------------------
# Pure-JAX reference (straightforward NCHW math) for a correctness check.
# ---------------------------------------------------------------------------
def _conv_block_ref(x, w, b):
    y = lax.conv_general_dilated(
        x, w, window_strides=(2, 2), padding=((1, 1), (1, 1)),
        dimension_numbers=("NCHW", "OIHW", "NCHW"),
        precision=lax.Precision.HIGHEST)
    y = y + b.reshape(1, -1, 1, 1)
    return jnp.where(y >= 0.0, y, NEG_SLOPE * y)


def discriminator_forward_ref(params, x):
    def branch(conv_layers, dense):
        h = x
        for layer in conv_layers:
            h = _conv_block_ref(h, layer["w"], layer["b"])
        h = h.reshape(-1, 2048)                       # matches PyTorch .view(-1, 2048)
        h = jnp.dot(h, dense["w"], precision=lax.Precision.HIGHEST) + dense["b"]
        return jnp.where(h >= 0.0, h, NEG_SLOPE * h)

    x1 = branch(params["global_branch"], params["dense_global_branch"])
    x2 = branch(params["local_branch"], params["dense_local_branch"])
    cat = jnp.concatenate([x1, x2], axis=1)
    return jnp.dot(cat, params["neck"]["w"],
                   precision=lax.Precision.HIGHEST) + params["neck"]["b"]


if __name__ == "__main__":
    key = jax.random.PRNGKey(0)
    k_params, k_x = jax.random.split(key)
    params = make_params(k_params)
    x = jax.random.normal(k_x, (2, C_IN, H_IN, W_IN), jnp.float32)   # NCHW

    packed = pack_params(params)                      # one-time, batch-independent
    fwd = jax.jit(discriminator_forward_packed)
    out = fwd(packed, x)
    jax.block_until_ready(out)

    assert out.shape == (2, 1), out.shape
    assert out.dtype == jnp.float32

    ref = jax.jit(discriminator_forward_ref)(params, x)
    jax.block_until_ready(ref)
    # Tolerance sized for the bf16 matmul path (f32 accumulation / bias / LeakyReLU).
    assert jnp.allclose(out, ref, rtol=5e-2, atol=1e-2), (out, ref)

    print("KERNEL_OK")
</pallas_src>

<mosaic_0001>
module attributes {stable_mosaic.version = 11 : i64} {
  func.func @_discriminator_kernel(%arg0: i32, %arg1: memref<512x128xbf16, #tpu.memory_space<vmem>>, %arg2: memref<128x32xbf16, #tpu.memory_space<vmem>>, %arg3: memref<128x64xbf16, #tpu.memory_space<vmem>>, %arg4: memref<1x32xf32, #tpu.memory_space<vmem>>, %arg5: memref<1x64xf32, #tpu.memory_space<vmem>>, %arg6: memref<288x128xbf16, #tpu.memory_space<vmem>>, %arg7: memref<576x128xbf16, #tpu.memory_space<vmem>>, %arg8: memref<1x128xf32, #tpu.memory_space<vmem>>, %arg9: memref<1x128xf32, #tpu.memory_space<vmem>>, %arg10: memref<16x128x128xbf16, #tpu.memory_space<vmem>>, %arg11: memref<16x128x128xbf16, #tpu.memory_space<vmem>>, %arg12: memref<1x128xf32, #tpu.memory_space<vmem>>, %arg13: memref<1x128xf32, #tpu.memory_space<vmem>>, %arg14: memref<128x128xbf16, #tpu.memory_space<vmem>>, %arg15: memref<128x128xbf16, #tpu.memory_space<vmem>>, %arg16: memref<1x128xf32, #tpu.memory_space<vmem>>, %arg17: memref<8x128xf32, #tpu.memory_space<vmem>>) attributes {dimension_semantics = [#tpu.dimension_semantics<parallel>], iteration_bounds = array<i64: 1>, scalar_prefetch = 0 : i64, scratch_operands = 0 : i64, tpu.core_type = #tpu.core_type<tc>, window_params = [{transform_indices = @transform_0, window_bounds = array<i64: 512, 128>}, {pipeline_mode = #tpu.pipeline_mode<synchronous>, transform_indices = @transform_1, window_bounds = array<i64: 128, 32>}, {pipeline_mode = #tpu.pipeline_mode<synchronous>, transform_indices = @transform_2, window_bounds = array<i64: 128, 64>}, {pipeline_mode = #tpu.pipeline_mode<synchronous>, transform_indices = @transform_3, window_bounds = array<i64: 1, 32>}, {pipeline_mode = #tpu.pipeline_mode<synchronous>, transform_indices = @transform_4, window_bounds = array<i64: 1, 64>}, {pipeline_mode = #tpu.pipeline_mode<synchronous>, transform_indices = @transform_5, window_bounds = array<i64: 288, 128>}, {pipeline_mode = #tpu.pipeline_mode<synchronous>, transform_indices = @transform_6, window_bounds = array<i64: 576, 128>}, {pipeline_mode = #tpu.pipeline_mode<synchronous>, transform_indices = @transform_7, window_bounds = array<i64: 1, 128>}, {pipeline_mode = #tpu.pipeline_mode<synchronous>, transform_indices = @transform_8, window_bounds = array<i64: 1, 128>}, {pipeline_mode = #tpu.pipeline_mode<synchronous>, transform_indices = @transform_9, window_bounds = array<i64: 16, 128, 128>}, {pipeline_mode = #tpu.pipeline_mode<synchronous>, transform_indices = @transform_10, window_bounds = array<i64: 16, 128, 128>}, {pipeline_mode = #tpu.pipeline_mode<synchronous>, transform_indices = @transform_11, window_bounds = array<i64: 1, 128>}, {pipeline_mode = #tpu.pipeline_mode<synchronous>, transform_indices = @transform_12, window_bounds = array<i64: 1, 128>}, {pipeline_mode = #tpu.pipeline_mode<synchronous>, transform_indices = @transform_13, window_bounds = array<i64: 128, 128>}, {pipeline_mode = #tpu.pipeline_mode<synchronous>, transform_indices = @transform_14, window_bounds = array<i64: 128, 128>}, {pipeline_mode = #tpu.pipeline_mode<synchronous>, transform_indices = @transform_15, window_bounds = array<i64: 1, 128>}, {transform_indices = @transform_16, window_bounds = array<i64: 8, 128>}]} {
    %c0 = arith.constant 0 : index
    %c0_0 = arith.constant 0 : index
    %0 = vector.load %arg1[%c0, %c0_0] : memref<512x128xbf16, #tpu.memory_space<vmem>>, vector<512x128xbf16>
    %c0_1 = arith.constant 0 : index
    %c0_2 = arith.constant 0 : index
    %1 = vector.load %arg2[%c0_1, %c0_2] : memref<128x32xbf16, #tpu.memory_space<vmem>>, vector<128x32xbf16>
    %cst = arith.constant dense<0.000000e+00> : vector<512x32xf32>
    %2 = tpu.matmul %0, %1, %cst {dimension_numbers = #tpu.dot_dimension_numbers<[1], [0], [0], [1], [0, 0, 1, 1], [], []>} : vector<512x128xbf16>, vector<128x32xbf16>, vector<512x32xf32> -> vector<512x32xf32>
    %c0_3 = arith.constant 0 : index
    %c0_4 = arith.constant 0 : index
    %3 = vector.load %arg4[%c0_3, %c0_4] : memref<1x32xf32, #tpu.memory_space<vmem>>, vector<1x32xf32>
    %4 = vector.broadcast %3 : vector<1x32xf32> to vector<512x32xf32>
    %5 = arith.addf %2, %4 : vector<512x32xf32>
    %cst_5 = arith.constant 0.000000e+00 : f32
    %6 = vector.broadcast %cst_5 : f32 to vector<512x32xf32>
    %7 = arith.cmpf oge, %5, %6 : vector<512x32xf32>
    %cst_6 = arith.constant 2.000000e-01 : f32
    %8 = vector.broadcast %cst_6 : f32 to vector<512x32xf32>
    %9 = arith.mulf %8, %5 : vector<512x32xf32>
    %10 = arith.select %7, %5, %9 : vector<512x32xi1>, vector<512x32xf32>
    %c0_7 = arith.constant 0 : index
    %c0_8 = arith.constant 0 : index
    %11 = vector.load %arg3[%c0_7, %c0_8] : memref<128x64xbf16, #tpu.memory_space<vmem>>, vector<128x64xbf16>
    %cst_9 = arith.constant dense<0.000000e+00> : vector<512x64xf32>
    %12 = tpu.matmul %0, %11, %cst_9 {dimension_numbers = #tpu.dot_dimension_numbers<[1], [0], [0], [1], [0, 0, 1, 1], [], []>} : vector<512x128xbf16>, vector<128x64xbf16>, vector<512x64xf32> -> vector<512x64xf32>
    %c0_10 = arith.constant 0 : index
    %c0_11 = arith.constant 0 : index
    %13 = vector.load %arg5[%c0_10, %c0_11] : memref<1x64xf32, #tpu.memory_space<vmem>>, vector<1x64xf32>
    %14 = vector.broadcast %13 : vector<1x64xf32> to vector<512x64xf32>
    %15 = arith.addf %12, %14 : vector<512x64xf32>
    %cst_12 = arith.constant 0.000000e+00 : f32
    %16 = vector.broadcast %cst_12 : f32 to vector<512x64xf32>
    %17 = arith.cmpf oge, %15, %16 : vector<512x64xf32>
    %cst_13 = arith.constant 2.000000e-01 : f32
    %18 = vector.broadcast %cst_13 : f32 to vector<512x64xf32>
    %19 = arith.mulf %18, %15 : vector<512x64xf32>
    %20 = arith.select %17, %15, %19 : vector<512x64xi1>, vector<512x64xf32>
    %21 = vector.shape_cast %10 : vector<512x32xf32> to vector<8x8x8x32xf32>
    %22 = vector.shape_cast %21 : vector<8x8x8x32xf32> to vector<4x2x8x8x32xf32>
    %23 = vector.extract_strided_slice %22 {offsets = [0, 0, 0, 0, 0], sizes = [4, 1, 8, 8, 32], strides = [1, 1, 1, 1, 1]} : vector<4x2x8x8x32xf32> to vector<4x1x8x8x32xf32>
    %24 = vector.shape_cast %23 : vector<4x1x8x8x32xf32> to vector<4x8x8x32xf32>
    %25 = vector.extract_strided_slice %22 {offsets = [0, 1, 0, 0, 0], sizes = [4, 1, 8, 8, 32], strides = [1, 1, 1, 1, 1]} : vector<4x2x8x8x32xf32> to vector<4x1x8x8x32xf32>
    %26 = vector.shape_cast %25 : vector<4x1x8x8x32xf32> to vector<4x8x8x32xf32>
    %cst_14 = arith.constant 0.000000e+00 : f32
    %27 = vector.broadcast %cst_14 : f32 to vector<1x8x8x32xf32>
    %28 = vector.extract_strided_slice %26 {offsets = [0, 0, 0, 0], sizes = [3, 8, 8, 32], strides = [1, 1, 1, 1]} : vector<4x8x8x32xf32> to vector<3x8x8x32xf32>
    %29 = tpu.concatenate %27, %28 in 0 : vector<1x8x8x32xf32>, vector<3x8x8x32xf32> -> vector<4x8x8x32xf32>
    %cst_15 = arith.constant 0.000000e+00 : f32
    %30 = vector.broadcast %cst_15 : f32 to vector<4x1x8x32xf32>
    %31 = vector.shape_cast %29 : vector<4x8x8x32xf32> to vector<4x4x2x8x32xf32>
    %32 = vector.extract_strided_slice %31 {offsets = [0, 0, 0, 0, 0], sizes = [4, 4, 1, 8, 32], strides = [1, 1, 1, 1, 1]} : vector<4x4x2x8x32xf32> to vector<4x4x1x8x32xf32>
    %33 = vector.shape_cast %32 : vector<4x4x1x8x32xf32> to vector<4x4x8x32xf32>
    %34 = vector.extract_strided_slice %31 {offsets = [0, 0, 1, 0, 0], sizes = [4, 4, 1, 8, 32], strides = [1, 1, 1, 1, 1]} : vector<4x4x2x8x32xf32> to vector<4x4x1x8x32xf32>
    %35 = vector.shape_cast %34 : vector<4x4x1x8x32xf32> to vector<4x4x8x32xf32>
    %36 = vector.extract_strided_slice %35 {offsets = [0, 0, 0, 0], sizes = [4, 3, 8, 32], strides = [1, 1, 1, 1]} : vector<4x4x8x32xf32> to vector<4x3x8x32xf32>
    %37 = tpu.concatenate %30, %36 in 1 : vector<4x1x8x32xf32>, vector<4x3x8x32xf32> -> vector<4x4x8x32xf32>
    %38 = vector.shape_cast %37 : vector<4x4x8x32xf32> to vector<128x32xf32>
    %39 = vector.shape_cast %33 : vector<4x4x8x32xf32> to vector<128x32xf32>
    %40 = vector.shape_cast %35 : vector<4x4x8x32xf32> to vector<128x32xf32>
    %41 = vector.shape_cast %24 : vector<4x8x8x32xf32> to vector<4x4x2x8x32xf32>
    %42 = vector.extract_strided_slice %41 {offsets = [0, 0, 0, 0, 0], sizes = [4, 4, 1, 8, 32], strides = [1, 1, 1, 1, 1]} : vector<4x4x2x8x32xf32> to vector<4x4x1x8x32xf32>
    %43 = vector.shape_cast %42 : vector<4x4x1x8x32xf32> to vector<4x4x8x32xf32>
    %44 = vector.extract_strided_slice %41 {offsets = [0, 0, 1, 0, 0], sizes = [4, 4, 1, 8, 32], strides = [1, 1, 1, 1, 1]} : vector<4x4x2x8x32xf32> to vector<4x4x1x8x32xf32>
    %45 = vector.shape_cast %44 : vector<4x4x1x8x32xf32> to vector<4x4x8x32xf32>
    %46 = vector.extract_strided_slice %45 {offsets = [0, 0, 0, 0], sizes = [4, 3, 8, 32], strides = [1, 1, 1, 1]} : vector<4x4x8x32xf32> to vector<4x3x8x32xf32>
    %47 = tpu.concatenate %30, %46 in 1 : vector<4x1x8x32xf32>, vector<4x3x8x32xf32> -> vector<4x4x8x32xf32>
    %48 = vector.shape_cast %47 : vector<4x4x8x32xf32> to vector<128x32xf32>
    %49 = vector.shape_cast %43 : vector<4x4x8x32xf32> to vector<128x32xf32>
    %50 = vector.shape_cast %45 : vector<4x4x8x32xf32> to vector<128x32xf32>
    %51 = vector.shape_cast %26 : vector<4x8x8x32xf32> to vector<4x4x2x8x32xf32>
    %52 = vector.extract_strided_slice %51 {offsets = [0, 0, 0, 0, 0], sizes = [4, 4, 1, 8, 32], strides = [1, 1, 1, 1, 1]} : vector<4x4x2x8x32xf32> to vector<4x4x1x8x32xf32>
    %53 = vector.shape_cast %52 : vector<4x4x1x8x32xf32> to vector<4x4x8x32xf32>
    %54 = vector.extract_strided_slice %51 {offsets = [0, 0, 1, 0, 0], sizes = [4, 4, 1, 8, 32], strides = [1, 1, 1, 1, 1]} : vector<4x4x2x8x32xf32> to vector<4x4x1x8x32xf32>
    %55 = vector.shape_cast %54 : vector<4x4x1x8x32xf32> to vector<4x4x8x32xf32>
    %56 = vector.extract_strided_slice %55 {offsets = [0, 0, 0, 0], sizes = [4, 3, 8, 32], strides = [1, 1, 1, 1]} : vector<4x4x8x32xf32> to vector<4x3x8x32xf32>
    %57 = tpu.concatenate %30, %56 in 1 : vector<4x1x8x32xf32>, vector<4x3x8x32xf32> -> vector<4x4x8x32xf32>
    %58 = vector.shape_cast %57 : vector<4x4x8x32xf32> to vector<128x32xf32>
    %59 = vector.shape_cast %53 : vector<4x4x8x32xf32> to vector<128x32xf32>
    %60 = vector.shape_cast %55 : vector<4x4x8x32xf32> to vector<128x32xf32>
    %61 = tpu.concatenate %38, %39, %40, %48, %49, %50, %58, %59, %60 in 1 : vector<128x32xf32>, vector<128x32xf32>, vector<128x32xf32>, vector<128x32xf32>, vector<128x32xf32>, vector<128x32xf32>, vector<128x32xf32>, vector<128x32xf32>, vector<128x32xf32> -> vector<128x288xf32>
    %62 = arith.truncf %61 : vector<128x288xf32> to vector<128x288xbf16>
    %63 = vector.shape_cast %20 : vector<512x64xf32> to vector<8x8x8x64xf32>
    %64 = vector.shape_cast %63 : vector<8x8x8x64xf32> to vector<4x2x8x8x64xf32>
    %65 = vector.extract_strided_slice %64 {offsets = [0, 0, 0, 0, 0], sizes = [4, 1, 8, 8, 64], strides = [1, 1, 1, 1, 1]} : vector<4x2x8x8x64xf32> to vector<4x1x8x8x64xf32>
    %66 = vector.shape_cast %65 : vector<4x1x8x8x64xf32> to vector<4x8x8x64xf32>
    %67 = vector.extract_strided_slice %64 {offsets = [0, 1, 0, 0, 0], sizes = [4, 1, 8, 8, 64], strides = [1, 1, 1, 1, 1]} : vector<4x2x8x8x64xf32> to vector<4x1x8x8x64xf32>
    %68 = vector.shape_cast %67 : vector<4x1x8x8x64xf32> to vector<4x8x8x64xf32>
    %cst_16 = arith.constant 0.000000e+00 : f32
    %69 = vector.broadcast %cst_16 : f32 to vector<1x8x8x64xf32>
    %70 = vector.extract_strided_slice %68 {offsets = [0, 0, 0, 0], sizes = [3, 8, 8, 64], strides = [1, 1, 1, 1]} : vector<4x8x8x64xf32> to vector<3x8x8x64xf32>
    %71 = tpu.concatenate %69, %70 in 0 : vector<1x8x8x64xf32>, vector<3x8x8x64xf32> -> vector<4x8x8x64xf32>
    %cst_17 = arith.constant 0.000000e+00 : f32
    %72 = vector.broadcast %cst_17 : f32 to vector<4x1x8x64xf32>
    %73 = vector.shape_cast %71 : vector<4x8x8x64xf32> to vector<4x4x2x8x64xf32>
    %74 = vector.extract_strided_slice %73 {offsets = [0, 0, 0, 0, 0], sizes = [4, 4, 1, 8, 64], strides = [1, 1, 1, 1, 1]} : vector<4x4x2x8x64xf32> to vector<4x4x1x8x64xf32>
    %75 = vector.shape_cast %74 : vector<4x4x1x8x64xf32> to vector<4x4x8x64xf32>
    %76 = vector.extract_strided_slice %73 {offsets = [0, 0, 1, 0, 0], sizes = [4, 4, 1, 8, 64], strides = [1, 1, 1, 1, 1]} : vector<4x4x2x8x64xf32> to vector<4x4x1x8x64xf32>
    %77 = vector.shape_cast %76 : vector<4x4x1x8x64xf32> to vector<4x4x8x64xf32>
    %78 = vector.extract_strided_slice %77 {offsets = [0, 0, 0, 0], sizes = [4, 3, 8, 64], strides = [1, 1, 1, 1]} : vector<4x4x8x64xf32> to vector<4x3x8x64xf32>
    %79 = tpu.concatenate %72, %78 in 1 : vector<4x1x8x64xf32>, vector<4x3x8x64xf32> -> vector<4x4x8x64xf32>
    %80 = vector.shape_cast %79 : vector<4x4x8x64xf32> to vector<128x64xf32>
    %81 = vector.shape_cast %75 : vector<4x4x8x64xf32> to vector<128x64xf32>
    %82 = vector.shape_cast %77 : vector<4x4x8x64xf32> to vector<128x64xf32>
    %83 = vector.shape_cast %66 : vector<4x8x8x64xf32> to vector<4x4x2x8x64xf32>
    %84 = vector.extract_strided_slice %83 {offsets = [0, 0, 0, 0, 0], sizes = [4, 4, 1, 8, 64], strides = [1, 1, 1, 1, 1]} : vector<4x4x2x8x64xf32> to vector<4x4x1x8x64xf32>
    %85 = vector.shape_cast %84 : vector<4x4x1x8x64xf32> to vector<4x4x8x64xf32>
    %86 = vector.extract_strided_slice %83 {offsets = [0, 0, 1, 0, 0], sizes = [4, 4, 1, 8, 64], strides = [1, 1, 1, 1, 1]} : vector<4x4x2x8x64xf32> to vector<4x4x1x8x64xf32>
    %87 = vector.shape_cast %86 : vector<4x4x1x8x64xf32> to vector<4x4x8x64xf32>
    %88 = vector.extract_strided_slice %87 {offsets = [0, 0, 0, 0], sizes = [4, 3, 8, 64], strides = [1, 1, 1, 1]} : vector<4x4x8x64xf32> to vector<4x3x8x64xf32>
    %89 = tpu.concatenate %72, %88 in 1 : vector<4x1x8x64xf32>, vector<4x3x8x64xf32> -> vector<4x4x8x64xf32>
    %90 = vector.shape_cast %89 : vector<4x4x8x64xf32> to vector<128x64xf32>
    %91 = vector.shape_cast %85 : vector<4x4x8x64xf32> to vector<128x64xf32>
    %92 = vector.shape_cast %87 : vector<4x4x8x64xf32> to vector<128x64xf32>
    %93 = vector.shape_cast %68 : vector<4x8x8x64xf32> to vector<4x4x2x8x64xf32>
    %94 = vector.extract_strided_slice %93 {offsets = [0, 0, 0, 0, 0], sizes = [4, 4, 1, 8, 64], strides = [1, 1, 1, 1, 1]} : vector<4x4x2x8x64xf32> to vector<4x4x1x8x64xf32>
    %95 = vector.shape_cast %94 : vector<4x4x1x8x64xf32> to vector<4x4x8x64xf32>
    %96 = vector.extract_strided_slice %93 {offsets = [0, 0, 1, 0, 0], sizes = [4, 4, 1, 8, 64], strides = [1, 1, 1, 1, 1]} : vector<4x4x2x8x64xf32> to vector<4x4x1x8x64xf32>
    %97 = vector.shape_cast %96 : vector<4x4x1x8x64xf32> to vector<4x4x8x64xf32>
    %98 = vector.extract_strided_slice %97 {offsets = [0, 0, 0, 0], sizes = [4, 3, 8, 64], strides = [1, 1, 1, 1]} : vector<4x4x8x64xf32> to vector<4x3x8x64xf32>
    %99 = tpu.concatenate %72, %98 in 1 : vector<4x1x8x64xf32>, vector<4x3x8x64xf32> -> vector<4x4x8x64xf32>
    %100 = vector.shape_cast %99 : vector<4x4x8x64xf32> to vector<128x64xf32>
    %101 = vector.shape_cast %95 : vector<4x4x8x64xf32> to vector<128x64xf32>
    %102 = vector.shape_cast %97 : vector<4x4x8x64xf32> to vector<128x64xf32>
    %103 = tpu.concatenate %80, %81, %82, %90, %91, %92, %100, %101, %102 in 1 : vector<128x64xf32>, vector<128x64xf32>, vector<128x64xf32>, vector<128x64xf32>, vector<128x64xf32>, vector<128x64xf32>, vector<128x64xf32>, vector<128x64xf32>, vector<128x64xf32> -> vector<128x576xf32>
    %104 = arith.truncf %103 : vector<128x576xf32> to vector<128x576xbf16>
    %c0_18 = arith.constant 0 : index
    %c0_19 = arith.constant 0 : index
    %105 = vector.load %arg6[%c0_18, %c0_19] : memref<288x128xbf16, #tpu.memory_space<vmem>>, vector<288x128xbf16>
    %cst_20 = arith.constant dense<0.000000e+00> : vector<128x128xf32>
    %106 = tpu.matmul %62, %105, %cst_20 {dimension_numbers = #tpu.dot_dimension_numbers<[1], [0], [0], [1], [0, 0, 1, 1], [], []>} : vector<128x288xbf16>, vector<288x128xbf16>, vector<128x128xf32> -> vector<128x128xf32>
    %c0_21 = arith.constant 0 : index
    %c0_22 = arith.constant 0 : index
    %107 = vector.load %arg8[%c0_21, %c0_22] : memref<1x128xf32, #tpu.memory_space<vmem>>, vector<1x128xf32>
    %108 = vector.broadcast %107 : vector<1x128xf32> to vector<128x128xf32>
    %109 = arith.addf %106, %108 : vector<128x128xf32>
    %cst_23 = arith.constant 0.000000e+00 : f32
    %110 = vector.broadcast %cst_23 : f32 to vector<128x128xf32>
    %111 = arith.cmpf oge, %109, %110 : vector<128x128xf32>
    %cst_24 = arith.constant 2.000000e-01 : f32
    %112 = vector.broadcast %cst_24 : f32 to vector<128x128xf32>
    %113 = arith.mulf %112, %109 : vector<128x128xf32>
    %114 = arith.select %111, %109, %113 : vector<128x128xi1>, vector<128x128xf32>
    %c0_25 = arith.constant 0 : index
    %c0_26 = arith.constant 0 : index
    %115 = vector.load %arg7[%c0_25, %c0_26] : memref<576x128xbf16, #tpu.memory_space<vmem>>, vector<576x128xbf16>
    %cst_27 = arith.constant dense<0.000000e+00> : vector<128x128xf32>
    %116 = tpu.matmul %104, %115, %cst_27 {dimension_numbers = #tpu.dot_dimension_numbers<[1], [0], [0], [1], [0, 0, 1, 1], [], []>} : vector<128x576xbf16>, vector<576x128xbf16>, vector<128x128xf32> -> vector<128x128xf32>
    %c0_28 = arith.constant 0 : index
    %c0_29 = arith.constant 0 : index
    %117 = vector.load %arg9[%c0_28, %c0_29] : memref<1x128xf32, #tpu.memory_space<vmem>>, vector<1x128xf32>
    %118 = vector.broadcast %117 : vector<1x128xf32> to vector<128x128xf32>
    %119 = arith.addf %116, %118 : vector<128x128xf32>
    %cst_30 = arith.constant 0.000000e+00 : f32
    %120 = vector.broadcast %cst_30 : f32 to vector<128x128xf32>
    %121 = arith.cmpf oge, %119, %120 : vector<128x128xf32>
    %cst_31 = arith.constant 2.000000e-01 : f32
    %122 = vector.broadcast %cst_31 : f32 to vector<128x128xf32>
    %123 = arith.mulf %122, %119 : vector<128x128xf32>
    %124 = arith.select %121, %119, %123 : vector<128x128xi1>, vector<128x128xf32>
    %125 = vector.shape_cast %114 : vector<128x128xf32> to vector<16x8x128xf32>
    %126 = vector.shape_cast %124 : vector<128x128xf32> to vector<16x8x128xf32>
    %cst_32 = arith.constant 0.000000e+00 : f32
    %127 = vector.broadcast %cst_32 : f32 to vector<8x128xf32>
    %cst_33 = arith.constant 0.000000e+00 : f32
    %128 = vector.broadcast %cst_33 : f32 to vector<8x128xf32>
    %129 = vector.extract_strided_slice %125 {offsets = [0, 0, 0], sizes = [1, 8, 128], strides = [1, 1, 1]} : vector<16x8x128xf32> to vector<1x8x128xf32>
    %130 = vector.shape_cast %129 : vector<1x8x128xf32> to vector<8x128xf32>
    %131 = arith.truncf %130 : vector<8x128xf32> to vector<8x128xbf16>
    %c0_34 = arith.constant 0 : index
    %c0_35 = arith.constant 0 : index
    %c0_36 = arith.constant 0 : index
    %132 = vector.load %arg10[%c0_34, %c0_35, %c0_36] : memref<16x128x128xbf16, #tpu.memory_space<vmem>>, vector<1x128x128xbf16>
    %133 = vector.shape_cast %132 : vector<1x128x128xbf16> to vector<128x128xbf16>
    %cst_37 = arith.constant dense<0.000000e+00> : vector<8x128xf32>
    %134 = tpu.matmul %131, %133, %cst_37 {dimension_numbers = #tpu.dot_dimension_numbers<[1], [0], [0], [1], [0, 0, 1, 1], [], []>} : vector<8x128xbf16>, vector<128x128xbf16>, vector<8x128xf32> -> vector<8x128xf32>
    %135 = arith.addf %127, %134 : vector<8x128xf32>
    %136 = vector.extract_strided_slice %126 {offsets = [0, 0, 0], sizes = [1, 8, 128], strides = [1, 1, 1]} : vector<16x8x128xf32> to vector<1x8x128xf32>
    %137 = vector.shape_cast %136 : vector<1x8x128xf32> to vector<8x128xf32>
    %138 = arith.truncf %137 : vector<8x128xf32> to vector<8x128xbf16>
    %c0_38 = arith.constant 0 : index
    %c0_39 = arith.constant 0 : index
    %c0_40 = arith.constant 0 : index
    %139 = vector.load %arg11[%c0_38, %c0_39, %c0_40] : memref<16x128x128xbf16, #tpu.memory_space<vmem>>, vector<1x128x128xbf16>
    %140 = vector.shape_cast %139 : vector<1x128x128xbf16> to vector<128x128xbf16>
    %cst_41 = arith.constant dense<0.000000e+00> : vector<8x128xf32>
    %141 = tpu.matmul %138, %140, %cst_41 {dimension_numbers = #tpu.dot_dimension_numbers<[1], [0], [0], [1], [0, 0, 1, 1], [], []>} : vector<8x128xbf16>, vector<128x128xbf16>, vector<8x128xf32> -> vector<8x128xf32>
    %142 = arith.addf %128, %141 : vector<8x128xf32>
    %143 = vector.extract_strided_slice %125 {offsets = [1, 0, 0], sizes = [1, 8, 128], strides = [1, 1, 1]} : vector<16x8x128xf32> to vector<1x8x128xf32>
    %144 = vector.shape_cast %143 : vector<1x8x128xf32> to vector<8x128xf32>
    %145 = arith.truncf %144 : vector<8x128xf32> to vector<8x128xbf16>
    %c1 = arith.constant 1 : index
    %c0_42 = arith.constant 0 : index
    %c0_43 = arith.constant 0 : index
    %146 = vector.load %arg10[%c1, %c0_42, %c0_43] : memref<16x128x128xbf16, #tpu.memory_space<vmem>>, vector<1x128x128xbf16>
    %147 = vector.shape_cast %146 : vector<1x128x128xbf16> to vector<128x128xbf16>
    %cst_44 = arith.constant dense<0.000000e+00> : vector<8x128xf32>
    %148 = tpu.matmul %145, %147, %cst_44 {dimension_numbers = #tpu.dot_dimension_numbers<[1], [0], [0], [1], [0, 0, 1, 1], [], []>} : vector<8x128xbf16>, vector<128x128xbf16>, vector<8x128xf32> -> vector<8x128xf32>
    %149 = arith.addf %135, %148 : vector<8x128xf32>
    %150 = vector.extract_strided_slice %126 {offsets = [1, 0, 0], sizes = [1, 8, 128], strides = [1, 1, 1]} : vector<16x8x128xf32> to vector<1x8x128xf32>
    %151 = vector.shape_cast %150 : vector<1x8x128xf32> to vector<8x128xf32>
    %152 = arith.truncf %151 : vector<8x128xf32> to vector<8x128xbf16>
    %c1_45 = arith.constant 1 : index
    %c0_46 = arith.constant 0 : index
    %c0_47 = arith.constant 0 : index
    %153 = vector.load %arg11[%c1_45, %c0_46, %c0_47] : memref<16x128x128xbf16, #tpu.memory_space<vmem>>, vector<1x128x128xbf16>
    %154 = vector.shape_cast %153 : vector<1x128x128xbf16> to vector<128x128xbf16>
    %cst_48 = arith.constant dense<0.000000e+00> : vector<8x128xf32>
    %155 = tpu.matmul %152, %154, %cst_48 {dimension_numbers = #tpu.dot_dimension_numbers<[1], [0], [0], [1], [0, 0, 1, 1], [], []>} : vector<8x128xbf16>, vector<128x128xbf16>, vector<8x128xf32> -> vector<8x128xf32>
    %156 = arith.addf %142, %155 : vector<8x128xf32>
    %157 = vector.extract_strided_slice %125 {offsets = [2, 0, 0], sizes = [1, 8, 128], strides = [1, 1, 1]} : vector<16x8x128xf32> to vector<1x8x128xf32>
    %158 = vector.shape_cast %157 : vector<1x8x128xf32> to vector<8x128xf32>
    %159 = arith.truncf %158 : vector<8x128xf32> to vector<8x128xbf16>
    %c2 = arith.constant 2 : index
    %c0_49 = arith.constant 0 : index
    %c0_50 = arith.constant 0 : index
    %160 = vector.load %arg10[%c2, %c0_49, %c0_50] : memref<16x128x128xbf16, #tpu.memory_space<vmem>>, vector<1x128x128xbf16>
    %161 = vector.shape_cast %160 : vector<1x128x128xbf16> to vector<128x128xbf16>
    %cst_51 = arith.constant dense<0.000000e+00> : vector<8x128xf32>
    %162 = tpu.matmul %159, %161, %cst_51 {dimension_numbers = #tpu.dot_dimension_numbers<[1], [0], [0], [1], [0, 0, 1, 1], [], []>} : vector<8x128xbf16>, vector<128x128xbf16>, vector<8x128xf32> -> vector<8x128xf32>
    %163 = arith.addf %149, %162 : vector<8x128xf32>
    %164 = vector.extract_strided_slice %126 {offsets = [2, 0, 0], sizes = [1, 8, 128], strides = [1, 1, 1]} : vector<16x8x128xf32> to vector<1x8x128xf32>
    %165 = vector.shape_cast %164 : vector<1x8x128xf32> to vector<8x128xf32>
    %166 = arith.truncf %165 : vector<8x128xf32> to vector<8x128xbf16>
    %c2_52 = arith.constant 2 : index
    %c0_53 = arith.constant 0 : index
    %c0_54 = arith.constant 0 : index
    %167 = vector.load %arg11[%c2_52, %c0_53, %c0_54] : memref<16x128x128xbf16, #tpu.memory_space<vmem>>, vector<1x128x128xbf16>
    %168 = vector.shape_cast %167 : vector<1x128x128xbf16> to vector<128x128xbf16>
    %cst_55 = arith.constant dense<0.000000e+00> : vector<8x128xf32>
    %169 = tpu.matmul %166, %168, %cst_55 {dimension_numbers = #tpu.dot_dimension_numbers<[1], [0], [0], [1], [0, 0, 1, 1], [], []>} : vector<8x128xbf16>, vector<128x128xbf16>, vector<8x128xf32> -> vector<8x128xf32>
    %170 = arith.addf %156, %169 : vector<8x128xf32>
    %171 = vector.extract_strided_slice %125 {offsets = [3, 0, 0], sizes = [1, 8, 128], strides = [1, 1, 1]} : vector<16x8x128xf32> to vector<1x8x128xf32>
    %172 = vector.shape_cast %171 : vector<1x8x128xf32> to vector<8x128xf32>
    %173 = arith.truncf %172 : vector<8x128xf32> to vector<8x128xbf16>
    %c3 = arith.constant 3 : index
    %c0_56 = arith.constant 0 : index
    %c0_57 = arith.constant 0 : index
    %174 = vector.load %arg10[%c3, %c0_56, %c0_57] : memref<16x128x128xbf16, #tpu.memory_space<vmem>>, vector<1x128x128xbf16>
    %175 = vector.shape_cast %174 : vector<1x128x128xbf16> to vector<128x128xbf16>
    %cst_58 = arith.constant dense<0.000000e+00> : vector<8x128xf32>
    %176 = tpu.matmul %173, %175, %cst_58 {dimension_numbers = #tpu.dot_dimension_numbers<[1], [0], [0], [1], [0, 0, 1, 1], [], []>} : vector<8x128xbf16>, vector<128x128xbf16>, vector<8x128xf32> -> vector<8x128xf32>
    %177 = arith.addf %163, %176 : vector<8x128xf32>
    %178 = vector.extract_strided_slice %126 {offsets = [3, 0, 0], sizes = [1, 8, 128], strides = [1, 1, 1]} : vector<16x8x128xf32> to vector<1x8x128xf32>
    %179 = vector.shape_cast %178 : vector<1x8x128xf32> to vector<8x128xf32>
    %180 = arith.truncf %179 : vector<8x128xf32> to vector<8x128xbf16>
    %c3_59 = arith.constant 3 : index
    %c0_60 = arith.constant 0 : index
    %c0_61 = arith.constant 0 : index
    %181 = vector.load %arg11[%c3_59, %c0_60, %c0_61] : memref<16x128x128xbf16, #tpu.memory_space<vmem>>, vector<1x128x128xbf16>
    %182 = vector.shape_cast %181 : vector<1x128x128xbf16> to vector<128x128xbf16>
    %cst_62 = arith.constant dense<0.000000e+00> : vector<8x128xf32>
    %183 = tpu.matmul %180, %182, %cst_62 {dimension_numbers = #tpu.dot_dimension_numbers<[1], [0], [0], [1], [0, 0, 1, 1], [], []>} : vector<8x128xbf16>, vector<128x128xbf16>, vector<8x128xf32> -> vector<8x128xf32>
    %184 = arith.addf %170, %183 : vector<8x128xf32>
    %185 = vector.extract_strided_slice %125 {offsets = [4, 0, 0], sizes = [1, 8, 128], strides = [1, 1, 1]} : vector<16x8x128xf32> to vector<1x8x128xf32>
    %186 = vector.shape_cast %185 : vector<1x8x128xf32> to vector<8x128xf32>
    %187 = arith.truncf %186 : vector<8x128xf32> to vector<8x128xbf16>
    %c4 = arith.constant 4 : index
    %c0_63 = arith.constant 0 : index
    %c0_64 = arith.constant 0 : index
    %188 = vector.load %arg10[%c4, %c0_63, %c0_64] : memref<16x128x128xbf16, #tpu.memory_space<vmem>>, vector<1x128x128xbf16>
    %189 = vector.shape_cast %188 : vector<1x128x128xbf16> to vector<128x128xbf16>
    %cst_65 = arith.constant dense<0.000000e+00> : vector<8x128xf32>
    %190 = tpu.matmul %187, %189, %cst_65 {dimension_numbers = #tpu.dot_dimension_numbers<[1], [0], [0], [1], [0, 0, 1, 1], [], []>} : vector<8x128xbf16>, vector<128x128xbf16>, vector<8x128xf32> -> vector<8x128xf32>
    %191 = arith.addf %177, %190 : vector<8x128xf32>
    %192 = vector.extract_strided_slice %126 {offsets = [4, 0, 0], sizes = [1, 8, 128], strides = [1, 1, 1]} : vector<16x8x128xf32> to vector<1x8x128xf32>
    %193 = vector.shape_cast %192 : vector<1x8x128xf32> to vector<8x128xf32>
    %194 = arith.truncf %193 : vector<8x128xf32> to vector<8x128xbf16>
    %c4_66 = arith.constant 4 : index
    %c0_67 = arith.constant 0 : index
    %c0_68 = arith.constant 0 : index
    %195 = vector.load %arg11[%c4_66, %c0_67, %c0_68] : memref<16x128x128xbf16, #tpu.memory_space<vmem>>, vector<1x128x128xbf16>
    %196 = vector.shape_cast %195 : vector<1x128x128xbf16> to vector<128x128xbf16>
    %cst_69 = arith.constant dense<0.000000e+00> : vector<8x128xf32>
    %197 = tpu.matmul %194, %196, %cst_69 {dimension_numbers = #tpu.dot_dimension_numbers<[1], [0], [0], [1], [0, 0, 1, 1], [], []>} : vector<8x128xbf16>, vector<128x128xbf16>, vector<8x128xf32> -> vector<8x128xf32>
    %198 = arith.addf %184, %197 : vector<8x128xf32>
    %199 = vector.extract_strided_slice %125 {offsets = [5, 0, 0], sizes = [1, 8, 128], strides = [1, 1, 1]} : vector<16x8x128xf32> to vector<1x8x128xf32>
    %200 = vector.shape_cast %199 : vector<1x8x128xf32> to vector<8x128xf32>
    %201 = arith.truncf %200 : vector<8x128xf32> to vector<8x128xbf16>
    %c5 = arith.constant 5 : index
    %c0_70 = arith.constant 0 : index
    %c0_71 = arith.constant 0 : index
    %202 = vector.load %arg10[%c5, %c0_70, %c0_71] : memref<16x128x128xbf16, #tpu.memory_space<vmem>>, vector<1x128x128xbf16>
    %203 = vector.shape_cast %202 : vector<1x128x128xbf16> to vector<128x128xbf16>
    %cst_72 = arith.constant dense<0.000000e+00> : vector<8x128xf32>
    %204 = tpu.matmul %201, %203, %cst_72 {dimension_numbers = #tpu.dot_dimension_numbers<[1], [0], [0], [1], [0, 0, 1, 1], [], []>} : vector<8x128xbf16>, vector<128x128xbf16>, vector<8x128xf32> -> vector<8x128xf32>
    %205 = arith.addf %191, %204 : vector<8x128xf32>
    %206 = vector.extract_strided_slice %126 {offsets = [5, 0, 0], sizes = [1, 8, 128], strides = [1, 1, 1]} : vector<16x8x128xf32> to vector<1x8x128xf32>
    %207 = vector.shape_cast %206 : vector<1x8x128xf32> to vector<8x128xf32>
    %208 = arith.truncf %207 : vector<8x128xf32> to vector<8x128xbf16>
    %c5_73 = arith.constant 5 : index
    %c0_74 = arith.constant 0 : index
    %c0_75 = arith.constant 0 : index
    %209 = vector.load %arg11[%c5_73, %c0_74, %c0_75] : memref<16x128x128xbf16, #tpu.memory_space<vmem>>, vector<1x128x128xbf16>
    %210 = vector.shape_cast %209 : vector<1x128x128xbf16> to vector<128x128xbf16>
    %cst_76 = arith.constant dense<0.000000e+00> : vector<8x128xf32>
    %211 = tpu.matmul %208, %210, %cst_76 {dimension_numbers = #tpu.dot_dimension_numbers<[1], [0], [0], [1], [0, 0, 1, 1], [], []>} : vector<8x128xbf16>, vector<128x128xbf16>, vector<8x128xf32> -> vector<8x128xf32>
    %212 = arith.addf %198, %211 : vector<8x128xf32>
    %213 = vector.extract_strided_slice %125 {offsets = [6, 0, 0], sizes = [1, 8, 128], strides = [1, 1, 1]} : vector<16x8x128xf32> to vector<1x8x128xf32>
    %214 = vector.shape_cast %213 : vector<1x8x128xf32> to vector<8x128xf32>
    %215 = arith.truncf %214 : vector<8x128xf32> to vector<8x128xbf16>
    %c6 = arith.constant 6 : index
    %c0_77 = arith.constant 0 : index
    %c0_78 = arith.constant 0 : index
    %216 = vector.load %arg10[%c6, %c0_77, %c0_78] : memref<16x128x128xbf16, #tpu.memory_space<vmem>>, vector<1x128x128xbf16>
    %217 = vector.shape_cast %216 : vector<1x128x128xbf16> to vector<128x128xbf16>
    %cst_79 = arith.constant dense<0.000000e+00> : vector<8x128xf32>
    %218 = tpu.matmul %215, %217, %cst_79 {dimension_numbers = #tpu.dot_dimension_numbers<[1], [0], [0], [1], [0, 0, 1, 1], [], []>} : vector<8x128xbf16>, vector<128x128xbf16>, vector<8x128xf32> -> vector<8x128xf32>
    %219 = arith.addf %205, %218 : vector<8x128xf32>
    %220 = vector.extract_strided_slice %126 {offsets = [6, 0, 0], sizes = [1, 8, 128], strides = [1, 1, 1]} : vector<16x8x128xf32> to vector<1x8x128xf32>
    %221 = vector.shape_cast %220 : vector<1x8x128xf32> to vector<8x128xf32>
    %222 = arith.truncf %221 : vector<8x128xf32> to vector<8x128xbf16>
    %c6_80 = arith.constant 6 : index
    %c0_81 = arith.constant 0 : index
    %c0_82 = arith.constant 0 : index
    %223 = vector.load %arg11[%c6_80, %c0_81, %c0_82] : memref<16x128x128xbf16, #tpu.memory_space<vmem>>, vector<1x128x128xbf16>
    %224 = vector.shape_cast %223 : vector<1x128x128xbf16> to vector<128x128xbf16>
    %cst_83 = arith.constant dense<0.000000e+00> : vector<8x128xf32>
    %225 = tpu.matmul %222, %224, %cst_83 {dimension_numbers = #tpu.dot_dimension_numbers<[1], [0], [0], [1], [0, 0, 1, 1], [], []>} : vector<8x128xbf16>, vector<128x128xbf16>, vector<8x128xf32> -> vector<8x128xf32>
    %226 = arith.addf %212, %225 : vector<8x128xf32>
    %227 = vector.extract_strided_slice %125 {offsets = [7, 0, 0], sizes = [1, 8, 128], strides = [1, 1, 1]} : vector<16x8x128xf32> to vector<1x8x128xf32>
    %228 = vector.shape_cast %227 : vector<1x8x128xf32> to vector<8x128xf32>
    %229 = arith.truncf %228 : vector<8x128xf32> to vector<8x128xbf16>
    %c7 = arith.constant 7 : index
    %c0_84 = arith.constant 0 : index
    %c0_85 = arith.constant 0 : index
    %230 = vector.load %arg10[%c7, %c0_84, %c0_85] : memref<16x128x128xbf16, #tpu.memory_space<vmem>>, vector<1x128x128xbf16>
    %231 = vector.shape_cast %230 : vector<1x128x128xbf16> to vector<128x128xbf16>
    %cst_86 = arith.constant dense<0.000000e+00> : vector<8x128xf32>
    %232 = tpu.matmul %229, %231, %cst_86 {dimension_numbers = #tpu.dot_dimension_numbers<[1], [0], [0], [1], [0, 0, 1, 1], [], []>} : vector<8x128xbf16>, vector<128x128xbf16>, vector<8x128xf32> -> vector<8x128xf32>
    %233 = arith.addf %219, %232 : vector<8x128xf32>
    %234 = vector.extract_strided_slice %126 {offsets = [7, 0, 0], sizes = [1, 8, 128], strides = [1, 1, 1]} : vector<16x8x128xf32> to vector<1x8x128xf32>
    %235 = vector.shape_cast %234 : vector<1x8x128xf32> to vector<8x128xf32>
    %236 = arith.truncf %235 : vector<8x128xf32> to vector<8x128xbf16>
    %c7_87 = arith.constant 7 : index
    %c0_88 = arith.constant 0 : index
    %c0_89 = arith.constant 0 : index
    %237 = vector.load %arg11[%c7_87, %c0_88, %c0_89] : memref<16x128x128xbf16, #tpu.memory_space<vmem>>, vector<1x128x128xbf16>
    %238 = vector.shape_cast %237 : vector<1x128x128xbf16> to vector<128x128xbf16>
    %cst_90 = arith.constant dense<0.000000e+00> : vector<8x128xf32>
    %239 = tpu.matmul %236, %238, %cst_90 {dimension_numbers = #tpu.dot_dimension_numbers<[1], [0], [0], [1], [0, 0, 1, 1], [], []>} : vector<8x128xbf16>, vector<128x128xbf16>, vector<8x128xf32> -> vector<8x128xf32>
    %240 = arith.addf %226, %239 : vector<8x128xf32>
    %241 = vector.extract_strided_slice %125 {offsets = [8, 0, 0], sizes = [1, 8, 128], strides = [1, 1, 1]} : vector<16x8x128xf32> to vector<1x8x128xf32>
    %242 = vector.shape_cast %241 : vector<1x8x128xf32> to vector<8x128xf32>
    %243 = arith.truncf %242 : vector<8x128xf32> to vector<8x128xbf16>
    %c8 = arith.constant 8 : index
    %c0_91 = arith.constant 0 : index
    %c0_92 = arith.constant 0 : index
    %244 = vector.load %arg10[%c8, %c0_91, %c0_92] : memref<16x128x128xbf16, #tpu.memory_space<vmem>>, vector<1x128x128xbf16>
    %245 = vector.shape_cast %244 : vector<1x128x128xbf16> to vector<128x128xbf16>
    %cst_93 = arith.constant dense<0.000000e+00> : vector<8x128xf32>
    %246 = tpu.matmul %243, %245, %cst_93 {dimension_numbers = #tpu.dot_dimension_numbers<[1], [0], [0], [1], [0, 0, 1, 1], [], []>} : vector<8x128xbf16>, vector<128x128xbf16>, vector<8x128xf32> -> vector<8x128xf32>
    %247 = arith.addf %233, %246 : vector<8x128xf32>
    %248 = vector.extract_strided_slice %126 {offsets = [8, 0, 0], sizes = [1, 8, 128], strides = [1, 1, 1]} : vector<16x8x128xf32> to vector<1x8x128xf32>
    %249 = vector.shape_cast %248 : vector<1x8x128xf32> to vector<8x128xf32>
    %250 = arith.truncf %249 : vector<8x128xf32> to vector<8x128xbf16>
    %c8_94 = arith.constant 8 : index
    %c0_95 = arith.constant 0 : index
    %c0_96 = arith.constant 0 : index
    %251 = vector.load %arg11[%c8_94, %c0_95, %c0_96] : memref<16x128x128xbf16, #tpu.memory_space<vmem>>, vector<1x128x128xbf16>
    %252 = vector.shape_cast %251 : vector<1x128x128xbf16> to vector<128x128xbf16>
    %cst_97 = arith.constant dense<0.000000e+00> : vector<8x128xf32>
    %253 = tpu.matmul %250, %252, %cst_97 {dimension_numbers = #tpu.dot_dimension_numbers<[1], [0], [0], [1], [0, 0, 1, 1], [], []>} : vector<8x128xbf16>, vector<128x128xbf16>, vector<8x128xf32> -> vector<8x128xf32>
    %254 = arith.addf %240, %253 : vector<8x128xf32>
    %255 = vector.extract_strided_slice %125 {offsets = [9, 0, 0], sizes = [1, 8, 128], strides = [1, 1, 1]} : vector<16x8x128xf32> to vector<1x8x128xf32>
    %256 = vector.shape_cast %255 : vector<1x8x128xf32> to vector<8x128xf32>
    %257 = arith.truncf %256 : vector<8x128xf32> to vector<8x128xbf16>
    %c9 = arith.constant 9 : index
    %c0_98 = arith.constant 0 : index
    %c0_99 = arith.constant 0 : index
    %258 = vector.load %arg10[%c9, %c0_98, %c0_99] : memref<16x128x128xbf16, #tpu.memory_space<vmem>>, vector<1x128x128xbf16>
    %259 = vector.shape_cast %258 : vector<1x128x128xbf16> to vector<128x128xbf16>
    %cst_100 = arith.constant dense<0.000000e+00> : vector<8x128xf32>
    %260 = tpu.matmul %257, %259, %cst_100 {dimension_numbers = #tpu.dot_dimension_numbers<[1], [0], [0], [1], [0, 0, 1, 1], [], []>} : vector<8x128xbf16>, vector<128x128xbf16>, vector<8x128xf32> -> vector<8x128xf32>
    %261 = arith.addf %247, %260 : vector<8x128xf32>
    %262 = vector.extract_strided_slice %126 {offsets = [9, 0, 0], sizes = [1, 8, 128], strides = [1, 1, 1]} : vector<16x8x128xf32> to vector<1x8x128xf32>
    %263 = vector.shape_cast %262 : vector<1x8x128xf32> to vector<8x128xf32>
    %264 = arith.truncf %263 : vector<8x128xf32> to vector<8x128xbf16>
    %c9_101 = arith.constant 9 : index
    %c0_102 = arith.constant 0 : index
    %c0_103 = arith.constant 0 : index
    %265 = vector.load %arg11[%c9_101, %c0_102, %c0_103] : memref<16x128x128xbf16, #tpu.memory_space<vmem>>, vector<1x128x128xbf16>
    %266 = vector.shape_cast %265 : vector<1x128x128xbf16> to vector<128x128xbf16>
    %cst_104 = arith.constant dense<0.000000e+00> : vector<8x128xf32>
    %267 = tpu.matmul %264, %266, %cst_104 {dimension_numbers = #tpu.dot_dimension_numbers<[1], [0], [0], [1], [0, 0, 1, 1], [], []>} : vector<8x128xbf16>, vector<128x128xbf16>, vector<8x128xf32> -> vector<8x128xf32>
    %268 = arith.addf %254, %267 : vector<8x128xf32>
    %269 = vector.extract_strided_slice %125 {offsets = [10, 0, 0], sizes = [1, 8, 128], strides = [1, 1, 1]} : vector<16x8x128xf32> to vector<1x8x128xf32>
    %270 = vector.shape_cast %269 : vector<1x8x128xf32> to vector<8x128xf32>
    %271 = arith.truncf %270 : vector<8x128xf32> to vector<8x128xbf16>
    %c10 = arith.constant 10 : index
    %c0_105 = arith.constant 0 : index
    %c0_106 = arith.constant 0 : index
    %272 = vector.load %arg10[%c10, %c0_105, %c0_106] : memref<16x128x128xbf16, #tpu.memory_space<vmem>>, vector<1x128x128xbf16>
    %273 = vector.shape_cast %272 : vector<1x128x128xbf16> to vector<128x128xbf16>
    %cst_107 = arith.constant dense<0.000000e+00> : vector<8x128xf32>
    %274 = tpu.matmul %271, %273, %cst_107 {dimension_numbers = #tpu.dot_dimension_numbers<[1], [0], [0], [1], [0, 0, 1, 1], [], []>} : vector<8x128xbf16>, vector<128x128xbf16>, vector<8x128xf32> -> vector<8x128xf32>
    %275 = arith.addf %261, %274 : vector<8x128xf32>
    %276 = vector.extract_strided_slice %126 {offsets = [10, 0, 0], sizes = [1, 8, 128], strides = [1, 1, 1]} : vector<16x8x128xf32> to vector<1x8x128xf32>
    %277 = vector.shape_cast %276 : vector<1x8x128xf32> to vector<8x128xf32>
    %278 = arith.truncf %277 : vector<8x128xf32> to vector<8x128xbf16>
    %c10_108 = arith.constant 10 : index
    %c0_109 = arith.constant 0 : index
    %c0_110 = arith.constant 0 : index
    %279 = vector.load %arg11[%c10_108, %c0_109, %c0_110] : memref<16x128x128xbf16, #tpu.memory_space<vmem>>, vector<1x128x128xbf16>
    %280 = vector.shape_cast %279 : vector<1x128x128xbf16> to vector<128x128xbf16>
    %cst_111 = arith.constant dense<0.000000e+00> : vector<8x128xf32>
    %281 = tpu.matmul %278, %280, %cst_111 {dimension_numbers = #tpu.dot_dimension_numbers<[1], [0], [0], [1], [0, 0, 1, 1], [], []>} : vector<8x128xbf16>, vector<128x128xbf16>, vector<8x128xf32> -> vector<8x128xf32>
    %282 = arith.addf %268, %281 : vector<8x128xf32>
    %283 = vector.extract_strided_slice %125 {offsets = [11, 0, 0], sizes = [1, 8, 128], strides = [1, 1, 1]} : vector<16x8x128xf32> to vector<1x8x128xf32>
    %284 = vector.shape_cast %283 : vector<1x8x128xf32> to vector<8x128xf32>
    %285 = arith.truncf %284 : vector<8x128xf32> to vector<8x128xbf16>
    %c11 = arith.constant 11 : index
    %c0_112 = arith.constant 0 : index
    %c0_113 = arith.constant 0 : index
    %286 = vector.load %arg10[%c11, %c0_112, %c0_113] : memref<16x128x128xbf16, #tpu.memory_space<vmem>>, vector<1x128x128xbf16>
    %287 = vector.shape_cast %286 : vector<1x128x128xbf16> to vector<128x128xbf16>
    %cst_114 = arith.constant dense<0.000000e+00> : vector<8x128xf32>
    %288 = tpu.matmul %285, %287, %cst_114 {dimension_numbers = #tpu.dot_dimension_numbers<[1], [0], [0], [1], [0, 0, 1, 1], [], []>} : vector<8x128xbf16>, vector<128x128xbf16>, vector<8x128xf32> -> vector<8x128xf32>
    %289 = arith.addf %275, %288 : vector<8x128xf32>
    %290 = vector.extract_strided_slice %126 {offsets = [11, 0, 0], sizes = [1, 8, 128], strides = [1, 1, 1]} : vector<16x8x128xf32> to vector<1x8x128xf32>
    %291 = vector.shape_cast %290 : vector<1x8x128xf32> to vector<8x128xf32>
    %292 = arith.truncf %291 : vector<8x128xf32> to vector<8x128xbf16>
    %c11_115 = arith.constant 11 : index
    %c0_116 = arith.constant 0 : index
    %c0_117 = arith.constant 0 : index
    %293 = vector.load %arg11[%c11_115, %c0_116, %c0_117] : memref<16x128x128xbf16, #tpu.memory_space<vmem>>, vector<1x128x128xbf16>
    %294 = vector.shape_cast %293 : vector<1x128x128xbf16> to vector<128x128xbf16>
    %cst_118 = arith.constant dense<0.000000e+00> : vector<8x128xf32>
    %295 = tpu.matmul %292, %294, %cst_118 {dimension_numbers = #tpu.dot_dimension_numbers<[1], [0], [0], [1], [0, 0, 1, 1], [], []>} : vector<8x128xbf16>, vector<128x128xbf16>, vector<8x128xf32> -> vector<8x128xf32>
    %296 = arith.addf %282, %295 : vector<8x128xf32>
    %297 = vector.extract_strided_slice %125 {offsets = [12, 0, 0], sizes = [1, 8, 128], strides = [1, 1, 1]} : vector<16x8x128xf32> to vector<1x8x128xf32>
    %298 = vector.shape_cast %297 : vector<1x8x128xf32> to vector<8x128xf32>
    %299 = arith.truncf %298 : vector<8x128xf32> to vector<8x128xbf16>
    %c12 = arith.constant 12 : index
    %c0_119 = arith.constant 0 : index
    %c0_120 = arith.constant 0 : index
    %300 = vector.load %arg10[%c12, %c0_119, %c0_120] : memref<16x128x128xbf16, #tpu.memory_space<vmem>>, vector<1x128x128xbf16>
    %301 = vector.shape_cast %300 : vector<1x128x128xbf16> to vector<128x128xbf16>
    %cst_121 = arith.constant dense<0.000000e+00> : vector<8x128xf32>
    %302 = tpu.matmul %299, %301, %cst_121 {dimension_numbers = #tpu.dot_dimension_numbers<[1], [0], [0], [1], [0, 0, 1, 1], [], []>} : vector<8x128xbf16>, vector<128x128xbf16>, vector<8x128xf32> -> vector<8x128xf32>
    %303 = arith.addf %289, %302 : vector<8x128xf32>
    %304 = vector.extract_strided_slice %126 {offsets = [12, 0, 0], sizes = [1, 8, 128], strides = [1, 1, 1]} : vector<16x8x128xf32> to vector<1x8x128xf32>
    %305 = vector.shape_cast %304 : vector<1x8x128xf32> to vector<8x128xf32>
    %306 = arith.truncf %305 : vector<8x128xf32> to vector<8x128xbf16>
    %c12_122 = arith.constant 12 : index
    %c0_123 = arith.constant 0 : index
    %c0_124 = arith.constant 0 : index
    %307 = vector.load %arg11[%c12_122, %c0_123, %c0_124] : memref<16x128x128xbf16, #tpu.memory_space<vmem>>, vector<1x128x128xbf16>
    %308 = vector.shape_cast %307 : vector<1x128x128xbf16> to vector<128x128xbf16>
    %cst_125 = arith.constant dense<0.000000e+00> : vector<8x128xf32>
    %309 = tpu.matmul %306, %308, %cst_125 {dimension_numbers = #tpu.dot_dimension_numbers<[1], [0], [0], [1], [0, 0, 1, 1], [], []>} : vector<8x128xbf16>, vector<128x128xbf16>, vector<8x128xf32> -> vector<8x128xf32>
    %310 = arith.addf %296, %309 : vector<8x128xf32>
    %311 = vector.extract_strided_slice %125 {offsets = [13, 0, 0], sizes = [1, 8, 128], strides = [1, 1, 1]} : vector<16x8x128xf32> to vector<1x8x128xf32>
    %312 = vector.shape_cast %311 : vector<1x8x128xf32> to vector<8x128xf32>
    %313 = arith.truncf %312 : vector<8x128xf32> to vector<8x128xbf16>
    %c13 = arith.constant 13 : index
    %c0_126 = arith.constant 0 : index
    %c0_127 = arith.constant 0 : index
    %314 = vector.load %arg10[%c13, %c0_126, %c0_127] : memref<16x128x128xbf16, #tpu.memory_space<vmem>>, vector<1x128x128xbf16>
    %315 = vector.shape_cast %314 : vector<1x128x128xbf16> to vector<128x128xbf16>
    %cst_128 = arith.constant dense<0.000000e+00> : vector<8x128xf32>
    %316 = tpu.matmul %313, %315, %cst_128 {dimension_numbers = #tpu.dot_dimension_numbers<[1], [0], [0], [1], [0, 0, 1, 1], [], []>} : vector<8x128xbf16>, vector<128x128xbf16>, vector<8x128xf32> -> vector<8x128xf32>
    %317 = arith.addf %303, %316 : vector<8x128xf32>
    %318 = vector.extract_strided_slice %126 {offsets = [13, 0, 0], sizes = [1, 8, 128], strides = [1, 1, 1]} : vector<16x8x128xf32> to vector<1x8x128xf32>
    %319 = vector.shape_cast %318 : vector<1x8x128xf32> to vector<8x128xf32>
    %320 = arith.truncf %319 : vector<8x128xf32> to vector<8x128xbf16>
    %c13_129 = arith.constant 13 : index
    %c0_130 = arith.constant 0 : index
    %c0_131 = arith.constant 0 : index
    %321 = vector.load %arg11[%c13_129, %c0_130, %c0_131] : memref<16x128x128xbf16, #tpu.memory_space<vmem>>, vector<1x128x128xbf16>
    %322 = vector.shape_cast %321 : vector<1x128x128xbf16> to vector<128x128xbf16>
    %cst_132 = arith.constant dense<0.000000e+00> : vector<8x128xf32>
    %323 = tpu.matmul %320, %322, %cst_132 {dimension_numbers = #tpu.dot_dimension_numbers<[1], [0], [0], [1], [0, 0, 1, 1], [], []>} : vector<8x128xbf16>, vector<128x128xbf16>, vector<8x128xf32> -> vector<8x128xf32>
    %324 = arith.addf %310, %323 : vector<8x128xf32>
    %325 = vector.extract_strided_slice %125 {offsets = [14, 0, 0], sizes = [1, 8, 128], strides = [1, 1, 1]} : vector<16x8x128xf32> to vector<1x8x128xf32>
    %326 = vector.shape_cast %325 : vector<1x8x128xf32> to vector<8x128xf32>
    %327 = arith.truncf %326 : vector<8x128xf32> to vector<8x128xbf16>
    %c14 = arith.constant 14 : index
    %c0_133 = arith.constant 0 : index
    %c0_134 = arith.constant 0 : index
    %328 = vector.load %arg10[%c14, %c0_133, %c0_134] : memref<16x128x128xbf16, #tpu.memory_space<vmem>>, vector<1x128x128xbf16>
    %329 = vector.shape_cast %328 : vector<1x128x128xbf16> to vector<128x128xbf16>
    %cst_135 = arith.constant dense<0.000000e+00> : vector<8x128xf32>
    %330 = tpu.matmul %327, %329, %cst_135 {dimension_numbers = #tpu.dot_dimension_numbers<[1], [0], [0], [1], [0, 0, 1, 1], [], []>} : vector<8x128xbf16>, vector<128x128xbf16>, vector<8x128xf32> -> vector<8x128xf32>
    %331 = arith.addf %317, %330 : vector<8x128xf32>
    %332 = vector.extract_strided_slice %126 {offsets = [14, 0, 0], sizes = [1, 8, 128], strides = [1, 1, 1]} : vector<16x8x128xf32> to vector<1x8x128xf32>
    %333 = vector.shape_cast %332 : vector<1x8x128xf32> to vector<8x128xf32>
    %334 = arith.truncf %333 : vector<8x128xf32> to vector<8x128xbf16>
    %c14_136 = arith.constant 14 : index
    %c0_137 = arith.constant 0 : index
    %c0_138 = arith.constant 0 : index
    %335 = vector.load %arg11[%c14_136, %c0_137, %c0_138] : memref<16x128x128xbf16, #tpu.memory_space<vmem>>, vector<1x128x128xbf16>
    %336 = vector.shape_cast %335 : vector<1x128x128xbf16> to vector<128x128xbf16>
    %cst_139 = arith.constant dense<0.000000e+00> : vector<8x128xf32>
    %337 = tpu.matmul %334, %336, %cst_139 {dimension_numbers = #tpu.dot_dimension_numbers<[1], [0], [0], [1], [0, 0, 1, 1], [], []>} : vector<8x128xbf16>, vector<128x128xbf16>, vector<8x128xf32> -> vector<8x128xf32>
    %338 = arith.addf %324, %337 : vector<8x128xf32>
    %339 = vector.extract_strided_slice %125 {offsets = [15, 0, 0], sizes = [1, 8, 128], strides = [1, 1, 1]} : vector<16x8x128xf32> to vector<1x8x128xf32>
    %340 = vector.shape_cast %339 : vector<1x8x128xf32> to vector<8x128xf32>
    %341 = arith.truncf %340 : vector<8x128xf32> to vector<8x128xbf16>
    %c15 = arith.constant 15 : index
    %c0_140 = arith.constant 0 : index
    %c0_141 = arith.constant 0 : index
    %342 = vector.load %arg10[%c15, %c0_140, %c0_141] : memref<16x128x128xbf16, #tpu.memory_space<vmem>>, vector<1x128x128xbf16>
    %343 = vector.shape_cast %342 : vector<1x128x128xbf16> to vector<128x128xbf16>
    %cst_142 = arith.constant dense<0.000000e+00> : vector<8x128xf32>
    %344 = tpu.matmul %341, %343, %cst_142 {dimension_numbers = #tpu.dot_dimension_numbers<[1], [0], [0], [1], [0, 0, 1, 1], [], []>} : vector<8x128xbf16>, vector<128x128xbf16>, vector<8x128xf32> -> vector<8x128xf32>
    %345 = arith.addf %331, %344 : vector<8x128xf32>
    %346 = vector.extract_strided_slice %126 {offsets = [15, 0, 0], sizes = [1, 8, 128], strides = [1, 1, 1]} : vector<16x8x128xf32> to vector<1x8x128xf32>
    %347 = vector.shape_cast %346 : vector<1x8x128xf32> to vector<8x128xf32>
    %348 = arith.truncf %347 : vector<8x128xf32> to vector<8x128xbf16>
    %c15_143 = arith.constant 15 : index
    %c0_144 = arith.constant 0 : index
    %c0_145 = arith.constant 0 : index
    %349 = vector.load %arg11[%c15_143, %c0_144, %c0_145] : memref<16x128x128xbf16, #tpu.memory_space<vmem>>, vector<1x128x128xbf16>
    %350 = vector.shape_cast %349 : vector<1x128x128xbf16> to vector<128x128xbf16>
    %cst_146 = arith.constant dense<0.000000e+00> : vector<8x128xf32>
    %351 = tpu.matmul %348, %350, %cst_146 {dimension_numbers = #tpu.dot_dimension_numbers<[1], [0], [0], [1], [0, 0, 1, 1], [], []>} : vector<8x128xbf16>, vector<128x128xbf16>, vector<8x128xf32> -> vector<8x128xf32>
    %352 = arith.addf %338, %351 : vector<8x128xf32>
    %c0_147 = arith.constant 0 : index
    %c0_148 = arith.constant 0 : index
    %353 = vector.load %arg12[%c0_147, %c0_148] : memref<1x128xf32, #tpu.memory_space<vmem>>, vector<1x128xf32>
    %354 = vector.broadcast %353 : vector<1x128xf32> to vector<8x128xf32>
    %355 = arith.addf %345, %354 : vector<8x128xf32>
    %cst_149 = arith.constant 0.000000e+00 : f32
    %356 = vector.broadcast %cst_149 : f32 to vector<8x128xf32>
    %357 = arith.cmpf oge, %355, %356 : vector<8x128xf32>
    %cst_150 = arith.constant 2.000000e-01 : f32
    %358 = vector.broadcast %cst_150 : f32 to vector<8x128xf32>
    %359 = arith.mulf %358, %355 : vector<8x128xf32>
    %360 = arith.select %357, %355, %359 : vector<8x128xi1>, vector<8x128xf32>
    %c0_151 = arith.constant 0 : index
    %c0_152 = arith.constant 0 : index
    %361 = vector.load %arg13[%c0_151, %c0_152] : memref<1x128xf32, #tpu.memory_space<vmem>>, vector<1x128xf32>
    %362 = vector.broadcast %361 : vector<1x128xf32> to vector<8x128xf32>
    %363 = arith.addf %352, %362 : vector<8x128xf32>
    %cst_153 = arith.constant 0.000000e+00 : f32
    %364 = vector.broadcast %cst_153 : f32 to vector<8x128xf32>
    %365 = arith.cmpf oge, %363, %364 : vector<8x128xf32>
    %cst_154 = arith.constant 2.000000e-01 : f32
    %366 = vector.broadcast %cst_154 : f32 to vector<8x128xf32>
    %367 = arith.mulf %366, %363 : vector<8x128xf32>
    %368 = arith.select %365, %363, %367 : vector<8x128xi1>, vector<8x128xf32>
    %369 = arith.truncf %360 : vector<8x128xf32> to vector<8x128xbf16>
    %c0_155 = arith.constant 0 : index
    %c0_156 = arith.constant 0 : index
    %370 = vector.load %arg14[%c0_155, %c0_156] : memref<128x128xbf16, #tpu.memory_space<vmem>>, vector<128x128xbf16>
    %cst_157 = arith.constant dense<0.000000e+00> : vector<8x128xf32>
    %371 = tpu.matmul %369, %370, %cst_157 {dimension_numbers = #tpu.dot_dimension_numbers<[1], [0], [0], [1], [0, 0, 1, 1], [], []>} : vector<8x128xbf16>, vector<128x128xbf16>, vector<8x128xf32> -> vector<8x128xf32>
    %372 = arith.truncf %368 : vector<8x128xf32> to vector<8x128xbf16>
    %c0_158 = arith.constant 0 : index
    %c0_159 = arith.constant 0 : index
    %373 = vector.load %arg15[%c0_158, %c0_159] : memref<128x128xbf16, #tpu.memory_space<vmem>>, vector<128x128xbf16>
    %cst_160 = arith.constant dense<0.000000e+00> : vector<8x128xf32>
    %374 = tpu.matmul %372, %373, %cst_160 {dimension_numbers = #tpu.dot_dimension_numbers<[1], [0], [0], [1], [0, 0, 1, 1], [], []>} : vector<8x128xbf16>, vector<128x128xbf16>, vector<8x128xf32> -> vector<8x128xf32>
    %375 = arith.addf %371, %374 : vector<8x128xf32>
    %c0_161 = arith.constant 0 : index
    %c0_162 = arith.constant 0 : index
    %376 = vector.load %arg16[%c0_161, %c0_162] : memref<1x128xf32, #tpu.memory_space<vmem>>, vector<1x128xf32>
    %377 = vector.broadcast %376 : vector<1x128xf32> to vector<8x128xf32>
    %378 = arith.addf %375, %377 : vector<8x128xf32>
    %c0_163 = arith.constant 0 : index
    %c0_164 = arith.constant 0 : index
    %379 = vector.load %arg17[%c0_163, %c0_164] : memref<8x128xf32, #tpu.memory_space<vmem>>, vector<8x128xf32>
    tpu.vector_store %arg17[%c0_163, %c0_164], %378 {strides = array<i32>} : memref<8x128xf32, #tpu.memory_space<vmem>>, vector<8x128xf32>,
    return
  }
  func.func @transform_0(%arg0: i32) -> (i32, i32) {
    %c0_i32 = arith.constant 0 : i32
    %c0_i32_0 = arith.constant 0 : i32
    return %arg0, %c0_i32 : i32, i32
  }
  func.func @transform_1(%arg0: i32) -> (i32, i32) {
    %c0_i32 = arith.constant 0 : i32
    %c0_i32_0 = arith.constant 0 : i32
    %c0_i32_1 = arith.constant 0 : i32
    return %c0_i32, %c0_i32_0 : i32, i32
  }
  func.func @transform_2(%arg0: i32) -> (i32, i32) {
    %c0_i32 = arith.constant 0 : i32
    %c0_i32_0 = arith.constant 0 : i32
    %c0_i32_1 = arith.constant 0 : i32
    return %c0_i32, %c0_i32_0 : i32, i32
  }
  func.func @transform_3(%arg0: i32) -> (i32, i32) {
    %c0_i32 = arith.constant 0 : i32
    %c0_i32_0 = arith.constant 0 : i32
    %c0_i32_1 = arith.constant 0 : i32
    return %c0_i32, %c0_i32_0 : i32, i32
  }
  func.func @transform_4(%arg0: i32) -> (i32, i32) {
    %c0_i32 = arith.constant 0 : i32
    %c0_i32_0 = arith.constant 0 : i32
    %c0_i32_1 = arith.constant 0 : i32
    return %c0_i32, %c0_i32_0 : i32, i32
  }
  func.func @transform_5(%arg0: i32) -> (i32, i32) {
    %c0_i32 = arith.constant 0 : i32
    %c0_i32_0 = arith.constant 0 : i32
    %c0_i32_1 = arith.constant 0 : i32
    return %c0_i32, %c0_i32_0 : i32, i32
  }
  func.func @transform_6(%arg0: i32) -> (i32, i32) {
    %c0_i32 = arith.constant 0 : i32
    %c0_i32_0 = arith.constant 0 : i32
    %c0_i32_1 = arith.constant 0 : i32
    return %c0_i32, %c0_i32_0 : i32, i32
  }
  func.func @transform_7(%arg0: i32) -> (i32, i32) {
    %c0_i32 = arith.constant 0 : i32
    %c0_i32_0 = arith.constant 0 : i32
    %c0_i32_1 = arith.constant 0 : i32
    return %c0_i32, %c0_i32_0 : i32, i32
  }
  func.func @transform_8(%arg0: i32) -> (i32, i32) {
    %c0_i32 = arith.constant 0 : i32
    %c0_i32_0 = arith.constant 0 : i32
    %c0_i32_1 = arith.constant 0 : i32
    return %c0_i32, %c0_i32_0 : i32, i32
  }
  func.func @transform_9(%arg0: i32) -> (i32, i32, i32) {
    %c0_i32 = arith.constant 0 : i32
    %c0_i32_0 = arith.constant 0 : i32
    %c0_i32_1 = arith.constant 0 : i32
    %c0_i32_2 = arith.constant 0 : i32
    return %c0_i32, %c0_i32_0, %c0_i32_1 : i32, i32, i32
  }
  func.func @transform_10(%arg0: i32) -> (i32, i32, i32) {
    %c0_i32 = arith.constant 0 : i32
    %c0_i32_0 = arith.constant 0 : i32
    %c0_i32_1 = arith.constant 0 : i32
    %c0_i32_2 = arith.constant 0 : i32
    return %c0_i32, %c0_i32_0, %c0_i32_1 : i32, i32, i32
  }
  func.func @transform_11(%arg0: i32) -> (i32, i32) {
    %c0_i32 = arith.constant 0 : i32
    %c0_i32_0 = arith.constant 0 : i32
    %c0_i32_1 = arith.constant 0 : i32
    return %c0_i32, %c0_i32_0 : i32, i32
  }
  func.func @transform_12(%arg0: i32) -> (i32, i32) {
    %c0_i32 = arith.constant 0 : i32
    %c0_i32_0 = arith.constant 0 : i32
    %c0_i32_1 = arith.constant 0 : i32
    return %c0_i32, %c0_i32_0 : i32, i32
  }
  func.func @transform_13(%arg0: i32) -> (i32, i32) {
    %c0_i32 = arith.constant 0 : i32
    %c0_i32_0 = arith.constant 0 : i32
    %c0_i32_1 = arith.constant 0 : i32
    return %c0_i32, %c0_i32_0 : i32, i32
  }
  func.func @transform_14(%arg0: i32) -> (i32, i32) {
    %c0_i32 = arith.constant 0 : i32
    %c0_i32_0 = arith.constant 0 : i32
    %c0_i32_1 = arith.constant 0 : i32
    return %c0_i32, %c0_i32_0 : i32, i32
  }
  func.func @transform_15(%arg0: i32) -> (i32, i32) {
    %c0_i32 = arith.constant 0 : i32
    %c0_i32_0 = arith.constant 0 : i32
    %c0_i32_1 = arith.constant 0 : i32
    return %c0_i32, %c0_i32_0 : i32, i32
  }
  func.func @transform_16(%arg0: i32) -> (i32, i32) {
    %c0_i32 = arith.constant 0 : i32
    %c0_i32_0 = arith.constant 0 : i32
    return %arg0, %c0_i32 : i32, i32
  }
}

</mosaic_0001>

<llo_original>
// kernel: discriminator_forward_packed.1
$region0: #{discriminator_forward_packed.1}
  #allocation0 [shape = 'u32[]', space=smem, size = 0x4, offset = 0x4, fixed_abs, tag = 'smem constant byte address 0x4 - core index']
  #allocation1 [shape = 'u32[144,128]{1,0:T(1,128)}', space=vmem, size = 0x12000, scoped, tag = 'internal scratch']
  %s0 = inlined_call_operand.vmem [shape: bf16[512,128], index: 0, kind: input, shape index: {}]
  %s1 = inlined_call_operand.vmem [shape: bf16[128,32], index: 1, kind: input, shape index: {}]
  %s2 = inlined_call_operand.vmem [shape: bf16[128,64], index: 2, kind: input, shape index: {}]
  %s3 = inlined_call_operand.vmem [shape: f32[1,32], index: 3, kind: input, shape index: {}]
  %s4 = inlined_call_operand.vmem [shape: f32[1,64], index: 4, kind: input, shape index: {}]
  %s5 = inlined_call_operand.vmem [shape: bf16[288,128], index: 5, kind: input, shape index: {}]
  %s6 = inlined_call_operand.vmem [shape: bf16[576,128], index: 6, kind: input, shape index: {}]
  %s7 = inlined_call_operand.vmem [shape: f32[1,128], index: 7, kind: input, shape index: {}]
  %s8 = inlined_call_operand.vmem [shape: f32[1,128], index: 8, kind: input, shape index: {}]
  %s9 = inlined_call_operand.vmem [shape: bf16[16,128,128], index: 9, kind: input, shape index: {}]
  %s10 = inlined_call_operand.vmem [shape: bf16[16,128,128], index: 10, kind: input, shape index: {}]
  %s11 = inlined_call_operand.vmem [shape: f32[1,128], index: 11, kind: input, shape index: {}]
  %s12 = inlined_call_operand.vmem [shape: f32[1,128], index: 12, kind: input, shape index: {}]
  %s13 = inlined_call_operand.vmem [shape: bf16[128,128], index: 13, kind: input, shape index: {}]
  %s14 = inlined_call_operand.vmem [shape: bf16[128,128], index: 14, kind: input, shape index: {}]
  %s15 = inlined_call_operand.vmem [shape: f32[1,128], index: 15, kind: input, shape index: {}]
  %s16 = inlined_call_operand.vmem [shape: f32[8,128], index: 16, kind: output, shape index: {}]
  %s17 = sld [smem:[#allocation0]]
  $region74: #{discriminator_forward_packed.1} parent=0
    _
  %s19 = ssub.s32 1, %s17
  %s20 = scalar_select 0, %s19, %s17
  // Predicated region
  $region2: #{discriminator_forward_packed.1} parent=0 // pred_check
    _
  $region3: #{discriminator_forward_packed.1} parent=0 // pred_check_branch
    %22 = sbr.rel (0) target = $region5
  $region4: #{discriminator_forward_packed.1} parent=0 // pred_region
    _
  $region5: #{discriminator_forward_packed.1} parent=0 // pred_fallthru
    _
  // Predicated region
  $region6: #{discriminator_forward_packed.1} parent=0 // pred_check
    _
  $region7: #{discriminator_forward_packed.1} parent=0 // pred_check_branch
    %24 = sbr.rel (0) target = $region9
  $region8: #{discriminator_forward_packed.1} parent=0 // pred_region
    _
  $region9: #{discriminator_forward_packed.1} parent=0 // pred_fallthru
    _
  // Predicated region
  $region10: #{discriminator_forward_packed.1} parent=0 // pred_check
    _
  $region11: #{discriminator_forward_packed.1} parent=0 // pred_check_branch
    %26 = sbr.rel (0) target = $region13
  $region12: #{discriminator_forward_packed.1} parent=0 // pred_region
    _
  $region13: #{discriminator_forward_packed.1} parent=0 // pred_fallthru
    _
  // Predicated region
  $region14: #{discriminator_forward_packed.1} parent=0 // pred_check
    _
  $region15: #{discriminator_forward_packed.1} parent=0 // pred_check_branch
    %28 = sbr.rel (0) target = $region17
  $region16: #{discriminator_forward_packed.1} parent=0 // pred_region
    _
  $region17: #{discriminator_forward_packed.1} parent=0 // pred_fallthru
    _
  // Predicated region
  $region18: #{discriminator_forward_packed.1} parent=0 // pred_check
    _
  $region19: #{discriminator_forward_packed.1} parent=0 // pred_check_branch
    %30 = sbr.rel (0) target = $region21
  $region20: #{discriminator_forward_packed.1} parent=0 // pred_region
    _
  $region21: #{discriminator_forward_packed.1} parent=0 // pred_fallthru
    _
  // Predicated region
  $region22: #{discriminator_forward_packed.1} parent=0 // pred_check
    _
  $region23: #{discriminator_forward_packed.1} parent=0 // pred_check_branch
    %32 = sbr.rel (0) target = $region25
  $region24: #{discriminator_forward_packed.1} parent=0 // pred_region
    _
  $region25: #{discriminator_forward_packed.1} parent=0 // pred_fallthru
    _
  // Predicated region
  $region26: #{discriminator_forward_packed.1} parent=0 // pred_check
    _
  $region27: #{discriminator_forward_packed.1} parent=0 // pred_check_branch
    %34 = sbr.rel (0) target = $region29
  $region28: #{discriminator_forward_packed.1} parent=0 // pred_region
    _
  $region29: #{discriminator_forward_packed.1} parent=0 // pred_fallthru
    _
  // Predicated region
  $region30: #{discriminator_forward_packed.1} parent=0 // pred_check
    _
  $region31: #{discriminator_forward_packed.1} parent=0 // pred_check_branch
    %36 = sbr.rel (0) target = $region33
  $region32: #{discriminator_forward_packed.1} parent=0 // pred_region
    _
  $region33: #{discriminator_forward_packed.1} parent=0 // pred_fallthru
    _
  // Predicated region
  $region34: #{discriminator_forward_packed.1} parent=0 // pred_check
    _
  $region35: #{discriminator_forward_packed.1} parent=0 // pred_check_branch
    %38 = sbr.rel (0) target = $region37
  $region36: #{discriminator_forward_packed.1} parent=0 // pred_region
    _
  $region37: #{discriminator_forward_packed.1} parent=0 // pred_fallthru
    _
  // Predicated region
  $region38: #{discriminator_forward_packed.1} parent=0 // pred_check
    _
  $region39: #{discriminator_forward_packed.1} parent=0 // pred_check_branch
    %40 = sbr.rel (0) target = $region41
  $region40: #{discriminator_forward_packed.1} parent=0 // pred_region
    _
  $region41: #{discriminator_forward_packed.1} parent=0 // pred_fallthru
    _
  // Predicated region
  $region42: #{discriminator_forward_packed.1} parent=0 // pred_check
    _
  $region43: #{discriminator_forward_packed.1} parent=0 // pred_check_branch
    %42 = sbr.rel (0) target = $region45
  $region44: #{discriminator_forward_packed.1} parent=0 // pred_region
    _
  $region45: #{discriminator_forward_packed.1} parent=0 // pred_fallthru
    _
  // Predicated region
  $region46: #{discriminator_forward_packed.1} parent=0 // pred_check
    _
  $region47: #{discriminator_forward_packed.1} parent=0 // pred_check_branch
    %44 = sbr.rel (0) target = $region49
  $region48: #{discriminator_forward_packed.1} parent=0 // pred_region
    _
  $region49: #{discriminator_forward_packed.1} parent=0 // pred_fallthru
    _
  // Predicated region
  $region50: #{discriminator_forward_packed.1} parent=0 // pred_check
    _
  $region51: #{discriminator_forward_packed.1} parent=0 // pred_check_branch
    %46 = sbr.rel (0) target = $region53
  $region52: #{discriminator_forward_packed.1} parent=0 // pred_region
    _
  $region53: #{discriminator_forward_packed.1} parent=0 // pred_fallthru
    _
  // Predicated region
  $region54: #{discriminator_forward_packed.1} parent=0 // pred_check
    _
  $region55: #{discriminator_forward_packed.1} parent=0 // pred_check_branch
    %48 = sbr.rel (0) target = $region57
  $region56: #{discriminator_forward_packed.1} parent=0 // pred_region
    _
  $region57: #{discriminator_forward_packed.1} parent=0 // pred_fallthru
    _
  // Predicated region
  $region58: #{discriminator_forward_packed.1} parent=0 // pred_check
    _
  $region59: #{discriminator_forward_packed.1} parent=0 // pred_check_branch
    %50 = sbr.rel (0) target = $region61
  $region60: #{discriminator_forward_packed.1} parent=0 // pred_region
    _
  $region61: #{discriminator_forward_packed.1} parent=0 // pred_fallthru
    _
  // Predicated region
  $region62: #{discriminator_forward_packed.1} parent=0 // pred_check
    _
  $region63: #{discriminator_forward_packed.1} parent=0 // pred_check_branch
    %52 = sbr.rel (0) target = $region65
  $region64: #{discriminator_forward_packed.1} parent=0 // pred_region
    _
  $region65: #{discriminator_forward_packed.1} parent=0 // pred_fallthru
    _
  %v54 = vld [vmem:[%s0] sm:$0xf]
  %v55 = vld [vmem:[%s0 + $0x4] sm:$0xf]
  %v56 = vld [vmem:[%s0 + $0x8] sm:$0xf]
  %v57 = vld [vmem:[%s0 + $0xc] sm:$0xf]
  %v58 = vld [vmem:[%s0 + $0x10] sm:$0xf]
  %v59 = vld [vmem:[%s0 + $0x14] sm:$0xf]
  %v60 = vld [vmem:[%s0 + $0x18] sm:$0xf]
  %v61 = vld [vmem:[%s0 + $0x1c] sm:$0xf]
  %v62 = vld [vmem:[%s0 + $0x20] sm:$0xf]
  %v63 = vld [vmem:[%s0 + $0x24] sm:$0xf]
  %v64 = vld [vmem:[%s0 + $0x28] sm:$0xf]
  %v65 = vld [vmem:[%s0 + $0x2c] sm:$0xf]
  %v66 = vld [vmem:[%s0 + $0x30] sm:$0xf]
  %v67 = vld [vmem:[%s0 + $0x34] sm:$0xf]
  %v68 = vld [vmem:[%s0 + $0x38] sm:$0xf]
  %v69 = vld [vmem:[%s0 + $0x3c] sm:$0xf]
  %v70 = vld [vmem:[%s0 + $0x40] sm:$0xf]
  %v71 = vld [vmem:[%s0 + $0x44] sm:$0xf]
  %v72 = vld [vmem:[%s0 + $0x48] sm:$0xf]
  %v73 = vld [vmem:[%s0 + $0x4c] sm:$0xf]
  %v74 = vld [vmem:[%s0 + $0x50] sm:$0xf]
  %v75 = vld [vmem:[%s0 + $0x54] sm:$0xf]
  %v76 = vld [vmem:[%s0 + $0x58] sm:$0xf]
  %v77 = vld [vmem:[%s0 + $0x5c] sm:$0xf]
  %v78 = vld [vmem:[%s0 + $0x60] sm:$0xf]
  %v79 = vld [vmem:[%s0 + $0x64] sm:$0xf]
  %v80 = vld [vmem:[%s0 + $0x68] sm:$0xf]
  %v81 = vld [vmem:[%s0 + $0x6c] sm:$0xf]
  %v82 = vld [vmem:[%s0 + $0x70] sm:$0xf]
  %v83 = vld [vmem:[%s0 + $0x74] sm:$0xf]
  %v84 = vld [vmem:[%s0 + $0x78] sm:$0xf]
  %v85 = vld [vmem:[%s0 + $0x7c] sm:$0xf]
  %v86 = vld [vmem:[%s0 + $0x80] sm:$0xf]
  %v87 = vld [vmem:[%s0 + $0x84] sm:$0xf]
  %v88 = vld [vmem:[%s0 + $0x88] sm:$0xf]
  %v89 = vld [vmem:[%s0 + $0x8c] sm:$0xf]
  %v90 = vld [vmem:[%s0 + $0x90] sm:$0xf]
  %v91 = vld [vmem:[%s0 + $0x94] sm:$0xf]
  %v92 = vld [vmem:[%s0 + $0x98] sm:$0xf]
  %v93 = vld [vmem:[%s0 + $0x9c] sm:$0xf]
  %v94 = vld [vmem:[%s0 + $0xa0] sm:$0xf]
  %v95 = vld [vmem:[%s0 + $0xa4] sm:$0xf]
  %v96 = vld [vmem:[%s0 + $0xa8] sm:$0xf]
  %v97 = vld [vmem:[%s0 + $0xac] sm:$0xf]
  %v98 = vld [vmem:[%s0 + $0xb0] sm:$0xf]
  %v99 = vld [vmem:[%s0 + $0xb4] sm:$0xf]
  %v100 = vld [vmem:[%s0 + $0xb8] sm:$0xf]
  %v101 = vld [vmem:[%s0 + $0xbc] sm:$0xf]
  %v102 = vld [vmem:[%s0 + $0xc0] sm:$0xf]
  %v103 = vld [vmem:[%s0 + $0xc4] sm:$0xf]
  %v104 = vld [vmem:[%s0 + $0xc8] sm:$0xf]
  %v105 = vld [vmem:[%s0 + $0xcc] sm:$0xf]
  %v106 = vld [vmem:[%s0 + $0xd0] sm:$0xf]
  %v107 = vld [vmem:[%s0 + $0xd4] sm:$0xf]
  %v108 = vld [vmem:[%s0 + $0xd8] sm:$0xf]
  %v109 = vld [vmem:[%s0 + $0xdc] sm:$0xf]
  %v110 = vld [vmem:[%s0 + $0xe0] sm:$0xf]
  %v111 = vld [vmem:[%s0 + $0xe4] sm:$0xf]
  %v112 = vld [vmem:[%s0 + $0xe8] sm:$0xf]
  %v113 = vld [vmem:[%s0 + $0xec] sm:$0xf]
  %v114 = vld [vmem:[%s0 + $0xf0] sm:$0xf]
  %v115 = vld [vmem:[%s0 + $0xf4] sm:$0xf]
  %v116 = vld [vmem:[%s0 + $0xf8] sm:$0xf]
  %v117 = vld [vmem:[%s0 + $0xfc] sm:$0xf]
  %v118 = vld [vmem:[%s1] sm:$0xf]
  %v119 = vld [vmem:[%s1 + $0x4] sm:$0xf]
  %v120 = vld [vmem:[%s1 + $0x8] sm:$0xf]
  %v121 = vld [vmem:[%s1 + $0xc] sm:$0xf]
  %v122 = vld [vmem:[%s1 + $0x10] sm:$0xf]
  %v123 = vld [vmem:[%s1 + $0x14] sm:$0xf]
  %v124 = vld [vmem:[%s1 + $0x18] sm:$0xf]
  %v125 = vld [vmem:[%s1 + $0x1c] sm:$0xf]
  %v126 = vld [vmem:[%s1 + $0x20] sm:$0xf]
  %v127 = vld [vmem:[%s1 + $0x24] sm:$0xf]
  %v128 = vld [vmem:[%s1 + $0x28] sm:$0xf]
  %v129 = vld [vmem:[%s1 + $0x2c] sm:$0xf]
  %v130 = vld [vmem:[%s1 + $0x30] sm:$0xf]
  %v131 = vld [vmem:[%s1 + $0x34] sm:$0xf]
  %v132 = vld [vmem:[%s1 + $0x38] sm:$0xf]
  %v133 = vld [vmem:[%s1 + $0x3c] sm:$0xf]
  %v134 = vld [vmem:[%s3] sm:$0x1]
  %v136 = vlaneseq
  %v137 = vshrl.u32 %v136, 7
  %v138 = vsub.s32 0, %v137
  %v139 = vrot.slane %v134, %v138
  %v205 = vunpack.c.l.b16 %v54
  %v206 = vunpack.c.l.b16 %v55
  %v207 = vunpack.c.l.b16 %v56
  %v208 = vunpack.c.l.b16 %v57
  %v209 = vunpack.c.l.b16 %v58
  %v210 = vunpack.c.l.b16 %v59
  %v211 = vunpack.c.l.b16 %v60
  %v212 = vunpack.c.l.b16 %v61
  %v213 = vunpack.c.l.b16 %v62
  %v214 = vunpack.c.l.b16 %v63
  %v215 = vunpack.c.l.b16 %v64
  %v216 = vunpack.c.l.b16 %v65
  %v217 = vunpack.c.l.b16 %v66
  %v218 = vunpack.c.l.b16 %v67
  %v219 = vunpack.c.l.b16 %v68
  %v220 = vunpack.c.l.b16 %v69
  %v221 = vunpack.c.l.b16 %v70
  %v222 = vunpack.c.l.b16 %v71
  %v223 = vunpack.c.l.b16 %v72
  %v224 = vunpack.c.l.b16 %v73
  %v225 = vunpack.c.l.b16 %v74
  %v226 = vunpack.c.l.b16 %v75
  %v227 = vunpack.c.l.b16 %v76
  %v228 = vunpack.c.l.b16 %v77
  %v229 = vunpack.c.l.b16 %v78
  %v230 = vunpack.c.l.b16 %v79
  %v231 = vunpack.c.l.b16 %v80
  %v232 = vunpack.c.l.b16 %v81
  %v233 = vunpack.c.l.b16 %v82
  %v234 = vunpack.c.l.b16 %v83
  %v235 = vunpack.c.l.b16 %v84
  %v236 = vunpack.c.l.b16 %v85
  %v237 = vunpack.c.l.b16 %v86
  %v238 = vunpack.c.l.b16 %v87
  %v239 = vunpack.c.l.b16 %v88
  %v240 = vunpack.c.l.b16 %v89
  %v241 = vunpack.c.l.b16 %v90
  %v242 = vunpack.c.l.b16 %v91
  %v243 = vunpack.c.l.b16 %v92
  %v244 = vunpack.c.l.b16 %v93
  %v245 = vunpack.c.l.b16 %v94
  %v246 = vunpack.c.l.b16 %v95
  %v247 = vunpack.c.l.b16 %v96
  %v248 = vunpack.c.l.b16 %v97
  %v249 = vunpack.c.l.b16 %v98
  %v250 = vunpack.c.l.b16 %v99
  %v251 = vunpack.c.l.b16 %v100
  %v252 = vunpack.c.l.b16 %v101
  %v253 = vunpack.c.l.b16 %v102
  %v254 = vunpack.c.l.b16 %v103
  %v255 = vunpack.c.l.b16 %v104
  %v256 = vunpack.c.l.b16 %v105
  %v257 = vunpack.c.l.b16 %v106
  %v258 = vunpack.c.l.b16 %v107
  %v259 = vunpack.c.l.b16 %v108
  %v260 = vunpack.c.l.b16 %v109
  %v261 = vunpack.c.l.b16 %v110
  %v262 = vunpack.c.l.b16 %v111
  %v263 = vunpack.c.l.b16 %v112
  %v264 = vunpack.c.l.b16 %v113
  %v265 = vunpack.c.l.b16 %v114
  %v266 = vunpack.c.l.b16 %v115
  %v267 = vunpack.c.l.b16 %v116
  %v268 = vunpack.c.l.b16 %v117
  %v269 = vpack.c.b16 %v206, %v205
  %v270 = vpack.c.b16 %v208, %v207
  %v271 = vpack.c.b16 %v210, %v209
  %v272 = vpack.c.b16 %v212, %v211
  %v273 = vpack.c.b16 %v214, %v213
  %v274 = vpack.c.b16 %v216, %v215
  %v275 = vpack.c.b16 %v218, %v217
  %v276 = vpack.c.b16 %v220, %v219
  %v277 = vpack.c.b16 %v222, %v221
  %v278 = vpack.c.b16 %v224, %v223
  %v279 = vpack.c.b16 %v226, %v225
  %v280 = vpack.c.b16 %v228, %v227
  %v281 = vpack.c.b16 %v230, %v229
  %v282 = vpack.c.b16 %v232, %v231
  %v283 = vpack.c.b16 %v234, %v233
  %v284 = vpack.c.b16 %v236, %v235
  %v285 = vpack.c.b16 %v238, %v237
  %v286 = vpack.c.b16 %v240, %v239
  %v287 = vpack.c.b16 %v242, %v241
  %v288 = vpack.c.b16 %v244, %v243
  %v289 = vpack.c.b16 %v246, %v245
  %v290 = vpack.c.b16 %v248, %v247
  %v291 = vpack.c.b16 %v250, %v249
  %v292 = vpack.c.b16 %v252, %v251
  %v293 = vpack.c.b16 %v254, %v253
  %v294 = vpack.c.b16 %v256, %v255
  %v295 = vpack.c.b16 %v258, %v257
  %v296 = vpack.c.b16 %v260, %v259
  %v297 = vpack.c.b16 %v262, %v261
  %v298 = vpack.c.b16 %v264, %v263
  %v299 = vpack.c.b16 %v266, %v265
  %v300 = vpack.c.b16 %v268, %v267
  %v349 = vunpack.c.l.b16 %v118
  %v350 = vunpack.c.l.b16 %v119
  %v351 = vunpack.c.l.b16 %v120
  %v352 = vunpack.c.l.b16 %v121
  %v353 = vunpack.c.l.b16 %v122
  %v354 = vunpack.c.l.b16 %v123
  %v355 = vunpack.c.l.b16 %v124
  %v356 = vunpack.c.l.b16 %v125
  %v357 = vunpack.c.l.b16 %v126
  %v358 = vunpack.c.l.b16 %v127
  %v359 = vunpack.c.l.b16 %v128
  %v360 = vunpack.c.l.b16 %v129
  %v361 = vunpack.c.l.b16 %v130
  %v362 = vunpack.c.l.b16 %v131
  %v363 = vunpack.c.l.b16 %v132
  %v364 = vunpack.c.l.b16 %v133
  %v365 = vpack.c.b16 %v350, %v349
  %v366 = vpack.c.b16 %v352, %v351
  %v367 = vpack.c.b16 %v354, %v353
  %v368 = vpack.c.b16 %v356, %v355
  %v369 = vpack.c.b16 %v358, %v357
  %v370 = vpack.c.b16 %v360, %v359
  %v371 = vpack.c.b16 %v362, %v361
  %v372 = vpack.c.b16 %v364, %v363
  %381 = vmatprep.subr.bf16.mxu0 0
  %382 = vmatpush1.bf16.msra.mxu0 %v372
  %383 = vmatprep.subr.bf16.mxu0 0
  %384 = vmatpush1.bf16.msra.mxu0 %v371
  %385 = vmatprep.subr.bf16.mxu0 0
  %386 = vmatpush1.bf16.msra.mxu0 %v370
  %387 = vmatprep.subr.bf16.mxu0 0
  %388 = vmatpush1.bf16.msra.mxu0 %v369
  %389 = vmatprep.subr.bf16.mxu0 0
  %390 = vmatpush1.bf16.msra.mxu0 %v368
  %391 = vmatprep.subr.bf16.mxu0 0
  %392 = vmatpush1.bf16.msra.mxu0 %v367
  %393 = vmatprep.subr.bf16.mxu0 0
  %394 = vmatpush1.bf16.msra.mxu0 %v366
  %395 = vmatprep.subr.bf16.mxu0 0
  %396 = vmatpush1.bf16.msra.mxu0 %v365
  %397 = vmatprep.subr.bf16.mxu0 0
  %398 = vmatpush2.bf16.msra.mxu0 0
  %399 = vmatprep.subr.bf16.mxu0 0
  %400 = vmatpush2.bf16.msra.mxu0 0
  %401 = vmatprep.subr.bf16.mxu0 0
  %402 = vmatpush2.bf16.msra.mxu0 0
  %403 = vmatprep.subr.bf16.mxu0 0
  %404 = vmatpush2.bf16.msra.mxu0 0
  %405 = vmatprep.subr.bf16.mxu0 0
  %406 = vmatpush2.bf16.msra.mxu0 0
  %407 = vmatprep.subr.bf16.mxu0 0
  %408 = vmatpush2.bf16.msra.mxu0 0
  %409 = vmatprep.subr.bf16.mxu0 0
  %410 = vmatpush2.bf16.msra.mxu0 0
  %411 = vmatprep.subr.bf16.mxu0 0
  %412 = vmatpush2.bf16.msra.mxu0 0
  %413 = vmatprep.mubr.bf16.mxu0 0
  %414 = vmatmul.mubr.bf16.gmra.mxu0 %v269
  %v415 = vpop.f32.mrf.mxu0
  %v416 = vadd.f32 %v139, %v415
  %v417 = vpop.f32.mrf.mxu0
  %v418 = vpop.f32.mrf.mxu0
  %v419 = vadd.f32 %v139, %v418
  %v420 = vpop.f32.mrf.mxu0
  %421 = vmatprep.mubr.bf16.mxu0 0
  %422 = vmatmul.mubr.bf16.gmra.mxu0 %v270
  %v423 = vpop.f32.mrf.mxu0
  %v424 = vadd.f32 %v139, %v423
  %v425 = vpop.f32.mrf.mxu0
  %v426 = vpop.f32.mrf.mxu0
  %v427 = vadd.f32 %v139, %v426
  %v428 = vpop.f32.mrf.mxu0
  %429 = vmatprep.mubr.bf16.mxu0 0
  %430 = vmatmul.mubr.bf16.gmra.mxu0 %v271
  %v431 = vpop.f32.mrf.mxu0
  %v432 = vadd.f32 %v139, %v431
  %v433 = vpop.f32.mrf.mxu0
  %v434 = vpop.f32.mrf.mxu0
  %v435 = vadd.f32 %v139, %v434
  %v436 = vpop.f32.mrf.mxu0
  %437 = vmatprep.mubr.bf16.mxu0 0
  %438 = vmatmul.mubr.bf16.gmra.mxu0 %v272
  %v439 = vpop.f32.mrf.mxu0
  %v440 = vadd.f32 %v139, %v439
  %v441 = vpop.f32.mrf.mxu0
  %v442 = vpop.f32.mrf.mxu0
  %v443 = vadd.f32 %v139, %v442
  %v444 = vpop.f32.mrf.mxu0
  %445 = vmatprep.mubr.bf16.mxu0 0
  %446 = vmatmul.mubr.bf16.gmra.mxu0 %v273
  %v447 = vpop.f32.mrf.mxu0
  %v448 = vadd.f32 %v139, %v447
  %v449 = vpop.f32.mrf.mxu0
  %v450 = vpop.f32.mrf.mxu0
  %v451 = vadd.f32 %v139, %v450
  %v452 = vpop.f32.mrf.mxu0
  %453 = vmatprep.mubr.bf16.mxu0 0
  %454 = vmatmul.mubr.bf16.gmra.mxu0 %v274
  %v455 = vpop.f32.mrf.mxu0
  %v456 = vadd.f32 %v139, %v455
  %v457 = vpop.f32.mrf.mxu0
  %v458 = vpop.f32.mrf.mxu0
  %v459 = vadd.f32 %v139, %v458
  %v460 = vpop.f32.mrf.mxu0
  %461 = vmatprep.mubr.bf16.mxu0 0
  %462 = vmatmul.mubr.bf16.gmra.mxu0 %v275
  %v463 = vpop.f32.mrf.mxu0
  %v464 = vadd.f32 %v139, %v463
  %v465 = vpop.f32.mrf.mxu0
  %v466 = vpop.f32.mrf.mxu0
  %v467 = vadd.f32 %v139, %v466
  %v468 = vpop.f32.mrf.mxu0
  %469 = vmatprep.mubr.bf16.mxu0 0
  %470 = vmatmul.mubr.bf16.gmra.mxu0 %v276
  %v471 = vpop.f32.mrf.mxu0
  %v472 = vadd.f32 %v139, %v471
  %v473 = vpop.f32.mrf.mxu0
  %v474 = vpop.f32.mrf.mxu0
  %v475 = vadd.f32 %v139, %v474
  %v476 = vpop.f32.mrf.mxu0
  %477 = vmatprep.mubr.bf16.mxu0 0
  %478 = vmatmul.mubr.bf16.gmra.mxu0 %v277
  %v479 = vpop.f32.mrf.mxu0
  %v480 = vadd.f32 %v139, %v479
  %v481 = vpop.f32.mrf.mxu0
  %v482 = vpop.f32.mrf.mxu0
  %v483 = vadd.f32 %v139, %v482
  %v484 = vpop.f32.mrf.mxu0
  %485 = vmatprep.mubr.bf16.mxu0 0
  %486 = vmatmul.mubr.bf16.gmra.mxu0 %v278
  %v487 = vpop.f32.mrf.mxu0
  %v488 = vadd.f32 %v139, %v487
  %v489 = vpop.f32.mrf.mxu0
  %v490 = vpop.f32.mrf.mxu0
  %v491 = vadd.f32 %v139, %v490
  %v492 = vpop.f32.mrf.mxu0
  %493 = vmatprep.mubr.bf16.mxu0 0
  %494 = vmatmul.mubr.bf16.gmra.mxu0 %v279
  %v495 = vpop.f32.mrf.mxu0
  %v496 = vadd.f32 %v139, %v495
  %v497 = vpop.f32.mrf.mxu0
  %v498 = vpop.f32.mrf.mxu0
  %v499 = vadd.f32 %v139, %v498
  %v500 = vpop.f32.mrf.mxu0
  %501 = vmatprep.mubr.bf16.mxu0 0
  %502 = vmatmul.mubr.bf16.gmra.mxu0 %v280
  %v503 = vpop.f32.mrf.mxu0
  %v504 = vadd.f32 %v139, %v503
  %v505 = vpop.f32.mrf.mxu0
  %v506 = vpop.f32.mrf.mxu0
  %v507 = vadd.f32 %v139, %v506
  %v508 = vpop.f32.mrf.mxu0
  %509 = vmatprep.mubr.bf16.mxu0 0
  %510 = vmatmul.mubr.bf16.gmra.mxu0 %v281
  %v511 = vpop.f32.mrf.mxu0
  %v512 = vadd.f32 %v139, %v511
  %v513 = vpop.f32.mrf.mxu0
  %v514 = vpop.f32.mrf.mxu0
  %v515 = vadd.f32 %v139, %v514
  %v516 = vpop.f32.mrf.mxu0
  %517 = vmatprep.mubr.bf16.mxu0 0
  %518 = vmatmul.mubr.bf16.gmra.mxu0 %v282
  %v519 = vpop.f32.mrf.mxu0
  %v520 = vadd.f32 %v139, %v519
  %v521 = vpop.f32.mrf.mxu0
  %v522 = vpop.f32.mrf.mxu0
  %v523 = vadd.f32 %v139, %v522
  %v524 = vpop.f32.mrf.mxu0
  %525 = vmatprep.mubr.bf16.mxu0 0
  %526 = vmatmul.mubr.bf16.gmra.mxu0 %v283
  %v527 = vpop.f32.mrf.mxu0
  %v528 = vadd.f32 %v139, %v527
  %v529 = vpop.f32.mrf.mxu0
  %v530 = vpop.f32.mrf.mxu0
  %v531 = vadd.f32 %v139, %v530
  %v532 = vpop.f32.mrf.mxu0
  %533 = vmatprep.mubr.bf16.mxu0 0
  %534 = vmatmul.mubr.bf16.gmra.mxu0 %v284
  %v535 = vpop.f32.mrf.mxu0
  %v536 = vadd.f32 %v139, %v535
  %v537 = vpop.f32.mrf.mxu0
  %v538 = vpop.f32.mrf.mxu0
  %v539 = vadd.f32 %v139, %v538
  %v540 = vpop.f32.mrf.mxu0
  %541 = vmatprep.mubr.bf16.mxu0 0
  %542 = vmatmul.mubr.bf16.gmra.mxu0 %v285
  %v543 = vpop.f32.mrf.mxu0
  %v544 = vadd.f32 %v139, %v543
  %v545 = vpop.f32.mrf.mxu0
  %v546 = vpop.f32.mrf.mxu0
  %v547 = vadd.f32 %v139, %v546
  %v548 = vpop.f32.mrf.mxu0
  %549 = vmatprep.mubr.bf16.mxu0 0
  %550 = vmatmul.mubr.bf16.gmra.mxu0 %v286
  %v551 = vpop.f32.mrf.mxu0
  %v552 = vadd.f32 %v139, %v551
  %v553 = vpop.f32.mrf.mxu0
  %v554 = vpop.f32.mrf.mxu0
  %v555 = vadd.f32 %v139, %v554
  %v556 = vpop.f32.mrf.mxu0
  %557 = vmatprep.mubr.bf16.mxu0 0
  %558 = vmatmul.mubr.bf16.gmra.mxu0 %v287
  %v559 = vpop.f32.mrf.mxu0
  %v560 = vadd.f32 %v139, %v559
  %v561 = vpop.f32.mrf.mxu0
  %v562 = vpop.f32.mrf.mxu0
  %v563 = vadd.f32 %v139, %v562
  %v564 = vpop.f32.mrf.mxu0
  %565 = vmatprep.mubr.bf16.mxu0 0
  %566 = vmatmul.mubr.bf16.gmra.mxu0 %v288
  %v567 = vpop.f32.mrf.mxu0
  %v568 = vadd.f32 %v139, %v567
  %v569 = vpop.f32.mrf.mxu0
  %v570 = vpop.f32.mrf.mxu0
  %v571 = vadd.f32 %v139, %v570
  %v572 = vpop.f32.mrf.mxu0
  %573 = vmatprep.mubr.bf16.mxu0 0
  %574 = vmatmul.mubr.bf16.gmra.mxu0 %v289
  %v575 = vpop.f32.mrf.mxu0
  %v576 = vadd.f32 %v139, %v575
  %v577 = vpop.f32.mrf.mxu0
  %v578 = vpop.f32.mrf.mxu0
  %v579 = vadd.f32 %v139, %v578
  %v580 = vpop.f32.mrf.mxu0
  %581 = vmatprep.mubr.bf16.mxu0 0
  %582 = vmatmul.mubr.bf16.gmra.mxu0 %v290
  %v583 = vpop.f32.mrf.mxu0
  %v584 = vadd.f32 %v139, %v583
  %v585 = vpop.f32.mrf.mxu0
  %v586 = vpop.f32.mrf.mxu0
  %v587 = vadd.f32 %v139, %v586
  %v588 = vpop.f32.mrf.mxu0
  %589 = vmatprep.mubr.bf16.mxu0 0
  %590 = vmatmul.mubr.bf16.gmra.mxu0 %v291
  %v591 = vpop.f32.mrf.mxu0
  %v592 = vadd.f32 %v139, %v591
  %v593 = vpop.f32.mrf.mxu0
  %v594 = vpop.f32.mrf.mxu0
  %v595 = vadd.f32 %v139, %v594
  %v596 = vpop.f32.mrf.mxu0
  %597 = vmatprep.mubr.bf16.mxu0 0
  %598 = vmatmul.mubr.bf16.gmra.mxu0 %v292
  %v599 = vpop.f32.mrf.mxu0
  %v600 = vadd.f32 %v139, %v599
  %v601 = vpop.f32.mrf.mxu0
  %v602 = vpop.f32.mrf.mxu0
  %v603 = vadd.f32 %v139, %v602
  %v604 = vpop.f32.mrf.mxu0
  %605 = vmatprep.mubr.bf16.mxu0 0
  %606 = vmatmul.mubr.bf16.gmra.mxu0 %v293
  %v607 = vpop.f32.mrf.mxu0
  %v608 = vadd.f32 %v139, %v607
  %v609 = vpop.f32.mrf.mxu0
  %v610 = vpop.f32.mrf.mxu0
  %v611 = vadd.f32 %v139, %v610
  %v612 = vpop.f32.mrf.mxu0
  %613 = vmatprep.mubr.bf16.mxu0 0
  %614 = vmatmul.mubr.bf16.gmra.mxu0 %v294
  %v615 = vpop.f32.mrf.mxu0
  %v616 = vadd.f32 %v139, %v615
  %v617 = vpop.f32.mrf.mxu0
  %v618 = vpop.f32.mrf.mxu0
  %v619 = vadd.f32 %v139, %v618
  %v620 = vpop.f32.mrf.mxu0
  %621 = vmatprep.mubr.bf16.mxu0 0
  %622 = vmatmul.mubr.bf16.gmra.mxu0 %v295
  %v623 = vpop.f32.mrf.mxu0
  %v624 = vadd.f32 %v139, %v623
  %v625 = vpop.f32.mrf.mxu0
  %v626 = vpop.f32.mrf.mxu0
  %v627 = vadd.f32 %v139, %v626
  %v628 = vpop.f32.mrf.mxu0
  %629 = vmatprep.mubr.bf16.mxu0 0
  %630 = vmatmul.mubr.bf16.gmra.mxu0 %v296
  %v631 = vpop.f32.mrf.mxu0
  %v632 = vadd.f32 %v139, %v631
  %v633 = vpop.f32.mrf.mxu0
  %v634 = vpop.f32.mrf.mxu0
  %v635 = vadd.f32 %v139, %v634
  %v636 = vpop.f32.mrf.mxu0
  %637 = vmatprep.mubr.bf16.mxu0 0
  %638 = vmatmul.mubr.bf16.gmra.mxu0 %v297
  %v639 = vpop.f32.mrf.mxu0
  %v640 = vadd.f32 %v139, %v639
  %v641 = vpop.f32.mrf.mxu0
  %v642 = vpop.f32.mrf.mxu0
  %v643 = vadd.f32 %v139, %v642
  %v644 = vpop.f32.mrf.mxu0
  %645 = vmatprep.mubr.bf16.mxu0 0
  %646 = vmatmul.mubr.bf16.gmra.mxu0 %v298
  %v647 = vpop.f32.mrf.mxu0
  %v648 = vadd.f32 %v139, %v647
  %v649 = vpop.f32.mrf.mxu0
  %v650 = vpop.f32.mrf.mxu0
  %v651 = vadd.f32 %v139, %v650
  %v652 = vpop.f32.mrf.mxu0
  %653 = vmatprep.mubr.bf16.mxu0 0
  %654 = vmatmul.mubr.bf16.gmra.mxu0 %v299
  %v655 = vpop.f32.mrf.mxu0
  %v656 = vadd.f32 %v139, %v655
  %v657 = vpop.f32.mrf.mxu0
  %v658 = vpop.f32.mrf.mxu0
  %v659 = vadd.f32 %v139, %v658
  %v660 = vpop.f32.mrf.mxu0
  %661 = vmatprep.mubr.bf16.mxu0 0
  %662 = vmatmul.mubr.bf16.gmra.mxu0 %v300
  %v663 = vpop.f32.mrf.mxu0
  %v664 = vadd.f32 %v139, %v663
  %v665 = vpop.f32.mrf.mxu0
  %v666 = vpop.f32.mrf.mxu0
  %v667 = vadd.f32 %v139, %v666
  %v668 = vpop.f32.mrf.mxu0
  %669 = vdwg.mxu0
  %vm670 = vcmp.ge.f32.partialorder %v416, 0.0
  %vm671 = vcmp.ge.f32.partialorder %v419, 0.0
  %vm672 = vcmp.ge.f32.partialorder %v424, 0.0
  %vm673 = vcmp.ge.f32.partialorder %v427, 0.0
  %vm674 = vcmp.ge.f32.partialorder %v432, 0.0
  %vm675 = vcmp.ge.f32.partialorder %v435, 0.0
  %vm676 = vcmp.ge.f32.partialorder %v440, 0.0
  %vm677 = vcmp.ge.f32.partialorder %v443, 0.0
  %vm678 = vcmp.ge.f32.partialorder %v448, 0.0
  %vm679 = vcmp.ge.f32.partialorder %v451, 0.0
  %vm680 = vcmp.ge.f32.partialorder %v456, 0.0
  %vm681 = vcmp.ge.f32.partialorder %v459, 0.0
  %vm682 = vcmp.ge.f32.partialorder %v464, 0.0
  %vm683 = vcmp.ge.f32.partialorder %v467, 0.0
  %vm684 = vcmp.ge.f32.partialorder %v472, 0.0
  %vm685 = vcmp.ge.f32.partialorder %v475, 0.0
  %vm686 = vcmp.ge.f32.partialorder %v480, 0.0
  %vm687 = vcmp.ge.f32.partialorder %v483, 0.0
  %vm688 = vcmp.ge.f32.partialorder %v488, 0.0
  %vm689 = vcmp.ge.f32.partialorder %v491, 0.0
  %vm690 = vcmp.ge.f32.partialorder %v496, 0.0
  %vm691 = vcmp.ge.f32.partialorder %v499, 0.0
  %vm692 = vcmp.ge.f32.partialorder %v504, 0.0
  %vm693 = vcmp.ge.f32.partialorder %v507, 0.0
  %vm694 = vcmp.ge.f32.partialorder %v512, 0.0
  %vm695 = vcmp.ge.f32.partialorder %v515, 0.0
  %vm696 = vcmp.ge.f32.partialorder %v520, 0.0
  %vm697 = vcmp.ge.f32.partialorder %v523, 0.0
  %vm698 = vcmp.ge.f32.partialorder %v528, 0.0
  %vm699 = vcmp.ge.f32.partialorder %v531, 0.0
  %vm700 = vcmp.ge.f32.partialorder %v536, 0.0
  %vm701 = vcmp.ge.f32.partialorder %v539, 0.0
  %vm702 = vcmp.ge.f32.partialorder %v544, 0.0
  %vm703 = vcmp.ge.f32.partialorder %v547, 0.0
  %vm704 = vcmp.ge.f32.partialorder %v552, 0.0
  %vm705 = vcmp.ge.f32.partialorder %v555, 0.0
  %vm706 = vcmp.ge.f32.partialorder %v560, 0.0
  %vm707 = vcmp.ge.f32.partialorder %v563, 0.0
  %vm708 = vcmp.ge.f32.partialorder %v568, 0.0
  %vm709 = vcmp.ge.f32.partialorder %v571, 0.0
  %vm710 = vcmp.ge.f32.partialorder %v576, 0.0
  %vm711 = vcmp.ge.f32.partialorder %v579, 0.0
  %vm712 = vcmp.ge.f32.partialorder %v584, 0.0
  %vm713 = vcmp.ge.f32.partialorder %v587, 0.0
  %vm714 = vcmp.ge.f32.partialorder %v592, 0.0
  %vm715 = vcmp.ge.f32.partialorder %v595, 0.0
  %vm716 = vcmp.ge.f32.partialorder %v600, 0.0
  %vm717 = vcmp.ge.f32.partialorder %v603, 0.0
  %vm718 = vcmp.ge.f32.partialorder %v608, 0.0
  %vm719 = vcmp.ge.f32.partialorder %v611, 0.0
  %vm720 = vcmp.ge.f32.partialorder %v616, 0.0
  %vm721 = vcmp.ge.f32.partialorder %v619, 0.0
  %vm722 = vcmp.ge.f32.partialorder %v624, 0.0
  %vm723 = vcmp.ge.f32.partialorder %v627, 0.0
  %vm724 = vcmp.ge.f32.partialorder %v632, 0.0
  %vm725 = vcmp.ge.f32.partialorder %v635, 0.0
  %vm726 = vcmp.ge.f32.partialorder %v640, 0.0
  %vm727 = vcmp.ge.f32.partialorder %v643, 0.0
  %vm728 = vcmp.ge.f32.partialorder %v648, 0.0
  %vm729 = vcmp.ge.f32.partialorder %v651, 0.0
  %vm730 = vcmp.ge.f32.partialorder %v656, 0.0
  %vm731 = vcmp.ge.f32.partialorder %v659, 0.0
  %vm732 = vcmp.ge.f32.partialorder %v664, 0.0
  %vm733 = vcmp.ge.f32.partialorder %v667, 0.0
  %v734 = vmul.f32 %v416, 0.2
  %v735 = vmul.f32 %v419, 0.2
  %v736 = vmul.f32 %v424, 0.2
  %v737 = vmul.f32 %v427, 0.2
  %v738 = vmul.f32 %v432, 0.2
  %v739 = vmul.f32 %v435, 0.2
  %v740 = vmul.f32 %v440, 0.2
  %v741 = vmul.f32 %v443, 0.2
  %v742 = vmul.f32 %v448, 0.2
  %v743 = vmul.f32 %v451, 0.2
  %v744 = vmul.f32 %v456, 0.2
  %v745 = vmul.f32 %v459, 0.2
  %v746 = vmul.f32 %v464, 0.2
  %v747 = vmul.f32 %v467, 0.2
  %v748 = vmul.f32 %v472, 0.2
  %v749 = vmul.f32 %v475, 0.2
  %v750 = vmul.f32 %v480, 0.2
  %v751 = vmul.f32 %v483, 0.2
  %v752 = vmul.f32 %v488, 0.2
  %v753 = vmul.f32 %v491, 0.2
  %v754 = vmul.f32 %v496, 0.2
  %v755 = vmul.f32 %v499, 0.2
  %v756 = vmul.f32 %v504, 0.2
  %v757 = vmul.f32 %v507, 0.2
  %v758 = vmul.f32 %v512, 0.2
  %v759 = vmul.f32 %v515, 0.2
  %v760 = vmul.f32 %v520, 0.2
  %v761 = vmul.f32 %v523, 0.2
  %v762 = vmul.f32 %v528, 0.2
  %v763 = vmul.f32 %v531, 0.2
  %v764 = vmul.f32 %v536, 0.2
  %v765 = vmul.f32 %v539, 0.2
  %v766 = vmul.f32 %v544, 0.2
  %v767 = vmul.f32 %v547, 0.2
  %v768 = vmul.f32 %v552, 0.2
  %v769 = vmul.f32 %v555, 0.2
  %v770 = vmul.f32 %v560, 0.2
  %v771 = vmul.f32 %v563, 0.2
  %v772 = vmul.f32 %v568, 0.2
  %v773 = vmul.f32 %v571, 0.2
  %v774 = vmul.f32 %v576, 0.2
  %v775 = vmul.f32 %v579, 0.2
  %v776 = vmul.f32 %v584, 0.2
  %v777 = vmul.f32 %v587, 0.2
  %v778 = vmul.f32 %v592, 0.2
  %v779 = vmul.f32 %v595, 0.2
  %v780 = vmul.f32 %v600, 0.2
  %v781 = vmul.f32 %v603, 0.2
  %v782 = vmul.f32 %v608, 0.2
  %v783 = vmul.f32 %v611, 0.2
  %v784 = vmul.f32 %v616, 0.2
  %v785 = vmul.f32 %v619, 0.2
  %v786 = vmul.f32 %v624, 0.2
  %v787 = vmul.f32 %v627, 0.2
  %v788 = vmul.f32 %v632, 0.2
  %v789 = vmul.f32 %v635, 0.2
  %v790 = vmul.f32 %v640, 0.2
  %v791 = vmul.f32 %v643, 0.2
  %v792 = vmul.f32 %v648, 0.2
  %v793 = vmul.f32 %v651, 0.2
  %v794 = vmul.f32 %v656, 0.2
  %v795 = vmul.f32 %v659, 0.2
  %v796 = vmul.f32 %v664, 0.2
  %v797 = vmul.f32 %v667, 0.2
  %v798 = vsel %vm670, %v416, %v734
  %v799 = vsel %vm671, %v419, %v735
  %v800 = vsel %vm672, %v424, %v736
  %v801 = vsel %vm673, %v427, %v737
  %v802 = vsel %vm674, %v432, %v738
  %v803 = vsel %vm675, %v435, %v739
  %v804 = vsel %vm676, %v440, %v740
  %v805 = vsel %vm677, %v443, %v741
  %v806 = vsel %vm678, %v448, %v742
  %v807 = vsel %vm679, %v451, %v743
  %v808 = vsel %vm680, %v456, %v744
  %v809 = vsel %vm681, %v459, %v745
  %v810 = vsel %vm682, %v464, %v746
  %v811 = vsel %vm683, %v467, %v747
  %v812 = vsel %vm684, %v472, %v748
  %v813 = vsel %vm685, %v475, %v749
  %v814 = vsel %vm686, %v480, %v750
  %v815 = vsel %vm687, %v483, %v751
  %v816 = vsel %vm688, %v488, %v752
  %v817 = vsel %vm689, %v491, %v753
  %v818 = vsel %vm690, %v496, %v754
  %v819 = vsel %vm691, %v499, %v755
  %v820 = vsel %vm692, %v504, %v756
  %v821 = vsel %vm693, %v507, %v757
  %v822 = vsel %vm694, %v512, %v758
  %v823 = vsel %vm695, %v515, %v759
  %v824 = vsel %vm696, %v520, %v760
  %v825 = vsel %vm697, %v523, %v761
  %v826 = vsel %vm698, %v528, %v762
  %v827 = vsel %vm699, %v531, %v763
  %v828 = vsel %vm700, %v536, %v764
  %v829 = vsel %vm701, %v539, %v765
  %v830 = vsel %vm702, %v544, %v766
  %v831 = vsel %vm703, %v547, %v767
  %v832 = vsel %vm704, %v552, %v768
  %v833 = vsel %vm705, %v555, %v769
  %v834 = vsel %vm706, %v560, %v770
  %v835 = vsel %vm707, %v563, %v771
  %v836 = vsel %vm708, %v568, %v772
  %v837 = vsel %vm709, %v571, %v773
  %v838 = vsel %vm710, %v576, %v774
  %v839 = vsel %vm711, %v579, %v775
  %v840 = vsel %vm712, %v584, %v776
  %v841 = vsel %vm713, %v587, %v777
  %v842 = vsel %vm714, %v592, %v778
  %v843 = vsel %vm715, %v595, %v779
  %v844 = vsel %vm716, %v600, %v780
  %v845 = vsel %vm717, %v603, %v781
  %v846 = vsel %vm718, %v608, %v782
  %v847 = vsel %vm719, %v611, %v783
  %v848 = vsel %vm720, %v616, %v784
  %v849 = vsel %vm721, %v619, %v785
  %v850 = vsel %vm722, %v624, %v786
  %v851 = vsel %vm723, %v627, %v787
  %v852 = vsel %vm724, %v632, %v788
  %v853 = vsel %vm725, %v635, %v789
  %v854 = vsel %vm726, %v640, %v790
  %v855 = vsel %vm727, %v643, %v791
  %v856 = vsel %vm728, %v648, %v792
  %v857 = vsel %vm729, %v651, %v793
  %v858 = vsel %vm730, %v656, %v794
  %v859 = vsel %vm731, %v659, %v795
  %v860 = vsel %vm732, %v664, %v796
  %v861 = vsel %vm733, %v667, %v797
  %v862 = vld [vmem:[%s2] sm:$0xf]
  %v863 = vld [vmem:[%s2 + $0x4] sm:$0xf]
  %v864 = vld [vmem:[%s2 + $0x8] sm:$0xf]
  %v865 = vld [vmem:[%s2 + $0xc] sm:$0xf]
  %v866 = vld [vmem:[%s2 + $0x10] sm:$0xf]
  %v867 = vld [vmem:[%s2 + $0x14] sm:$0xf]
  %v868 = vld [vmem:[%s2 + $0x18] sm:$0xf]
  %v869 = vld [vmem:[%s2 + $0x1c] sm:$0xf]
  %v870 = vld [vmem:[%s2 + $0x20] sm:$0xf]
  %v871 = vld [vmem:[%s2 + $0x24] sm:$0xf]
  %v872 = vld [vmem:[%s2 + $0x28] sm:$0xf]
  %v873 = vld [vmem:[%s2 + $0x2c] sm:$0xf]
  %v874 = vld [vmem:[%s2 + $0x30] sm:$0xf]
  %v875 = vld [vmem:[%s2 + $0x34] sm:$0xf]
  %v876 = vld [vmem:[%s2 + $0x38] sm:$0xf]
  %v877 = vld [vmem:[%s2 + $0x3c] sm:$0xf]
  %v878 = vld [vmem:[%s4] sm:$0x1]
  %v880 = vlaneseq
  %v881 = vshrl.u32 %v880, 7
  %v882 = vsub.s32 0, %v881
  %v883 = vrot.slane %v878, %v882
  %v901 = vunpack.c.l.b16 %v862
  %v902 = vunpack.c.l.b16 %v863
  %v903 = vunpack.c.l.b16 %v864
  %v904 = vunpack.c.l.b16 %v865
  %v905 = vunpack.c.l.b16 %v866
  %v906 = vunpack.c.l.b16 %v867
  %v907 = vunpack.c.l.b16 %v868
  %v908 = vunpack.c.l.b16 %v869
  %v909 = vunpack.c.l.b16 %v870
  %v910 = vunpack.c.l.b16 %v871
  %v911 = vunpack.c.l.b16 %v872
  %v912 = vunpack.c.l.b16 %v873
  %v913 = vunpack.c.l.b16 %v874
  %v914 = vunpack.c.l.b16 %v875
  %v915 = vunpack.c.l.b16 %v876
  %v916 = vunpack.c.l.b16 %v877
  %v917 = vpack.c.b16 %v902, %v901
  %v918 = vpack.c.b16 %v904, %v903
  %v919 = vpack.c.b16 %v906, %v905
  %v920 = vpack.c.b16 %v908, %v907
  %v921 = vpack.c.b16 %v910, %v909
  %v922 = vpack.c.b16 %v912, %v911
  %v923 = vpack.c.b16 %v914, %v913
  %v924 = vpack.c.b16 %v916, %v915
  %933 = vmatprep.subr.bf16.mxu0 0
  %934 = vmatpush1.bf16.msra.mxu0 %v924
  %935 = vmatprep.subr.bf16.mxu0 0
  %936 = vmatpush1.bf16.msra.mxu0 %v923
  %937 = vmatprep.subr.bf16.mxu0 0
  %938 = vmatpush1.bf16.msra.mxu0 %v922
  %939 = vmatprep.subr.bf16.mxu0 0
  %940 = vmatpush1.bf16.msra.mxu0 %v921
  %941 = vmatprep.subr.bf16.mxu0 0
  %942 = vmatpush1.bf16.msra.mxu0 %v920
  %943 = vmatprep.subr.bf16.mxu0 0
  %944 = vmatpush1.bf16.msra.mxu0 %v919
  %945 = vmatprep.subr.bf16.mxu0 0
  %946 = vmatpush1.bf16.msra.mxu0 %v918
  %947 = vmatprep.subr.bf16.mxu0 0
  %948 = vmatpush1.bf16.msra.mxu0 %v917
  %949 = vmatprep.subr.bf16.mxu0 0
  %950 = vmatpush2.bf16.msra.mxu0 0
  %951 = vmatprep.subr.bf16.mxu0 0
  %952 = vmatpush2.bf16.msra.mxu0 0
  %953 = vmatprep.subr.bf16.mxu0 0
  %954 = vmatpush2.bf16.msra.mxu0 0
  %955 = vmatprep.subr.bf16.mxu0 0
  %956 = vmatpush2.bf16.msra.mxu0 0
  %957 = vmatprep.subr.bf16.mxu0 0
  %958 = vmatpush2.bf16.msra.mxu0 0
  %959 = vmatprep.subr.bf16.mxu0 0
  %960 = vmatpush2.bf16.msra.mxu0 0
  %961 = vmatprep.subr.bf16.mxu0 0
  %962 = vmatpush2.bf16.msra.mxu0 0
  %963 = vmatprep.subr.bf16.mxu0 0
  %964 = vmatpush2.bf16.msra.mxu0 0
  %965 = vmatprep.mubr.bf16.mxu0 0
  %966 = vmatmul.mubr.bf16.gmra.mxu0 %v269
  %v967 = vpop.f32.mrf.mxu0
  %v968 = vadd.f32 %v883, %v967
  %v969 = vpop.f32.mrf.mxu0
  %v970 = vpop.f32.mrf.mxu0
  %v971 = vadd.f32 %v883, %v970
  %v972 = vpop.f32.mrf.mxu0
  %973 = vmatprep.mubr.bf16.mxu0 0
  %974 = vmatmul.mubr.bf16.gmra.mxu0 %v270
  %v975 = vpop.f32.mrf.mxu0
  %v976 = vadd.f32 %v883, %v975
  %v977 = vpop.f32.mrf.mxu0
  %v978 = vpop.f32.mrf.mxu0
  %v979 = vadd.f32 %v883, %v978
  %v980 = vpop.f32.mrf.mxu0
  %981 = vmatprep.mubr.bf16.mxu0 0
  %982 = vmatmul.mubr.bf16.gmra.mxu0 %v271
  %v983 = vpop.f32.mrf.mxu0
  %v984 = vadd.f32 %v883, %v983
  %v985 = vpop.f32.mrf.mxu0
  %v986 = vpop.f32.mrf.mxu0
  %v987 = vadd.f32 %v883, %v986
  %v988 = vpop.f32.mrf.mxu0
  %989 = vmatprep.mubr.bf16.mxu0 0
  %990 = vmatmul.mubr.bf16.gmra.mxu0 %v272
  %v991 = vpop.f32.mrf.mxu0
  %v992 = vadd.f32 %v883, %v991
  %v993 = vpop.f32.mrf.mxu0
  %v994 = vpop.f32.mrf.mxu0
  %v995 = vadd.f32 %v883, %v994
  %v996 = vpop.f32.mrf.mxu0
  %997 = vmatprep.mubr.bf16.mxu0 0
  %998 = vmatmul.mubr.bf16.gmra.mxu0 %v273
  %v999 = vpop.f32.mrf.mxu0
  %v1000 = vadd.f32 %v883, %v999
  %v1001 = vpop.f32.mrf.mxu0
  %v1002 = vpop.f32.mrf.mxu0
  %v1003 = vadd.f32 %v883, %v1002
  %v1004 = vpop.f32.mrf.mxu0
  %1005 = vmatprep.mubr.bf16.mxu0 0
  %1006 = vmatmul.mubr.bf16.gmra.mxu0 %v274
  %v1007 = vpop.f32.mrf.mxu0
  %v1008 = vadd.f32 %v883, %v1007
  %v1009 = vpop.f32.mrf.mxu0
  %v1010 = vpop.f32.mrf.mxu0
  %v1011 = vadd.f32 %v883, %v1010
  %v1012 = vpop.f32.mrf.mxu0
  %1013 = vmatprep.mubr.bf16.mxu0 0
  %1014 = vmatmul.mubr.bf16.gmra.mxu0 %v275
  %v1015 = vpop.f32.mrf.mxu0
  %v1016 = vadd.f32 %v883, %v1015
  %v1017 = vpop.f32.mrf.mxu0
  %v1018 = vpop.f32.mrf.mxu0
  %v1019 = vadd.f32 %v883, %v1018
  %v1020 = vpop.f32.mrf.mxu0
  %1021 = vmatprep.mubr.bf16.mxu0 0
  %1022 = vmatmul.mubr.bf16.gmra.mxu0 %v276
  %v1023 = vpop.f32.mrf.mxu0
  %v1024 = vadd.f32 %v883, %v1023
  %v1025 = vpop.f32.mrf.mxu0
  %v1026 = vpop.f32.mrf.mxu0
  %v1027 = vadd.f32 %v883, %v1026
  %v1028 = vpop.f32.mrf.mxu0
  %1029 = vmatprep.mubr.bf16.mxu0 0
  %1030 = vmatmul.mubr.bf16.gmra.mxu0 %v277
  %v1031 = vpop.f32.mrf.mxu0
  %v1032 = vadd.f32 %v883, %v1031
  %v1033 = vpop.f32.mrf.mxu0
  %v1034 = vpop.f32.mrf.mxu0
  %v1035 = vadd.f32 %v883, %v1034
  %v1036 = vpop.f32.mrf.mxu0
  %1037 = vmatprep.mubr.bf16.mxu0 0
  %1038 = vmatmul.mubr.bf16.gmra.mxu0 %v278
  %v1039 = vpop.f32.mrf.mxu0
  %v1040 = vadd.f32 %v883, %v1039
  %v1041 = vpop.f32.mrf.mxu0
  %v1042 = vpop.f32.mrf.mxu0
  %v1043 = vadd.f32 %v883, %v1042
  %v1044 = vpop.f32.mrf.mxu0
  %1045 = vmatprep.mubr.bf16.mxu0 0
  %1046 = vmatmul.mubr.bf16.gmra.mxu0 %v279
  %v1047 = vpop.f32.mrf.mxu0
  %v1048 = vadd.f32 %v883, %v1047
  %v1049 = vpop.f32.mrf.mxu0
  %v1050 = vpop.f32.mrf.mxu0
  %v1051 = vadd.f32 %v883, %v1050
  %v1052 = vpop.f32.mrf.mxu0
  %1053 = vmatprep.mubr.bf16.mxu0 0
  %1054 = vmatmul.mubr.bf16.gmra.mxu0 %v280
  %v1055 = vpop.f32.mrf.mxu0
  %v1056 = vadd.f32 %v883, %v1055
  %v1057 = vpop.f32.mrf.mxu0
  %v1058 = vpop.f32.mrf.mxu0
  %v1059 = vadd.f32 %v883, %v1058
  %v1060 = vpop.f32.mrf.mxu0
  %1061 = vmatprep.mubr.bf16.mxu0 0
  %1062 = vmatmul.mubr.bf16.gmra.mxu0 %v281
  %v1063 = vpop.f32.mrf.mxu0
  %v1064 = vadd.f32 %v883, %v1063
  %v1065 = vpop.f32.mrf.mxu0
  %v1066 = vpop.f32.mrf.mxu0
  %v1067 = vadd.f32 %v883, %v1066
  %v1068 = vpop.f32.mrf.mxu0
  %1069 = vmatprep.mubr.bf16.mxu0 0
  %1070 = vmatmul.mubr.bf16.gmra.mxu0 %v282
  %v1071 = vpop.f32.mrf.mxu0
  %v1072 = vadd.f32 %v883, %v1071
  %v1073 = vpop.f32.mrf.mxu0
  %v1074 = vpop.f32.mrf.mxu0
  %v1075 = vadd.f32 %v883, %v1074
  %v1076 = vpop.f32.mrf.mxu0
  %1077 = vmatprep.mubr.bf16.mxu0 0
  %1078 = vmatmul.mubr.bf16.gmra.mxu0 %v283
  %v1079 = vpop.f32.mrf.mxu0
  %v1080 = vadd.f32 %v883, %v1079
  %v1081 = vpop.f32.mrf.mxu0
  %v1082 = vpop.f32.mrf.mxu0
  %v1083 = vadd.f32 %v883, %v1082
  %v1084 = vpop.f32.mrf.mxu0
  %1085 = vmatprep.mubr.bf16.mxu0 0
  %1086 = vmatmul.mubr.bf16.gmra.mxu0 %v284
  %v1087 = vpop.f32.mrf.mxu0
  %v1088 = vadd.f32 %v883, %v1087
  %v1089 = vpop.f32.mrf.mxu0
  %v1090 = vpop.f32.mrf.mxu0
  %v1091 = vadd.f32 %v883, %v1090
  %v1092 = vpop.f32.mrf.mxu0
  %1093 = vmatprep.mubr.bf16.mxu0 0
  %1094 = vmatmul.mubr.bf16.gmra.mxu0 %v285
  %v1095 = vpop.f32.mrf.mxu0
  %v1096 = vadd.f32 %v883, %v1095
  %v1097 = vpop.f32.mrf.mxu0
  %v1098 = vpop.f32.mrf.mxu0
  %v1099 = vadd.f32 %v883, %v1098
  %v1100 = vpop.f32.mrf.mxu0
  %1101 = vmatprep.mubr.bf16.mxu0 0
  %1102 = vmatmul.mubr.bf16.gmra.mxu0 %v286
  %v1103 = vpop.f32.mrf.mxu0
  %v1104 = vadd.f32 %v883, %v1103
  %v1105 = vpop.f32.mrf.mxu0
  %v1106 = vpop.f32.mrf.mxu0
  %v1107 = vadd.f32 %v883, %v1106
  %v1108 = vpop.f32.mrf.mxu0
  %1109 = vmatprep.mubr.bf16.mxu0 0
  %1110 = vmatmul.mubr.bf16.gmra.mxu0 %v287
  %v1111 = vpop.f32.mrf.mxu0
  %v1112 = vadd.f32 %v883, %v1111
  %v1113 = vpop.f32.mrf.mxu0
  %v1114 = vpop.f32.mrf.mxu0
  %v1115 = vadd.f32 %v883, %v1114
  %v1116 = vpop.f32.mrf.mxu0
  %1117 = vmatprep.mubr.bf16.mxu0 0
  %1118 = vmatmul.mubr.bf16.gmra.mxu0 %v288
  %v1119 = vpop.f32.mrf.mxu0
  %v1120 = vadd.f32 %v883, %v1119
  %v1121 = vpop.f32.mrf.mxu0
  %v1122 = vpop.f32.mrf.mxu0
  %v1123 = vadd.f32 %v883, %v1122
  %v1124 = vpop.f32.mrf.mxu0
  %1125 = vmatprep.mubr.bf16.mxu0 0
  %1126 = vmatmul.mubr.bf16.gmra.mxu0 %v289
  %v1127 = vpop.f32.mrf.mxu0
  %v1128 = vadd.f32 %v883, %v1127
  %v1129 = vpop.f32.mrf.mxu0
  %v1130 = vpop.f32.mrf.mxu0
  %v1131 = vadd.f32 %v883, %v1130
  %v1132 = vpop.f32.mrf.mxu0
  %1133 = vmatprep.mubr.bf16.mxu0 0
  %1134 = vmatmul.mubr.bf16.gmra.mxu0 %v290
  %v1135 = vpop.f32.mrf.mxu0
  %v1136 = vadd.f32 %v883, %v1135
  %v1137 = vpop.f32.mrf.mxu0
  %v1138 = vpop.f32.mrf.mxu0
  %v1139 = vadd.f32 %v883, %v1138
  %v1140 = vpop.f32.mrf.mxu0
  %1141 = vmatprep.mubr.bf16.mxu0 0
  %1142 = vmatmul.mubr.bf16.gmra.mxu0 %v291
  %v1143 = vpop.f32.mrf.mxu0
  %v1144 = vadd.f32 %v883, %v1143
  %v1145 = vpop.f32.mrf.mxu0
  %v1146 = vpop.f32.mrf.mxu0
  %v1147 = vadd.f32 %v883, %v1146
  %v1148 = vpop.f32.mrf.mxu0
  %1149 = vmatprep.mubr.bf16.mxu0 0
  %1150 = vmatmul.mubr.bf16.gmra.mxu0 %v292
  %v1151 = vpop.f32.mrf.mxu0
  %v1152 = vadd.f32 %v883, %v1151
  %v1153 = vpop.f32.mrf.mxu0
  %v1154 = vpop.f32.mrf.mxu0
  %v1155 = vadd.f32 %v883, %v1154
  %v1156 = vpop.f32.mrf.mxu0
  %1157 = vmatprep.mubr.bf16.mxu0 0
  %1158 = vmatmul.mubr.bf16.gmra.mxu0 %v293
  %v1159 = vpop.f32.mrf.mxu0
  %v1160 = vadd.f32 %v883, %v1159
  %v1161 = vpop.f32.mrf.mxu0
  %v1162 = vpop.f32.mrf.mxu0
  %v1163 = vadd.f32 %v883, %v1162
  %v1164 = vpop.f32.mrf.mxu0
  %1165 = vmatprep.mubr.bf16.mxu0 0
  %1166 = vmatmul.mubr.bf16.gmra.mxu0 %v294
  %v1167 = vpop.f32.mrf.mxu0
  %v1168 = vadd.f32 %v883, %v1167
  %v1169 = vpop.f32.mrf.mxu0
  %v1170 = vpop.f32.mrf.mxu0
  %v1171 = vadd.f32 %v883, %v1170
  %v1172 = vpop.f32.mrf.mxu0
  %1173 = vmatprep.mubr.bf16.mxu0 0
  %1174 = vmatmul.mubr.bf16.gmra.mxu0 %v295
  %v1175 = vpop.f32.mrf.mxu0
  %v1176 = vadd.f32 %v883, %v1175
  %v1177 = vpop.f32.mrf.mxu0
  %v1178 = vpop.f32.mrf.mxu0
  %v1179 = vadd.f32 %v883, %v1178
  %v1180 = vpop.f32.mrf.mxu0
  %1181 = vmatprep.mubr.bf16.mxu0 0
  %1182 = vmatmul.mubr.bf16.gmra.mxu0 %v296
  %v1183 = vpop.f32.mrf.mxu0
  %v1184 = vadd.f32 %v883, %v1183
  %v1185 = vpop.f32.mrf.mxu0
  %v1186 = vpop.f32.mrf.mxu0
  %v1187 = vadd.f32 %v883, %v1186
  %v1188 = vpop.f32.mrf.mxu0
  %1189 = vmatprep.mubr.bf16.mxu0 0
  %1190 = vmatmul.mubr.bf16.gmra.mxu0 %v297
  %v1191 = vpop.f32.mrf.mxu0
  %v1192 = vadd.f32 %v883, %v1191
  %v1193 = vpop.f32.mrf.mxu0
  %v1194 = vpop.f32.mrf.mxu0
  %v1195 = vadd.f32 %v883, %v1194
  %v1196 = vpop.f32.mrf.mxu0
  %1197 = vmatprep.mubr.bf16.mxu0 0
  %1198 = vmatmul.mubr.bf16.gmra.mxu0 %v298
  %v1199 = vpop.f32.mrf.mxu0
  %v1200 = vadd.f32 %v883, %v1199
  %v1201 = vpop.f32.mrf.mxu0
  %v1202 = vpop.f32.mrf.mxu0
  %v1203 = vadd.f32 %v883, %v1202
  %v1204 = vpop.f32.mrf.mxu0
  %1205 = vmatprep.mubr.bf16.mxu0 0
  %1206 = vmatmul.mubr.bf16.gmra.mxu0 %v299
  %v1207 = vpop.f32.mrf.mxu0
  %v1208 = vadd.f32 %v883, %v1207
  %v1209 = vpop.f32.mrf.mxu0
  %v1210 = vpop.f32.mrf.mxu0
  %v1211 = vadd.f32 %v883, %v1210
  %v1212 = vpop.f32.mrf.mxu0
  %1213 = vmatprep.mubr.bf16.mxu0 0
  %1214 = vmatmul.mubr.bf16.gmra.mxu0 %v300
  %v1215 = vpop.f32.mrf.mxu0
  %v1216 = vadd.f32 %v883, %v1215
  %v1217 = vpop.f32.mrf.mxu0
  %v1218 = vpop.f32.mrf.mxu0
  %v1219 = vadd.f32 %v883, %v1218
  %v1220 = vpop.f32.mrf.mxu0
  %1221 = vdwg.mxu0
  %vm1222 = vcmp.ge.f32.partialorder %v968, 0.0
  %vm1223 = vcmp.ge.f32.partialorder %v971, 0.0
  %vm1224 = vcmp.ge.f32.partialorder %v976, 0.0
  %vm1225 = vcmp.ge.f32.partialorder %v979, 0.0
  %vm1226 = vcmp.ge.f32.partialorder %v984, 0.0
  %vm1227 = vcmp.ge.f32.partialorder %v987, 0.0
  %vm1228 = vcmp.ge.f32.partialorder %v992, 0.0
  %vm1229 = vcmp.ge.f32.partialorder %v995, 0.0
  %vm1230 = vcmp.ge.f32.partialorder %v1000, 0.0
  %vm1231 = vcmp.ge.f32.partialorder %v1003, 0.0
  %vm1232 = vcmp.ge.f32.partialorder %v1008, 0.0
  %vm1233 = vcmp.ge.f32.partialorder %v1011, 0.0
  %vm1234 = vcmp.ge.f32.partialorder %v1016, 0.0
  %vm1235 = vcmp.ge.f32.partialorder %v1019, 0.0
  %vm1236 = vcmp.ge.f32.partialorder %v1024, 0.0
  %vm1237 = vcmp.ge.f32.partialorder %v1027, 0.0
  %vm1238 = vcmp.ge.f32.partialorder %v1032, 0.0
  %vm1239 = vcmp.ge.f32.partialorder %v1035, 0.0
  %vm1240 = vcmp.ge.f32.partialorder %v1040, 0.0
  %vm1241 = vcmp.ge.f32.partialorder %v1043, 0.0
  %vm1242 = vcmp.ge.f32.partialorder %v1048, 0.0
  %vm1243 = vcmp.ge.f32.partialorder %v1051, 0.0
  %vm1244 = vcmp.ge.f32.partialorder %v1056, 0.0
  %vm1245 = vcmp.ge.f32.partialorder %v1059, 0.0
  %vm1246 = vcmp.ge.f32.partialorder %v1064, 0.0
  %vm1247 = vcmp.ge.f32.partialorder %v1067, 0.0
  %vm1248 = vcmp.ge.f32.partialorder %v1072, 0.0
  %vm1249 = vcmp.ge.f32.partialorder %v1075, 0.0
  %vm1250 = vcmp.ge.f32.partialorder %v1080, 0.0
  %vm1251 = vcmp.ge.f32.partialorder %v1083, 0.0
  %vm1252 = vcmp.ge.f32.partialorder %v1088, 0.0
  %vm1253 = vcmp.ge.f32.partialorder %v1091, 0.0
  %vm1254 = vcmp.ge.f32.partialorder %v1096, 0.0
  %vm1255 = vcmp.ge.f32.partialorder %v1099, 0.0
  %vm1256 = vcmp.ge.f32.partialorder %v1104, 0.0
  %vm1257 = vcmp.ge.f32.partialorder %v1107, 0.0
  %vm1258 = vcmp.ge.f32.partialorder %v1112, 0.0
  %vm1259 = vcmp.ge.f32.partialorder %v1115, 0.0
  %vm1260 = vcmp.ge.f32.partialorder %v1120, 0.0
  %vm1261 = vcmp.ge.f32.partialorder %v1123, 0.0
  %vm1262 = vcmp.ge.f32.partialorder %v1128, 0.0
  %vm1263 = vcmp.ge.f32.partialorder %v1131, 0.0
  %vm1264 = vcmp.ge.f32.partialorder %v1136, 0.0
  %vm1265 = vcmp.ge.f32.partialorder %v1139, 0.0
  %vm1266 = vcmp.ge.f32.partialorder %v1144, 0.0
  %vm1267 = vcmp.ge.f32.partialorder %v1147, 0.0
  %vm1268 = vcmp.ge.f32.partialorder %v1152, 0.0
  %vm1269 = vcmp.ge.f32.partialorder %v1155, 0.0
  %vm1270 = vcmp.ge.f32.partialorder %v1160, 0.0
  %vm1271 = vcmp.ge.f32.partialorder %v1163, 0.0
  %vm1272 = vcmp.ge.f32.partialorder %v1168, 0.0
  %vm1273 = vcmp.ge.f32.partialorder %v1171, 0.0
  %vm1274 = vcmp.ge.f32.partialorder %v1176, 0.0
  %vm1275 = vcmp.ge.f32.partialorder %v1179, 0.0
  %vm1276 = vcmp.ge.f32.partialorder %v1184, 0.0
  %vm1277 = vcmp.ge.f32.partialorder %v1187, 0.0
  %vm1278 = vcmp.ge.f32.partialorder %v1192, 0.0
  %vm1279 = vcmp.ge.f32.partialorder %v1195, 0.0
  %vm1280 = vcmp.ge.f32.partialorder %v1200, 0.0
  %vm1281 = vcmp.ge.f32.partialorder %v1203, 0.0
  %vm1282 = vcmp.ge.f32.partialorder %v1208, 0.0
  %vm1283 = vcmp.ge.f32.partialorder %v1211, 0.0
  %vm1284 = vcmp.ge.f32.partialorder %v1216, 0.0
  %vm1285 = vcmp.ge.f32.partialorder %v1219, 0.0
  %v1286 = vmul.f32 %v968, 0.2
  %v1287 = vmul.f32 %v971, 0.2
  %v1288 = vmul.f32 %v976, 0.2
  %v1289 = vmul.f32 %v979, 0.2
  %v1290 = vmul.f32 %v984, 0.2
  %v1291 = vmul.f32 %v987, 0.2
  %v1292 = vmul.f32 %v992, 0.2
  %v1293 = vmul.f32 %v995, 0.2
  %v1294 = vmul.f32 %v1000, 0.2
  %v1295 = vmul.f32 %v1003, 0.2
  %v1296 = vmul.f32 %v1008, 0.2
  %v1297 = vmul.f32 %v1011, 0.2
  %v1298 = vmul.f32 %v1016, 0.2
  %v1299 = vmul.f32 %v1019, 0.2
  %v1300 = vmul.f32 %v1024, 0.2
  %v1301 = vmul.f32 %v1027, 0.2
  %v1302 = vmul.f32 %v1032, 0.2
  %v1303 = vmul.f32 %v1035, 0.2
  %v1304 = vmul.f32 %v1040, 0.2
  %v1305 = vmul.f32 %v1043, 0.2
  %v1306 = vmul.f32 %v1048, 0.2
  %v1307 = vmul.f32 %v1051, 0.2
  %v1308 = vmul.f32 %v1056, 0.2
  %v1309 = vmul.f32 %v1059, 0.2
  %v1310 = vmul.f32 %v1064, 0.2
  %v1311 = vmul.f32 %v1067, 0.2
  %v1312 = vmul.f32 %v1072, 0.2
  %v1313 = vmul.f32 %v1075, 0.2
  %v1314 = vmul.f32 %v1080, 0.2
  %v1315 = vmul.f32 %v1083, 0.2
  %v1316 = vmul.f32 %v1088, 0.2
  %v1317 = vmul.f32 %v1091, 0.2
  %v1318 = vmul.f32 %v1096, 0.2
  %v1319 = vmul.f32 %v1099, 0.2
  %v1320 = vmul.f32 %v1104, 0.2
  %v1321 = vmul.f32 %v1107, 0.2
  %v1322 = vmul.f32 %v1112, 0.2
  %v1323 = vmul.f32 %v1115, 0.2
  %v1324 = vmul.f32 %v1120, 0.2
  %v1325 = vmul.f32 %v1123, 0.2
  %v1326 = vmul.f32 %v1128, 0.2
  %v1327 = vmul.f32 %v1131, 0.2
  %v1328 = vmul.f32 %v1136, 0.2
  %v1329 = vmul.f32 %v1139, 0.2
  %v1330 = vmul.f32 %v1144, 0.2
  %v1331 = vmul.f32 %v1147, 0.2
  %v1332 = vmul.f32 %v1152, 0.2
  %v1333 = vmul.f32 %v1155, 0.2
  %v1334 = vmul.f32 %v1160, 0.2
  %v1335 = vmul.f32 %v1163, 0.2
  %v1336 = vmul.f32 %v1168, 0.2
  %v1337 = vmul.f32 %v1171, 0.2
  %v1338 = vmul.f32 %v1176, 0.2
  %v1339 = vmul.f32 %v1179, 0.2
  %v1340 = vmul.f32 %v1184, 0.2
  %v1341 = vmul.f32 %v1187, 0.2
  %v1342 = vmul.f32 %v1192, 0.2
  %v1343 = vmul.f32 %v1195, 0.2
  %v1344 = vmul.f32 %v1200, 0.2
  %v1345 = vmul.f32 %v1203, 0.2
  %v1346 = vmul.f32 %v1208, 0.2
  %v1347 = vmul.f32 %v1211, 0.2
  %v1348 = vmul.f32 %v1216, 0.2
  %v1349 = vmul.f32 %v1219, 0.2
  %v1350 = vsel %vm1222, %v968, %v1286
  %v1351 = vsel %vm1223, %v971, %v1287
  %v1352 = vsel %vm1224, %v976, %v1288
  %v1353 = vsel %vm1225, %v979, %v1289
  %v1354 = vsel %vm1226, %v984, %v1290
  %v1355 = vsel %vm1227, %v987, %v1291
  %v1356 = vsel %vm1228, %v992, %v1292
  %v1357 = vsel %vm1229, %v995, %v1293
  %v1358 = vsel %vm1230, %v1000, %v1294
  %v1359 = vsel %vm1231, %v1003, %v1295
  %v1360 = vsel %vm1232, %v1008, %v1296
  %v1361 = vsel %vm1233, %v1011, %v1297
  %v1362 = vsel %vm1234, %v1016, %v1298
  %v1363 = vsel %vm1235, %v1019, %v1299
  %v1364 = vsel %vm1236, %v1024, %v1300
  %v1365 = vsel %vm1237, %v1027, %v1301
  %v1366 = vsel %vm1238, %v1032, %v1302
  %v1367 = vsel %vm1239, %v1035, %v1303
  %v1368 = vsel %vm1240, %v1040, %v1304
  %v1369 = vsel %vm1241, %v1043, %v1305
  %v1370 = vsel %vm1242, %v1048, %v1306
  %v1371 = vsel %vm1243, %v1051, %v1307
  %v1372 = vsel %vm1244, %v1056, %v1308
  %v1373 = vsel %vm1245, %v1059, %v1309
  %v1374 = vsel %vm1246, %v1064, %v1310
  %v1375 = vsel %vm1247, %v1067, %v1311
  %v1376 = vsel %vm1248, %v1072, %v1312
  %v1377 = vsel %vm1249, %v1075, %v1313
  %v1378 = vsel %vm1250, %v1080, %v1314
  %v1379 = vsel %vm1251, %v1083, %v1315
  %v1380 = vsel %vm1252, %v1088, %v1316
  %v1381 = vsel %vm1253, %v1091, %v1317
  %v1382 = vsel %vm1254, %v1096, %v1318
  %v1383 = vsel %vm1255, %v1099, %v1319
  %v1384 = vsel %vm1256, %v1104, %v1320
  %v1385 = vsel %vm1257, %v1107, %v1321
  %v1386 = vsel %vm1258, %v1112, %v1322
  %v1387 = vsel %vm1259, %v1115, %v1323
  %v1388 = vsel %vm1260, %v1120, %v1324
  %v1389 = vsel %vm1261, %v1123, %v1325
  %v1390 = vsel %vm1262, %v1128, %v1326
  %v1391 = vsel %vm1263, %v1131, %v1327
  %v1392 = vsel %vm1264, %v1136, %v1328
  %v1393 = vsel %vm1265, %v1139, %v1329
  %v1394 = vsel %vm1266, %v1144, %v1330
  %v1395 = vsel %vm1267, %v1147, %v1331
  %v1396 = vsel %vm1268, %v1152, %v1332
  %v1397 = vsel %vm1269, %v1155, %v1333
  %v1398 = vsel %vm1270, %v1160, %v1334
  %v1399 = vsel %vm1271, %v1163, %v1335
  %v1400 = vsel %vm1272, %v1168, %v1336
  %v1401 = vsel %vm1273, %v1171, %v1337
  %v1402 = vsel %vm1274, %v1176, %v1338
  %v1403 = vsel %vm1275, %v1179, %v1339
  %v1404 = vsel %vm1276, %v1184, %v1340
  %v1405 = vsel %vm1277, %v1187, %v1341
  %v1406 = vsel %vm1278, %v1192, %v1342
  %v1407 = vsel %vm1279, %v1195, %v1343
  %v1408 = vsel %vm1280, %v1200, %v1344
  %v1409 = vsel %vm1281, %v1203, %v1345
  %v1410 = vsel %vm1282, %v1208, %v1346
  %v1411 = vsel %vm1283, %v1211, %v1347
  %v1412 = vsel %vm1284, %v1216, %v1348
  %v1413 = vsel %vm1285, %v1219, %v1349
  %1427 = vrot.lane.b32.xlu0 0.0, 32
  %v1428 = vpop.permute.xlu0 %1427
  %1429 = vrot.lane.b32.xlu0 %v806, 32
  %v1430 = vpop.permute.xlu0 %1429
  %1431 = vrot.lane.b32.xlu0 %v808, 32
  %v1432 = vpop.permute.xlu0 %1431
  %1433 = vrot.lane.b32.xlu0 %v810, 32
  %v1434 = vpop.permute.xlu0 %1433
  %1435 = vrot.lane.b32.xlu0 %v812, 32
  %v1436 = vpop.permute.xlu0 %1435
  %1437 = vrot.lane.b32.xlu0 %v822, 32
  %v1438 = vpop.permute.xlu0 %1437
  %1439 = vrot.lane.b32.xlu0 %v824, 32
  %v1440 = vpop.permute.xlu0 %1439
  %1441 = vrot.lane.b32.xlu0 %v826, 32
  %v1442 = vpop.permute.xlu0 %1441
  %1443 = vrot.lane.b32.xlu0 %v828, 32
  %v1444 = vpop.permute.xlu0 %1443
  %1445 = vrot.lane.b32.xlu0 %v838, 32
  %v1446 = vpop.permute.xlu0 %1445
  %1447 = vrot.lane.b32.xlu0 %v840, 32
  %v1448 = vpop.permute.xlu0 %1447
  %1449 = vrot.lane.b32.xlu0 %v842, 32
  %v1450 = vpop.permute.xlu0 %1449
  %1451 = vrot.lane.b32.xlu0 %v844, 32
  %v1452 = vpop.permute.xlu0 %1451
  %1478 = vrot.lane.b32.xlu0 0.0, 64
  %v1479 = vpop.permute.xlu0 %1478
  %1480 = vrot.lane.b32.xlu0 %v807, 64
  %v1481 = vpop.permute.xlu0 %1480
  %1482 = vrot.lane.b32.xlu0 %v809, 64
  %v1483 = vpop.permute.xlu0 %1482
  %1484 = vrot.lane.b32.xlu0 %v811, 64
  %v1485 = vpop.permute.xlu0 %1484
  %1486 = vrot.lane.b32.xlu0 %v813, 64
  %v1487 = vpop.permute.xlu0 %1486
  %1488 = vrot.lane.b32.xlu0 %v823, 64
  %v1489 = vpop.permute.xlu0 %1488
  %1490 = vrot.lane.b32.xlu0 %v825, 64
  %v1491 = vpop.permute.xlu0 %1490
  %1492 = vrot.lane.b32.xlu0 %v827, 64
  %v1493 = vpop.permute.xlu0 %1492
  %1494 = vrot.lane.b32.xlu0 %v829, 64
  %v1495 = vpop.permute.xlu0 %1494
  %1496 = vrot.lane.b32.xlu0 %v839, 64
  %v1497 = vpop.permute.xlu0 %1496
  %1498 = vrot.lane.b32.xlu0 %v841, 64
  %v1499 = vpop.permute.xlu0 %1498
  %1500 = vrot.lane.b32.xlu0 %v843, 64
  %v1501 = vpop.permute.xlu0 %1500
  %1502 = vrot.lane.b32.xlu0 %v845, 64
  %v1503 = vpop.permute.xlu0 %1502
  %1529 = vrot.lane.b32.xlu0 0.0, 96
  %v1530 = vpop.permute.xlu0 %1529
  %1531 = vrot.lane.b32.xlu0 %v799, 96
  %v1532 = vpop.permute.xlu0 %1531
  %1533 = vrot.lane.b32.xlu0 %v801, 96
  %v1534 = vpop.permute.xlu0 %1533
  %1535 = vrot.lane.b32.xlu0 %v803, 96
  %v1536 = vpop.permute.xlu0 %1535
  %1537 = vrot.lane.b32.xlu0 %v815, 96
  %v1538 = vpop.permute.xlu0 %1537
  %1539 = vrot.lane.b32.xlu0 %v817, 96
  %v1540 = vpop.permute.xlu0 %1539
  %1541 = vrot.lane.b32.xlu0 %v819, 96
  %v1542 = vpop.permute.xlu0 %1541
  %1543 = vrot.lane.b32.xlu0 %v831, 96
  %v1544 = vpop.permute.xlu0 %1543
  %1545 = vrot.lane.b32.xlu0 %v833, 96
  %v1546 = vpop.permute.xlu0 %1545
  %1547 = vrot.lane.b32.xlu0 %v835, 96
  %v1548 = vpop.permute.xlu0 %1547
  %1549 = vrot.lane.b32.xlu0 %v847, 96
  %v1550 = vpop.permute.xlu0 %1549
  %1551 = vrot.lane.b32.xlu0 %v849, 96
  %v1552 = vpop.permute.xlu0 %1551
  %1553 = vrot.lane.b32.xlu0 %v851, 96
  %v1554 = vpop.permute.xlu0 %1553
  %1572 = vrot.lane.b32.xlu0 %v799, 32
  %v1573 = vpop.permute.xlu0 %1572
  %1574 = vrot.lane.b32.xlu0 %v801, 32
  %v1575 = vpop.permute.xlu0 %1574
  %1576 = vrot.lane.b32.xlu0 %v803, 32
  %v1577 = vpop.permute.xlu0 %1576
  %1578 = vrot.lane.b32.xlu0 %v805, 32
  %v1579 = vpop.permute.xlu0 %1578
  %1580 = vrot.lane.b32.xlu0 %v815, 32
  %v1581 = vpop.permute.xlu0 %1580
  %1582 = vrot.lane.b32.xlu0 %v817, 32
  %v1583 = vpop.permute.xlu0 %1582
  %1584 = vrot.lane.b32.xlu0 %v819, 32
  %v1585 = vpop.permute.xlu0 %1584
  %1586 = vrot.lane.b32.xlu0 %v821, 32
  %v1587 = vpop.permute.xlu0 %1586
  %1588 = vrot.lane.b32.xlu0 %v831, 32
  %v1589 = vpop.permute.xlu0 %1588
  %1590 = vrot.lane.b32.xlu0 %v833, 32
  %v1591 = vpop.permute.xlu0 %1590
  %1592 = vrot.lane.b32.xlu0 %v835, 32
  %v1593 = vpop.permute.xlu0 %1592
  %1594 = vrot.lane.b32.xlu0 %v837, 32
  %v1595 = vpop.permute.xlu0 %1594
  %1596 = vrot.lane.b32.xlu0 %v847, 32
  %v1597 = vpop.permute.xlu0 %1596
  %1598 = vrot.lane.b32.xlu0 %v849, 32
  %v1599 = vpop.permute.xlu0 %1598
  %1600 = vrot.lane.b32.xlu0 %v851, 32
  %v1601 = vpop.permute.xlu0 %1600
  %1602 = vrot.lane.b32.xlu0 %v853, 32
  %v1603 = vpop.permute.xlu0 %1602
  %1623 = vrot.lane.b32.xlu0 %v855, 64
  %v1624 = vpop.permute.xlu0 %1623
  %1625 = vrot.lane.b32.xlu0 %v857, 64
  %v1626 = vpop.permute.xlu0 %1625
  %1627 = vrot.lane.b32.xlu0 %v859, 64
  %v1628 = vpop.permute.xlu0 %1627
  %1636 = vrot.lane.b32.xlu0 %v806, 96
  %v1637 = vpop.permute.xlu0 %1636
  %1638 = vrot.lane.b32.xlu0 %v808, 96
  %v1639 = vpop.permute.xlu0 %1638
  %1640 = vrot.lane.b32.xlu0 %v810, 96
  %v1641 = vpop.permute.xlu0 %1640
  %1642 = vrot.lane.b32.xlu0 %v812, 96
  %v1643 = vpop.permute.xlu0 %1642
  %1644 = vrot.lane.b32.xlu0 %v822, 96
  %v1645 = vpop.permute.xlu0 %1644
  %1646 = vrot.lane.b32.xlu0 %v824, 96
  %v1647 = vpop.permute.xlu0 %1646
  %1648 = vrot.lane.b32.xlu0 %v826, 96
  %v1649 = vpop.permute.xlu0 %1648
  %1650 = vrot.lane.b32.xlu0 %v828, 96
  %v1651 = vpop.permute.xlu0 %1650
  %1652 = vrot.lane.b32.xlu0 %v838, 96
  %v1653 = vpop.permute.xlu0 %1652
  %1654 = vrot.lane.b32.xlu0 %v840, 96
  %v1655 = vpop.permute.xlu0 %1654
  %1656 = vrot.lane.b32.xlu0 %v842, 96
  %v1657 = vpop.permute.xlu0 %1656
  %1658 = vrot.lane.b32.xlu0 %v844, 96
  %v1659 = vpop.permute.xlu0 %1658
  %1660 = vrot.lane.b32.xlu0 %v854, 96
  %v1661 = vpop.permute.xlu0 %1660
  %1662 = vrot.lane.b32.xlu0 %v856, 96
  %v1663 = vpop.permute.xlu0 %1662
  %1664 = vrot.lane.b32.xlu0 %v858, 96
  %v1665 = vpop.permute.xlu0 %1664
  %1666 = vrot.lane.b32.xlu0 %v860, 96
  %v1667 = vpop.permute.xlu0 %1666
  %vm1684 = vcmask 261120
  %v1685 = vsel %vm1684, 0.0, %v1428
  %v1686 = vsel %vm1684, 0.0, %v1430
  %v1687 = vsel %vm1684, %v807, %v1432
  %v1688 = vsel %vm1684, %v809, %v1434
  %v1689 = vsel %vm1684, %v811, %v1436
  %v1690 = vsel %vm1684, 0.0, %v1438
  %v1691 = vsel %vm1684, %v823, %v1440
  %v1692 = vsel %vm1684, %v825, %v1442
  %v1693 = vsel %vm1684, %v827, %v1444
  %v1694 = vsel %vm1684, 0.0, %v1446
  %v1695 = vsel %vm1684, %v839, %v1448
  %v1696 = vsel %vm1684, %v841, %v1450
  %v1697 = vsel %vm1684, %v843, %v1452
  %vm1698 = vcmask 523264
  %v1699 = vsel %vm1698, %v1685, %v1479
  %v1700 = vsel %vm1698, %v1686, %v1481
  %v1701 = vsel %vm1698, %v1687, %v1483
  %v1702 = vsel %vm1698, %v1688, %v1485
  %v1703 = vsel %vm1698, %v1689, %v1487
  %v1704 = vsel %vm1698, %v1690, %v1489
  %v1705 = vsel %vm1698, %v1691, %v1491
  %v1706 = vsel %vm1698, %v1692, %v1493
  %v1707 = vsel %vm1698, %v1693, %v1495
  %v1708 = vsel %vm1698, %v1694, %v1497
  %v1709 = vsel %vm1698, %v1695, %v1499
  %v1710 = vsel %vm1698, %v1696, %v1501
  %v1711 = vsel %vm1698, %v1697, %v1503
  %vm1712 = vcmask 785408
  %v1713 = vsel %vm1712, %v1699, %v1530
  %v1714 = vsel %vm1712, %v1699, %v1532
  %v1715 = vsel %vm1712, %v1699, %v1534
  %v1716 = vsel %vm1712, %v1699, %v1536
  %v1717 = vsel %vm1712, %v1700, %v1530
  %v1718 = vsel %vm1712, %v1701, %v1538
  %v1719 = vsel %vm1712, %v1702, %v1540
  %v1720 = vsel %vm1712, %v1703, %v1542
  %v1721 = vsel %vm1712, %v1704, %v1530
  %v1722 = vsel %vm1712, %v1705, %v1544
  %v1723 = vsel %vm1712, %v1706, %v1546
  %v1724 = vsel %vm1712, %v1707, %v1548
  %v1725 = vsel %vm1712, %v1708, %v1530
  %v1726 = vsel %vm1712, %v1709, %v1550
  %v1727 = vsel %vm1712, %v1710, %v1552
  %v1728 = vsel %vm1712, %v1711, %v1554
  %v1729 = vsel %vm1684, %v798, %v1573
  %v1730 = vsel %vm1684, %v800, %v1575
  %v1731 = vsel %vm1684, %v802, %v1577
  %v1732 = vsel %vm1684, %v804, %v1579
  %v1733 = vsel %vm1684, %v814, %v1581
  %v1734 = vsel %vm1684, %v816, %v1583
  %v1735 = vsel %vm1684, %v818, %v1585
  %v1736 = vsel %vm1684, %v820, %v1587
  %v1737 = vsel %vm1684, %v830, %v1589
  %v1738 = vsel %vm1684, %v832, %v1591
  %v1739 = vsel %vm1684, %v834, %v1593
  %v1740 = vsel %vm1684, %v836, %v1595
  %v1741 = vsel %vm1684, %v846, %v1597
  %v1742 = vsel %vm1684, %v848, %v1599
  %v1743 = vsel %vm1684, %v850, %v1601
  %v1744 = vsel %vm1684, %v852, %v1603
  %v1745 = vsel %vm1698, %v1729, %v1479
  %v1746 = vsel %vm1698, %v1730, %v1481
  %v1747 = vsel %vm1698, %v1731, %v1483
  %v1748 = vsel %vm1698, %v1732, %v1485
  %v1749 = vsel %vm1698, %v1733, %v1479
  %v1750 = vsel %vm1698, %v1734, %v1489
  %v1751 = vsel %vm1698, %v1735, %v1491
  %v1752 = vsel %vm1698, %v1736, %v1493
  %v1753 = vsel %vm1698, %v1737, %v1479
  %v1754 = vsel %vm1698, %v1738, %v1497
  %v1755 = vsel %vm1698, %v1739, %v1499
  %v1756 = vsel %vm1698, %v1740, %v1501
  %v1757 = vsel %vm1698, %v1741, %v1479
  %v1758 = vsel %vm1698, %v1742, %v1624
  %v1759 = vsel %vm1698, %v1743, %v1626
  %v1760 = vsel %vm1698, %v1744, %v1628
  %v1761 = vsel %vm1712, %v1745, %v1637
  %v1762 = vsel %vm1712, %v1746, %v1639
  %v1763 = vsel %vm1712, %v1747, %v1641
  %v1764 = vsel %vm1712, %v1748, %v1643
  %v1765 = vsel %vm1712, %v1749, %v1645
  %v1766 = vsel %vm1712, %v1750, %v1647
  %v1767 = vsel %vm1712, %v1751, %v1649
  %v1768 = vsel %vm1712, %v1752, %v1651
  %v1769 = vsel %vm1712, %v1753, %v1653
  %v1770 = vsel %vm1712, %v1754, %v1655
  %v1771 = vsel %vm1712, %v1755, %v1657
  %v1772 = vsel %vm1712, %v1756, %v1659
  %v1773 = vsel %vm1712, %v1757, %v1661
  %v1774 = vsel %vm1712, %v1758, %v1663
  %v1775 = vsel %vm1712, %v1759, %v1665
  %v1776 = vsel %vm1712, %v1760, %v1667
  %v1777 = vpack.c.bf16 %v1714, %v1713
  %v1778 = vpack.c.bf16 %v1762, %v1761
  %v1779 = vpack.c.bf16 %v809, %v807
  %v1780 = vpack.c.bf16 %v1716, %v1715
  %v1781 = vpack.c.bf16 %v1764, %v1763
  %v1782 = vpack.c.bf16 %v813, %v811
  %v1783 = vpack.c.bf16 %v1718, %v1717
  %v1784 = vpack.c.bf16 %v1766, %v1765
  %v1785 = vpack.c.bf16 %v825, %v823
  %v1786 = vpack.c.bf16 %v1720, %v1719
  %v1787 = vpack.c.bf16 %v1768, %v1767
  %v1788 = vpack.c.bf16 %v829, %v827
  %v1789 = vpack.c.bf16 %v1722, %v1721
  %v1790 = vpack.c.bf16 %v1770, %v1769
  %v1791 = vpack.c.bf16 %v841, %v839
  %v1792 = vpack.c.bf16 %v1724, %v1723
  %v1793 = vpack.c.bf16 %v1772, %v1771
  %v1794 = vpack.c.bf16 %v845, %v843
  %v1795 = vpack.c.bf16 %v1726, %v1725
  %v1796 = vpack.c.bf16 %v1774, %v1773
  %v1797 = vpack.c.bf16 %v857, %v855
  %v1798 = vpack.c.bf16 %v1728, %v1727
  %v1799 = vpack.c.bf16 %v1776, %v1775
  %v1800 = vpack.c.bf16 %v861, %v859
  %1813 = vrot.lane.b32.xlu0 %v1358, 64
  %v1814 = vpop.permute.xlu0 %1813
  %1815 = vrot.lane.b32.xlu0 %v1360, 64
  %v1816 = vpop.permute.xlu0 %1815
  %1817 = vrot.lane.b32.xlu0 %v1362, 64
  %v1818 = vpop.permute.xlu0 %1817
  %1819 = vrot.lane.b32.xlu0 %v1364, 64
  %v1820 = vpop.permute.xlu0 %1819
  %1821 = vrot.lane.b32.xlu0 %v1374, 64
  %v1822 = vpop.permute.xlu0 %1821
  %1823 = vrot.lane.b32.xlu0 %v1376, 64
  %v1824 = vpop.permute.xlu0 %1823
  %1825 = vrot.lane.b32.xlu0 %v1378, 64
  %v1826 = vpop.permute.xlu0 %1825
  %1827 = vrot.lane.b32.xlu0 %v1380, 64
  %v1828 = vpop.permute.xlu0 %1827
  %1829 = vrot.lane.b32.xlu0 %v1390, 64
  %v1830 = vpop.permute.xlu0 %1829
  %1831 = vrot.lane.b32.xlu0 %v1392, 64
  %v1832 = vpop.permute.xlu0 %1831
  %1833 = vrot.lane.b32.xlu0 %v1394, 64
  %v1834 = vpop.permute.xlu0 %1833
  %1835 = vrot.lane.b32.xlu0 %v1396, 64
  %v1836 = vpop.permute.xlu0 %1835
  %1861 = vrot.lane.b32.xlu0 %v1351, 64
  %v1862 = vpop.permute.xlu0 %1861
  %1863 = vrot.lane.b32.xlu0 %v1353, 64
  %v1864 = vpop.permute.xlu0 %1863
  %1865 = vrot.lane.b32.xlu0 %v1355, 64
  %v1866 = vpop.permute.xlu0 %1865
  %1867 = vrot.lane.b32.xlu0 %v1367, 64
  %v1868 = vpop.permute.xlu0 %1867
  %1869 = vrot.lane.b32.xlu0 %v1369, 64
  %v1870 = vpop.permute.xlu0 %1869
  %1871 = vrot.lane.b32.xlu0 %v1371, 64
  %v1872 = vpop.permute.xlu0 %1871
  %1873 = vrot.lane.b32.xlu0 %v1383, 64
  %v1874 = vpop.permute.xlu0 %1873
  %1875 = vrot.lane.b32.xlu0 %v1385, 64
  %v1876 = vpop.permute.xlu0 %1875
  %1877 = vrot.lane.b32.xlu0 %v1387, 64
  %v1878 = vpop.permute.xlu0 %1877
  %1879 = vrot.lane.b32.xlu0 %v1399, 64
  %v1880 = vpop.permute.xlu0 %1879
  %1881 = vrot.lane.b32.xlu0 %v1401, 64
  %v1882 = vpop.permute.xlu0 %1881
  %1883 = vrot.lane.b32.xlu0 %v1403, 64
  %v1884 = vpop.permute.xlu0 %1883
  %1901 = vrot.lane.b32.xlu0 %v1357, 64
  %v1902 = vpop.permute.xlu0 %1901
  %1903 = vrot.lane.b32.xlu0 %v1373, 64
  %v1904 = vpop.permute.xlu0 %1903
  %1905 = vrot.lane.b32.xlu0 %v1389, 64
  %v1906 = vpop.permute.xlu0 %1905
  %1907 = vrot.lane.b32.xlu0 %v1405, 64
  %v1908 = vpop.permute.xlu0 %1907
  %1917 = vrot.lane.b32.xlu0 %v1406, 64
  %v1918 = vpop.permute.xlu0 %1917
  %1919 = vrot.lane.b32.xlu0 %v1408, 64
  %v1920 = vpop.permute.xlu0 %1919
  %1921 = vrot.lane.b32.xlu0 %v1410, 64
  %v1922 = vpop.permute.xlu0 %1921
  %1923 = vrot.lane.b32.xlu0 %v1412, 64
  %v1924 = vpop.permute.xlu0 %1923
  %v1929 = vsel %vm1698, 0.0, %v1479
  %v1930 = vsel %vm1698, 0.0, %v1814
  %v1931 = vsel %vm1698, %v1359, %v1816
  %v1932 = vsel %vm1698, %v1361, %v1818
  %v1933 = vsel %vm1698, %v1363, %v1820
  %v1934 = vsel %vm1698, 0.0, %v1822
  %v1935 = vsel %vm1698, %v1375, %v1824
  %v1936 = vsel %vm1698, %v1377, %v1826
  %v1937 = vsel %vm1698, %v1379, %v1828
  %v1938 = vsel %vm1698, 0.0, %v1830
  %v1939 = vsel %vm1698, %v1391, %v1832
  %v1940 = vsel %vm1698, %v1393, %v1834
  %v1941 = vsel %vm1698, %v1395, %v1836
  %v1942 = vsel %vm1698, 0.0, %v1862
  %v1943 = vsel %vm1698, 0.0, %v1864
  %v1944 = vsel %vm1698, 0.0, %v1866
  %v1945 = vsel %vm1698, %v1359, %v1479
  %v1946 = vsel %vm1698, %v1361, %v1868
  %v1947 = vsel %vm1698, %v1363, %v1870
  %v1948 = vsel %vm1698, %v1365, %v1872
  %v1949 = vsel %vm1698, %v1375, %v1479
  %v1950 = vsel %vm1698, %v1377, %v1874
  %v1951 = vsel %vm1698, %v1379, %v1876
  %v1952 = vsel %vm1698, %v1381, %v1878
  %v1953 = vsel %vm1698, %v1391, %v1479
  %v1954 = vsel %vm1698, %v1393, %v1880
  %v1955 = vsel %vm1698, %v1395, %v1882
  %v1956 = vsel %vm1698, %v1397, %v1884
  %v1957 = vsel %vm1698, %v1350, %v1862
  %v1958 = vsel %vm1698, %v1352, %v1864
  %v1959 = vsel %vm1698, %v1354, %v1866
  %v1960 = vsel %vm1698, %v1356, %v1902
  %v1961 = vsel %vm1698, %v1366, %v1868
  %v1962 = vsel %vm1698, %v1368, %v1870
  %v1963 = vsel %vm1698, %v1370, %v1872
  %v1964 = vsel %vm1698, %v1372, %v1904
  %v1965 = vsel %vm1698, %v1382, %v1874
  %v1966 = vsel %vm1698, %v1384, %v1876
  %v1967 = vsel %vm1698, %v1386, %v1878
  %v1968 = vsel %vm1698, %v1388, %v1906
  %v1969 = vsel %vm1698, %v1398, %v1880
  %v1970 = vsel %vm1698, %v1400, %v1882
  %v1971 = vsel %vm1698, %v1402, %v1884
  %v1972 = vsel %vm1698, %v1404, %v1908
  %v1973 = vsel %vm1698, 0.0, %v1918
  %v1974 = vsel %vm1698, %v1407, %v1920
  %v1975 = vsel %vm1698, %v1409, %v1922
  %v1976 = vsel %vm1698, %v1411, %v1924
  %v1977 = vpack.c.bf16 %v1929, %v1929
  %v1978 = vpack.c.bf16 %v1942, %v1929
  %v1979 = vpack.c.bf16 %v1958, %v1957
  %v1980 = vpack.c.bf16 %v1931, %v1930
  %v1981 = vpack.c.bf16 %v1361, %v1359
  %v1982 = vpack.c.bf16 %v1944, %v1943
  %v1983 = vpack.c.bf16 %v1960, %v1959
  %v1984 = vpack.c.bf16 %v1933, %v1932
  %v1985 = vpack.c.bf16 %v1365, %v1363
  %v1986 = vpack.c.bf16 %v1946, %v1945
  %v1987 = vpack.c.bf16 %v1962, %v1961
  %v1988 = vpack.c.bf16 %v1935, %v1934
  %v1989 = vpack.c.bf16 %v1377, %v1375
  %v1990 = vpack.c.bf16 %v1948, %v1947
  %v1991 = vpack.c.bf16 %v1964, %v1963
  %v1992 = vpack.c.bf16 %v1937, %v1936
  %v1993 = vpack.c.bf16 %v1381, %v1379
  %v1994 = vpack.c.bf16 %v1950, %v1949
  %v1995 = vpack.c.bf16 %v1966, %v1965
  %v1996 = vpack.c.bf16 %v1939, %v1938
  %v1997 = vpack.c.bf16 %v1393, %v1391
  %v1998 = vpack.c.bf16 %v1952, %v1951
  %v1999 = vpack.c.bf16 %v1968, %v1967
  %v2000 = vpack.c.bf16 %v1941, %v1940
  %v2001 = vpack.c.bf16 %v1397, %v1395
  %v2002 = vpack.c.bf16 %v1954, %v1953
  %v2003 = vpack.c.bf16 %v1970, %v1969
  %v2004 = vpack.c.bf16 %v1974, %v1973
  %v2005 = vpack.c.bf16 %v1409, %v1407
  %v2006 = vpack.c.bf16 %v1956, %v1955
  %v2007 = vpack.c.bf16 %v1972, %v1971
  %v2008 = vpack.c.bf16 %v1976, %v1975
  %v2009 = vpack.c.bf16 %v1413, %v1411
  %v2010 = vld [vmem:[%s5] sm:$0xf]
  %v2011 = vld [vmem:[%s5 + $0x4] sm:$0xf]
  %v2012 = vld [vmem:[%s5 + $0x8] sm:$0xf]
  %v2013 = vld [vmem:[%s5 + $0xc] sm:$0xf]
  %v2014 = vld [vmem:[%s5 + $0x10] sm:$0xf]
  %v2015 = vld [vmem:[%s5 + $0x14] sm:$0xf]
  %v2016 = vld [vmem:[%s5 + $0x18] sm:$0xf]
  %v2017 = vld [vmem:[%s5 + $0x1c] sm:$0xf]
  %v2018 = vld [vmem:[%s5 + $0x20] sm:$0xf]
  %v2019 = vld [vmem:[%s5 + $0x24] sm:$0xf]
  %v2020 = vld [vmem:[%s5 + $0x28] sm:$0xf]
  %v2021 = vld [vmem:[%s5 + $0x2c] sm:$0xf]
  %v2022 = vld [vmem:[%s5 + $0x30] sm:$0xf]
  %v2023 = vld [vmem:[%s5 + $0x34] sm:$0xf]
  %v2024 = vld [vmem:[%s5 + $0x38] sm:$0xf]
  %v2025 = vld [vmem:[%s5 + $0x3c] sm:$0xf]
  %v2026 = vld [vmem:[%s5 + $0x40] sm:$0xf]
  %v2027 = vld [vmem:[%s5 + $0x44] sm:$0xf]
  %v2028 = vld [vmem:[%s5 + $0x48] sm:$0xf]
  %v2029 = vld [vmem:[%s5 + $0x4c] sm:$0xf]
  %v2030 = vld [vmem:[%s5 + $0x50] sm:$0xf]
  %v2031 = vld [vmem:[%s5 + $0x54] sm:$0xf]
  %v2032 = vld [vmem:[%s5 + $0x58] sm:$0xf]
  %v2033 = vld [vmem:[%s5 + $0x5c] sm:$0xf]
  %v2034 = vld [vmem:[%s5 + $0x60] sm:$0xf]
  %v2035 = vld [vmem:[%s5 + $0x64] sm:$0xf]
  %v2036 = vld [vmem:[%s5 + $0x68] sm:$0xf]
  %v2037 = vld [vmem:[%s5 + $0x6c] sm:$0xf]
  %v2038 = vld [vmem:[%s5 + $0x70] sm:$0xf]
  %v2039 = vld [vmem:[%s5 + $0x74] sm:$0xf]
  %v2040 = vld [vmem:[%s5 + $0x78] sm:$0xf]
  %v2041 = vld [vmem:[%s5 + $0x7c] sm:$0xf]
  %v2042 = vld [vmem:[%s5 + $0x80] sm:$0xf]
  %v2043 = vld [vmem:[%s5 + $0x84] sm:$0xf]
  %v2044 = vld [vmem:[%s5 + $0x88] sm:$0xf]
  %v2045 = vld [vmem:[%s5 + $0x8c] sm:$0xf]
  %v2046 = vld [vmem:[%s7] sm:$0x1]
  %v2048 = vlaneseq
  %v2049 = vshrl.u32 %v2048, 7
  %v2050 = vsub.s32 0, %v2049
  %v2051 = vrot.slane %v2046, %v2050
  %v2089 = vunpack.c.l.b16 %v2010
  %v2090 = vunpack.c.l.b16 %v2011
  %v2091 = vunpack.c.l.b16 %v2012
  %v2092 = vunpack.c.l.b16 %v2013
  %v2093 = vunpack.c.l.b16 %v2014
  %v2094 = vunpack.c.l.b16 %v2015
  %v2095 = vunpack.c.l.b16 %v2016
  %v2096 = vunpack.c.l.b16 %v2017
  %v2097 = vunpack.c.l.b16 %v2018
  %v2098 = vunpack.c.l.b16 %v2019
  %v2099 = vunpack.c.l.b16 %v2020
  %v2100 = vunpack.c.l.b16 %v2021
  %v2101 = vunpack.c.l.b16 %v2022
  %v2102 = vunpack.c.l.b16 %v2023
  %v2103 = vunpack.c.l.b16 %v2024
  %v2104 = vunpack.c.l.b16 %v2025
  %v2105 = vunpack.c.l.b16 %v2026
  %v2106 = vunpack.c.l.b16 %v2027
  %v2107 = vunpack.c.l.b16 %v2028
  %v2108 = vunpack.c.l.b16 %v2029
  %v2109 = vunpack.c.l.b16 %v2030
  %v2110 = vunpack.c.l.b16 %v2031
  %v2111 = vunpack.c.l.b16 %v2032
  %v2112 = vunpack.c.l.b16 %v2033
  %v2113 = vunpack.c.l.b16 %v2034
  %v2114 = vunpack.c.l.b16 %v2035
  %v2115 = vunpack.c.l.b16 %v2036
  %v2116 = vunpack.c.l.b16 %v2037
  %v2117 = vunpack.c.l.b16 %v2038
  %v2118 = vunpack.c.l.b16 %v2039
  %v2119 = vunpack.c.l.b16 %v2040
  %v2120 = vunpack.c.l.b16 %v2041
  %v2121 = vunpack.c.l.b16 %v2042
  %v2122 = vunpack.c.l.b16 %v2043
  %v2123 = vunpack.c.l.b16 %v2044
  %v2124 = vunpack.c.l.b16 %v2045
  %v2125 = vpack.c.b16 %v2090, %v2089
  %v2126 = vpack.c.b16 %v2092, %v2091
  %v2127 = vpack.c.b16 %v2094, %v2093
  %v2128 = vpack.c.b16 %v2096, %v2095
  %v2129 = vpack.c.b16 %v2098, %v2097
  %v2130 = vpack.c.b16 %v2100, %v2099
  %v2131 = vpack.c.b16 %v2102, %v2101
  %v2132 = vpack.c.b16 %v2104, %v2103
  %v2133 = vpack.c.b16 %v2106, %v2105
  %v2134 = vpack.c.b16 %v2108, %v2107
  %v2135 = vpack.c.b16 %v2110, %v2109
  %v2136 = vpack.c.b16 %v2112, %v2111
  %v2137 = vpack.c.b16 %v2114, %v2113
  %v2138 = vpack.c.b16 %v2116, %v2115
  %v2139 = vpack.c.b16 %v2118, %v2117
  %v2140 = vpack.c.b16 %v2120, %v2119
  %v2141 = vpack.c.b16 %v2122, %v2121
  %v2142 = vpack.c.b16 %v2124, %v2123
  %v2162 = vsel %vm1684, %v1779, 0
  %v2165 = vsel %vm1684, %v1782, 0
  %v2168 = vsel %vm1684, %v1785, 0
  %v2171 = vsel %vm1684, %v1788, 0
  %v2174 = vsel %vm1684, %v1791, 0
  %v2177 = vsel %vm1684, %v1794, 0
  %v2180 = vsel %vm1684, %v1797, 0
  %v2183 = vsel %vm1684, %v1800, 0
  %2185 = vmatprep.subr.bf16.mxu0 0
  %2186 = vmatpush1.bf16.msra.mxu0 %v2132
  %2187 = vmatprep.subr.bf16.mxu0 0
  %2188 = vmatpush1.bf16.msra.mxu0 %v2131
  %2189 = vmatprep.subr.bf16.mxu0 0
  %2190 = vmatpush1.bf16.msra.mxu0 %v2130
  %2191 = vmatprep.subr.bf16.mxu0 0
  %2192 = vmatpush1.bf16.msra.mxu0 %v2129
  %2193 = vmatprep.subr.bf16.mxu0 0
  %2194 = vmatpush1.bf16.msra.mxu0 %v2128
  %2195 = vmatprep.subr.bf16.mxu0 0
  %2196 = vmatpush1.bf16.msra.mxu0 %v2127
  %2197 = vmatprep.subr.bf16.mxu0 0
  %2198 = vmatpush1.bf16.msra.mxu0 %v2126
  %2199 = vmatprep.subr.bf16.mxu0 0
  %2200 = vmatpush1.bf16.msra.mxu0 %v2125
  %2201 = vmatprep.subr.bf16.mxu0 0
  %2202 = vmatpush2.bf16.msra.mxu0 %v2140
  %2203 = vmatprep.subr.bf16.mxu0 0
  %2204 = vmatpush2.bf16.msra.mxu0 %v2139
  %2205 = vmatprep.subr.bf16.mxu0 0
  %2206 = vmatpush2.bf16.msra.mxu0 %v2138
  %2207 = vmatprep.subr.bf16.mxu0 0
  %2208 = vmatpush2.bf16.msra.mxu0 %v2137
  %2209 = vmatprep.subr.bf16.mxu0 0
  %2210 = vmatpush2.bf16.msra.mxu0 %v2136
  %2211 = vmatprep.subr.bf16.mxu0 0
  %2212 = vmatpush2.bf16.msra.mxu0 %v2135
  %2213 = vmatprep.subr.bf16.mxu0 0
  %2214 = vmatpush2.bf16.msra.mxu0 %v2134
  %2215 = vmatprep.subr.bf16.mxu0 0
  %2216 = vmatpush2.bf16.msra.mxu0 %v2133
  %2217 = vmatprep.mubr.bf16.mxu0 %v1778
  %2218 = vmatmul.mubr.bf16.gmra.mxu0 %v1777
  %v2219 = vpop.f32.mrf.mxu0
  %v2220 = vadd.f32 %v2051, %v2219
  %v2221 = vpop.f32.mrf.mxu0
  %v2222 = vpop.f32.mrf.mxu0
  %v2223 = vadd.f32 %v2051, %v2222
  %v2224 = vpop.f32.mrf.mxu0
  %2225 = vmatprep.mubr.bf16.mxu0 %v1781
  %2226 = vmatmul.mubr.bf16.gmra.mxu0 %v1780
  %v2227 = vpop.f32.mrf.mxu0
  %v2228 = vadd.f32 %v2051, %v2227
  %v2229 = vpop.f32.mrf.mxu0
  %v2230 = vpop.f32.mrf.mxu0
  %v2231 = vadd.f32 %v2051, %v2230
  %v2232 = vpop.f32.mrf.mxu0
  %2233 = vmatprep.mubr.bf16.mxu0 %v1784
  %2234 = vmatmul.mubr.bf16.gmra.mxu0 %v1783
  %v2235 = vpop.f32.mrf.mxu0
  %v2236 = vadd.f32 %v2051, %v2235
  %v2237 = vpop.f32.mrf.mxu0
  %v2238 = vpop.f32.mrf.mxu0
  %v2239 = vadd.f32 %v2051, %v2238
  %v2240 = vpop.f32.mrf.mxu0
  %2241 = vmatprep.mubr.bf16.mxu0 %v1787
  %2242 = vmatmul.mubr.bf16.gmra.mxu0 %v1786
  %v2243 = vpop.f32.mrf.mxu0
  %v2244 = vadd.f32 %v2051, %v2243
  %v2245 = vpop.f32.mrf.mxu0
  %v2246 = vpop.f32.mrf.mxu0
  %v2247 = vadd.f32 %v2051, %v2246
  %v2248 = vpop.f32.mrf.mxu0
  %2249 = vmatprep.mubr.bf16.mxu0 %v1790
  %2250 = vmatmul.mubr.bf16.gmra.mxu0 %v1789
  %v2251 = vpop.f32.mrf.mxu0
  %v2252 = vadd.f32 %v2051, %v2251
  %v2253 = vpop.f32.mrf.mxu0
  %v2254 = vpop.f32.mrf.mxu0
  %v2255 = vadd.f32 %v2051, %v2254
  %v2256 = vpop.f32.mrf.mxu0
  %2257 = vmatprep.mubr.bf16.mxu0 %v1793
  %2258 = vmatmul.mubr.bf16.gmra.mxu0 %v1792
  %v2259 = vpop.f32.mrf.mxu0
  %v2260 = vadd.f32 %v2051, %v2259
  %v2261 = vpop.f32.mrf.mxu0
  %v2262 = vpop.f32.mrf.mxu0
  %v2263 = vadd.f32 %v2051, %v2262
  %v2264 = vpop.f32.mrf.mxu0
  %2265 = vmatprep.mubr.bf16.mxu0 %v1796
  %2266 = vmatmul.mubr.bf16.gmra.mxu0 %v1795
  %v2267 = vpop.f32.mrf.mxu0
  %v2268 = vadd.f32 %v2051, %v2267
  %v2269 = vpop.f32.mrf.mxu0
  %v2270 = vpop.f32.mrf.mxu0
  %v2271 = vadd.f32 %v2051, %v2270
  %v2272 = vpop.f32.mrf.mxu0
  %2273 = vmatprep.mubr.bf16.mxu0 %v1799
  %2274 = vmatmul.mubr.bf16.gmra.mxu0 %v1798
  %v2275 = vpop.f32.mrf.mxu0
  %v2276 = vadd.f32 %v2051, %v2275
  %v2277 = vpop.f32.mrf.mxu0
  %v2278 = vpop.f32.mrf.mxu0
  %v2279 = vadd.f32 %v2051, %v2278
  %v2280 = vpop.f32.mrf.mxu0
  %2281 = vdwg.mxu0
  %2282 = vmatprep.subr.bf16.mxu0 0
  %2283 = vmatpush1.bf16.msra.mxu0 0
  %2284 = vmatprep.subr.bf16.mxu0 0
  %2285 = vmatpush1.bf16.msra.mxu0 0
  %2286 = vmatprep.subr.bf16.mxu0 0
  %2287 = vmatpush1.bf16.msra.mxu0 0
  %2288 = vmatprep.subr.bf16.mxu0 0
  %2289 = vmatpush1.bf16.msra.mxu0 0
  %2290 = vmatprep.subr.bf16.mxu0 0
  %2291 = vmatpush1.bf16.msra.mxu0 0
  %2292 = vmatprep.subr.bf16.mxu0 0
  %2293 = vmatpush1.bf16.msra.mxu0 0
  %2294 = vmatprep.subr.bf16.mxu0 0
  %2295 = vmatpush1.bf16.msra.mxu0 %v2142
  %2296 = vmatprep.subr.bf16.mxu0 0
  %2297 = vmatpush1.bf16.msra.mxu0 %v2141
  %2298 = vmatprep.subr.bf16.mxu0 0
  %2299 = vmatpush2.bf16.msra.mxu0 0
  %2300 = vmatprep.subr.bf16.mxu0 0
  %2301 = vmatpush2.bf16.msra.mxu0 0
  %2302 = vmatprep.subr.bf16.mxu0 0
  %2303 = vmatpush2.bf16.msra.mxu0 0
  %2304 = vmatprep.subr.bf16.mxu0 0
  %2305 = vmatpush2.bf16.msra.mxu0 0
  %2306 = vmatprep.subr.bf16.mxu0 0
  %2307 = vmatpush2.bf16.msra.mxu0 0
  %2308 = vmatprep.subr.bf16.mxu0 0
  %2309 = vmatpush2.bf16.msra.mxu0 0
  %2310 = vmatprep.subr.bf16.mxu0 0
  %2311 = vmatpush2.bf16.msra.mxu0 0
  %2312 = vmatprep.subr.bf16.mxu0 0
  %2313 = vmatpush2.bf16.msra.mxu0 0
  %2314 = vmatprep.mubr.bf16.mxu0 0
  %2315 = vmatmul.mubr.bf16.gmra.mxu0 %v2162
  %v2316 = vpop.f32.mrf.mxu0
  %v2317 = vadd.f32 %v2220, %v2316
  %v2318 = vpop.f32.mrf.mxu0
  %v2319 = vpop.f32.mrf.mxu0
  %v2320 = vadd.f32 %v2223, %v2319
  %v2321 = vpop.f32.mrf.mxu0
  %2322 = vmatprep.mubr.bf16.mxu0 0
  %2323 = vmatmul.mubr.bf16.gmra.mxu0 %v2165
  %v2324 = vpop.f32.mrf.mxu0
  %v2325 = vadd.f32 %v2228, %v2324
  %v2326 = vpop.f32.mrf.mxu0
  %v2327 = vpop.f32.mrf.mxu0
  %v2328 = vadd.f32 %v2231, %v2327
  %v2329 = vpop.f32.mrf.mxu0
  %2330 = vmatprep.mubr.bf16.mxu0 0
  %2331 = vmatmul.mubr.bf16.gmra.mxu0 %v2168
  %v2332 = vpop.f32.mrf.mxu0
  %v2333 = vadd.f32 %v2236, %v2332
  %v2334 = vpop.f32.mrf.mxu0
  %v2335 = vpop.f32.mrf.mxu0
  %v2336 = vadd.f32 %v2239, %v2335
  %v2337 = vpop.f32.mrf.mxu0
  %2338 = vmatprep.mubr.bf16.mxu0 0
  %2339 = vmatmul.mubr.bf16.gmra.mxu0 %v2171
  %v2340 = vpop.f32.mrf.mxu0
  %v2341 = vadd.f32 %v2244, %v2340
  %v2342 = vpop.f32.mrf.mxu0
  %v2343 = vpop.f32.mrf.mxu0
  %v2344 = vadd.f32 %v2247, %v2343
  %v2345 = vpop.f32.mrf.mxu0
  %2346 = vmatprep.mubr.bf16.mxu0 0
  %2347 = vmatmul.mubr.bf16.gmra.mxu0 %v2174
  %v2348 = vpop.f32.mrf.mxu0
  %v2349 = vadd.f32 %v2252, %v2348
  %v2350 = vpop.f32.mrf.mxu0
  %v2351 = vpop.f32.mrf.mxu0
  %v2352 = vadd.f32 %v2255, %v2351
  %v2353 = vpop.f32.mrf.mxu0
  %2354 = vmatprep.mubr.bf16.mxu0 0
  %2355 = vmatmul.mubr.bf16.gmra.mxu0 %v2177
  %v2356 = vpop.f32.mrf.mxu0
  %v2357 = vadd.f32 %v2260, %v2356
  %v2358 = vpop.f32.mrf.mxu0
  %v2359 = vpop.f32.mrf.mxu0
  %v2360 = vadd.f32 %v2263, %v2359
  %v2361 = vpop.f32.mrf.mxu0
  %2362 = vmatprep.mubr.bf16.mxu0 0
  %2363 = vmatmul.mubr.bf16.gmra.mxu0 %v2180
  %v2364 = vpop.f32.mrf.mxu0
  %v2365 = vadd.f32 %v2268, %v2364
  %v2366 = vpop.f32.mrf.mxu0
  %v2367 = vpop.f32.mrf.mxu0
  %v2368 = vadd.f32 %v2271, %v2367
  %v2369 = vpop.f32.mrf.mxu0
  %2370 = vmatprep.mubr.bf16.mxu0 0
  %2371 = vmatmul.mubr.bf16.gmra.mxu0 %v2183
  %v2372 = vpop.f32.mrf.mxu0
  %v2373 = vadd.f32 %v2276, %v2372
  %v2374 = vpop.f32.mrf.mxu0
  %v2375 = vpop.f32.mrf.mxu0
  %v2376 = vadd.f32 %v2279, %v2375
  %v2377 = vpop.f32.mrf.mxu0
  %2378 = vdwg.mxu0
  %vm2379 = vcmp.ge.f32.partialorder %v2317, 0.0
  %vm2380 = vcmp.ge.f32.partialorder %v2320, 0.0
  %vm2381 = vcmp.ge.f32.partialorder %v2325, 0.0
  %vm2382 = vcmp.ge.f32.partialorder %v2328, 0.0
  %vm2383 = vcmp.ge.f32.partialorder %v2333, 0.0
  %vm2384 = vcmp.ge.f32.partialorder %v2336, 0.0
  %vm2385 = vcmp.ge.f32.partialorder %v2341, 0.0
  %vm2386 = vcmp.ge.f32.partialorder %v2344, 0.0
  %vm2387 = vcmp.ge.f32.partialorder %v2349, 0.0
  %vm2388 = vcmp.ge.f32.partialorder %v2352, 0.0
  %vm2389 = vcmp.ge.f32.partialorder %v2357, 0.0
  %vm2390 = vcmp.ge.f32.partialorder %v2360, 0.0
  %vm2391 = vcmp.ge.f32.partialorder %v2365, 0.0
  %vm2392 = vcmp.ge.f32.partialorder %v2368, 0.0
  %vm2393 = vcmp.ge.f32.partialorder %v2373, 0.0
  %vm2394 = vcmp.ge.f32.partialorder %v2376, 0.0
  %v2395 = vmul.f32 %v2317, 0.2
  %v2396 = vmul.f32 %v2320, 0.2
  %v2397 = vmul.f32 %v2325, 0.2
  %v2398 = vmul.f32 %v2328, 0.2
  %v2399 = vmul.f32 %v2333, 0.2
  %v2400 = vmul.f32 %v2336, 0.2
  %v2401 = vmul.f32 %v2341, 0.2
  %v2402 = vmul.f32 %v2344, 0.2
  %v2403 = vmul.f32 %v2349, 0.2
  %v2404 = vmul.f32 %v2352, 0.2
  %v2405 = vmul.f32 %v2357, 0.2
  %v2406 = vmul.f32 %v2360, 0.2
  %v2407 = vmul.f32 %v2365, 0.2
  %v2408 = vmul.f32 %v2368, 0.2
  %v2409 = vmul.f32 %v2373, 0.2
  %v2410 = vmul.f32 %v2376, 0.2
  %v2411 = vsel %vm2379, %v2317, %v2395
  %v2412 = vsel %vm2380, %v2320, %v2396
  %v2413 = vsel %vm2381, %v2325, %v2397
  %v2414 = vsel %vm2382, %v2328, %v2398
  %v2415 = vsel %vm2383, %v2333, %v2399
  %v2416 = vsel %vm2384, %v2336, %v2400
  %v2417 = vsel %vm2385, %v2341, %v2401
  %v2418 = vsel %vm2386, %v2344, %v2402
  %v2419 = vsel %vm2387, %v2349, %v2403
  %v2420 = vsel %vm2388, %v2352, %v2404
  %v2421 = vsel %vm2389, %v2357, %v2405
  %v2422 = vsel %vm2390, %v2360, %v2406
  %v2423 = vsel %vm2391, %v2365, %v2407
  %v2424 = vsel %vm2392, %v2368, %v2408
  %v2425 = vsel %vm2393, %v2373, %v2409
  %v2426 = vsel %vm2394, %v2376, %v2410
  %v2427 = vld [vmem:[%s6] sm:$0xf]
  %v2428 = vld [vmem:[%s6 + $0x4] sm:$0xf]
  %v2429 = vld [vmem:[%s6 + $0x8] sm:$0xf]
  %v2430 = vld [vmem:[%s6 + $0xc] sm:$0xf]
  %v2431 = vld [vmem:[%s6 + $0x10] sm:$0xf]
  %v2432 = vld [vmem:[%s6 + $0x14] sm:$0xf]
  %v2433 = vld [vmem:[%s6 + $0x18] sm:$0xf]
  %v2434 = vld [vmem:[%s6 + $0x1c] sm:$0xf]
  %v2435 = vld [vmem:[%s6 + $0x20] sm:$0xf]
  %v2436 = vld [vmem:[%s6 + $0x24] sm:$0xf]
  %v2437 = vld [vmem:[%s6 + $0x28] sm:$0xf]
  %v2438 = vld [vmem:[%s6 + $0x2c] sm:$0xf]
  %v2439 = vld [vmem:[%s6 + $0x30] sm:$0xf]
  %v2440 = vld [vmem:[%s6 + $0x34] sm:$0xf]
  %v2441 = vld [vmem:[%s6 + $0x38] sm:$0xf]
  %v2442 = vld [vmem:[%s6 + $0x3c] sm:$0xf]
  %v2443 = vld [vmem:[%s6 + $0x40] sm:$0xf]
  %v2444 = vld [vmem:[%s6 + $0x44] sm:$0xf]
  %v2445 = vld [vmem:[%s6 + $0x48] sm:$0xf]
  %v2446 = vld [vmem:[%s6 + $0x4c] sm:$0xf]
  %v2447 = vld [vmem:[%s6 + $0x50] sm:$0xf]
  %v2448 = vld [vmem:[%s6 + $0x54] sm:$0xf]
  %v2449 = vld [vmem:[%s6 + $0x58] sm:$0xf]
  %v2450 = vld [vmem:[%s6 + $0x5c] sm:$0xf]
  %v2451 = vld [vmem:[%s6 + $0x60] sm:$0xf]
  %v2452 = vld [vmem:[%s6 + $0x64] sm:$0xf]
  %v2453 = vld [vmem:[%s6 + $0x68] sm:$0xf]
  %v2454 = vld [vmem:[%s6 + $0x6c] sm:$0xf]
  %v2455 = vld [vmem:[%s6 + $0x70] sm:$0xf]
  %v2456 = vld [vmem:[%s6 + $0x74] sm:$0xf]
  %v2457 = vld [vmem:[%s6 + $0x78] sm:$0xf]
  %v2458 = vld [vmem:[%s6 + $0x7c] sm:$0xf]
  %v2459 = vld [vmem:[%s6 + $0x80] sm:$0xf]
  %v2460 = vld [vmem:[%s6 + $0x84] sm:$0xf]
  %v2461 = vld [vmem:[%s6 + $0x88] sm:$0xf]
  %v2462 = vld [vmem:[%s6 + $0x8c] sm:$0xf]
  %v2463 = vld [vmem:[%s6 + $0x90] sm:$0xf]
  %v2464 = vld [vmem:[%s6 + $0x94] sm:$0xf]
  %v2465 = vld [vmem:[%s6 + $0x98] sm:$0xf]
  %v2466 = vld [vmem:[%s6 + $0x9c] sm:$0xf]
  %v2467 = vld [vmem:[%s6 + $0xa0] sm:$0xf]
  %v2468 = vld [vmem:[%s6 + $0xa4] sm:$0xf]
  %v2469 = vld [vmem:[%s6 + $0xa8] sm:$0xf]
  %v2470 = vld [vmem:[%s6 + $0xac] sm:$0xf]
  %v2471 = vld [vmem:[%s6 + $0xb0] sm:$0xf]
  %v2472 = vld [vmem:[%s6 + $0xb4] sm:$0xf]
  %v2473 = vld [vmem:[%s6 + $0xb8] sm:$0xf]
  %v2474 = vld [vmem:[%s6 + $0xbc] sm:$0xf]
  %v2475 = vld [vmem:[%s6 + $0xc0] sm:$0xf]
  %v2476 = vld [vmem:[%s6 + $0xc4] sm:$0xf]
  %v2477 = vld [vmem:[%s6 + $0xc8] sm:$0xf]
  %v2478 = vld [vmem:[%s6 + $0xcc] sm:$0xf]
  %v2479 = vld [vmem:[%s6 + $0xd0] sm:$0xf]
  %v2480 = vld [vmem:[%s6 + $0xd4] sm:$0xf]
  %v2481 = vld [vmem:[%s6 + $0xd8] sm:$0xf]
  %v2482 = vld [vmem:[%s6 + $0xdc] sm:$0xf]
  %v2483 = vld [vmem:[%s6 + $0xe0] sm:$0xf]
  %v2484 = vld [vmem:[%s6 + $0xe4] sm:$0xf]
  %v2485 = vld [vmem:[%s6 + $0xe8] sm:$0xf]
  %v2486 = vld [vmem:[%s6 + $0xec] sm:$0xf]
  %v2487 = vld [vmem:[%s6 + $0xf0] sm:$0xf]
  %v2488 = vld [vmem:[%s6 + $0xf4] sm:$0xf]
  %v2489 = vld [vmem:[%s6 + $0xf8] sm:$0xf]
  %v2490 = vld [vmem:[%s6 + $0xfc] sm:$0xf]
  %v2491 = vld [vmem:[%s6 + $0x100] sm:$0xf]
  %v2492 = vld [vmem:[%s6 + $0x104] sm:$0xf]
  %v2493 = vld [vmem:[%s6 + $0x108] sm:$0xf]
  %v2494 = vld [vmem:[%s6 + $0x10c] sm:$0xf]
  %v2495 = vld [vmem:[%s6 + $0x110] sm:$0xf]
  %v2496 = vld [vmem:[%s6 + $0x114] sm:$0xf]
  %v2497 = vld [vmem:[%s6 + $0x118] sm:$0xf]
  %v2498 = vld [vmem:[%s6 + $0x11c] sm:$0xf]
  %v2499 = vld [vmem:[%s8] sm:$0x1]
  %v2501 = vlaneseq
  %v2502 = vshrl.u32 %v2501, 7
  %v2503 = vsub.s32 0, %v2502
  %v2504 = vrot.slane %v2499, %v2503
  %v2578 = vunpack.c.l.b16 %v2427
  %v2579 = vunpack.c.l.b16 %v2428
  %v2580 = vunpack.c.l.b16 %v2429
  %v2581 = vunpack.c.l.b16 %v2430
  %v2582 = vunpack.c.l.b16 %v2431
  %v2583 = vunpack.c.l.b16 %v2432
  %v2584 = vunpack.c.l.b16 %v2433
  %v2585 = vunpack.c.l.b16 %v2434
  %v2586 = vunpack.c.l.b16 %v2435
  %v2587 = vunpack.c.l.b16 %v2436
  %v2588 = vunpack.c.l.b16 %v2437
  %v2589 = vunpack.c.l.b16 %v2438
  %v2590 = vunpack.c.l.b16 %v2439
  %v2591 = vunpack.c.l.b16 %v2440
  %v2592 = vunpack.c.l.b16 %v2441
  %v2593 = vunpack.c.l.b16 %v2442
  %v2594 = vunpack.c.l.b16 %v2443
  %v2595 = vunpack.c.l.b16 %v2444
  %v2596 = vunpack.c.l.b16 %v2445
  %v2597 = vunpack.c.l.b16 %v2446
  %v2598 = vunpack.c.l.b16 %v2447
  %v2599 = vunpack.c.l.b16 %v2448
  %v2600 = vunpack.c.l.b16 %v2449
  %v2601 = vunpack.c.l.b16 %v2450
  %v2602 = vunpack.c.l.b16 %v2451
  %v2603 = vunpack.c.l.b16 %v2452
  %v2604 = vunpack.c.l.b16 %v2453
  %v2605 = vunpack.c.l.b16 %v2454
  %v2606 = vunpack.c.l.b16 %v2455
  %v2607 = vunpack.c.l.b16 %v2456
  %v2608 = vunpack.c.l.b16 %v2457
  %v2609 = vunpack.c.l.b16 %v2458
  %v2610 = vunpack.c.l.b16 %v2459
  %v2611 = vunpack.c.l.b16 %v2460
  %v2612 = vunpack.c.l.b16 %v2461
  %v2613 = vunpack.c.l.b16 %v2462
  %v2614 = vunpack.c.l.b16 %v2463
  %v2615 = vunpack.c.l.b16 %v2464
  %v2616 = vunpack.c.l.b16 %v2465
  %v2617 = vunpack.c.l.b16 %v2466
  %v2618 = vunpack.c.l.b16 %v2467
  %v2619 = vunpack.c.l.b16 %v2468
  %v2620 = vunpack.c.l.b16 %v2469
  %v2621 = vunpack.c.l.b16 %v2470
  %v2622 = vunpack.c.l.b16 %v2471
  %v2623 = vunpack.c.l.b16 %v2472
  %v2624 = vunpack.c.l.b16 %v2473
  %v2625 = vunpack.c.l.b16 %v2474
  %v2626 = vunpack.c.l.b16 %v2475
  %v2627 = vunpack.c.l.b16 %v2476
  %v2628 = vunpack.c.l.b16 %v2477
  %v2629 = vunpack.c.l.b16 %v2478
  %v2630 = vunpack.c.l.b16 %v2479
  %v2631 = vunpack.c.l.b16 %v2480
  %v2632 = vunpack.c.l.b16 %v2481
  %v2633 = vunpack.c.l.b16 %v2482
  %v2634 = vunpack.c.l.b16 %v2483
  %v2635 = vunpack.c.l.b16 %v2484
  %v2636 = vunpack.c.l.b16 %v2485
  %v2637 = vunpack.c.l.b16 %v2486
  %v2638 = vunpack.c.l.b16 %v2487
  %v2639 = vunpack.c.l.b16 %v2488
  %v2640 = vunpack.c.l.b16 %v2489
  %v2641 = vunpack.c.l.b16 %v2490
  %v2642 = vunpack.c.l.b16 %v2491
  %v2643 = vunpack.c.l.b16 %v2492
  %v2644 = vunpack.c.l.b16 %v2493
  %v2645 = vunpack.c.l.b16 %v2494
  %v2646 = vunpack.c.l.b16 %v2495
  %v2647 = vunpack.c.l.b16 %v2496
  %v2648 = vunpack.c.l.b16 %v2497
  %v2649 = vunpack.c.l.b16 %v2498
  %v2650 = vpack.c.b16 %v2579, %v2578
  %v2651 = vpack.c.b16 %v2581, %v2580
  %v2652 = vpack.c.b16 %v2583, %v2582
  %v2653 = vpack.c.b16 %v2585, %v2584
  %v2654 = vpack.c.b16 %v2587, %v2586
  %v2655 = vpack.c.b16 %v2589, %v2588
  %v2656 = vpack.c.b16 %v2591, %v2590
  %v2657 = vpack.c.b16 %v2593, %v2592
  %v2658 = vpack.c.b16 %v2595, %v2594
  %v2659 = vpack.c.b16 %v2597, %v2596
  %v2660 = vpack.c.b16 %v2599, %v2598
  %v2661 = vpack.c.b16 %v2601, %v2600
  %v2662 = vpack.c.b16 %v2603, %v2602
  %v2663 = vpack.c.b16 %v2605, %v2604
  %v2664 = vpack.c.b16 %v2607, %v2606
  %v2665 = vpack.c.b16 %v2609, %v2608
  %v2666 = vpack.c.b16 %v2611, %v2610
  %v2667 = vpack.c.b16 %v2613, %v2612
  %v2668 = vpack.c.b16 %v2615, %v2614
  %v2669 = vpack.c.b16 %v2617, %v2616
  %v2670 = vpack.c.b16 %v2619, %v2618
  %v2671 = vpack.c.b16 %v2621, %v2620
  %v2672 = vpack.c.b16 %v2623, %v2622
  %v2673 = vpack.c.b16 %v2625, %v2624
  %v2674 = vpack.c.b16 %v2627, %v2626
  %v2675 = vpack.c.b16 %v2629, %v2628
  %v2676 = vpack.c.b16 %v2631, %v2630
  %v2677 = vpack.c.b16 %v2633, %v2632
  %v2678 = vpack.c.b16 %v2635, %v2634
  %v2679 = vpack.c.b16 %v2637, %v2636
  %v2680 = vpack.c.b16 %v2639, %v2638
  %v2681 = vpack.c.b16 %v2641, %v2640
  %v2682 = vpack.c.b16 %v2643, %v2642
  %v2683 = vpack.c.b16 %v2645, %v2644
  %v2684 = vpack.c.b16 %v2647, %v2646
  %v2685 = vpack.c.b16 %v2649, %v2648
  %v2723 = vsel %vm1698, %v1981, 0
  %v2726 = vsel %vm1698, %v1985, 0
  %v2729 = vsel %vm1698, %v1989, 0
  %v2732 = vsel %vm1698, %v1993, 0
  %v2735 = vsel %vm1698, %v1997, 0
  %v2738 = vsel %vm1698, %v2001, 0
  %v2741 = vsel %vm1698, %v2005, 0
  %v2744 = vsel %vm1698, %v2009, 0
  %2746 = vmatprep.subr.bf16.mxu0 0
  %2747 = vmatpush1.bf16.msra.mxu0 %v2657
  %2748 = vmatprep.subr.bf16.mxu0 0
  %2749 = vmatpush1.bf16.msra.mxu0 %v2656
  %2750 = vmatprep.subr.bf16.mxu0 0
  %2751 = vmatpush1.bf16.msra.mxu0 %v2655
  %2752 = vmatprep.subr.bf16.mxu0 0
  %2753 = vmatpush1.bf16.msra.mxu0 %v2654
  %2754 = vmatprep.subr.bf16.mxu0 0
  %2755 = vmatpush1.bf16.msra.mxu0 %v2653
  %2756 = vmatprep.subr.bf16.mxu0 0
  %2757 = vmatpush1.bf16.msra.mxu0 %v2652
  %2758 = vmatprep.subr.bf16.mxu0 0
  %2759 = vmatpush1.bf16.msra.mxu0 %v2651
  %2760 = vmatprep.subr.bf16.mxu0 0
  %2761 = vmatpush1.bf16.msra.mxu0 %v2650
  %2762 = vmatprep.subr.bf16.mxu0 0
  %2763 = vmatpush2.bf16.msra.mxu0 %v2665
  %2764 = vmatprep.subr.bf16.mxu0 0
  %2765 = vmatpush2.bf16.msra.mxu0 %v2664
  %2766 = vmatprep.subr.bf16.mxu0 0
  %2767 = vmatpush2.bf16.msra.mxu0 %v2663
  %2768 = vmatprep.subr.bf16.mxu0 0
  %2769 = vmatpush2.bf16.msra.mxu0 %v2662
  %2770 = vmatprep.subr.bf16.mxu0 0
  %2771 = vmatpush2.bf16.msra.mxu0 %v2661
  %2772 = vmatprep.subr.bf16.mxu0 0
  %2773 = vmatpush2.bf16.msra.mxu0 %v2660
  %2774 = vmatprep.subr.bf16.mxu0 0
  %2775 = vmatpush2.bf16.msra.mxu0 %v2659
  %2776 = vmatprep.subr.bf16.mxu0 0
  %2777 = vmatpush2.bf16.msra.mxu0 %v2658
  %2778 = vmatprep.mubr.bf16.mxu0 %v1978
  %2779 = vmatmul.mubr.bf16.gmra.mxu0 %v1977
  %v2780 = vpop.f32.mrf.mxu0
  %v2781 = vadd.f32 %v2504, %v2780
  %v2782 = vpop.f32.mrf.mxu0
  %v2783 = vpop.f32.mrf.mxu0
  %v2784 = vadd.f32 %v2504, %v2783
  %v2785 = vpop.f32.mrf.mxu0
  %2786 = vmatprep.mubr.bf16.mxu0 %v1982
  %2787 = vmatmul.mubr.bf16.gmra.mxu0 %v1977
  %v2788 = vpop.f32.mrf.mxu0
  %v2789 = vadd.f32 %v2504, %v2788
  %v2790 = vpop.f32.mrf.mxu0
  %v2791 = vpop.f32.mrf.mxu0
  %v2792 = vadd.f32 %v2504, %v2791
  %v2793 = vpop.f32.mrf.mxu0
  %2794 = vmatprep.mubr.bf16.mxu0 %v1986
  %2795 = vmatmul.mubr.bf16.gmra.mxu0 %v1980
  %v2796 = vpop.f32.mrf.mxu0
  %v2797 = vadd.f32 %v2504, %v2796
  %v2798 = vpop.f32.mrf.mxu0
  %v2799 = vpop.f32.mrf.mxu0
  %v2800 = vadd.f32 %v2504, %v2799
  %v2801 = vpop.f32.mrf.mxu0
  %2802 = vmatprep.mubr.bf16.mxu0 %v1990
  %2803 = vmatmul.mubr.bf16.gmra.mxu0 %v1984
  %v2804 = vpop.f32.mrf.mxu0
  %v2805 = vadd.f32 %v2504, %v2804
  %v2806 = vpop.f32.mrf.mxu0
  %v2807 = vpop.f32.mrf.mxu0
  %v2808 = vadd.f32 %v2504, %v2807
  %v2809 = vpop.f32.mrf.mxu0
  %2810 = vmatprep.mubr.bf16.mxu0 %v1994
  %2811 = vmatmul.mubr.bf16.gmra.mxu0 %v1988
  %v2812 = vpop.f32.mrf.mxu0
  %v2813 = vadd.f32 %v2504, %v2812
  %v2814 = vpop.f32.mrf.mxu0
  %v2815 = vpop.f32.mrf.mxu0
  %v2816 = vadd.f32 %v2504, %v2815
  %v2817 = vpop.f32.mrf.mxu0
  %2818 = vmatprep.mubr.bf16.mxu0 %v1998
  %2819 = vmatmul.mubr.bf16.gmra.mxu0 %v1992
  %v2820 = vpop.f32.mrf.mxu0
  %v2821 = vadd.f32 %v2504, %v2820
  %v2822 = vpop.f32.mrf.mxu0
  %v2823 = vpop.f32.mrf.mxu0
  %v2824 = vadd.f32 %v2504, %v2823
  %v2825 = vpop.f32.mrf.mxu0
  %2826 = vmatprep.mubr.bf16.mxu0 %v2002
  %2827 = vmatmul.mubr.bf16.gmra.mxu0 %v1996
  %v2828 = vpop.f32.mrf.mxu0
  %v2829 = vadd.f32 %v2504, %v2828
  %v2830 = vpop.f32.mrf.mxu0
  %v2831 = vpop.f32.mrf.mxu0
  %v2832 = vadd.f32 %v2504, %v2831
  %v2833 = vpop.f32.mrf.mxu0
  %2834 = vmatprep.mubr.bf16.mxu0 %v2006
  %2835 = vmatmul.mubr.bf16.gmra.mxu0 %v2000
  %v2836 = vpop.f32.mrf.mxu0
  %v2837 = vadd.f32 %v2504, %v2836
  %v2838 = vpop.f32.mrf.mxu0
  %v2839 = vpop.f32.mrf.mxu0
  %v2840 = vadd.f32 %v2504, %v2839
  %v2841 = vpop.f32.mrf.mxu0
  %2842 = vdwg.mxu0
  %2843 = vmatprep.subr.bf16.mxu0 0
  %2844 = vmatpush1.bf16.msra.mxu0 %v2673
  %2845 = vmatprep.subr.bf16.mxu0 0
  %2846 = vmatpush1.bf16.msra.mxu0 %v2672
  %2847 = vmatprep.subr.bf16.mxu0 0
  %2848 = vmatpush1.bf16.msra.mxu0 %v2671
  %2849 = vmatprep.subr.bf16.mxu0 0
  %2850 = vmatpush1.bf16.msra.mxu0 %v2670
  %2851 = vmatprep.subr.bf16.mxu0 0
  %2852 = vmatpush1.bf16.msra.mxu0 %v2669
  %2853 = vmatprep.subr.bf16.mxu0 0
  %2854 = vmatpush1.bf16.msra.mxu0 %v2668
  %2855 = vmatprep.subr.bf16.mxu0 0
  %2856 = vmatpush1.bf16.msra.mxu0 %v2667
  %2857 = vmatprep.subr.bf16.mxu0 0
  %2858 = vmatpush1.bf16.msra.mxu0 %v2666
  %2859 = vmatprep.subr.bf16.mxu0 0
  %2860 = vmatpush2.bf16.msra.mxu0 %v2681
  %2861 = vmatprep.subr.bf16.mxu0 0
  %2862 = vmatpush2.bf16.msra.mxu0 %v2680
  %2863 = vmatprep.subr.bf16.mxu0 0
  %2864 = vmatpush2.bf16.msra.mxu0 %v2679
  %2865 = vmatprep.subr.bf16.mxu0 0
  %2866 = vmatpush2.bf16.msra.mxu0 %v2678
  %2867 = vmatprep.subr.bf16.mxu0 0
  %2868 = vmatpush2.bf16.msra.mxu0 %v2677
  %2869 = vmatprep.subr.bf16.mxu0 0
  %2870 = vmatpush2.bf16.msra.mxu0 %v2676
  %2871 = vmatprep.subr.bf16.mxu0 0
  %2872 = vmatpush2.bf16.msra.mxu0 %v2675
  %2873 = vmatprep.subr.bf16.mxu0 0
  %2874 = vmatpush2.bf16.msra.mxu0 %v2674
  %2875 = vmatprep.mubr.bf16.mxu0 %v1980
  %2876 = vmatmul.mubr.bf16.gmra.mxu0 %v1979
  %v2877 = vpop.f32.mrf.mxu0
  %v2878 = vadd.f32 %v2781, %v2877
  %v2879 = vpop.f32.mrf.mxu0
  %v2880 = vpop.f32.mrf.mxu0
  %v2881 = vadd.f32 %v2784, %v2880
  %v2882 = vpop.f32.mrf.mxu0
  %2883 = vmatprep.mubr.bf16.mxu0 %v1984
  %2884 = vmatmul.mubr.bf16.gmra.mxu0 %v1983
  %v2885 = vpop.f32.mrf.mxu0
  %v2886 = vadd.f32 %v2789, %v2885
  %v2887 = vpop.f32.mrf.mxu0
  %v2888 = vpop.f32.mrf.mxu0
  %v2889 = vadd.f32 %v2792, %v2888
  %v2890 = vpop.f32.mrf.mxu0
  %2891 = vmatprep.mubr.bf16.mxu0 %v1988
  %2892 = vmatmul.mubr.bf16.gmra.mxu0 %v1987
  %v2893 = vpop.f32.mrf.mxu0
  %v2894 = vadd.f32 %v2797, %v2893
  %v2895 = vpop.f32.mrf.mxu0
  %v2896 = vpop.f32.mrf.mxu0
  %v2897 = vadd.f32 %v2800, %v2896
  %v2898 = vpop.f32.mrf.mxu0
  %2899 = vmatprep.mubr.bf16.mxu0 %v1992
  %2900 = vmatmul.mubr.bf16.gmra.mxu0 %v1991
  %v2901 = vpop.f32.mrf.mxu0
  %v2902 = vadd.f32 %v2805, %v2901
  %v2903 = vpop.f32.mrf.mxu0
  %v2904 = vpop.f32.mrf.mxu0
  %v2905 = vadd.f32 %v2808, %v2904
  %v2906 = vpop.f32.mrf.mxu0
  %2907 = vmatprep.mubr.bf16.mxu0 %v1996
  %2908 = vmatmul.mubr.bf16.gmra.mxu0 %v1995
  %v2909 = vpop.f32.mrf.mxu0
  %v2910 = vadd.f32 %v2813, %v2909
  %v2911 = vpop.f32.mrf.mxu0
  %v2912 = vpop.f32.mrf.mxu0
  %v2913 = vadd.f32 %v2816, %v2912
  %v2914 = vpop.f32.mrf.mxu0
  %2915 = vmatprep.mubr.bf16.mxu0 %v2000
  %2916 = vmatmul.mubr.bf16.gmra.mxu0 %v1999
  %v2917 = vpop.f32.mrf.mxu0
  %v2918 = vadd.f32 %v2821, %v2917
  %v2919 = vpop.f32.mrf.mxu0
  %v2920 = vpop.f32.mrf.mxu0
  %v2921 = vadd.f32 %v2824, %v2920
  %v2922 = vpop.f32.mrf.mxu0
  %2923 = vmatprep.mubr.bf16.mxu0 %v2004
  %2924 = vmatmul.mubr.bf16.gmra.mxu0 %v2003
  %v2925 = vpop.f32.mrf.mxu0
  %v2926 = vadd.f32 %v2829, %v2925
  %v2927 = vpop.f32.mrf.mxu0
  %v2928 = vpop.f32.mrf.mxu0
  %v2929 = vadd.f32 %v2832, %v2928
  %v2930 = vpop.f32.mrf.mxu0
  %2931 = vmatprep.mubr.bf16.mxu0 %v2008
  %2932 = vmatmul.mubr.bf16.gmra.mxu0 %v2007
  %v2933 = vpop.f32.mrf.mxu0
  %v2934 = vadd.f32 %v2837, %v2933
  %v2935 = vpop.f32.mrf.mxu0
  %v2936 = vpop.f32.mrf.mxu0
  %v2937 = vadd.f32 %v2840, %v2936
  %v2938 = vpop.f32.mrf.mxu0
  %2939 = vdwg.mxu0
  %2940 = vmatprep.subr.bf16.mxu0 0
  %2941 = vmatpush1.bf16.msra.mxu0 0
  %2942 = vmatprep.subr.bf16.mxu0 0
  %2943 = vmatpush1.bf16.msra.mxu0 0
  %2944 = vmatprep.subr.bf16.mxu0 0
  %2945 = vmatpush1.bf16.msra.mxu0 0
  %2946 = vmatprep.subr.bf16.mxu0 0
  %2947 = vmatpush1.bf16.msra.mxu0 0
  %2948 = vmatprep.subr.bf16.mxu0 0
  %2949 = vmatpush1.bf16.msra.mxu0 %v2685
  %2950 = vmatprep.subr.bf16.mxu0 0
  %2951 = vmatpush1.bf16.msra.mxu0 %v2684
  %2952 = vmatprep.subr.bf16.mxu0 0
  %2953 = vmatpush1.bf16.msra.mxu0 %v2683
  %2954 = vmatprep.subr.bf16.mxu0 0
  %2955 = vmatpush1.bf16.msra.mxu0 %v2682
  %2956 = vmatprep.subr.bf16.mxu0 0
  %2957 = vmatpush2.bf16.msra.mxu0 0
  %2958 = vmatprep.subr.bf16.mxu0 0
  %2959 = vmatpush2.bf16.msra.mxu0 0
  %2960 = vmatprep.subr.bf16.mxu0 0
  %2961 = vmatpush2.bf16.msra.mxu0 0
  %2962 = vmatprep.subr.bf16.mxu0 0
  %2963 = vmatpush2.bf16.msra.mxu0 0
  %2964 = vmatprep.subr.bf16.mxu0 0
  %2965 = vmatpush2.bf16.msra.mxu0 0
  %2966 = vmatprep.subr.bf16.mxu0 0
  %2967 = vmatpush2.bf16.msra.mxu0 0
  %2968 = vmatprep.subr.bf16.mxu0 0
  %2969 = vmatpush2.bf16.msra.mxu0 0
  %2970 = vmatprep.subr.bf16.mxu0 0
  %2971 = vmatpush2.bf16.msra.mxu0 0
  %2972 = vmatprep.mubr.bf16.mxu0 0
  %2973 = vmatmul.mubr.bf16.gmra.mxu0 %v2723
  %v2974 = vpop.f32.mrf.mxu0
  %v2975 = vadd.f32 %v2878, %v2974
  %v2976 = vpop.f32.mrf.mxu0
  %v2977 = vpop.f32.mrf.mxu0
  %v2978 = vadd.f32 %v2881, %v2977
  %v2979 = vpop.f32.mrf.mxu0
  %2980 = vmatprep.mubr.bf16.mxu0 0
  %2981 = vmatmul.mubr.bf16.gmra.mxu0 %v2726
  %v2982 = vpop.f32.mrf.mxu0
  %v2983 = vadd.f32 %v2886, %v2982
  %v2984 = vpop.f32.mrf.mxu0
  %v2985 = vpop.f32.mrf.mxu0
  %v2986 = vadd.f32 %v2889, %v2985
  %v2987 = vpop.f32.mrf.mxu0
  %2988 = vmatprep.mubr.bf16.mxu0 0
  %2989 = vmatmul.mubr.bf16.gmra.mxu0 %v2729
  %v2990 = vpop.f32.mrf.mxu0
  %v2991 = vadd.f32 %v2894, %v2990
  %v2992 = vpop.f32.mrf.mxu0
  %v2993 = vpop.f32.mrf.mxu0
  %v2994 = vadd.f32 %v2897, %v2993
  %v2995 = vpop.f32.mrf.mxu0
  %2996 = vmatprep.mubr.bf16.mxu0 0
  %2997 = vmatmul.mubr.bf16.gmra.mxu0 %v2732
  %v2998 = vpop.f32.mrf.mxu0
  %v2999 = vadd.f32 %v2902, %v2998
  %v3000 = vpop.f32.mrf.mxu0
  %v3001 = vpop.f32.mrf.mxu0
  %v3002 = vadd.f32 %v2905, %v3001
  %v3003 = vpop.f32.mrf.mxu0
  %3004 = vmatprep.mubr.bf16.mxu0 0
  %3005 = vmatmul.mubr.bf16.gmra.mxu0 %v2735
  %v3006 = vpop.f32.mrf.mxu0
  %v3007 = vadd.f32 %v2910, %v3006
  %v3008 = vpop.f32.mrf.mxu0
  %v3009 = vpop.f32.mrf.mxu0
  %v3010 = vadd.f32 %v2913, %v3009
  %v3011 = vpop.f32.mrf.mxu0
  %3012 = vmatprep.mubr.bf16.mxu0 0
  %3013 = vmatmul.mubr.bf16.gmra.mxu0 %v2738
  %v3014 = vpop.f32.mrf.mxu0
  %v3015 = vadd.f32 %v2918, %v3014
  %v3016 = vpop.f32.mrf.mxu0
  %v3017 = vpop.f32.mrf.mxu0
  %v3018 = vadd.f32 %v2921, %v3017
  %v3019 = vpop.f32.mrf.mxu0
  %3020 = vmatprep.mubr.bf16.mxu0 0
  %3021 = vmatmul.mubr.bf16.gmra.mxu0 %v2741
  %v3022 = vpop.f32.mrf.mxu0
  %v3023 = vadd.f32 %v2926, %v3022
  %v3024 = vpop.f32.mrf.mxu0
  %v3025 = vpop.f32.mrf.mxu0
  %v3026 = vadd.f32 %v2929, %v3025
  %v3027 = vpop.f32.mrf.mxu0
  %3028 = vmatprep.mubr.bf16.mxu0 0
  %3029 = vmatmul.mubr.bf16.gmra.mxu0 %v2744
  %v3030 = vpop.f32.mrf.mxu0
  %v3031 = vadd.f32 %v2934, %v3030
  %v3032 = vpop.f32.mrf.mxu0
  %v3033 = vpop.f32.mrf.mxu0
  %v3034 = vadd.f32 %v2937, %v3033
  %v3035 = vpop.f32.mrf.mxu0
  %3036 = vdwg.mxu0
  %vm3037 = vcmp.ge.f32.partialorder %v2975, 0.0
  %vm3038 = vcmp.ge.f32.partialorder %v2978, 0.0
  %vm3039 = vcmp.ge.f32.partialorder %v2983, 0.0
  %vm3040 = vcmp.ge.f32.partialorder %v2986, 0.0
  %vm3041 = vcmp.ge.f32.partialorder %v2991, 0.0
  %vm3042 = vcmp.ge.f32.partialorder %v2994, 0.0
  %vm3043 = vcmp.ge.f32.partialorder %v2999, 0.0
  %vm3044 = vcmp.ge.f32.partialorder %v3002, 0.0
  %vm3045 = vcmp.ge.f32.partialorder %v3007, 0.0
  %vm3046 = vcmp.ge.f32.partialorder %v3010, 0.0
  %vm3047 = vcmp.ge.f32.partialorder %v3015, 0.0
  %vm3048 = vcmp.ge.f32.partialorder %v3018, 0.0
  %vm3049 = vcmp.ge.f32.partialorder %v3023, 0.0
  %vm3050 = vcmp.ge.f32.partialorder %v3026, 0.0
  %vm3051 = vcmp.ge.f32.partialorder %v3031, 0.0
  %vm3052 = vcmp.ge.f32.partialorder %v3034, 0.0
  %v3053 = vmul.f32 %v2975, 0.2
  %v3054 = vmul.f32 %v2978, 0.2
  %v3055 = vmul.f32 %v2983, 0.2
  %v3056 = vmul.f32 %v2986, 0.2
  %v3057 = vmul.f32 %v2991, 0.2
  %v3058 = vmul.f32 %v2994, 0.2
  %v3059 = vmul.f32 %v2999, 0.2
  %v3060 = vmul.f32 %v3002, 0.2
  %v3061 = vmul.f32 %v3007, 0.2
  %v3062 = vmul.f32 %v3010, 0.2
  %v3063 = vmul.f32 %v3015, 0.2
  %v3064 = vmul.f32 %v3018, 0.2
  %v3065 = vmul.f32 %v3023, 0.2
  %v3066 = vmul.f32 %v3026, 0.2
  %v3067 = vmul.f32 %v3031, 0.2
  %v3068 = vmul.f32 %v3034, 0.2
  %v3069 = vsel %vm3037, %v2975, %v3053
  %v3070 = vsel %vm3038, %v2978, %v3054
  %v3071 = vsel %vm3039, %v2983, %v3055
  %v3072 = vsel %vm3040, %v2986, %v3056
  %v3073 = vsel %vm3041, %v2991, %v3057
  %v3074 = vsel %vm3042, %v2994, %v3058
  %v3075 = vsel %vm3043, %v2999, %v3059
  %v3076 = vsel %vm3044, %v3002, %v3060
  %v3077 = vsel %vm3045, %v3007, %v3061
  %v3078 = vsel %vm3046, %v3010, %v3062
  %v3079 = vsel %vm3047, %v3015, %v3063
  %v3080 = vsel %vm3048, %v3018, %v3064
  %v3081 = vsel %vm3049, %v3023, %v3065
  %v3082 = vsel %vm3050, %v3026, %v3066
  %v3083 = vsel %vm3051, %v3031, %v3067
  %v3084 = vsel %vm3052, %v3034, %v3068
  %v3085 = vpack.c.bf16 %v2411, %v2411
  %v3086 = vld [vmem:[%s9] sm:$0xf]
  %v3087 = vld [vmem:[%s9 + $0x4] sm:$0xf]
  %v3088 = vld [vmem:[%s9 + $0x8] sm:$0xf]
  %v3089 = vld [vmem:[%s9 + $0xc] sm:$0xf]
  %v3090 = vld [vmem:[%s9 + $0x10] sm:$0xf]
  %v3091 = vld [vmem:[%s9 + $0x14] sm:$0xf]
  %v3092 = vld [vmem:[%s9 + $0x18] sm:$0xf]
  %v3093 = vld [vmem:[%s9 + $0x1c] sm:$0xf]
  %v3094 = vld [vmem:[%s9 + $0x20] sm:$0xf]
  %v3095 = vld [vmem:[%s9 + $0x24] sm:$0xf]
  %v3096 = vld [vmem:[%s9 + $0x28] sm:$0xf]
  %v3097 = vld [vmem:[%s9 + $0x2c] sm:$0xf]
  %v3098 = vld [vmem:[%s9 + $0x30] sm:$0xf]
  %v3099 = vld [vmem:[%s9 + $0x34] sm:$0xf]
  %v3100 = vld [vmem:[%s9 + $0x38] sm:$0xf]
  %v3101 = vld [vmem:[%s9 + $0x3c] sm:$0xf]
  %v3102 = vpack.c.bf16 %v3069, %v3069
  %v3103 = vld [vmem:[%s10] sm:$0xf]
  %v3104 = vld [vmem:[%s10 + $0x4] sm:$0xf]
  %v3105 = vld [vmem:[%s10 + $0x8] sm:$0xf]
  %v3106 = vld [vmem:[%s10 + $0xc] sm:$0xf]
  %v3107 = vld [vmem:[%s10 + $0x10] sm:$0xf]
  %v3108 = vld [vmem:[%s10 + $0x14] sm:$0xf]
  %v3109 = vld [vmem:[%s10 + $0x18] sm:$0xf]
  %v3110 = vld [vmem:[%s10 + $0x1c] sm:$0xf]
  %v3111 = vld [vmem:[%s10 + $0x20] sm:$0xf]
  %v3112 = vld [vmem:[%s10 + $0x24] sm:$0xf]
  %v3113 = vld [vmem:[%s10 + $0x28] sm:$0xf]
  %v3114 = vld [vmem:[%s10 + $0x2c] sm:$0xf]
  %v3115 = vld [vmem:[%s10 + $0x30] sm:$0xf]
  %v3116 = vld [vmem:[%s10 + $0x34] sm:$0xf]
  %v3117 = vld [vmem:[%s10 + $0x38] sm:$0xf]
  %v3118 = vld [vmem:[%s10 + $0x3c] sm:$0xf]
  %v3119 = vpack.c.bf16 %v2412, %v2412
  %s3120 = scalar_lea.vmem %s9, 64
  %v3121 = vld [vmem:[%s3120] sm:$0xf]
  %v3122 = vld [vmem:[%s3120 + $0x4] sm:$0xf]
  %v3123 = vld [vmem:[%s3120 + $0x8] sm:$0xf]
  %v3124 = vld [vmem:[%s3120 + $0xc] sm:$0xf]
  %v3125 = vld [vmem:[%s3120 + $0x10] sm:$0xf]
  %v3126 = vld [vmem:[%s3120 + $0x14] sm:$0xf]
  %v3127 = vld [vmem:[%s3120 + $0x18] sm:$0xf]
  %v3128 = vld [vmem:[%s3120 + $0x1c] sm:$0xf]
  %v3129 = vld [vmem:[%s3120 + $0x20] sm:$0xf]
  %v3130 = vld [vmem:[%s3120 + $0x24] sm:$0xf]
  %v3131 = vld [vmem:[%s3120 + $0x28] sm:$0xf]
  %v3132 = vld [vmem:[%s3120 + $0x2c] sm:$0xf]
  %v3133 = vld [vmem:[%s3120 + $0x30] sm:$0xf]
  %v3134 = vld [vmem:[%s3120 + $0x34] sm:$0xf]
  %v3135 = vld [vmem:[%s3120 + $0x38] sm:$0xf]
  %v3136 = vld [vmem:[%s3120 + $0x3c] sm:$0xf]
  %v3153 = vunpack.c.l.b16 %v3121
  %v3154 = vunpack.c.l.b16 %v3122
  %v3155 = vunpack.c.l.b16 %v3123
  %v3156 = vunpack.c.l.b16 %v3124
  %v3157 = vunpack.c.l.b16 %v3125
  %v3158 = vunpack.c.l.b16 %v3126
  %v3159 = vunpack.c.l.b16 %v3127
  %v3160 = vunpack.c.l.b16 %v3128
  %v3161 = vunpack.c.l.b16 %v3129
  %v3162 = vunpack.c.l.b16 %v3130
  %v3163 = vunpack.c.l.b16 %v3131
  %v3164 = vunpack.c.l.b16 %v3132
  %v3165 = vunpack.c.l.b16 %v3133
  %v3166 = vunpack.c.l.b16 %v3134
  %v3167 = vunpack.c.l.b16 %v3135
  %v3168 = vunpack.c.l.b16 %v3136
  %v3169 = vpack.c.b16 %v3154, %v3153
  %v3170 = vpack.c.b16 %v3156, %v3155
  %v3171 = vpack.c.b16 %v3158, %v3157
  %v3172 = vpack.c.b16 %v3160, %v3159
  %v3173 = vpack.c.b16 %v3162, %v3161
  %v3174 = vpack.c.b16 %v3164, %v3163
  %v3175 = vpack.c.b16 %v3166, %v3165
  %v3176 = vpack.c.b16 %v3168, %v3167
  %3185 = vmatprep.subr.bf16.mxu0 0
  %3186 = vmatpush1.bf16.msra.mxu0 %v3176
  %3187 = vmatprep.subr.bf16.mxu0 0
  %3188 = vmatpush1.bf16.msra.mxu0 %v3175
  %3189 = vmatprep.subr.bf16.mxu0 0
  %3190 = vmatpush1.bf16.msra.mxu0 %v3174
  %3191 = vmatprep.subr.bf16.mxu0 0
  %3192 = vmatpush1.bf16.msra.mxu0 %v3173
  %3193 = vmatprep.subr.bf16.mxu0 0
  %3194 = vmatpush1.bf16.msra.mxu0 %v3172
  %3195 = vmatprep.subr.bf16.mxu0 0
  %3196 = vmatpush1.bf16.msra.mxu0 %v3171
  %3197 = vmatprep.subr.bf16.mxu0 0
  %3198 = vmatpush1.bf16.msra.mxu0 %v3170
  %3199 = vmatprep.subr.bf16.mxu0 0
  %3200 = vmatpush1.bf16.msra.mxu0 %v3169
  %3201 = vmatprep.subr.bf16.mxu0 0
  %3202 = vmatpush2.bf16.msra.mxu0 0
  %3203 = vmatprep.subr.bf16.mxu0 0
  %3204 = vmatpush2.bf16.msra.mxu0 0
  %3205 = vmatprep.subr.bf16.mxu0 0
  %3206 = vmatpush2.bf16.msra.mxu0 0
  %3207 = vmatprep.subr.bf16.mxu0 0
  %3208 = vmatpush2.bf16.msra.mxu0 0
  %3209 = vmatprep.subr.bf16.mxu0 0
  %3210 = vmatpush2.bf16.msra.mxu0 0
  %3211 = vmatprep.subr.bf16.mxu0 0
  %3212 = vmatpush2.bf16.msra.mxu0 0
  %3213 = vmatprep.subr.bf16.mxu0 0
  %3214 = vmatpush2.bf16.msra.mxu0 0
  %3215 = vmatprep.subr.bf16.mxu0 0
  %3216 = vmatpush2.bf16.msra.mxu0 0
  %3217 = vmatprep.mubr.bf16.mxu0 0
  %3218 = vmatmul.mubr.bf16.gmra.mxu0 %v3119
  %v3219 = vpop.f32.mrf.mxu0
  %v3220 = vadd.f32 0.0, %v3219
  %v3221 = vpop.f32.mrf.mxu0
  %v3222 = vpop.f32.mrf.mxu0
  %v3223 = vpop.f32.mrf.mxu0
  %3224 = vdwg.mxu0
  %v3241 = vunpack.c.l.b16 %v3086
  %v3242 = vunpack.c.l.b16 %v3087
  %v3243 = vunpack.c.l.b16 %v3088
  %v3244 = vunpack.c.l.b16 %v3089
  %v3245 = vunpack.c.l.b16 %v3090
  %v3246 = vunpack.c.l.b16 %v3091
  %v3247 = vunpack.c.l.b16 %v3092
  %v3248 = vunpack.c.l.b16 %v3093
  %v3249 = vunpack.c.l.b16 %v3094
  %v3250 = vunpack.c.l.b16 %v3095
  %v3251 = vunpack.c.l.b16 %v3096
  %v3252 = vunpack.c.l.b16 %v3097
  %v3253 = vunpack.c.l.b16 %v3098
  %v3254 = vunpack.c.l.b16 %v3099
  %v3255 = vunpack.c.l.b16 %v3100
  %v3256 = vunpack.c.l.b16 %v3101
  %v3257 = vpack.c.b16 %v3242, %v3241
  %v3258 = vpack.c.b16 %v3244, %v3243
  %v3259 = vpack.c.b16 %v3246, %v3245
  %v3260 = vpack.c.b16 %v3248, %v3247
  %v3261 = vpack.c.b16 %v3250, %v3249
  %v3262 = vpack.c.b16 %v3252, %v3251
  %v3263 = vpack.c.b16 %v3254, %v3253
  %v3264 = vpack.c.b16 %v3256, %v3255
  %3273 = vmatprep.subr.bf16.mxu0 0
  %3274 = vmatpush1.bf16.msra.mxu0 %v3264
  %3275 = vmatprep.subr.bf16.mxu0 0
  %3276 = vmatpush1.bf16.msra.mxu0 %v3263
  %3277 = vmatprep.subr.bf16.mxu0 0
  %3278 = vmatpush1.bf16.msra.mxu0 %v3262
  %3279 = vmatprep.subr.bf16.mxu0 0
  %3280 = vmatpush1.bf16.msra.mxu0 %v3261
  %3281 = vmatprep.subr.bf16.mxu0 0
  %3282 = vmatpush1.bf16.msra.mxu0 %v3260
  %3283 = vmatprep.subr.bf16.mxu0 0
  %3284 = vmatpush1.bf16.msra.mxu0 %v3259
  %3285 = vmatprep.subr.bf16.mxu0 0
  %3286 = vmatpush1.bf16.msra.mxu0 %v3258
  %3287 = vmatprep.subr.bf16.mxu0 0
  %3288 = vmatpush1.bf16.msra.mxu0 %v3257
  %3289 = vmatprep.subr.bf16.mxu0 0
  %3290 = vmatpush2.bf16.msra.mxu0 0
  %3291 = vmatprep.subr.bf16.mxu0 0
  %3292 = vmatpush2.bf16.msra.mxu0 0
  %3293 = vmatprep.subr.bf16.mxu0 0
  %3294 = vmatpush2.bf16.msra.mxu0 0
  %3295 = vmatprep.subr.bf16.mxu0 0
  %3296 = vmatpush2.bf16.msra.mxu0 0
  %3297 = vmatprep.subr.bf16.mxu0 0
  %3298 = vmatpush2.bf16.msra.mxu0 0
  %3299 = vmatprep.subr.bf16.mxu0 0
  %3300 = vmatpush2.bf16.msra.mxu0 0
  %3301 = vmatprep.subr.bf16.mxu0 0
  %3302 = vmatpush2.bf16.msra.mxu0 0
  %3303 = vmatprep.subr.bf16.mxu0 0
  %3304 = vmatpush2.bf16.msra.mxu0 0
  %3305 = vmatprep.mubr.bf16.mxu0 0
  %3306 = vmatmul.mubr.bf16.gmra.mxu0 %v3085
  %v3307 = vpop.f32.mrf.mxu0
  %v3308 = vadd.f32 %v3220, %v3307
  %v3309 = vpop.f32.mrf.mxu0
  %v3310 = vpop.f32.mrf.mxu0
  %v3311 = vpop.f32.mrf.mxu0
  %3312 = vdwg.mxu0
  %v3313 = vpack.c.bf16 %v3070, %v3070
  %s3314 = scalar_lea.vmem %s10, 64
  %v3315 = vld [vmem:[%s3314] sm:$0xf]
  %v3316 = vld [vmem:[%s3314 + $0x4] sm:$0xf]
  %v3317 = vld [vmem:[%s3314 + $0x8] sm:$0xf]
  %v3318 = vld [vmem:[%s3314 + $0xc] sm:$0xf]
  %v3319 = vld [vmem:[%s3314 + $0x10] sm:$0xf]
  %v3320 = vld [vmem:[%s3314 + $0x14] sm:$0xf]
  %v3321 = vld [vmem:[%s3314 + $0x18] sm:$0xf]
  %v3322 = vld [vmem:[%s3314 + $0x1c] sm:$0xf]
  %v3323 = vld [vmem:[%s3314 + $0x20] sm:$0xf]
  %v3324 = vld [vmem:[%s3314 + $0x24] sm:$0xf]
  %v3325 = vld [vmem:[%s3314 + $0x28] sm:$0xf]
  %v3326 = vld [vmem:[%s3314 + $0x2c] sm:$0xf]
  %v3327 = vld [vmem:[%s3314 + $0x30] sm:$0xf]
  %v3328 = vld [vmem:[%s3314 + $0x34] sm:$0xf]
  %v3329 = vld [vmem:[%s3314 + $0x38] sm:$0xf]
  %v3330 = vld [vmem:[%s3314 + $0x3c] sm:$0xf]
  %v3347 = vunpack.c.l.b16 %v3315
  %v3348 = vunpack.c.l.b16 %v3316
  %v3349 = vunpack.c.l.b16 %v3317
  %v3350 = vunpack.c.l.b16 %v3318
  %v3351 = vunpack.c.l.b16 %v3319
  %v3352 = vunpack.c.l.b16 %v3320
  %v3353 = vunpack.c.l.b16 %v3321
  %v3354 = vunpack.c.l.b16 %v3322
  %v3355 = vunpack.c.l.b16 %v3323
  %v3356 = vunpack.c.l.b16 %v3324
  %v3357 = vunpack.c.l.b16 %v3325
  %v3358 = vunpack.c.l.b16 %v3326
  %v3359 = vunpack.c.l.b16 %v3327
  %v3360 = vunpack.c.l.b16 %v3328
  %v3361 = vunpack.c.l.b16 %v3329
  %v3362 = vunpack.c.l.b16 %v3330
  %v3363 = vpack.c.b16 %v3348, %v3347
  %v3364 = vpack.c.b16 %v3350, %v3349
  %v3365 = vpack.c.b16 %v3352, %v3351
  %v3366 = vpack.c.b16 %v3354, %v3353
  %v3367 = vpack.c.b16 %v3356, %v3355
  %v3368 = vpack.c.b16 %v3358, %v3357
  %v3369 = vpack.c.b16 %v3360, %v3359
  %v3370 = vpack.c.b16 %v3362, %v3361
  %3379 = vmatprep.subr.bf16.mxu0 0
  %3380 = vmatpush1.bf16.msra.mxu0 %v3370
  %3381 = vmatprep.subr.bf16.mxu0 0
  %3382 = vmatpush1.bf16.msra.mxu0 %v3369
  %3383 = vmatprep.subr.bf16.mxu0 0
  %3384 = vmatpush1.bf16.msra.mxu0 %v3368
  %3385 = vmatprep.subr.bf16.mxu0 0
  %3386 = vmatpush1.bf16.msra.mxu0 %v3367
  %3387 = vmatprep.subr.bf16.mxu0 0
  %3388 = vmatpush1.bf16.msra.mxu0 %v3366
  %3389 = vmatprep.subr.bf16.mxu0 0
  %3390 = vmatpush1.bf16.msra.mxu0 %v3365
  %3391 = vmatprep.subr.bf16.mxu0 0
  %3392 = vmatpush1.bf16.msra.mxu0 %v3364
  %3393 = vmatprep.subr.bf16.mxu0 0
  %3394 = vmatpush1.bf16.msra.mxu0 %v3363
  %3395 = vmatprep.subr.bf16.mxu0 0
  %3396 = vmatpush2.bf16.msra.mxu0 0
  %3397 = vmatprep.subr.bf16.mxu0 0
  %3398 = vmatpush2.bf16.msra.mxu0 0
  %3399 = vmatprep.subr.bf16.mxu0 0
  %3400 = vmatpush2.bf16.msra.mxu0 0
  %3401 = vmatprep.subr.bf16.mxu0 0
  %3402 = vmatpush2.bf16.msra.mxu0 0
  %3403 = vmatprep.subr.bf16.mxu0 0
  %3404 = vmatpush2.bf16.msra.mxu0 0
  %3405 = vmatprep.subr.bf16.mxu0 0
  %3406 = vmatpush2.bf16.msra.mxu0 0
  %3407 = vmatprep.subr.bf16.mxu0 0
  %3408 = vmatpush2.bf16.msra.mxu0 0
  %3409 = vmatprep.subr.bf16.mxu0 0
  %3410 = vmatpush2.bf16.msra.mxu0 0
  %3411 = vmatprep.mubr.bf16.mxu0 0
  %3412 = vmatmul.mubr.bf16.gmra.mxu0 %v3313
  %v3413 = vpop.f32.mrf.mxu0
  %v3414 = vadd.f32 0.0, %v3413
  %v3415 = vpop.f32.mrf.mxu0
  %v3416 = vpop.f32.mrf.mxu0
  %v3417 = vpop.f32.mrf.mxu0
  %3418 = vdwg.mxu0
  %v3435 = vunpack.c.l.b16 %v3103
  %v3436 = vunpack.c.l.b16 %v3104
  %v3437 = vunpack.c.l.b16 %v3105
  %v3438 = vunpack.c.l.b16 %v3106
  %v3439 = vunpack.c.l.b16 %v3107
  %v3440 = vunpack.c.l.b16 %v3108
  %v3441 = vunpack.c.l.b16 %v3109
  %v3442 = vunpack.c.l.b16 %v3110
  %v3443 = vunpack.c.l.b16 %v3111
  %v3444 = vunpack.c.l.b16 %v3112
  %v3445 = vunpack.c.l.b16 %v3113
  %v3446 = vunpack.c.l.b16 %v3114
  %v3447 = vunpack.c.l.b16 %v3115
  %v3448 = vunpack.c.l.b16 %v3116
  %v3449 = vunpack.c.l.b16 %v3117
  %v3450 = vunpack.c.l.b16 %v3118
  %v3451 = vpack.c.b16 %v3436, %v3435
  %v3452 = vpack.c.b16 %v3438, %v3437
  %v3453 = vpack.c.b16 %v3440, %v3439
  %v3454 = vpack.c.b16 %v3442, %v3441
  %v3455 = vpack.c.b16 %v3444, %v3443
  %v3456 = vpack.c.b16 %v3446, %v3445
  %v3457 = vpack.c.b16 %v3448, %v3447
  %v3458 = vpack.c.b16 %v3450, %v3449
  %3467 = vmatprep.subr.bf16.mxu0 0
  %3468 = vmatpush1.bf16.msra.mxu0 %v3458
  %3469 = vmatprep.subr.bf16.mxu0 0
  %3470 = vmatpush1.bf16.msra.mxu0 %v3457
  %3471 = vmatprep.subr.bf16.mxu0 0
  %3472 = vmatpush1.bf16.msra.mxu0 %v3456
  %3473 = vmatprep.subr.bf16.mxu0 0
  %3474 = vmatpush1.bf16.msra.mxu0 %v3455
  %3475 = vmatprep.subr.bf16.mxu0 0
  %3476 = vmatpush1.bf16.msra.mxu0 %v3454
  %3477 = vmatprep.subr.bf16.mxu0 0
  %3478 = vmatpush1.bf16.msra.mxu0 %v3453
  %3479 = vmatprep.subr.bf16.mxu0 0
  %3480 = vmatpush1.bf16.msra.mxu0 %v3452
  %3481 = vmatprep.subr.bf16.mxu0 0
  %3482 = vmatpush1.bf16.msra.mxu0 %v3451
  %3483 = vmatprep.subr.bf16.mxu0 0
  %3484 = vmatpush2.bf16.msra.mxu0 0
  %3485 = vmatprep.subr.bf16.mxu0 0
  %3486 = vmatpush2.bf16.msra.mxu0 0
  %3487 = vmatprep.subr.bf16.mxu0 0
  %3488 = vmatpush2.bf16.msra.mxu0 0
  %3489 = vmatprep.subr.bf16.mxu0 0
  %3490 = vmatpush2.bf16.msra.mxu0 0
  %3491 = vmatprep.subr.bf16.mxu0 0
  %3492 = vmatpush2.bf16.msra.mxu0 0
  %3493 = vmatprep.subr.bf16.mxu0 0
  %3494 = vmatpush2.bf16.msra.mxu0 0
  %3495 = vmatprep.subr.bf16.mxu0 0
  %3496 = vmatpush2.bf16.msra.mxu0 0
  %3497 = vmatprep.subr.bf16.mxu0 0
  %3498 = vmatpush2.bf16.msra.mxu0 0
  %3499 = vmatprep.mubr.bf16.mxu0 0
  %3500 = vmatmul.mubr.bf16.gmra.mxu0 %v3102
  %v3501 = vpop.f32.mrf.mxu0
  %v3502 = vadd.f32 %v3414, %v3501
  %v3503 = vpop.f32.mrf.mxu0
  %v3504 = vpop.f32.mrf.mxu0
  %v3505 = vpop.f32.mrf.mxu0
  %3506 = vdwg.mxu0
  %v3507 = vpack.c.bf16 %v2413, %v2413
  %s3508 = scalar_lea.vmem %s9, 128
  %v3509 = vld [vmem:[%s3508] sm:$0xf]
  %v3510 = vld [vmem:[%s3508 + $0x4] sm:$0xf]
  %v3511 = vld [vmem:[%s3508 + $0x8] sm:$0xf]
  %v3512 = vld [vmem:[%s3508 + $0xc] sm:$0xf]
  %v3513 = vld [vmem:[%s3508 + $0x10] sm:$0xf]
  %v3514 = vld [vmem:[%s3508 + $0x14] sm:$0xf]
  %v3515 = vld [vmem:[%s3508 + $0x18] sm:$0xf]
  %v3516 = vld [vmem:[%s3508 + $0x1c] sm:$0xf]
  %v3517 = vld [vmem:[%s3508 + $0x20] sm:$0xf]
  %v3518 = vld [vmem:[%s3508 + $0x24] sm:$0xf]
  %v3519 = vld [vmem:[%s3508 + $0x28] sm:$0xf]
  %v3520 = vld [vmem:[%s3508 + $0x2c] sm:$0xf]
  %v3521 = vld [vmem:[%s3508 + $0x30] sm:$0xf]
  %v3522 = vld [vmem:[%s3508 + $0x34] sm:$0xf]
  %v3523 = vld [vmem:[%s3508 + $0x38] sm:$0xf]
  %v3524 = vld [vmem:[%s3508 + $0x3c] sm:$0xf]
  %v3541 = vunpack.c.l.b16 %v3509
  %v3542 = vunpack.c.l.b16 %v3510
  %v3543 = vunpack.c.l.b16 %v3511
  %v3544 = vunpack.c.l.b16 %v3512
  %v3545 = vunpack.c.l.b16 %v3513
  %v3546 = vunpack.c.l.b16 %v3514
  %v3547 = vunpack.c.l.b16 %v3515
  %v3548 = vunpack.c.l.b16 %v3516
  %v3549 = vunpack.c.l.b16 %v3517
  %v3550 = vunpack.c.l.b16 %v3518
  %v3551 = vunpack.c.l.b16 %v3519
  %v3552 = vunpack.c.l.b16 %v3520
  %v3553 = vunpack.c.l.b16 %v3521
  %v3554 = vunpack.c.l.b16 %v3522
  %v3555 = vunpack.c.l.b16 %v3523
  %v3556 = vunpack.c.l.b16 %v3524
  %v3557 = vpack.c.b16 %v3542, %v3541
  %v3558 = vpack.c.b16 %v3544, %v3543
  %v3559 = vpack.c.b16 %v3546, %v3545
  %v3560 = vpack.c.b16 %v3548, %v3547
  %v3561 = vpack.c.b16 %v3550, %v3549
  %v3562 = vpack.c.b16 %v3552, %v3551
  %v3563 = vpack.c.b16 %v3554, %v3553
  %v3564 = vpack.c.b16 %v3556, %v3555
  %3573 = vmatprep.subr.bf16.mxu0 0
  %3574 = vmatpush1.bf16.msra.mxu0 %v3564
  %3575 = vmatprep.subr.bf16.mxu0 0
  %3576 = vmatpush1.bf16.msra.mxu0 %v3563
  %3577 = vmatprep.subr.bf16.mxu0 0
  %3578 = vmatpush1.bf16.msra.mxu0 %v3562
  %3579 = vmatprep.subr.bf16.mxu0 0
  %3580 = vmatpush1.bf16.msra.mxu0 %v3561
  %3581 = vmatprep.subr.bf16.mxu0 0
  %3582 = vmatpush1.bf16.msra.mxu0 %v3560
  %3583 = vmatprep.subr.bf16.mxu0 0
  %3584 = vmatpush1.bf16.msra.mxu0 %v3559
  %3585 = vmatprep.subr.bf16.mxu0 0
  %3586 = vmatpush1.bf16.msra.mxu0 %v3558
  %3587 = vmatprep.subr.bf16.mxu0 0
  %3588 = vmatpush1.bf16.msra.mxu0 %v3557
  %3589 = vmatprep.subr.bf16.mxu0 0
  %3590 = vmatpush2.bf16.msra.mxu0 0
  %3591 = vmatprep.subr.bf16.mxu0 0
  %3592 = vmatpush2.bf16.msra.mxu0 0
  %3593 = vmatprep.subr.bf16.mxu0 0
  %3594 = vmatpush2.bf16.msra.mxu0 0
  %3595 = vmatprep.subr.bf16.mxu0 0
  %3596 = vmatpush2.bf16.msra.mxu0 0
  %3597 = vmatprep.subr.bf16.mxu0 0
  %3598 = vmatpush2.bf16.msra.mxu0 0
  %3599 = vmatprep.subr.bf16.mxu0 0
  %3600 = vmatpush2.bf16.msra.mxu0 0
  %3601 = vmatprep.subr.bf16.mxu0 0
  %3602 = vmatpush2.bf16.msra.mxu0 0
  %3603 = vmatprep.subr.bf16.mxu0 0
  %3604 = vmatpush2.bf16.msra.mxu0 0
  %3605 = vmatprep.mubr.bf16.mxu0 0
  %3606 = vmatmul.mubr.bf16.gmra.mxu0 %v3507
  %v3607 = vpop.f32.mrf.mxu0
  %v3608 = vadd.f32 0.0, %v3607
  %v3609 = vpop.f32.mrf.mxu0
  %v3610 = vpop.f32.mrf.mxu0
  %v3611 = vpop.f32.mrf.mxu0
  %3612 = vdwg.mxu0
  %v3613 = vadd.f32 %v3308, %v3608
  %v3614 = vpack.c.bf16 %v3071, %v3071
  %s3615 = scalar_lea.vmem %s10, 128
  %v3616 = vld [vmem:[%s3615] sm:$0xf]
  %v3617 = vld [vmem:[%s3615 + $0x4] sm:$0xf]
  %v3618 = vld [vmem:[%s3615 + $0x8] sm:$0xf]
  %v3619 = vld [vmem:[%s3615 + $0xc] sm:$0xf]
  %v3620 = vld [vmem:[%s3615 + $0x10] sm:$0xf]
  %v3621 = vld [vmem:[%s3615 + $0x14] sm:$0xf]
  %v3622 = vld [vmem:[%s3615 + $0x18] sm:$0xf]
  %v3623 = vld [vmem:[%s3615 + $0x1c] sm:$0xf]
  %v3624 = vld [vmem:[%s3615 + $0x20] sm:$0xf]
  %v3625 = vld [vmem:[%s3615 + $0x24] sm:$0xf]
  %v3626 = vld [vmem:[%s3615 + $0x28] sm:$0xf]
  %v3627 = vld [vmem:[%s3615 + $0x2c] sm:$0xf]
  %v3628 = vld [vmem:[%s3615 + $0x30] sm:$0xf]
  %v3629 = vld [vmem:[%s3615 + $0x34] sm:$0xf]
  %v3630 = vld [vmem:[%s3615 + $0x38] sm:$0xf]
  %v3631 = vld [vmem:[%s3615 + $0x3c] sm:$0xf]
  %v3648 = vunpack.c.l.b16 %v3616
  %v3649 = vunpack.c.l.b16 %v3617
  %v3650 = vunpack.c.l.b16 %v3618
  %v3651 = vunpack.c.l.b16 %v3619
  %v3652 = vunpack.c.l.b16 %v3620
  %v3653 = vunpack.c.l.b16 %v3621
  %v3654 = vunpack.c.l.b16 %v3622
  %v3655 = vunpack.c.l.b16 %v3623
  %v3656 = vunpack.c.l.b16 %v3624
  %v3657 = vunpack.c.l.b16 %v3625
  %v3658 = vunpack.c.l.b16 %v3626
  %v3659 = vunpack.c.l.b16 %v3627
  %v3660 = vunpack.c.l.b16 %v3628
  %v3661 = vunpack.c.l.b16 %v3629
  %v3662 = vunpack.c.l.b16 %v3630
  %v3663 = vunpack.c.l.b16 %v3631
  %v3664 = vpack.c.b16 %v3649, %v3648
  %v3665 = vpack.c.b16 %v3651, %v3650
  %v3666 = vpack.c.b16 %v3653, %v3652
  %v3667 = vpack.c.b16 %v3655, %v3654
  %v3668 = vpack.c.b16 %v3657, %v3656
  %v3669 = vpack.c.b16 %v3659, %v3658
  %v3670 = vpack.c.b16 %v3661, %v3660
  %v3671 = vpack.c.b16 %v3663, %v3662
  %3680 = vmatprep.subr.bf16.mxu0 0
  %3681 = vmatpush1.bf16.msra.mxu0 %v3671
  %3682 = vmatprep.subr.bf16.mxu0 0
  %3683 = vmatpush1.bf16.msra.mxu0 %v3670
  %3684 = vmatprep.subr.bf16.mxu0 0
  %3685 = vmatpush1.bf16.msra.mxu0 %v3669
  %3686 = vmatprep.subr.bf16.mxu0 0
  %3687 = vmatpush1.bf16.msra.mxu0 %v3668
  %3688 = vmatprep.subr.bf16.mxu0 0
  %3689 = vmatpush1.bf16.msra.mxu0 %v3667
  %3690 = vmatprep.subr.bf16.mxu0 0
  %3691 = vmatpush1.bf16.msra.mxu0 %v3666
  %3692 = vmatprep.subr.bf16.mxu0 0
  %3693 = vmatpush1.bf16.msra.mxu0 %v3665
  %3694 = vmatprep.subr.bf16.mxu0 0
  %3695 = vmatpush1.bf16.msra.mxu0 %v3664
  %3696 = vmatprep.subr.bf16.mxu0 0
  %3697 = vmatpush2.bf16.msra.mxu0 0
  %3698 = vmatprep.subr.bf16.mxu0 0
  %3699 = vmatpush2.bf16.msra.mxu0 0
  %3700 = vmatprep.subr.bf16.mxu0 0
  %3701 = vmatpush2.bf16.msra.mxu0 0
  %3702 = vmatprep.subr.bf16.mxu0 0
  %3703 = vmatpush2.bf16.msra.mxu0 0
  %3704 = vmatprep.subr.bf16.mxu0 0
  %3705 = vmatpush2.bf16.msra.mxu0 0
  %3706 = vmatprep.subr.bf16.mxu0 0
  %3707 = vmatpush2.bf16.msra.mxu0 0
  %3708 = vmatprep.subr.bf16.mxu0 0
  %3709 = vmatpush2.bf16.msra.mxu0 0
  %3710 = vmatprep.subr.bf16.mxu0 0
  %3711 = vmatpush2.bf16.msra.mxu0 0
  %3712 = vmatprep.mubr.bf16.mxu0 0
  %3713 = vmatmul.mubr.bf16.gmra.mxu0 %v3614
  %v3714 = vpop.f32.mrf.mxu0
  %v3715 = vadd.f32 0.0, %v3714
  %v3716 = vpop.f32.mrf.mxu0
  %v3717 = vpop.f32.mrf.mxu0
  %v3718 = vpop.f32.mrf.mxu0
  %3719 = vdwg.mxu0
  %v3720 = vadd.f32 %v3502, %v3715
  %v3721 = vpack.c.bf16 %v2414, %v2414
  %s3722 = scalar_lea.vmem %s9, 192
  %v3723 = vld [vmem:[%s3722] sm:$0xf]
  %v3724 = vld [vmem:[%s3722 + $0x4] sm:$0xf]
  %v3725 = vld [vmem:[%s3722 + $0x8] sm:$0xf]
  %v3726 = vld [vmem:[%s3722 + $0xc] sm:$0xf]
  %v3727 = vld [vmem:[%s3722 + $0x10] sm:$0xf]
  %v3728 = vld [vmem:[%s3722 + $0x14] sm:$0xf]
  %v3729 = vld [vmem:[%s3722 + $0x18] sm:$0xf]
  %v3730 = vld [vmem:[%s3722 + $0x1c] sm:$0xf]
  %v3731 = vld [vmem:[%s3722 + $0x20] sm:$0xf]
  %v3732 = vld [vmem:[%s3722 + $0x24] sm:$0xf]
  %v3733 = vld [vmem:[%s3722 + $0x28] sm:$0xf]
  %v3734 = vld [vmem:[%s3722 + $0x2c] sm:$0xf]
  %v3735 = vld [vmem:[%s3722 + $0x30] sm:$0xf]
  %v3736 = vld [vmem:[%s3722 + $0x34] sm:$0xf]
  %v3737 = vld [vmem:[%s3722 + $0x38] sm:$0xf]
  %v3738 = vld [vmem:[%s3722 + $0x3c] sm:$0xf]
  %v3755 = vunpack.c.l.b16 %v3723
  %v3756 = vunpack.c.l.b16 %v3724
  %v3757 = vunpack.c.l.b16 %v3725
  %v3758 = vunpack.c.l.b16 %v3726
  %v3759 = vunpack.c.l.b16 %v3727
  %v3760 = vunpack.c.l.b16 %v3728
  %v3761 = vunpack.c.l.b16 %v3729
  %v3762 = vunpack.c.l.b16 %v3730
  %v3763 = vunpack.c.l.b16 %v3731
  %v3764 = vunpack.c.l.b16 %v3732
  %v3765 = vunpack.c.l.b16 %v3733
  %v3766 = vunpack.c.l.b16 %v3734
  %v3767 = vunpack.c.l.b16 %v3735
  %v3768 = vunpack.c.l.b16 %v3736
  %v3769 = vunpack.c.l.b16 %v3737
  %v3770 = vunpack.c.l.b16 %v3738
  %v3771 = vpack.c.b16 %v3756, %v3755
  %v3772 = vpack.c.b16 %v3758, %v3757
  %v3773 = vpack.c.b16 %v3760, %v3759
  %v3774 = vpack.c.b16 %v3762, %v3761
  %v3775 = vpack.c.b16 %v3764, %v3763
  %v3776 = vpack.c.b16 %v3766, %v3765
  %v3777 = vpack.c.b16 %v3768, %v3767
  %v3778 = vpack.c.b16 %v3770, %v3769
  %3787 = vmatprep.subr.bf16.mxu0 0
  %3788 = vmatpush1.bf16.msra.mxu0 %v3778
  %3789 = vmatprep.subr.bf16.mxu0 0
  %3790 = vmatpush1.bf16.msra.mxu0 %v3777
  %3791 = vmatprep.subr.bf16.mxu0 0
  %3792 = vmatpush1.bf16.msra.mxu0 %v3776
  %3793 = vmatprep.subr.bf16.mxu0 0
  %3794 = vmatpush1.bf16.msra.mxu0 %v3775
  %3795 = vmatprep.subr.bf16.mxu0 0
  %3796 = vmatpush1.bf16.msra.mxu0 %v3774
  %3797 = vmatprep.subr.bf16.mxu0 0
  %3798 = vmatpush1.bf16.msra.mxu0 %v3773
  %3799 = vmatprep.subr.bf16.mxu0 0
  %3800 = vmatpush1.bf16.msra.mxu0 %v3772
  %3801 = vmatprep.subr.bf16.mxu0 0
  %3802 = vmatpush1.bf16.msra.mxu0 %v3771
  %3803 = vmatprep.subr.bf16.mxu0 0
  %3804 = vmatpush2.bf16.msra.mxu0 0
  %3805 = vmatprep.subr.bf16.mxu0 0
  %3806 = vmatpush2.bf16.msra.mxu0 0
  %3807 = vmatprep.subr.bf16.mxu0 0
  %3808 = vmatpush2.bf16.msra.mxu0 0
  %3809 = vmatprep.subr.bf16.mxu0 0
  %3810 = vmatpush2.bf16.msra.mxu0 0
  %3811 = vmatprep.subr.bf16.mxu0 0
  %3812 = vmatpush2.bf16.msra.mxu0 0
  %3813 = vmatprep.subr.bf16.mxu0 0
  %3814 = vmatpush2.bf16.msra.mxu0 0
  %3815 = vmatprep.subr.bf16.mxu0 0
  %3816 = vmatpush2.bf16.msra.mxu0 0
  %3817 = vmatprep.subr.bf16.mxu0 0
  %3818 = vmatpush2.bf16.msra.mxu0 0
  %3819 = vmatprep.mubr.bf16.mxu0 0
  %3820 = vmatmul.mubr.bf16.gmra.mxu0 %v3721
  %v3821 = vpop.f32.mrf.mxu0
  %v3822 = vadd.f32 0.0, %v3821
  %v3823 = vpop.f32.mrf.mxu0
  %v3824 = vpop.f32.mrf.mxu0
  %v3825 = vpop.f32.mrf.mxu0
  %3826 = vdwg.mxu0
  %v3827 = vadd.f32 %v3613, %v3822
  %v3828 = vpack.c.bf16 %v3072, %v3072
  %s3829 = scalar_lea.vmem %s10, 192
  %v3830 = vld [vmem:[%s3829] sm:$0xf]
  %v3831 = vld [vmem:[%s3829 + $0x4] sm:$0xf]
  %v3832 = vld [vmem:[%s3829 + $0x8] sm:$0xf]
  %v3833 = vld [vmem:[%s3829 + $0xc] sm:$0xf]
  %v3834 = vld [vmem:[%s3829 + $0x10] sm:$0xf]
  %v3835 = vld [vmem:[%s3829 + $0x14] sm:$0xf]
  %v3836 = vld [vmem:[%s3829 + $0x18] sm:$0xf]
  %v3837 = vld [vmem:[%s3829 + $0x1c] sm:$0xf]
  %v3838 = vld [vmem:[%s3829 + $0x20] sm:$0xf]
  %v3839 = vld [vmem:[%s3829 + $0x24] sm:$0xf]
  %v3840 = vld [vmem:[%s3829 + $0x28] sm:$0xf]
  %v3841 = vld [vmem:[%s3829 + $0x2c] sm:$0xf]
  %v3842 = vld [vmem:[%s3829 + $0x30] sm:$0xf]
  %v3843 = vld [vmem:[%s3829 + $0x34] sm:$0xf]
  %v3844 = vld [vmem:[%s3829 + $0x38] sm:$0xf]
  %v3845 = vld [vmem:[%s3829 + $0x3c] sm:$0xf]
  %v3862 = vunpack.c.l.b16 %v3830
  %v3863 = vunpack.c.l.b16 %v3831
  %v3864 = vunpack.c.l.b16 %v3832
  %v3865 = vunpack.c.l.b16 %v3833
  %v3866 = vunpack.c.l.b16 %v3834
  %v3867 = vunpack.c.l.b16 %v3835
  %v3868 = vunpack.c.l.b16 %v3836
  %v3869 = vunpack.c.l.b16 %v3837
  %v3870 = vunpack.c.l.b16 %v3838
  %v3871 = vunpack.c.l.b16 %v3839
  %v3872 = vunpack.c.l.b16 %v3840
  %v3873 = vunpack.c.l.b16 %v3841
  %v3874 = vunpack.c.l.b16 %v3842
  %v3875 = vunpack.c.l.b16 %v3843
  %v3876 = vunpack.c.l.b16 %v3844
  %v3877 = vunpack.c.l.b16 %v3845
  %v3878 = vpack.c.b16 %v3863, %v3862
  %v3879 = vpack.c.b16 %v3865, %v3864
  %v3880 = vpack.c.b16 %v3867, %v3866
  %v3881 = vpack.c.b16 %v3869, %v3868
  %v3882 = vpack.c.b16 %v3871, %v3870
  %v3883 = vpack.c.b16 %v3873, %v3872
  %v3884 = vpack.c.b16 %v3875, %v3874
  %v3885 = vpack.c.b16 %v3877, %v3876
  %3894 = vmatprep.subr.bf16.mxu0 0
  %3895 = vmatpush1.bf16.msra.mxu0 %v3885
  %3896 = vmatprep.subr.bf16.mxu0 0
  %3897 = vmatpush1.bf16.msra.mxu0 %v3884
  %3898 = vmatprep.subr.bf16.mxu0 0
  %3899 = vmatpush1.bf16.msra.mxu0 %v3883
  %3900 = vmatprep.subr.bf16.mxu0 0
  %3901 = vmatpush1.bf16.msra.mxu0 %v3882
  %3902 = vmatprep.subr.bf16.mxu0 0
  %3903 = vmatpush1.bf16.msra.mxu0 %v3881
  %3904 = vmatprep.subr.bf16.mxu0 0
  %3905 = vmatpush1.bf16.msra.mxu0 %v3880
  %3906 = vmatprep.subr.bf16.mxu0 0
  %3907 = vmatpush1.bf16.msra.mxu0 %v3879
  %3908 = vmatprep.subr.bf16.mxu0 0
  %3909 = vmatpush1.bf16.msra.mxu0 %v3878
  %3910 = vmatprep.subr.bf16.mxu0 0
  %3911 = vmatpush2.bf16.msra.mxu0 0
  %3912 = vmatprep.subr.bf16.mxu0 0
  %3913 = vmatpush2.bf16.msra.mxu0 0
  %3914 = vmatprep.subr.bf16.mxu0 0
  %3915 = vmatpush2.bf16.msra.mxu0 0
  %3916 = vmatprep.subr.bf16.mxu0 0
  %3917 = vmatpush2.bf16.msra.mxu0 0
  %3918 = vmatprep.subr.bf16.mxu0 0
  %3919 = vmatpush2.bf16.msra.mxu0 0
  %3920 = vmatprep.subr.bf16.mxu0 0
  %3921 = vmatpush2.bf16.msra.mxu0 0
  %3922 = vmatprep.subr.bf16.mxu0 0
  %3923 = vmatpush2.bf16.msra.mxu0 0
  %3924 = vmatprep.subr.bf16.mxu0 0
  %3925 = vmatpush2.bf16.msra.mxu0 0
  %3926 = vmatprep.mubr.bf16.mxu0 0
  %3927 = vmatmul.mubr.bf16.gmra.mxu0 %v3828
  %v3928 = vpop.f32.mrf.mxu0
  %v3929 = vadd.f32 0.0, %v3928
  %v3930 = vpop.f32.mrf.mxu0
  %v3931 = vpop.f32.mrf.mxu0
  %v3932 = vpop.f32.mrf.mxu0
  %3933 = vdwg.mxu0
  %v3934 = vadd.f32 %v3720, %v3929
  %v3935 = vpack.c.bf16 %v2415, %v2415
  %s3936 = scalar_lea.vmem %s9, 256
  %v3937 = vld [vmem:[%s3936] sm:$0xf]
  %v3938 = vld [vmem:[%s3936 + $0x4] sm:$0xf]
  %v3939 = vld [vmem:[%s3936 + $0x8] sm:$0xf]
  %v3940 = vld [vmem:[%s3936 + $0xc] sm:$0xf]
  %v3941 = vld [vmem:[%s3936 + $0x10] sm:$0xf]
  %v3942 = vld [vmem:[%s3936 + $0x14] sm:$0xf]
  %v3943 = vld [vmem:[%s3936 + $0x18] sm:$0xf]
  %v3944 = vld [vmem:[%s3936 + $0x1c] sm:$0xf]
  %v3945 = vld [vmem:[%s3936 + $0x20] sm:$0xf]
  %v3946 = vld [vmem:[%s3936 + $0x24] sm:$0xf]
  %v3947 = vld [vmem:[%s3936 + $0x28] sm:$0xf]
  %v3948 = vld [vmem:[%s3936 + $0x2c] sm:$0xf]
  %v3949 = vld [vmem:[%s3936 + $0x30] sm:$0xf]
  %v3950 = vld [vmem:[%s3936 + $0x34] sm:$0xf]
  %v3951 = vld [vmem:[%s3936 + $0x38] sm:$0xf]
  %v3952 = vld [vmem:[%s3936 + $0x3c] sm:$0xf]
  %v3969 = vunpack.c.l.b16 %v3937
  %v3970 = vunpack.c.l.b16 %v3938
  %v3971 = vunpack.c.l.b16 %v3939
  %v3972 = vunpack.c.l.b16 %v3940
  %v3973 = vunpack.c.l.b16 %v3941
  %v3974 = vunpack.c.l.b16 %v3942
  %v3975 = vunpack.c.l.b16 %v3943
  %v3976 = vunpack.c.l.b16 %v3944
  %v3977 = vunpack.c.l.b16 %v3945
  %v3978 = vunpack.c.l.b16 %v3946
  %v3979 = vunpack.c.l.b16 %v3947
  %v3980 = vunpack.c.l.b16 %v3948
  %v3981 = vunpack.c.l.b16 %v3949
  %v3982 = vunpack.c.l.b16 %v3950
  %v3983 = vunpack.c.l.b16 %v3951
  %v3984 = vunpack.c.l.b16 %v3952
  %v3985 = vpack.c.b16 %v3970, %v3969
  %v3986 = vpack.c.b16 %v3972, %v3971
  %v3987 = vpack.c.b16 %v3974, %v3973
  %v3988 = vpack.c.b16 %v3976, %v3975
  %v3989 = vpack.c.b16 %v3978, %v3977
  %v3990 = vpack.c.b16 %v3980, %v3979
  %v3991 = vpack.c.b16 %v3982, %v3981
  %v3992 = vpack.c.b16 %v3984, %v3983
  %4001 = vmatprep.subr.bf16.mxu0 0
  %4002 = vmatpush1.bf16.msra.mxu0 %v3992
  %4003 = vmatprep.subr.bf16.mxu0 0
  %4004 = vmatpush1.bf16.msra.mxu0 %v3991
  %4005 = vmatprep.subr.bf16.mxu0 0
  %4006 = vmatpush1.bf16.msra.mxu0 %v3990
  %4007 = vmatprep.subr.bf16.mxu0 0
  %4008 = vmatpush1.bf16.msra.mxu0 %v3989
  %4009 = vmatprep.subr.bf16.mxu0 0
  %4010 = vmatpush1.bf16.msra.mxu0 %v3988
  %4011 = vmatprep.subr.bf16.mxu0 0
  %4012 = vmatpush1.bf16.msra.mxu0 %v3987
  %4013 = vmatprep.subr.bf16.mxu0 0
  %4014 = vmatpush1.bf16.msra.mxu0 %v3986
  %4015 = vmatprep.subr.bf16.mxu0 0
  %4016 = vmatpush1.bf16.msra.mxu0 %v3985
  %4017 = vmatprep.subr.bf16.mxu0 0
  %4018 = vmatpush2.bf16.msra.mxu0 0
  %4019 = vmatprep.subr.bf16.mxu0 0
  %4020 = vmatpush2.bf16.msra.mxu0 0
  %4021 = vmatprep.subr.bf16.mxu0 0
  %4022 = vmatpush2.bf16.msra.mxu0 0
  %4023 = vmatprep.subr.bf16.mxu0 0
  %4024 = vmatpush2.bf16.msra.mxu0 0
  %4025 = vmatprep.subr.bf16.mxu0 0
  %4026 = vmatpush2.bf16.msra.mxu0 0
  %4027 = vmatprep.subr.bf16.mxu0 0
  %4028 = vmatpush2.bf16.msra.mxu0 0
  %4029 = vmatprep.subr.bf16.mxu0 0
  %4030 = vmatpush2.bf16.msra.mxu0 0
  %4031 = vmatprep.subr.bf16.mxu0 0
  %4032 = vmatpush2.bf16.msra.mxu0 0
  %4033 = vmatprep.mubr.bf16.mxu0 0
  %4034 = vmatmul.mubr.bf16.gmra.mxu0 %v3935
  %v4035 = vpop.f32.mrf.mxu0
  %v4036 = vadd.f32 0.0, %v4035
  %v4037 = vpop.f32.mrf.mxu0
  %v4038 = vpop.f32.mrf.mxu0
  %v4039 = vpop.f32.mrf.mxu0
  %4040 = vdwg.mxu0
  %v4041 = vadd.f32 %v3827, %v4036
  %v4042 = vpack.c.bf16 %v3073, %v3073
  %s4043 = scalar_lea.vmem %s10, 256
  %v4044 = vld [vmem:[%s4043] sm:$0xf]
  %v4045 = vld [vmem:[%s4043 + $0x4] sm:$0xf]
  %v4046 = vld [vmem:[%s4043 + $0x8] sm:$0xf]
  %v4047 = vld [vmem:[%s4043 + $0xc] sm:$0xf]
  %v4048 = vld [vmem:[%s4043 + $0x10] sm:$0xf]
  %v4049 = vld [vmem:[%s4043 + $0x14] sm:$0xf]
  %v4050 = vld [vmem:[%s4043 + $0x18] sm:$0xf]
  %v4051 = vld [vmem:[%s4043 + $0x1c] sm:$0xf]
  %v4052 = vld [vmem:[%s4043 + $0x20] sm:$0xf]
  %v4053 = vld [vmem:[%s4043 + $0x24] sm:$0xf]
  %v4054 = vld [vmem:[%s4043 + $0x28] sm:$0xf]
  %v4055 = vld [vmem:[%s4043 + $0x2c] sm:$0xf]
  %v4056 = vld [vmem:[%s4043 + $0x30] sm:$0xf]
  %v4057 = vld [vmem:[%s4043 + $0x34] sm:$0xf]
  %v4058 = vld [vmem:[%s4043 + $0x38] sm:$0xf]
  %v4059 = vld [vmem:[%s4043 + $0x3c] sm:$0xf]
  %v4076 = vunpack.c.l.b16 %v4044
  %v4077 = vunpack.c.l.b16 %v4045
  %v4078 = vunpack.c.l.b16 %v4046
  %v4079 = vunpack.c.l.b16 %v4047
  %v4080 = vunpack.c.l.b16 %v4048
  %v4081 = vunpack.c.l.b16 %v4049
  %v4082 = vunpack.c.l.b16 %v4050
  %v4083 = vunpack.c.l.b16 %v4051
  %v4084 = vunpack.c.l.b16 %v4052
  %v4085 = vunpack.c.l.b16 %v4053
  %v4086 = vunpack.c.l.b16 %v4054
  %v4087 = vunpack.c.l.b16 %v4055
  %v4088 = vunpack.c.l.b16 %v4056
  %v4089 = vunpack.c.l.b16 %v4057
  %v4090 = vunpack.c.l.b16 %v4058
  %v4091 = vunpack.c.l.b16 %v4059
  %v4092 = vpack.c.b16 %v4077, %v4076
  %v4093 = vpack.c.b16 %v4079, %v4078
  %v4094 = vpack.c.b16 %v4081, %v4080
  %v4095 = vpack.c.b16 %v4083, %v4082
  %v4096 = vpack.c.b16 %v4085, %v4084
  %v4097 = vpack.c.b16 %v4087, %v4086
  %v4098 = vpack.c.b16 %v4089, %v4088
  %v4099 = vpack.c.b16 %v4091, %v4090
  %4108 = vmatprep.subr.bf16.mxu0 0
  %4109 = vmatpush1.bf16.msra.mxu0 %v4099
  %4110 = vmatprep.subr.bf16.mxu0 0
  %4111 = vmatpush1.bf16.msra.mxu0 %v4098
  %4112 = vmatprep.subr.bf16.mxu0 0
  %4113 = vmatpush1.bf16.msra.mxu0 %v4097
  %4114 = vmatprep.subr.bf16.mxu0 0
  %4115 = vmatpush1.bf16.msra.mxu0 %v4096
  %4116 = vmatprep.subr.bf16.mxu0 0
  %4117 = vmatpush1.bf16.msra.mxu0 %v4095
  %4118 = vmatprep.subr.bf16.mxu0 0
  %4119 = vmatpush1.bf16.msra.mxu0 %v4094
  %4120 = vmatprep.subr.bf16.mxu0 0
  %4121 = vmatpush1.bf16.msra.mxu0 %v4093
  %4122 = vmatprep.subr.bf16.mxu0 0
  %4123 = vmatpush1.bf16.msra.mxu0 %v4092
  %4124 = vmatprep.subr.bf16.mxu0 0
  %4125 = vmatpush2.bf16.msra.mxu0 0
  %4126 = vmatprep.subr.bf16.mxu0 0
  %4127 = vmatpush2.bf16.msra.mxu0 0
  %4128 = vmatprep.subr.bf16.mxu0 0
  %4129 = vmatpush2.bf16.msra.mxu0 0
  %4130 = vmatprep.subr.bf16.mxu0 0
  %4131 = vmatpush2.bf16.msra.mxu0 0
  %4132 = vmatprep.subr.bf16.mxu0 0
  %4133 = vmatpush2.bf16.msra.mxu0 0
  %4134 = vmatprep.subr.bf16.mxu0 0
  %4135 = vmatpush2.bf16.msra.mxu0 0
  %4136 = vmatprep.subr.bf16.mxu0 0
  %4137 = vmatpush2.bf16.msra.mxu0 0
  %4138 = vmatprep.subr.bf16.mxu0 0
  %4139 = vmatpush2.bf16.msra.mxu0 0
  %4140 = vmatprep.mubr.bf16.mxu0 0
  %4141 = vmatmul.mubr.bf16.gmra.mxu0 %v4042
  %v4142 = vpop.f32.mrf.mxu0
  %v4143 = vadd.f32 0.0, %v4142
  %v4144 = vpop.f32.mrf.mxu0
  %v4145 = vpop.f32.mrf.mxu0
  %v4146 = vpop.f32.mrf.mxu0
  %4147 = vdwg.mxu0
  %v4148 = vadd.f32 %v3934, %v4143
  %v4149 = vpack.c.bf16 %v2416, %v2416
  %s4150 = scalar_lea.vmem %s9, 320
  %v4151 = vld [vmem:[%s4150] sm:$0xf]
  %v4152 = vld [vmem:[%s4150 + $0x4] sm:$0xf]
  %v4153 = vld [vmem:[%s4150 + $0x8] sm:$0xf]
  %v4154 = vld [vmem:[%s4150 + $0xc] sm:$0xf]
  %v4155 = vld [vmem:[%s4150 + $0x10] sm:$0xf]
  %v4156 = vld [vmem:[%s4150 + $0x14] sm:$0xf]
  %v4157 = vld [vmem:[%s4150 + $0x18] sm:$0xf]
  %v4158 = vld [vmem:[%s4150 + $0x1c] sm:$0xf]
  %v4159 = vld [vmem:[%s4150 + $0x20] sm:$0xf]
  %v4160 = vld [vmem:[%s4150 + $0x24] sm:$0xf]
  %v4161 = vld [vmem:[%s4150 + $0x28] sm:$0xf]
  %v4162 = vld [vmem:[%s4150 + $0x2c] sm:$0xf]
  %v4163 = vld [vmem:[%s4150 + $0x30] sm:$0xf]
  %v4164 = vld [vmem:[%s4150 + $0x34] sm:$0xf]
  %v4165 = vld [vmem:[%s4150 + $0x38] sm:$0xf]
  %v4166 = vld [vmem:[%s4150 + $0x3c] sm:$0xf]
  %v4183 = vunpack.c.l.b16 %v4151
  %v4184 = vunpack.c.l.b16 %v4152
  %v4185 = vunpack.c.l.b16 %v4153
  %v4186 = vunpack.c.l.b16 %v4154
  %v4187 = vunpack.c.l.b16 %v4155
  %v4188 = vunpack.c.l.b16 %v4156
  %v4189 = vunpack.c.l.b16 %v4157
  %v4190 = vunpack.c.l.b16 %v4158
  %v4191 = vunpack.c.l.b16 %v4159
  %v4192 = vunpack.c.l.b16 %v4160
  %v4193 = vunpack.c.l.b16 %v4161
  %v4194 = vunpack.c.l.b16 %v4162
  %v4195 = vunpack.c.l.b16 %v4163
  %v4196 = vunpack.c.l.b16 %v4164
  %v4197 = vunpack.c.l.b16 %v4165
  %v4198 = vunpack.c.l.b16 %v4166
  %v4199 = vpack.c.b16 %v4184, %v4183
  %v4200 = vpack.c.b16 %v4186, %v4185
  %v4201 = vpack.c.b16 %v4188, %v4187
  %v4202 = vpack.c.b16 %v4190, %v4189
  %v4203 = vpack.c.b16 %v4192, %v4191
  %v4204 = vpack.c.b16 %v4194, %v4193
  %v4205 = vpack.c.b16 %v4196, %v4195
  %v4206 = vpack.c.b16 %v4198, %v4197
  %4215 = vmatprep.subr.bf16.mxu0 0
  %4216 = vmatpush1.bf16.msra.mxu0 %v4206
  %4217 = vmatprep.subr.bf16.mxu0 0
  %4218 = vmatpush1.bf16.msra.mxu0 %v4205
  %4219 = vmatprep.subr.bf16.mxu0 0
  %4220 = vmatpush1.bf16.msra.mxu0 %v4204
  %4221 = vmatprep.subr.bf16.mxu0 0
  %4222 = vmatpush1.bf16.msra.mxu0 %v4203
  %4223 = vmatprep.subr.bf16.mxu0 0
  %4224 = vmatpush1.bf16.msra.mxu0 %v4202
  %4225 = vmatprep.subr.bf16.mxu0 0
  %4226 = vmatpush1.bf16.msra.mxu0 %v4201
  %4227 = vmatprep.subr.bf16.mxu0 0
  %4228 = vmatpush1.bf16.msra.mxu0 %v4200
  %4229 = vmatprep.subr.bf16.mxu0 0
  %4230 = vmatpush1.bf16.msra.mxu0 %v4199
  %4231 = vmatprep.subr.bf16.mxu0 0
  %4232 = vmatpush2.bf16.msra.mxu0 0
  %4233 = vmatprep.subr.bf16.mxu0 0
  %4234 = vmatpush2.bf16.msra.mxu0 0
  %4235 = vmatprep.subr.bf16.mxu0 0
  %4236 = vmatpush2.bf16.msra.mxu0 0
  %4237 = vmatprep.subr.bf16.mxu0 0
  %4238 = vmatpush2.bf16.msra.mxu0 0
  %4239 = vmatprep.subr.bf16.mxu0 0
  %4240 = vmatpush2.bf16.msra.mxu0 0
  %4241 = vmatprep.subr.bf16.mxu0 0
  %4242 = vmatpush2.bf16.msra.mxu0 0
  %4243 = vmatprep.subr.bf16.mxu0 0
  %4244 = vmatpush2.bf16.msra.mxu0 0
  %4245 = vmatprep.subr.bf16.mxu0 0
  %4246 = vmatpush2.bf16.msra.mxu0 0
  %4247 = vmatprep.mubr.bf16.mxu0 0
  %4248 = vmatmul.mubr.bf16.gmra.mxu0 %v4149
  %v4249 = vpop.f32.mrf.mxu0
  %v4250 = vadd.f32 0.0, %v4249
  %v4251 = vpop.f32.mrf.mxu0
  %v4252 = vpop.f32.mrf.mxu0
  %v4253 = vpop.f32.mrf.mxu0
  %4254 = vdwg.mxu0
  %v4255 = vadd.f32 %v4041, %v4250
  %v4256 = vpack.c.bf16 %v3074, %v3074
  %s4257 = scalar_lea.vmem %s10, 320
  %v4258 = vld [vmem:[%s4257] sm:$0xf]
  %v4259 = vld [vmem:[%s4257 + $0x4] sm:$0xf]
  %v4260 = vld [vmem:[%s4257 + $0x8] sm:$0xf]
  %v4261 = vld [vmem:[%s4257 + $0xc] sm:$0xf]
  %v4262 = vld [vmem:[%s4257 + $0x10] sm:$0xf]
  %v4263 = vld [vmem:[%s4257 + $0x14] sm:$0xf]
  %v4264 = vld [vmem:[%s4257 + $0x18] sm:$0xf]
  %v4265 = vld [vmem:[%s4257 + $0x1c] sm:$0xf]
  %v4266 = vld [vmem:[%s4257 + $0x20] sm:$0xf]
  %v4267 = vld [vmem:[%s4257 + $0x24] sm:$0xf]
  %v4268 = vld [vmem:[%s4257 + $0x28] sm:$0xf]
  %v4269 = vld [vmem:[%s4257 + $0x2c] sm:$0xf]
  %v4270 = vld [vmem:[%s4257 + $0x30] sm:$0xf]
  %v4271 = vld [vmem:[%s4257 + $0x34] sm:$0xf]
  %v4272 = vld [vmem:[%s4257 + $0x38] sm:$0xf]
  %v4273 = vld [vmem:[%s4257 + $0x3c] sm:$0xf]
  %v4290 = vunpack.c.l.b16 %v4258
  %v4291 = vunpack.c.l.b16 %v4259
  %v4292 = vunpack.c.l.b16 %v4260
  %v4293 = vunpack.c.l.b16 %v4261
  %v4294 = vunpack.c.l.b16 %v4262
  %v4295 = vunpack.c.l.b16 %v4263
  %v4296 = vunpack.c.l.b16 %v4264
  %v4297 = vunpack.c.l.b16 %v4265
  %v4298 = vunpack.c.l.b16 %v4266
  %v4299 = vunpack.c.l.b16 %v4267
  %v4300 = vunpack.c.l.b16 %v4268
  %v4301 = vunpack.c.l.b16 %v4269
  %v4302 = vunpack.c.l.b16 %v4270
  %v4303 = vunpack.c.l.b16 %v4271
  %v4304 = vunpack.c.l.b16 %v4272
  %v4305 = vunpack.c.l.b16 %v4273
  %v4306 = vpack.c.b16 %v4291, %v4290
  %v4307 = vpack.c.b16 %v4293, %v4292
  %v4308 = vpack.c.b16 %v4295, %v4294
  %v4309 = vpack.c.b16 %v4297, %v4296
  %v4310 = vpack.c.b16 %v4299, %v4298
  %v4311 = vpack.c.b16 %v4301, %v4300
  %v4312 = vpack.c.b16 %v4303, %v4302
  %v4313 = vpack.c.b16 %v4305, %v4304
  %4322 = vmatprep.subr.bf16.mxu0 0
  %4323 = vmatpush1.bf16.msra.mxu0 %v4313
  %4324 = vmatprep.subr.bf16.mxu0 0
  %4325 = vmatpush1.bf16.msra.mxu0 %v4312
  %4326 = vmatprep.subr.bf16.mxu0 0
  %4327 = vmatpush1.bf16.msra.mxu0 %v4311
  %4328 = vmatprep.subr.bf16.mxu0 0
  %4329 = vmatpush1.bf16.msra.mxu0 %v4310
  %4330 = vmatprep.subr.bf16.mxu0 0
  %4331 = vmatpush1.bf16.msra.mxu0 %v4309
  %4332 = vmatprep.subr.bf16.mxu0 0
  %4333 = vmatpush1.bf16.msra.mxu0 %v4308
  %4334 = vmatprep.subr.bf16.mxu0 0
  %4335 = vmatpush1.bf16.msra.mxu0 %v4307
  %4336 = vmatprep.subr.bf16.mxu0 0
  %4337 = vmatpush1.bf16.msra.mxu0 %v4306
  %4338 = vmatprep.subr.bf16.mxu0 0
  %4339 = vmatpush2.bf16.msra.mxu0 0
  %4340 = vmatprep.subr.bf16.mxu0 0
  %4341 = vmatpush2.bf16.msra.mxu0 0
  %4342 = vmatprep.subr.bf16.mxu0 0
  %4343 = vmatpush2.bf16.msra.mxu0 0
  %4344 = vmatprep.subr.bf16.mxu0 0
  %4345 = vmatpush2.bf16.msra.mxu0 0
  %4346 = vmatprep.subr.bf16.mxu0 0
  %4347 = vmatpush2.bf16.msra.mxu0 0
  %4348 = vmatprep.subr.bf16.mxu0 0
  %4349 = vmatpush2.bf16.msra.mxu0 0
  %4350 = vmatprep.subr.bf16.mxu0 0
  %4351 = vmatpush2.bf16.msra.mxu0 0
  %4352 = vmatprep.subr.bf16.mxu0 0
  %4353 = vmatpush2.bf16.msra.mxu0 0
  %4354 = vmatprep.mubr.bf16.mxu0 0
  %4355 = vmatmul.mubr.bf16.gmra.mxu0 %v4256
  %v4356 = vpop.f32.mrf.mxu0
  %v4357 = vadd.f32 0.0, %v4356
  %v4358 = vpop.f32.mrf.mxu0
  %v4359 = vpop.f32.mrf.mxu0
  %v4360 = vpop.f32.mrf.mxu0
  %4361 = vdwg.mxu0
  %v4362 = vadd.f32 %v4148, %v4357
  %v4363 = vpack.c.bf16 %v2417, %v2417
  %s4364 = scalar_lea.vmem %s9, 384
  %v4365 = vld [vmem:[%s4364] sm:$0xf]
  %v4366 = vld [vmem:[%s4364 + $0x4] sm:$0xf]
  %v4367 = vld [vmem:[%s4364 + $0x8] sm:$0xf]
  %v4368 = vld [vmem:[%s4364 + $0xc] sm:$0xf]
  %v4369 = vld [vmem:[%s4364 + $0x10] sm:$0xf]
  %v4370 = vld [vmem:[%s4364 + $0x14] sm:$0xf]
  %v4371 = vld [vmem:[%s4364 + $0x18] sm:$0xf]
  %v4372 = vld [vmem:[%s4364 + $0x1c] sm:$0xf]
  %v4373 = vld [vmem:[%s4364 + $0x20] sm:$0xf]
  %v4374 = vld [vmem:[%s4364 + $0x24] sm:$0xf]
  %v4375 = vld [vmem:[%s4364 + $0x28] sm:$0xf]
  %v4376 = vld [vmem:[%s4364 + $0x2c] sm:$0xf]
  %v4377 = vld [vmem:[%s4364 + $0x30] sm:$0xf]
  %v4378 = vld [vmem:[%s4364 + $0x34] sm:$0xf]
  %v4379 = vld [vmem:[%s4364 + $0x38] sm:$0xf]
  %v4380 = vld [vmem:[%s4364 + $0x3c] sm:$0xf]
  %v4397 = vunpack.c.l.b16 %v4365
  %v4398 = vunpack.c.l.b16 %v4366
  %v4399 = vunpack.c.l.b16 %v4367
  %v4400 = vunpack.c.l.b16 %v4368
  %v4401 = vunpack.c.l.b16 %v4369
  %v4402 = vunpack.c.l.b16 %v4370
  %v4403 = vunpack.c.l.b16 %v4371
  %v4404 = vunpack.c.l.b16 %v4372
  %v4405 = vunpack.c.l.b16 %v4373
  %v4406 = vunpack.c.l.b16 %v4374
  %v4407 = vunpack.c.l.b16 %v4375
  %v4408 = vunpack.c.l.b16 %v4376
  %v4409 = vunpack.c.l.b16 %v4377
  %v4410 = vunpack.c.l.b16 %v4378
  %v4411 = vunpack.c.l.b16 %v4379
  %v4412 = vunpack.c.l.b16 %v4380
  %v4413 = vpack.c.b16 %v4398, %v4397
  %v4414 = vpack.c.b16 %v4400, %v4399
  %v4415 = vpack.c.b16 %v4402, %v4401
  %v4416 = vpack.c.b16 %v4404, %v4403
  %v4417 = vpack.c.b16 %v4406, %v4405
  %v4418 = vpack.c.b16 %v4408, %v4407
  %v4419 = vpack.c.b16 %v4410, %v4409
  %v4420 = vpack.c.b16 %v4412, %v4411
  %4429 = vmatprep.subr.bf16.mxu0 0
  %4430 = vmatpush1.bf16.msra.mxu0 %v4420
  %4431 = vmatprep.subr.bf16.mxu0 0
  %4432 = vmatpush1.bf16.msra.mxu0 %v4419
  %4433 = vmatprep.subr.bf16.mxu0 0
  %4434 = vmatpush1.bf16.msra.mxu0 %v4418
  %4435 = vmatprep.subr.bf16.mxu0 0
  %4436 = vmatpush1.bf16.msra.mxu0 %v4417
  %4437 = vmatprep.subr.bf16.mxu0 0
  %4438 = vmatpush1.bf16.msra.mxu0 %v4416
  %4439 = vmatprep.subr.bf16.mxu0 0
  %4440 = vmatpush1.bf16.msra.mxu0 %v4415
  %4441 = vmatprep.subr.bf16.mxu0 0
  %4442 = vmatpush1.bf16.msra.mxu0 %v4414
  %4443 = vmatprep.subr.bf16.mxu0 0
  %4444 = vmatpush1.bf16.msra.mxu0 %v4413
  %4445 = vmatprep.subr.bf16.mxu0 0
  %4446 = vmatpush2.bf16.msra.mxu0 0
  %4447 = vmatprep.subr.bf16.mxu0 0
  %4448 = vmatpush2.bf16.msra.mxu0 0
  %4449 = vmatprep.subr.bf16.mxu0 0
  %4450 = vmatpush2.bf16.msra.mxu0 0
  %4451 = vmatprep.subr.bf16.mxu0 0
  %4452 = vmatpush2.bf16.msra.mxu0 0
  %4453 = vmatprep.subr.bf16.mxu0 0
  %4454 = vmatpush2.bf16.msra.mxu0 0
  %4455 = vmatprep.subr.bf16.mxu0 0
  %4456 = vmatpush2.bf16.msra.mxu0 0
  %4457 = vmatprep.subr.bf16.mxu0 0
  %4458 = vmatpush2.bf16.msra.mxu0 0
  %4459 = vmatprep.subr.bf16.mxu0 0
  %4460 = vmatpush2.bf16.msra.mxu0 0
  %4461 = vmatprep.mubr.bf16.mxu0 0
  %4462 = vmatmul.mubr.bf16.gmra.mxu0 %v4363
  %v4463 = vpop.f32.mrf.mxu0
  %v4464 = vadd.f32 0.0, %v4463
  %v4465 = vpop.f32.mrf.mxu0
  %v4466 = vpop.f32.mrf.mxu0
  %v4467 = vpop.f32.mrf.mxu0
  %4468 = vdwg.mxu0
  %v4469 = vadd.f32 %v4255, %v4464
  %v4470 = vpack.c.bf16 %v3075, %v3075
  %s4471 = scalar_lea.vmem %s10, 384
  %v4472 = vld [vmem:[%s4471] sm:$0xf]
  %v4473 = vld [vmem:[%s4471 + $0x4] sm:$0xf]
  %v4474 = vld [vmem:[%s4471 + $0x8] sm:$0xf]
  %v4475 = vld [vmem:[%s4471 + $0xc] sm:$0xf]
  %v4476 = vld [vmem:[%s4471 + $0x10] sm:$0xf]
  %v4477 = vld [vmem:[%s4471 + $0x14] sm:$0xf]
  %v4478 = vld [vmem:[%s4471 + $0x18] sm:$0xf]
  %v4479 = vld [vmem:[%s4471 + $0x1c] sm:$0xf]
  %v4480 = vld [vmem:[%s4471 + $0x20] sm:$0xf]
  %v4481 = vld [vmem:[%s4471 + $0x24] sm:$0xf]
  %v4482 = vld [vmem:[%s4471 + $0x28] sm:$0xf]
  %v4483 = vld [vmem:[%s4471 + $0x2c] sm:$0xf]
  %v4484 = vld [vmem:[%s4471 + $0x30] sm:$0xf]
  %v4485 = vld [vmem:[%s4471 + $0x34] sm:$0xf]
  %v4486 = vld [vmem:[%s4471 + $0x38] sm:$0xf]
  %v4487 = vld [vmem:[%s4471 + $0x3c] sm:$0xf]
  %v4504 = vunpack.c.l.b16 %v4472
  %v4505 = vunpack.c.l.b16 %v4473
  %v4506 = vunpack.c.l.b16 %v4474
  %v4507 = vunpack.c.l.b16 %v4475
  %v4508 = vunpack.c.l.b16 %v4476
  %v4509 = vunpack.c.l.b16 %v4477
  %v4510 = vunpack.c.l.b16 %v4478
  %v4511 = vunpack.c.l.b16 %v4479
  %v4512 = vunpack.c.l.b16 %v4480
  %v4513 = vunpack.c.l.b16 %v4481
  %v4514 = vunpack.c.l.b16 %v4482
  %v4515 = vunpack.c.l.b16 %v4483
  %v4516 = vunpack.c.l.b16 %v4484
  %v4517 = vunpack.c.l.b16 %v4485
  %v4518 = vunpack.c.l.b16 %v4486
  %v4519 = vunpack.c.l.b16 %v4487
  %v4520 = vpack.c.b16 %v4505, %v4504
  %v4521 = vpack.c.b16 %v4507, %v4506
  %v4522 = vpack.c.b16 %v4509, %v4508
  %v4523 = vpack.c.b16 %v4511, %v4510
  %v4524 = vpack.c.b16 %v4513, %v4512
  %v4525 = vpack.c.b16 %v4515, %v4514
  %v4526 = vpack.c.b16 %v4517, %v4516
  %v4527 = vpack.c.b16 %v4519, %v4518
  %4536 = vmatprep.subr.bf16.mxu0 0
  %4537 = vmatpush1.bf16.msra.mxu0 %v4527
  %4538 = vmatprep.subr.bf16.mxu0 0
  %4539 = vmatpush1.bf16.msra.mxu0 %v4526
  %4540 = vmatprep.subr.bf16.mxu0 0
  %4541 = vmatpush1.bf16.msra.mxu0 %v4525
  %4542 = vmatprep.subr.bf16.mxu0 0
  %4543 = vmatpush1.bf16.msra.mxu0 %v4524
  %4544 = vmatprep.subr.bf16.mxu0 0
  %4545 = vmatpush1.bf16.msra.mxu0 %v4523
  %4546 = vmatprep.subr.bf16.mxu0 0
  %4547 = vmatpush1.bf16.msra.mxu0 %v4522
  %4548 = vmatprep.subr.bf16.mxu0 0
  %4549 = vmatpush1.bf16.msra.mxu0 %v4521
  %4550 = vmatprep.subr.bf16.mxu0 0
  %4551 = vmatpush1.bf16.msra.mxu0 %v4520
  %4552 = vmatprep.subr.bf16.mxu0 0
  %4553 = vmatpush2.bf16.msra.mxu0 0
  %4554 = vmatprep.subr.bf16.mxu0 0
  %4555 = vmatpush2.bf16.msra.mxu0 0
  %4556 = vmatprep.subr.bf16.mxu0 0
  %4557 = vmatpush2.bf16.msra.mxu0 0
  %4558 = vmatprep.subr.bf16.mxu0 0
  %4559 = vmatpush2.bf16.msra.mxu0 0
  %4560 = vmatprep.subr.bf16.mxu0 0
  %4561 = vmatpush2.bf16.msra.mxu0 0
  %4562 = vmatprep.subr.bf16.mxu0 0
  %4563 = vmatpush2.bf16.msra.mxu0 0
  %4564 = vmatprep.subr.bf16.mxu0 0
  %4565 = vmatpush2.bf16.msra.mxu0 0
  %4566 = vmatprep.subr.bf16.mxu0 0
  %4567 = vmatpush2.bf16.msra.mxu0 0
  %4568 = vmatprep.mubr.bf16.mxu0 0
  %4569 = vmatmul.mubr.bf16.gmra.mxu0 %v4470
  %v4570 = vpop.f32.mrf.mxu0
  %v4571 = vadd.f32 0.0, %v4570
  %v4572 = vpop.f32.mrf.mxu0
  %v4573 = vpop.f32.mrf.mxu0
  %v4574 = vpop.f32.mrf.mxu0
  %4575 = vdwg.mxu0
  %v4576 = vadd.f32 %v4362, %v4571
  %v4577 = vpack.c.bf16 %v2418, %v2418
  %s4578 = scalar_lea.vmem %s9, 448
  %v4579 = vld [vmem:[%s4578] sm:$0xf]
  %v4580 = vld [vmem:[%s4578 + $0x4] sm:$0xf]
  %v4581 = vld [vmem:[%s4578 + $0x8] sm:$0xf]
  %v4582 = vld [vmem:[%s4578 + $0xc] sm:$0xf]
  %v4583 = vld [vmem:[%s4578 + $0x10] sm:$0xf]
  %v4584 = vld [vmem:[%s4578 + $0x14] sm:$0xf]
  %v4585 = vld [vmem:[%s4578 + $0x18] sm:$0xf]
  %v4586 = vld [vmem:[%s4578 + $0x1c] sm:$0xf]
  %v4587 = vld [vmem:[%s4578 + $0x20] sm:$0xf]
  %v4588 = vld [vmem:[%s4578 + $0x24] sm:$0xf]
  %v4589 = vld [vmem:[%s4578 + $0x28] sm:$0xf]
  %v4590 = vld [vmem:[%s4578 + $0x2c] sm:$0xf]
  %v4591 = vld [vmem:[%s4578 + $0x30] sm:$0xf]
  %v4592 = vld [vmem:[%s4578 + $0x34] sm:$0xf]
  %v4593 = vld [vmem:[%s4578 + $0x38] sm:$0xf]
  %v4594 = vld [vmem:[%s4578 + $0x3c] sm:$0xf]
  %v4611 = vunpack.c.l.b16 %v4579
  %v4612 = vunpack.c.l.b16 %v4580
  %v4613 = vunpack.c.l.b16 %v4581
  %v4614 = vunpack.c.l.b16 %v4582
  %v4615 = vunpack.c.l.b16 %v4583
  %v4616 = vunpack.c.l.b16 %v4584
  %v4617 = vunpack.c.l.b16 %v4585
  %v4618 = vunpack.c.l.b16 %v4586
  %v4619 = vunpack.c.l.b16 %v4587
  %v4620 = vunpack.c.l.b16 %v4588
  %v4621 = vunpack.c.l.b16 %v4589
  %v4622 = vunpack.c.l.b16 %v4590
  %v4623 = vunpack.c.l.b16 %v4591
  %v4624 = vunpack.c.l.b16 %v4592
  %v4625 = vunpack.c.l.b16 %v4593
  %v4626 = vunpack.c.l.b16 %v4594
  %v4627 = vpack.c.b16 %v4612, %v4611
  %v4628 = vpack.c.b16 %v4614, %v4613
  %v4629 = vpack.c.b16 %v4616, %v4615
  %v4630 = vpack.c.b16 %v4618, %v4617
  %v4631 = vpack.c.b16 %v4620, %v4619
  %v4632 = vpack.c.b16 %v4622, %v4621
  %v4633 = vpack.c.b16 %v4624, %v4623
  %v4634 = vpack.c.b16 %v4626, %v4625
  %4643 = vmatprep.subr.bf16.mxu0 0
  %4644 = vmatpush1.bf16.msra.mxu0 %v4634
  %4645 = vmatprep.subr.bf16.mxu0 0
  %4646 = vmatpush1.bf16.msra.mxu0 %v4633
  %4647 = vmatprep.subr.bf16.mxu0 0
  %4648 = vmatpush1.bf16.msra.mxu0 %v4632
  %4649 = vmatprep.subr.bf16.mxu0 0
  %4650 = vmatpush1.bf16.msra.mxu0 %v4631
  %4651 = vmatprep.subr.bf16.mxu0 0
  %4652 = vmatpush1.bf16.msra.mxu0 %v4630
  %4653 = vmatprep.subr.bf16.mxu0 0
  %4654 = vmatpush1.bf16.msra.mxu0 %v4629
  %4655 = vmatprep.subr.bf16.mxu0 0
  %4656 = vmatpush1.bf16.msra.mxu0 %v4628
  %4657 = vmatprep.subr.bf16.mxu0 0
  %4658 = vmatpush1.bf16.msra.mxu0 %v4627
  %4659 = vmatprep.subr.bf16.mxu0 0
  %4660 = vmatpush2.bf16.msra.mxu0 0
  %4661 = vmatprep.subr.bf16.mxu0 0
  %4662 = vmatpush2.bf16.msra.mxu0 0
  %4663 = vmatprep.subr.bf16.mxu0 0
  %4664 = vmatpush2.bf16.msra.mxu0 0
  %4665 = vmatprep.subr.bf16.mxu0 0
  %4666 = vmatpush2.bf16.msra.mxu0 0
  %4667 = vmatprep.subr.bf16.mxu0 0
  %4668 = vmatpush2.bf16.msra.mxu0 0
  %4669 = vmatprep.subr.bf16.mxu0 0
  %4670 = vmatpush2.bf16.msra.mxu0 0
  %4671 = vmatprep.subr.bf16.mxu0 0
  %4672 = vmatpush2.bf16.msra.mxu0 0
  %4673 = vmatprep.subr.bf16.mxu0 0
  %4674 = vmatpush2.bf16.msra.mxu0 0
  %4675 = vmatprep.mubr.bf16.mxu0 0
  %4676 = vmatmul.mubr.bf16.gmra.mxu0 %v4577
  %v4677 = vpop.f32.mrf.mxu0
  %v4678 = vadd.f32 0.0, %v4677
  %v4679 = vpop.f32.mrf.mxu0
  %v4680 = vpop.f32.mrf.mxu0
  %v4681 = vpop.f32.mrf.mxu0
  %4682 = vdwg.mxu0
  %v4683 = vadd.f32 %v4469, %v4678
  %v4684 = vpack.c.bf16 %v3076, %v3076
  %s4685 = scalar_lea.vmem %s10, 448
  %v4686 = vld [vmem:[%s4685] sm:$0xf]
  %v4687 = vld [vmem:[%s4685 + $0x4] sm:$0xf]
  %v4688 = vld [vmem:[%s4685 + $0x8] sm:$0xf]
  %v4689 = vld [vmem:[%s4685 + $0xc] sm:$0xf]
  %v4690 = vld [vmem:[%s4685 + $0x10] sm:$0xf]
  %v4691 = vld [vmem:[%s4685 + $0x14] sm:$0xf]
  %v4692 = vld [vmem:[%s4685 + $0x18] sm:$0xf]
  %v4693 = vld [vmem:[%s4685 + $0x1c] sm:$0xf]
  %v4694 = vld [vmem:[%s4685 + $0x20] sm:$0xf]
  %v4695 = vld [vmem:[%s4685 + $0x24] sm:$0xf]
  %v4696 = vld [vmem:[%s4685 + $0x28] sm:$0xf]
  %v4697 = vld [vmem:[%s4685 + $0x2c] sm:$0xf]
  %v4698 = vld [vmem:[%s4685 + $0x30] sm:$0xf]
  %v4699 = vld [vmem:[%s4685 + $0x34] sm:$0xf]
  %v4700 = vld [vmem:[%s4685 + $0x38] sm:$0xf]
  %v4701 = vld [vmem:[%s4685 + $0x3c] sm:$0xf]
  %v4718 = vunpack.c.l.b16 %v4686
  %v4719 = vunpack.c.l.b16 %v4687
  %v4720 = vunpack.c.l.b16 %v4688
  %v4721 = vunpack.c.l.b16 %v4689
  %v4722 = vunpack.c.l.b16 %v4690
  %v4723 = vunpack.c.l.b16 %v4691
  %v4724 = vunpack.c.l.b16 %v4692
  %v4725 = vunpack.c.l.b16 %v4693
  %v4726 = vunpack.c.l.b16 %v4694
  %v4727 = vunpack.c.l.b16 %v4695
  %v4728 = vunpack.c.l.b16 %v4696
  %v4729 = vunpack.c.l.b16 %v4697
  %v4730 = vunpack.c.l.b16 %v4698
  %v4731 = vunpack.c.l.b16 %v4699
  %v4732 = vunpack.c.l.b16 %v4700
  %v4733 = vunpack.c.l.b16 %v4701
  %v4734 = vpack.c.b16 %v4719, %v4718
  %v4735 = vpack.c.b16 %v4721, %v4720
  %v4736 = vpack.c.b16 %v4723, %v4722
  %v4737 = vpack.c.b16 %v4725, %v4724
  %v4738 = vpack.c.b16 %v4727, %v4726
  %v4739 = vpack.c.b16 %v4729, %v4728
  %v4740 = vpack.c.b16 %v4731, %v4730
  %v4741 = vpack.c.b16 %v4733, %v4732
  %4750 = vmatprep.subr.bf16.mxu0 0
  %4751 = vmatpush1.bf16.msra.mxu0 %v4741
  %4752 = vmatprep.subr.bf16.mxu0 0
  %4753 = vmatpush1.bf16.msra.mxu0 %v4740
  %4754 = vmatprep.subr.bf16.mxu0 0
  %4755 = vmatpush1.bf16.msra.mxu0 %v4739
  %4756 = vmatprep.subr.bf16.mxu0 0
  %4757 = vmatpush1.bf16.msra.mxu0 %v4738
  %4758 = vmatprep.subr.bf16.mxu0 0
  %4759 = vmatpush1.bf16.msra.mxu0 %v4737
  %4760 = vmatprep.subr.bf16.mxu0 0
  %4761 = vmatpush1.bf16.msra.mxu0 %v4736
  %4762 = vmatprep.subr.bf16.mxu0 0
  %4763 = vmatpush1.bf16.msra.mxu0 %v4735
  %4764 = vmatprep.subr.bf16.mxu0 0
  %4765 = vmatpush1.bf16.msra.mxu0 %v4734
  %4766 = vmatprep.subr.bf16.mxu0 0
  %4767 = vmatpush2.bf16.msra.mxu0 0
  %4768 = vmatprep.subr.bf16.mxu0 0
  %4769 = vmatpush2.bf16.msra.mxu0 0
  %4770 = vmatprep.subr.bf16.mxu0 0
  %4771 = vmatpush2.bf16.msra.mxu0 0
  %4772 = vmatprep.subr.bf16.mxu0 0
  %4773 = vmatpush2.bf16.msra.mxu0 0
  %4774 = vmatprep.subr.bf16.mxu0 0
  %4775 = vmatpush2.bf16.msra.mxu0 0
  %4776 = vmatprep.subr.bf16.mxu0 0
  %4777 = vmatpush2.bf16.msra.mxu0 0
  %4778 = vmatprep.subr.bf16.mxu0 0
  %4779 = vmatpush2.bf16.msra.mxu0 0
  %4780 = vmatprep.subr.bf16.mxu0 0
  %4781 = vmatpush2.bf16.msra.mxu0 0
  %4782 = vmatprep.mubr.bf16.mxu0 0
  %4783 = vmatmul.mubr.bf16.gmra.mxu0 %v4684
  %v4784 = vpop.f32.mrf.mxu0
  %v4785 = vadd.f32 0.0, %v4784
  %v4786 = vpop.f32.mrf.mxu0
  %v4787 = vpop.f32.mrf.mxu0
  %v4788 = vpop.f32.mrf.mxu0
  %4789 = vdwg.mxu0
  %v4790 = vadd.f32 %v4576, %v4785
  %v4791 = vpack.c.bf16 %v2419, %v2419
  %s4792 = scalar_lea.vmem %s9, 512
  %v4793 = vld [vmem:[%s4792] sm:$0xf]
  %v4794 = vld [vmem:[%s4792 + $0x4] sm:$0xf]
  %v4795 = vld [vmem:[%s4792 + $0x8] sm:$0xf]
  %v4796 = vld [vmem:[%s4792 + $0xc] sm:$0xf]
  %v4797 = vld [vmem:[%s4792 + $0x10] sm:$0xf]
  %v4798 = vld [vmem:[%s4792 + $0x14] sm:$0xf]
  %v4799 = vld [vmem:[%s4792 + $0x18] sm:$0xf]
  %v4800 = vld [vmem:[%s4792 + $0x1c] sm:$0xf]
  %v4801 = vld [vmem:[%s4792 + $0x20] sm:$0xf]
  %v4802 = vld [vmem:[%s4792 + $0x24] sm:$0xf]
  %v4803 = vld [vmem:[%s4792 + $0x28] sm:$0xf]
  %v4804 = vld [vmem:[%s4792 + $0x2c] sm:$0xf]
  %v4805 = vld [vmem:[%s4792 + $0x30] sm:$0xf]
  %v4806 = vld [vmem:[%s4792 + $0x34] sm:$0xf]
  %v4807 = vld [vmem:[%s4792 + $0x38] sm:$0xf]
  %v4808 = vld [vmem:[%s4792 + $0x3c] sm:$0xf]
  %v4825 = vunpack.c.l.b16 %v4793
  %v4826 = vunpack.c.l.b16 %v4794
  %v4827 = vunpack.c.l.b16 %v4795
  %v4828 = vunpack.c.l.b16 %v4796
  %v4829 = vunpack.c.l.b16 %v4797
  %v4830 = vunpack.c.l.b16 %v4798
  %v4831 = vunpack.c.l.b16 %v4799
  %v4832 = vunpack.c.l.b16 %v4800
  %v4833 = vunpack.c.l.b16 %v4801
  %v4834 = vunpack.c.l.b16 %v4802
  %v4835 = vunpack.c.l.b16 %v4803
  %v4836 = vunpack.c.l.b16 %v4804
  %v4837 = vunpack.c.l.b16 %v4805
  %v4838 = vunpack.c.l.b16 %v4806
  %v4839 = vunpack.c.l.b16 %v4807
  %v4840 = vunpack.c.l.b16 %v4808
  %v4841 = vpack.c.b16 %v4826, %v4825
  %v4842 = vpack.c.b16 %v4828, %v4827
  %v4843 = vpack.c.b16 %v4830, %v4829
  %v4844 = vpack.c.b16 %v4832, %v4831
  %v4845 = vpack.c.b16 %v4834, %v4833
  %v4846 = vpack.c.b16 %v4836, %v4835
  %v4847 = vpack.c.b16 %v4838, %v4837
  %v4848 = vpack.c.b16 %v4840, %v4839
  %4857 = vmatprep.subr.bf16.mxu0 0
  %4858 = vmatpush1.bf16.msra.mxu0 %v4848
  %4859 = vmatprep.subr.bf16.mxu0 0
  %4860 = vmatpush1.bf16.msra.mxu0 %v4847
  %4861 = vmatprep.subr.bf16.mxu0 0
  %4862 = vmatpush1.bf16.msra.mxu0 %v4846
  %4863 = vmatprep.subr.bf16.mxu0 0
  %4864 = vmatpush1.bf16.msra.mxu0 %v4845
  %4865 = vmatprep.subr.bf16.mxu0 0
  %4866 = vmatpush1.bf16.msra.mxu0 %v4844
  %4867 = vmatprep.subr.bf16.mxu0 0
  %4868 = vmatpush1.bf16.msra.mxu0 %v4843
  %4869 = vmatprep.subr.bf16.mxu0 0
  %4870 = vmatpush1.bf16.msra.mxu0 %v4842
  %4871 = vmatprep.subr.bf16.mxu0 0
  %4872 = vmatpush1.bf16.msra.mxu0 %v4841
  %4873 = vmatprep.subr.bf16.mxu0 0
  %4874 = vmatpush2.bf16.msra.mxu0 0
  %4875 = vmatprep.subr.bf16.mxu0 0
  %4876 = vmatpush2.bf16.msra.mxu0 0
  %4877 = vmatprep.subr.bf16.mxu0 0
  %4878 = vmatpush2.bf16.msra.mxu0 0
  %4879 = vmatprep.subr.bf16.mxu0 0
  %4880 = vmatpush2.bf16.msra.mxu0 0
  %4881 = vmatprep.subr.bf16.mxu0 0
  %4882 = vmatpush2.bf16.msra.mxu0 0
  %4883 = vmatprep.subr.bf16.mxu0 0
  %4884 = vmatpush2.bf16.msra.mxu0 0
  %4885 = vmatprep.subr.bf16.mxu0 0
  %4886 = vmatpush2.bf16.msra.mxu0 0
  %4887 = vmatprep.subr.bf16.mxu0 0
  %4888 = vmatpush2.bf16.msra.mxu0 0
  %4889 = vmatprep.mubr.bf16.mxu0 0
  %4890 = vmatmul.mubr.bf16.gmra.mxu0 %v4791
  %v4891 = vpop.f32.mrf.mxu0
  %v4892 = vadd.f32 0.0, %v4891
  %v4893 = vpop.f32.mrf.mxu0
  %v4894 = vpop.f32.mrf.mxu0
  %v4895 = vpop.f32.mrf.mxu0
  %4896 = vdwg.mxu0
  %v4897 = vadd.f32 %v4683, %v4892
  %v4898 = vpack.c.bf16 %v3077, %v3077
  %s4899 = scalar_lea.vmem %s10, 512
  %v4900 = vld [vmem:[%s4899] sm:$0xf]
  %v4901 = vld [vmem:[%s4899 + $0x4] sm:$0xf]
  %v4902 = vld [vmem:[%s4899 + $0x8] sm:$0xf]
  %v4903 = vld [vmem:[%s4899 + $0xc] sm:$0xf]
  %v4904 = vld [vmem:[%s4899 + $0x10] sm:$0xf]
  %v4905 = vld [vmem:[%s4899 + $0x14] sm:$0xf]
  %v4906 = vld [vmem:[%s4899 + $0x18] sm:$0xf]
  %v4907 = vld [vmem:[%s4899 + $0x1c] sm:$0xf]
  %v4908 = vld [vmem:[%s4899 + $0x20] sm:$0xf]
  %v4909 = vld [vmem:[%s4899 + $0x24] sm:$0xf]
  %v4910 = vld [vmem:[%s4899 + $0x28] sm:$0xf]
  %v4911 = vld [vmem:[%s4899 + $0x2c] sm:$0xf]
  %v4912 = vld [vmem:[%s4899 + $0x30] sm:$0xf]
  %v4913 = vld [vmem:[%s4899 + $0x34] sm:$0xf]
  %v4914 = vld [vmem:[%s4899 + $0x38] sm:$0xf]
  %v4915 = vld [vmem:[%s4899 + $0x3c] sm:$0xf]
  %v4932 = vunpack.c.l.b16 %v4900
  %v4933 = vunpack.c.l.b16 %v4901
  %v4934 = vunpack.c.l.b16 %v4902
  %v4935 = vunpack.c.l.b16 %v4903
  %v4936 = vunpack.c.l.b16 %v4904
  %v4937 = vunpack.c.l.b16 %v4905
  %v4938 = vunpack.c.l.b16 %v4906
  %v4939 = vunpack.c.l.b16 %v4907
  %v4940 = vunpack.c.l.b16 %v4908
  %v4941 = vunpack.c.l.b16 %v4909
  %v4942 = vunpack.c.l.b16 %v4910
  %v4943 = vunpack.c.l.b16 %v4911
  %v4944 = vunpack.c.l.b16 %v4912
  %v4945 = vunpack.c.l.b16 %v4913
  %v4946 = vunpack.c.l.b16 %v4914
  %v4947 = vunpack.c.l.b16 %v4915
  %v4948 = vpack.c.b16 %v4933, %v4932
  %v4949 = vpack.c.b16 %v4935, %v4934
  %v4950 = vpack.c.b16 %v4937, %v4936
  %v4951 = vpack.c.b16 %v4939, %v4938
  %v4952 = vpack.c.b16 %v4941, %v4940
  %v4953 = vpack.c.b16 %v4943, %v4942
  %v4954 = vpack.c.b16 %v4945, %v4944
  %v4955 = vpack.c.b16 %v4947, %v4946
  %4964 = vmatprep.subr.bf16.mxu0 0
  %4965 = vmatpush1.bf16.msra.mxu0 %v4955
  %4966 = vmatprep.subr.bf16.mxu0 0
  %4967 = vmatpush1.bf16.msra.mxu0 %v4954
  %4968 = vmatprep.subr.bf16.mxu0 0
  %4969 = vmatpush1.bf16.msra.mxu0 %v4953
  %4970 = vmatprep.subr.bf16.mxu0 0
  %4971 = vmatpush1.bf16.msra.mxu0 %v4952
  %4972 = vmatprep.subr.bf16.mxu0 0
  %4973 = vmatpush1.bf16.msra.mxu0 %v4951
  %4974 = vmatprep.subr.bf16.mxu0 0
  %4975 = vmatpush1.bf16.msra.mxu0 %v4950
  %4976 = vmatprep.subr.bf16.mxu0 0
  %4977 = vmatpush1.bf16.msra.mxu0 %v4949
  %4978 = vmatprep.subr.bf16.mxu0 0
  %4979 = vmatpush1.bf16.msra.mxu0 %v4948
  %4980 = vmatprep.subr.bf16.mxu0 0
  %4981 = vmatpush2.bf16.msra.mxu0 0
  %4982 = vmatprep.subr.bf16.mxu0 0
  %4983 = vmatpush2.bf16.msra.mxu0 0
  %4984 = vmatprep.subr.bf16.mxu0 0
  %4985 = vmatpush2.bf16.msra.mxu0 0
  %4986 = vmatprep.subr.bf16.mxu0 0
  %4987 = vmatpush2.bf16.msra.mxu0 0
  %4988 = vmatprep.subr.bf16.mxu0 0
  %4989 = vmatpush2.bf16.msra.mxu0 0
  %4990 = vmatprep.subr.bf16.mxu0 0
  %4991 = vmatpush2.bf16.msra.mxu0 0
  %4992 = vmatprep.subr.bf16.mxu0 0
  %4993 = vmatpush2.bf16.msra.mxu0 0
  %4994 = vmatprep.subr.bf16.mxu0 0
  %4995 = vmatpush2.bf16.msra.mxu0 0
  %4996 = vmatprep.mubr.bf16.mxu0 0
  %4997 = vmatmul.mubr.bf16.gmra.mxu0 %v4898
  %v4998 = vpop.f32.mrf.mxu0
  %v4999 = vadd.f32 0.0, %v4998
  %v5000 = vpop.f32.mrf.mxu0
  %v5001 = vpop.f32.mrf.mxu0
  %v5002 = vpop.f32.mrf.mxu0
  %5003 = vdwg.mxu0
  %v5004 = vadd.f32 %v4790, %v4999
  %v5005 = vpack.c.bf16 %v2420, %v2420
  %s5006 = scalar_lea.vmem %s9, 576
  %v5007 = vld [vmem:[%s5006] sm:$0xf]
  %v5008 = vld [vmem:[%s5006 + $0x4] sm:$0xf]
  %v5009 = vld [vmem:[%s5006 + $0x8] sm:$0xf]
  %v5010 = vld [vmem:[%s5006 + $0xc] sm:$0xf]
  %v5011 = vld [vmem:[%s5006 + $0x10] sm:$0xf]
  %v5012 = vld [vmem:[%s5006 + $0x14] sm:$0xf]
  %v5013 = vld [vmem:[%s5006 + $0x18] sm:$0xf]
  %v5014 = vld [vmem:[%s5006 + $0x1c] sm:$0xf]
  %v5015 = vld [vmem:[%s5006 + $0x20] sm:$0xf]
  %v5016 = vld [vmem:[%s5006 + $0x24] sm:$0xf]
  %v5017 = vld [vmem:[%s5006 + $0x28] sm:$0xf]
  %v5018 = vld [vmem:[%s5006 + $0x2c] sm:$0xf]
  %v5019 = vld [vmem:[%s5006 + $0x30] sm:$0xf]
  %v5020 = vld [vmem:[%s5006 + $0x34] sm:$0xf]
  %v5021 = vld [vmem:[%s5006 + $0x38] sm:$0xf]
  %v5022 = vld [vmem:[%s5006 + $0x3c] sm:$0xf]
  %v5039 = vunpack.c.l.b16 %v5007
  %v5040 = vunpack.c.l.b16 %v5008
  %v5041 = vunpack.c.l.b16 %v5009
  %v5042 = vunpack.c.l.b16 %v5010
  %v5043 = vunpack.c.l.b16 %v5011
  %v5044 = vunpack.c.l.b16 %v5012
  %v5045 = vunpack.c.l.b16 %v5013
  %v5046 = vunpack.c.l.b16 %v5014
  %v5047 = vunpack.c.l.b16 %v5015
  %v5048 = vunpack.c.l.b16 %v5016
  %v5049 = vunpack.c.l.b16 %v5017
  %v5050 = vunpack.c.l.b16 %v5018
  %v5051 = vunpack.c.l.b16 %v5019
  %v5052 = vunpack.c.l.b16 %v5020
  %v5053 = vunpack.c.l.b16 %v5021
  %v5054 = vunpack.c.l.b16 %v5022
  %v5055 = vpack.c.b16 %v5040, %v5039
  %v5056 = vpack.c.b16 %v5042, %v5041
  %v5057 = vpack.c.b16 %v5044, %v5043
  %v5058 = vpack.c.b16 %v5046, %v5045
  %v5059 = vpack.c.b16 %v5048, %v5047
  %v5060 = vpack.c.b16 %v5050, %v5049
  %v5061 = vpack.c.b16 %v5052, %v5051
  %v5062 = vpack.c.b16 %v5054, %v5053
  %5071 = vmatprep.subr.bf16.mxu0 0
  %5072 = vmatpush1.bf16.msra.mxu0 %v5062
  %5073 = vmatprep.subr.bf16.mxu0 0
  %5074 = vmatpush1.bf16.msra.mxu0 %v5061
  %5075 = vmatprep.subr.bf16.mxu0 0
  %5076 = vmatpush1.bf16.msra.mxu0 %v5060
  %5077 = vmatprep.subr.bf16.mxu0 0
  %5078 = vmatpush1.bf16.msra.mxu0 %v5059
  %5079 = vmatprep.subr.bf16.mxu0 0
  %5080 = vmatpush1.bf16.msra.mxu0 %v5058
  %5081 = vmatprep.subr.bf16.mxu0 0
  %5082 = vmatpush1.bf16.msra.mxu0 %v5057
  %5083 = vmatprep.subr.bf16.mxu0 0
  %5084 = vmatpush1.bf16.msra.mxu0 %v5056
  %5085 = vmatprep.subr.bf16.mxu0 0
  %5086 = vmatpush1.bf16.msra.mxu0 %v5055
  %5087 = vmatprep.subr.bf16.mxu0 0
  %5088 = vmatpush2.bf16.msra.mxu0 0
  %5089 = vmatprep.subr.bf16.mxu0 0
  %5090 = vmatpush2.bf16.msra.mxu0 0
  %5091 = vmatprep.subr.bf16.mxu0 0
  %5092 = vmatpush2.bf16.msra.mxu0 0
  %5093 = vmatprep.subr.bf16.mxu0 0
  %5094 = vmatpush2.bf16.msra.mxu0 0
  %5095 = vmatprep.subr.bf16.mxu0 0
  %5096 = vmatpush2.bf16.msra.mxu0 0
  %5097 = vmatprep.subr.bf16.mxu0 0
  %5098 = vmatpush2.bf16.msra.mxu0 0
  %5099 = vmatprep.subr.bf16.mxu0 0
  %5100 = vmatpush2.bf16.msra.mxu0 0
  %5101 = vmatprep.subr.bf16.mxu0 0
  %5102 = vmatpush2.bf16.msra.mxu0 0
  %5103 = vmatprep.mubr.bf16.mxu0 0
  %5104 = vmatmul.mubr.bf16.gmra.mxu0 %v5005
  %v5105 = vpop.f32.mrf.mxu0
  %v5106 = vadd.f32 0.0, %v5105
  %v5107 = vpop.f32.mrf.mxu0
  %v5108 = vpop.f32.mrf.mxu0
  %v5109 = vpop.f32.mrf.mxu0
  %5110 = vdwg.mxu0
  %v5111 = vadd.f32 %v4897, %v5106
  %v5112 = vpack.c.bf16 %v3078, %v3078
  %s5113 = scalar_lea.vmem %s10, 576
  %v5114 = vld [vmem:[%s5113] sm:$0xf]
  %v5115 = vld [vmem:[%s5113 + $0x4] sm:$0xf]
  %v5116 = vld [vmem:[%s5113 + $0x8] sm:$0xf]
  %v5117 = vld [vmem:[%s5113 + $0xc] sm:$0xf]
  %v5118 = vld [vmem:[%s5113 + $0x10] sm:$0xf]
  %v5119 = vld [vmem:[%s5113 + $0x14] sm:$0xf]
  %v5120 = vld [vmem:[%s5113 + $0x18] sm:$0xf]
  %v5121 = vld [vmem:[%s5113 + $0x1c] sm:$0xf]
  %v5122 = vld [vmem:[%s5113 + $0x20] sm:$0xf]
  %v5123 = vld [vmem:[%s5113 + $0x24] sm:$0xf]
  %v5124 = vld [vmem:[%s5113 + $0x28] sm:$0xf]
  %v5125 = vld [vmem:[%s5113 + $0x2c] sm:$0xf]
  %v5126 = vld [vmem:[%s5113 + $0x30] sm:$0xf]
  %v5127 = vld [vmem:[%s5113 + $0x34] sm:$0xf]
  %v5128 = vld [vmem:[%s5113 + $0x38] sm:$0xf]
  %v5129 = vld [vmem:[%s5113 + $0x3c] sm:$0xf]
  %v5146 = vunpack.c.l.b16 %v5114
  %v5147 = vunpack.c.l.b16 %v5115
  %v5148 = vunpack.c.l.b16 %v5116
  %v5149 = vunpack.c.l.b16 %v5117
  %v5150 = vunpack.c.l.b16 %v5118
  %v5151 = vunpack.c.l.b16 %v5119
  %v5152 = vunpack.c.l.b16 %v5120
  %v5153 = vunpack.c.l.b16 %v5121
  %v5154 = vunpack.c.l.b16 %v5122
  %v5155 = vunpack.c.l.b16 %v5123
  %v5156 = vunpack.c.l.b16 %v5124
  %v5157 = vunpack.c.l.b16 %v5125
  %v5158 = vunpack.c.l.b16 %v5126
  %v5159 = vunpack.c.l.b16 %v5127
  %v5160 = vunpack.c.l.b16 %v5128
  %v5161 = vunpack.c.l.b16 %v5129
  %v5162 = vpack.c.b16 %v5147, %v5146
  %v5163 = vpack.c.b16 %v5149, %v5148
  %v5164 = vpack.c.b16 %v5151, %v5150
  %v5165 = vpack.c.b16 %v5153, %v5152
  %v5166 = vpack.c.b16 %v5155, %v5154
  %v5167 = vpack.c.b16 %v5157, %v5156
  %v5168 = vpack.c.b16 %v5159, %v5158
  %v5169 = vpack.c.b16 %v5161, %v5160
  %5178 = vmatprep.subr.bf16.mxu0 0
  %5179 = vmatpush1.bf16.msra.mxu0 %v5169
  %5180 = vmatprep.subr.bf16.mxu0 0
  %5181 = vmatpush1.bf16.msra.mxu0 %v5168
  %5182 = vmatprep.subr.bf16.mxu0 0
  %5183 = vmatpush1.bf16.msra.mxu0 %v5167
  %5184 = vmatprep.subr.bf16.mxu0 0
  %5185 = vmatpush1.bf16.msra.mxu0 %v5166
  %5186 = vmatprep.subr.bf16.mxu0 0
  %5187 = vmatpush1.bf16.msra.mxu0 %v5165
  %5188 = vmatprep.subr.bf16.mxu0 0
  %5189 = vmatpush1.bf16.msra.mxu0 %v5164
  %5190 = vmatprep.subr.bf16.mxu0 0
  %5191 = vmatpush1.bf16.msra.mxu0 %v5163
  %5192 = vmatprep.subr.bf16.mxu0 0
  %5193 = vmatpush1.bf16.msra.mxu0 %v5162
  %5194 = vmatprep.subr.bf16.mxu0 0
  %5195 = vmatpush2.bf16.msra.mxu0 0
  %5196 = vmatprep.subr.bf16.mxu0 0
  %5197 = vmatpush2.bf16.msra.mxu0 0
  %5198 = vmatprep.subr.bf16.mxu0 0
  %5199 = vmatpush2.bf16.msra.mxu0 0
  %5200 = vmatprep.subr.bf16.mxu0 0
  %5201 = vmatpush2.bf16.msra.mxu0 0
  %5202 = vmatprep.subr.bf16.mxu0 0
  %5203 = vmatpush2.bf16.msra.mxu0 0
  %5204 = vmatprep.subr.bf16.mxu0 0
  %5205 = vmatpush2.bf16.msra.mxu0 0
  %5206 = vmatprep.subr.bf16.mxu0 0
  %5207 = vmatpush2.bf16.msra.mxu0 0
  %5208 = vmatprep.subr.bf16.mxu0 0
  %5209 = vmatpush2.bf16.msra.mxu0 0
  %5210 = vmatprep.mubr.bf16.mxu0 0
  %5211 = vmatmul.mubr.bf16.gmra.mxu0 %v5112
  %v5212 = vpop.f32.mrf.mxu0
  %v5213 = vadd.f32 0.0, %v5212
  %v5214 = vpop.f32.mrf.mxu0
  %v5215 = vpop.f32.mrf.mxu0
  %v5216 = vpop.f32.mrf.mxu0
  %5217 = vdwg.mxu0
  %v5218 = vadd.f32 %v5004, %v5213
  %v5219 = vpack.c.bf16 %v2421, %v2421
  %s5220 = scalar_lea.vmem %s9, 640
  %v5221 = vld [vmem:[%s5220] sm:$0xf]
  %v5222 = vld [vmem:[%s5220 + $0x4] sm:$0xf]
  %v5223 = vld [vmem:[%s5220 + $0x8] sm:$0xf]
  %v5224 = vld [vmem:[%s5220 + $0xc] sm:$0xf]
  %v5225 = vld [vmem:[%s5220 + $0x10] sm:$0xf]
  %v5226 = vld [vmem:[%s5220 + $0x14] sm:$0xf]
  %v5227 = vld [vmem:[%s5220 + $0x18] sm:$0xf]
  %v5228 = vld [vmem:[%s5220 + $0x1c] sm:$0xf]
  %v5229 = vld [vmem:[%s5220 + $0x20] sm:$0xf]
  %v5230 = vld [vmem:[%s5220 + $0x24] sm:$0xf]
  %v5231 = vld [vmem:[%s5220 + $0x28] sm:$0xf]
  %v5232 = vld [vmem:[%s5220 + $0x2c] sm:$0xf]
  %v5233 = vld [vmem:[%s5220 + $0x30] sm:$0xf]
  %v5234 = vld [vmem:[%s5220 + $0x34] sm:$0xf]
  %v5235 = vld [vmem:[%s5220 + $0x38] sm:$0xf]
  %v5236 = vld [vmem:[%s5220 + $0x3c] sm:$0xf]
  %v5253 = vunpack.c.l.b16 %v5221
  %v5254 = vunpack.c.l.b16 %v5222
  %v5255 = vunpack.c.l.b16 %v5223
  %v5256 = vunpack.c.l.b16 %v5224
  %v5257 = vunpack.c.l.b16 %v5225
  %v5258 = vunpack.c.l.b16 %v5226
  %v5259 = vunpack.c.l.b16 %v5227
  %v5260 = vunpack.c.l.b16 %v5228
  %v5261 = vunpack.c.l.b16 %v5229
  %v5262 = vunpack.c.l.b16 %v5230
  %v5263 = vunpack.c.l.b16 %v5231
  %v5264 = vunpack.c.l.b16 %v5232
  %v5265 = vunpack.c.l.b16 %v5233
  %v5266 = vunpack.c.l.b16 %v5234
  %v5267 = vunpack.c.l.b16 %v5235
  %v5268 = vunpack.c.l.b16 %v5236
  %v5269 = vpack.c.b16 %v5254, %v5253
  %v5270 = vpack.c.b16 %v5256, %v5255
  %v5271 = vpack.c.b16 %v5258, %v5257
  %v5272 = vpack.c.b16 %v5260, %v5259
  %v5273 = vpack.c.b16 %v5262, %v5261
  %v5274 = vpack.c.b16 %v5264, %v5263
  %v5275 = vpack.c.b16 %v5266, %v5265
  %v5276 = vpack.c.b16 %v5268, %v5267
  %5285 = vmatprep.subr.bf16.mxu0 0
  %5286 = vmatpush1.bf16.msra.mxu0 %v5276
  %5287 = vmatprep.subr.bf16.mxu0 0
  %5288 = vmatpush1.bf16.msra.mxu0 %v5275
  %5289 = vmatprep.subr.bf16.mxu0 0
  %5290 = vmatpush1.bf16.msra.mxu0 %v5274
  %5291 = vmatprep.subr.bf16.mxu0 0
  %5292 = vmatpush1.bf16.msra.mxu0 %v5273
  %5293 = vmatprep.subr.bf16.mxu0 0
  %5294 = vmatpush1.bf16.msra.mxu0 %v5272
  %5295 = vmatprep.subr.bf16.mxu0 0
  %5296 = vmatpush1.bf16.msra.mxu0 %v5271
  %5297 = vmatprep.subr.bf16.mxu0 0
  %5298 = vmatpush1.bf16.msra.mxu0 %v5270
  %5299 = vmatprep.subr.bf16.mxu0 0
  %5300 = vmatpush1.bf16.msra.mxu0 %v5269
  %5301 = vmatprep.subr.bf16.mxu0 0
  %5302 = vmatpush2.bf16.msra.mxu0 0
  %5303 = vmatprep.subr.bf16.mxu0 0
  %5304 = vmatpush2.bf16.msra.mxu0 0
  %5305 = vmatprep.subr.bf16.mxu0 0
  %5306 = vmatpush2.bf16.msra.mxu0 0
  %5307 = vmatprep.subr.bf16.mxu0 0
  %5308 = vmatpush2.bf16.msra.mxu0 0
  %5309 = vmatprep.subr.bf16.mxu0 0
  %5310 = vmatpush2.bf16.msra.mxu0 0
  %5311 = vmatprep.subr.bf16.mxu0 0
  %5312 = vmatpush2.bf16.msra.mxu0 0
  %5313 = vmatprep.subr.bf16.mxu0 0
  %5314 = vmatpush2.bf16.msra.mxu0 0
  %5315 = vmatprep.subr.bf16.mxu0 0
  %5316 = vmatpush2.bf16.msra.mxu0 0
  %5317 = vmatprep.mubr.bf16.mxu0 0
  %5318 = vmatmul.mubr.bf16.gmra.mxu0 %v5219
  %v5319 = vpop.f32.mrf.mxu0
  %v5320 = vadd.f32 0.0, %v5319
  %v5321 = vpop.f32.mrf.mxu0
  %v5322 = vpop.f32.mrf.mxu0
  %v5323 = vpop.f32.mrf.mxu0
  %5324 = vdwg.mxu0
  %v5325 = vadd.f32 %v5111, %v5320
  %v5326 = vpack.c.bf16 %v3079, %v3079
  %s5327 = scalar_lea.vmem %s10, 640
  %v5328 = vld [vmem:[%s5327] sm:$0xf]
  %v5329 = vld [vmem:[%s5327 + $0x4] sm:$0xf]
  %v5330 = vld [vmem:[%s5327 + $0x8] sm:$0xf]
  %v5331 = vld [vmem:[%s5327 + $0xc] sm:$0xf]
  %v5332 = vld [vmem:[%s5327 + $0x10] sm:$0xf]
  %v5333 = vld [vmem:[%s5327 + $0x14] sm:$0xf]
  %v5334 = vld [vmem:[%s5327 + $0x18] sm:$0xf]
  %v5335 = vld [vmem:[%s5327 + $0x1c] sm:$0xf]
  %v5336 = vld [vmem:[%s5327 + $0x20] sm:$0xf]
  %v5337 = vld [vmem:[%s5327 + $0x24] sm:$0xf]
  %v5338 = vld [vmem:[%s5327 + $0x28] sm:$0xf]
  %v5339 = vld [vmem:[%s5327 + $0x2c] sm:$0xf]
  %v5340 = vld [vmem:[%s5327 + $0x30] sm:$0xf]
  %v5341 = vld [vmem:[%s5327 + $0x34] sm:$0xf]
  %v5342 = vld [vmem:[%s5327 + $0x38] sm:$0xf]
  %v5343 = vld [vmem:[%s5327 + $0x3c] sm:$0xf]
  %v5360 = vunpack.c.l.b16 %v5328
  %v5361 = vunpack.c.l.b16 %v5329
  %v5362 = vunpack.c.l.b16 %v5330
  %v5363 = vunpack.c.l.b16 %v5331
  %v5364 = vunpack.c.l.b16 %v5332
  %v5365 = vunpack.c.l.b16 %v5333
  %v5366 = vunpack.c.l.b16 %v5334
  %v5367 = vunpack.c.l.b16 %v5335
  %v5368 = vunpack.c.l.b16 %v5336
  %v5369 = vunpack.c.l.b16 %v5337
  %v5370 = vunpack.c.l.b16 %v5338
  %v5371 = vunpack.c.l.b16 %v5339
  %v5372 = vunpack.c.l.b16 %v5340
  %v5373 = vunpack.c.l.b16 %v5341
  %v5374 = vunpack.c.l.b16 %v5342
  %v5375 = vunpack.c.l.b16 %v5343
  %v5376 = vpack.c.b16 %v5361, %v5360
  %v5377 = vpack.c.b16 %v5363, %v5362
  %v5378 = vpack.c.b16 %v5365, %v5364
  %v5379 = vpack.c.b16 %v5367, %v5366
  %v5380 = vpack.c.b16 %v5369, %v5368
  %v5381 = vpack.c.b16 %v5371, %v5370
  %v5382 = vpack.c.b16 %v5373, %v5372
  %v5383 = vpack.c.b16 %v5375, %v5374
  %5392 = vmatprep.subr.bf16.mxu0 0
  %5393 = vmatpush1.bf16.msra.mxu0 %v5383
  %5394 = vmatprep.subr.bf16.mxu0 0
  %5395 = vmatpush1.bf16.msra.mxu0 %v5382
  %5396 = vmatprep.subr.bf16.mxu0 0
  %5397 = vmatpush1.bf16.msra.mxu0 %v5381
  %5398 = vmatprep.subr.bf16.mxu0 0
  %5399 = vmatpush1.bf16.msra.mxu0 %v5380
  %5400 = vmatprep.subr.bf16.mxu0 0
  %5401 = vmatpush1.bf16.msra.mxu0 %v5379
  %5402 = vmatprep.subr.bf16.mxu0 0
  %5403 = vmatpush1.bf16.msra.mxu0 %v5378
  %5404 = vmatprep.subr.bf16.mxu0 0
  %5405 = vmatpush1.bf16.msra.mxu0 %v5377
  %5406 = vmatprep.subr.bf16.mxu0 0
  %5407 = vmatpush1.bf16.msra.mxu0 %v5376
  %5408 = vmatprep.subr.bf16.mxu0 0
  %5409 = vmatpush2.bf16.msra.mxu0 0
  %5410 = vmatprep.subr.bf16.mxu0 0
  %5411 = vmatpush2.bf16.msra.mxu0 0
  %5412 = vmatprep.subr.bf16.mxu0 0
  %5413 = vmatpush2.bf16.msra.mxu0 0
  %5414 = vmatprep.subr.bf16.mxu0 0
  %5415 = vmatpush2.bf16.msra.mxu0 0
  %5416 = vmatprep.subr.bf16.mxu0 0
  %5417 = vmatpush2.bf16.msra.mxu0 0
  %5418 = vmatprep.subr.bf16.mxu0 0
  %5419 = vmatpush2.bf16.msra.mxu0 0
  %5420 = vmatprep.subr.bf16.mxu0 0
  %5421 = vmatpush2.bf16.msra.mxu0 0
  %5422 = vmatprep.subr.bf16.mxu0 0
  %5423 = vmatpush2.bf16.msra.mxu0 0
  %5424 = vmatprep.mubr.bf16.mxu0 0
  %5425 = vmatmul.mubr.bf16.gmra.mxu0 %v5326
  %v5426 = vpop.f32.mrf.mxu0
  %v5427 = vadd.f32 0.0, %v5426
  %v5428 = vpop.f32.mrf.mxu0
  %v5429 = vpop.f32.mrf.mxu0
  %v5430 = vpop.f32.mrf.mxu0
  %5431 = vdwg.mxu0
  %v5432 = vadd.f32 %v5218, %v5427
  %v5433 = vpack.c.bf16 %v2422, %v2422
  %s5434 = scalar_lea.vmem %s9, 704
  %v5435 = vld [vmem:[%s5434] sm:$0xf]
  %v5436 = vld [vmem:[%s5434 + $0x4] sm:$0xf]
  %v5437 = vld [vmem:[%s5434 + $0x8] sm:$0xf]
  %v5438 = vld [vmem:[%s5434 + $0xc] sm:$0xf]
  %v5439 = vld [vmem:[%s5434 + $0x10] sm:$0xf]
  %v5440 = vld [vmem:[%s5434 + $0x14] sm:$0xf]
  %v5441 = vld [vmem:[%s5434 + $0x18] sm:$0xf]
  %v5442 = vld [vmem:[%s5434 + $0x1c] sm:$0xf]
  %v5443 = vld [vmem:[%s5434 + $0x20] sm:$0xf]
  %v5444 = vld [vmem:[%s5434 + $0x24] sm:$0xf]
  %v5445 = vld [vmem:[%s5434 + $0x28] sm:$0xf]
  %v5446 = vld [vmem:[%s5434 + $0x2c] sm:$0xf]
  %v5447 = vld [vmem:[%s5434 + $0x30] sm:$0xf]
  %v5448 = vld [vmem:[%s5434 + $0x34] sm:$0xf]
  %v5449 = vld [vmem:[%s5434 + $0x38] sm:$0xf]
  %v5450 = vld [vmem:[%s5434 + $0x3c] sm:$0xf]
  %v5467 = vunpack.c.l.b16 %v5435
  %v5468 = vunpack.c.l.b16 %v5436
  %v5469 = vunpack.c.l.b16 %v5437
  %v5470 = vunpack.c.l.b16 %v5438
  %v5471 = vunpack.c.l.b16 %v5439
  %v5472 = vunpack.c.l.b16 %v5440
  %v5473 = vunpack.c.l.b16 %v5441
  %v5474 = vunpack.c.l.b16 %v5442
  %v5475 = vunpack.c.l.b16 %v5443
  %v5476 = vunpack.c.l.b16 %v5444
  %v5477 = vunpack.c.l.b16 %v5445
  %v5478 = vunpack.c.l.b16 %v5446
  %v5479 = vunpack.c.l.b16 %v5447
  %v5480 = vunpack.c.l.b16 %v5448
  %v5481 = vunpack.c.l.b16 %v5449
  %v5482 = vunpack.c.l.b16 %v5450
  %v5483 = vpack.c.b16 %v5468, %v5467
  %v5484 = vpack.c.b16 %v5470, %v5469
  %v5485 = vpack.c.b16 %v5472, %v5471
  %v5486 = vpack.c.b16 %v5474, %v5473
  %v5487 = vpack.c.b16 %v5476, %v5475
  %v5488 = vpack.c.b16 %v5478, %v5477
  %v5489 = vpack.c.b16 %v5480, %v5479
  %v5490 = vpack.c.b16 %v5482, %v5481
  %5499 = vmatprep.subr.bf16.mxu0 0
  %5500 = vmatpush1.bf16.msra.mxu0 %v5490
  %5501 = vmatprep.subr.bf16.mxu0 0
  %5502 = vmatpush1.bf16.msra.mxu0 %v5489
  %5503 = vmatprep.subr.bf16.mxu0 0
  %5504 = vmatpush1.bf16.msra.mxu0 %v5488
  %5505 = vmatprep.subr.bf16.mxu0 0
  %5506 = vmatpush1.bf16.msra.mxu0 %v5487
  %5507 = vmatprep.subr.bf16.mxu0 0
  %5508 = vmatpush1.bf16.msra.mxu0 %v5486
  %5509 = vmatprep.subr.bf16.mxu0 0
  %5510 = vmatpush1.bf16.msra.mxu0 %v5485
  %5511 = vmatprep.subr.bf16.mxu0 0
  %5512 = vmatpush1.bf16.msra.mxu0 %v5484
  %5513 = vmatprep.subr.bf16.mxu0 0
  %5514 = vmatpush1.bf16.msra.mxu0 %v5483
  %5515 = vmatprep.subr.bf16.mxu0 0
  %5516 = vmatpush2.bf16.msra.mxu0 0
  %5517 = vmatprep.subr.bf16.mxu0 0
  %5518 = vmatpush2.bf16.msra.mxu0 0
  %5519 = vmatprep.subr.bf16.mxu0 0
  %5520 = vmatpush2.bf16.msra.mxu0 0
  %5521 = vmatprep.subr.bf16.mxu0 0
  %5522 = vmatpush2.bf16.msra.mxu0 0
  %5523 = vmatprep.subr.bf16.mxu0 0
  %5524 = vmatpush2.bf16.msra.mxu0 0
  %5525 = vmatprep.subr.bf16.mxu0 0
  %5526 = vmatpush2.bf16.msra.mxu0 0
  %5527 = vmatprep.subr.bf16.mxu0 0
  %5528 = vmatpush2.bf16.msra.mxu0 0
  %5529 = vmatprep.subr.bf16.mxu0 0
  %5530 = vmatpush2.bf16.msra.mxu0 0
  %5531 = vmatprep.mubr.bf16.mxu0 0
  %5532 = vmatmul.mubr.bf16.gmra.mxu0 %v5433
  %v5533 = vpop.f32.mrf.mxu0
  %v5534 = vadd.f32 0.0, %v5533
  %v5535 = vpop.f32.mrf.mxu0
  %v5536 = vpop.f32.mrf.mxu0
  %v5537 = vpop.f32.mrf.mxu0
  %5538 = vdwg.mxu0
  %v5539 = vadd.f32 %v5325, %v5534
  %v5540 = vpack.c.bf16 %v3080, %v3080
  %s5541 = scalar_lea.vmem %s10, 704
  %v5542 = vld [vmem:[%s5541] sm:$0xf]
  %v5543 = vld [vmem:[%s5541 + $0x4] sm:$0xf]
  %v5544 = vld [vmem:[%s5541 + $0x8] sm:$0xf]
  %v5545 = vld [vmem:[%s5541 + $0xc] sm:$0xf]
  %v5546 = vld [vmem:[%s5541 + $0x10] sm:$0xf]
  %v5547 = vld [vmem:[%s5541 + $0x14] sm:$0xf]
  %v5548 = vld [vmem:[%s5541 + $0x18] sm:$0xf]
  %v5549 = vld [vmem:[%s5541 + $0x1c] sm:$0xf]
  %v5550 = vld [vmem:[%s5541 + $0x20] sm:$0xf]
  %v5551 = vld [vmem:[%s5541 + $0x24] sm:$0xf]
  %v5552 = vld [vmem:[%s5541 + $0x28] sm:$0xf]
  %v5553 = vld [vmem:[%s5541 + $0x2c] sm:$0xf]
  %v5554 = vld [vmem:[%s5541 + $0x30] sm:$0xf]
  %v5555 = vld [vmem:[%s5541 + $0x34] sm:$0xf]
  %v5556 = vld [vmem:[%s5541 + $0x38] sm:$0xf]
  %v5557 = vld [vmem:[%s5541 + $0x3c] sm:$0xf]
  %v5574 = vunpack.c.l.b16 %v5542
  %v5575 = vunpack.c.l.b16 %v5543
  %v5576 = vunpack.c.l.b16 %v5544
  %v5577 = vunpack.c.l.b16 %v5545
  %v5578 = vunpack.c.l.b16 %v5546
  %v5579 = vunpack.c.l.b16 %v5547
  %v5580 = vunpack.c.l.b16 %v5548
  %v5581 = vunpack.c.l.b16 %v5549
  %v5582 = vunpack.c.l.b16 %v5550
  %v5583 = vunpack.c.l.b16 %v5551
  %v5584 = vunpack.c.l.b16 %v5552
  %v5585 = vunpack.c.l.b16 %v5553
  %v5586 = vunpack.c.l.b16 %v5554
  %v5587 = vunpack.c.l.b16 %v5555
  %v5588 = vunpack.c.l.b16 %v5556
  %v5589 = vunpack.c.l.b16 %v5557
  %v5590 = vpack.c.b16 %v5575, %v5574
  %v5591 = vpack.c.b16 %v5577, %v5576
  %v5592 = vpack.c.b16 %v5579, %v5578
  %v5593 = vpack.c.b16 %v5581, %v5580
  %v5594 = vpack.c.b16 %v5583, %v5582
  %v5595 = vpack.c.b16 %v5585, %v5584
  %v5596 = vpack.c.b16 %v5587, %v5586
  %v5597 = vpack.c.b16 %v5589, %v5588
  %5606 = vmatprep.subr.bf16.mxu0 0
  %5607 = vmatpush1.bf16.msra.mxu0 %v5597
  %5608 = vmatprep.subr.bf16.mxu0 0
  %5609 = vmatpush1.bf16.msra.mxu0 %v5596
  %5610 = vmatprep.subr.bf16.mxu0 0
  %5611 = vmatpush1.bf16.msra.mxu0 %v5595
  %5612 = vmatprep.subr.bf16.mxu0 0
  %5613 = vmatpush1.bf16.msra.mxu0 %v5594
  %5614 = vmatprep.subr.bf16.mxu0 0
  %5615 = vmatpush1.bf16.msra.mxu0 %v5593
  %5616 = vmatprep.subr.bf16.mxu0 0
  %5617 = vmatpush1.bf16.msra.mxu0 %v5592
  %5618 = vmatprep.subr.bf16.mxu0 0
  %5619 = vmatpush1.bf16.msra.mxu0 %v5591
  %5620 = vmatprep.subr.bf16.mxu0 0
  %5621 = vmatpush1.bf16.msra.mxu0 %v5590
  %5622 = vmatprep.subr.bf16.mxu0 0
  %5623 = vmatpush2.bf16.msra.mxu0 0
  %5624 = vmatprep.subr.bf16.mxu0 0
  %5625 = vmatpush2.bf16.msra.mxu0 0
  %5626 = vmatprep.subr.bf16.mxu0 0
  %5627 = vmatpush2.bf16.msra.mxu0 0
  %5628 = vmatprep.subr.bf16.mxu0 0
  %5629 = vmatpush2.bf16.msra.mxu0 0
  %5630 = vmatprep.subr.bf16.mxu0 0
  %5631 = vmatpush2.bf16.msra.mxu0 0
  %5632 = vmatprep.subr.bf16.mxu0 0
  %5633 = vmatpush2.bf16.msra.mxu0 0
  %5634 = vmatprep.subr.bf16.mxu0 0
  %5635 = vmatpush2.bf16.msra.mxu0 0
  %5636 = vmatprep.subr.bf16.mxu0 0
  %5637 = vmatpush2.bf16.msra.mxu0 0
  %5638 = vmatprep.mubr.bf16.mxu0 0
  %5639 = vmatmul.mubr.bf16.gmra.mxu0 %v5540
  %v5640 = vpop.f32.mrf.mxu0
  %v5641 = vadd.f32 0.0, %v5640
  %v5642 = vpop.f32.mrf.mxu0
  %v5643 = vpop.f32.mrf.mxu0
  %v5644 = vpop.f32.mrf.mxu0
  %5645 = vdwg.mxu0
  %v5646 = vadd.f32 %v5432, %v5641
  %v5647 = vpack.c.bf16 %v2423, %v2423
  %s5648 = scalar_lea.vmem %s9, 768
  %v5649 = vld [vmem:[%s5648] sm:$0xf]
  %v5650 = vld [vmem:[%s5648 + $0x4] sm:$0xf]
  %v5651 = vld [vmem:[%s5648 + $0x8] sm:$0xf]
  %v5652 = vld [vmem:[%s5648 + $0xc] sm:$0xf]
  %v5653 = vld [vmem:[%s5648 + $0x10] sm:$0xf]
  %v5654 = vld [vmem:[%s5648 + $0x14] sm:$0xf]
  %v5655 = vld [vmem:[%s5648 + $0x18] sm:$0xf]
  %v5656 = vld [vmem:[%s5648 + $0x1c] sm:$0xf]
  %v5657 = vld [vmem:[%s5648 + $0x20] sm:$0xf]
  %v5658 = vld [vmem:[%s5648 + $0x24] sm:$0xf]
  %v5659 = vld [vmem:[%s5648 + $0x28] sm:$0xf]
  %v5660 = vld [vmem:[%s5648 + $0x2c] sm:$0xf]
  %v5661 = vld [vmem:[%s5648 + $0x30] sm:$0xf]
  %v5662 = vld [vmem:[%s5648 + $0x34] sm:$0xf]
  %v5663 = vld [vmem:[%s5648 + $0x38] sm:$0xf]
  %v5664 = vld [vmem:[%s5648 + $0x3c] sm:$0xf]
  %v5681 = vunpack.c.l.b16 %v5649
  %v5682 = vunpack.c.l.b16 %v5650
  %v5683 = vunpack.c.l.b16 %v5651
  %v5684 = vunpack.c.l.b16 %v5652
  %v5685 = vunpack.c.l.b16 %v5653
  %v5686 = vunpack.c.l.b16 %v5654
  %v5687 = vunpack.c.l.b16 %v5655
  %v5688 = vunpack.c.l.b16 %v5656
  %v5689 = vunpack.c.l.b16 %v5657
  %v5690 = vunpack.c.l.b16 %v5658
  %v5691 = vunpack.c.l.b16 %v5659
  %v5692 = vunpack.c.l.b16 %v5660
  %v5693 = vunpack.c.l.b16 %v5661
  %v5694 = vunpack.c.l.b16 %v5662
  %v5695 = vunpack.c.l.b16 %v5663
  %v5696 = vunpack.c.l.b16 %v5664
  %v5697 = vpack.c.b16 %v5682, %v5681
  %v5698 = vpack.c.b16 %v5684, %v5683
  %v5699 = vpack.c.b16 %v5686, %v5685
  %v5700 = vpack.c.b16 %v5688, %v5687
  %v5701 = vpack.c.b16 %v5690, %v5689
  %v5702 = vpack.c.b16 %v5692, %v5691
  %v5703 = vpack.c.b16 %v5694, %v5693
  %v5704 = vpack.c.b16 %v5696, %v5695
  %5713 = vmatprep.subr.bf16.mxu0 0
  %5714 = vmatpush1.bf16.msra.mxu0 %v5704
  %5715 = vmatprep.subr.bf16.mxu0 0
  %5716 = vmatpush1.bf16.msra.mxu0 %v5703
  %5717 = vmatprep.subr.bf16.mxu0 0
  %5718 = vmatpush1.bf16.msra.mxu0 %v5702
  %5719 = vmatprep.subr.bf16.mxu0 0
  %5720 = vmatpush1.bf16.msra.mxu0 %v5701
  %5721 = vmatprep.subr.bf16.mxu0 0
  %5722 = vmatpush1.bf16.msra.mxu0 %v5700
  %5723 = vmatprep.subr.bf16.mxu0 0
  %5724 = vmatpush1.bf16.msra.mxu0 %v5699
  %5725 = vmatprep.subr.bf16.mxu0 0
  %5726 = vmatpush1.bf16.msra.mxu0 %v5698
  %5727 = vmatprep.subr.bf16.mxu0 0
  %5728 = vmatpush1.bf16.msra.mxu0 %v5697
  %5729 = vmatprep.subr.bf16.mxu0 0
  %5730 = vmatpush2.bf16.msra.mxu0 0
  %5731 = vmatprep.subr.bf16.mxu0 0
  %5732 = vmatpush2.bf16.msra.mxu0 0
  %5733 = vmatprep.subr.bf16.mxu0 0
  %5734 = vmatpush2.bf16.msra.mxu0 0
  %5735 = vmatprep.subr.bf16.mxu0 0
  %5736 = vmatpush2.bf16.msra.mxu0 0
  %5737 = vmatprep.subr.bf16.mxu0 0
  %5738 = vmatpush2.bf16.msra.mxu0 0
  %5739 = vmatprep.subr.bf16.mxu0 0
  %5740 = vmatpush2.bf16.msra.mxu0 0
  %5741 = vmatprep.subr.bf16.mxu0 0
  %5742 = vmatpush2.bf16.msra.mxu0 0
  %5743 = vmatprep.subr.bf16.mxu0 0
  %5744 = vmatpush2.bf16.msra.mxu0 0
  %5745 = vmatprep.mubr.bf16.mxu0 0
  %5746 = vmatmul.mubr.bf16.gmra.mxu0 %v5647
  %v5747 = vpop.f32.mrf.mxu0
  %v5748 = vadd.f32 0.0, %v5747
  %v5749 = vpop.f32.mrf.mxu0
  %v5750 = vpop.f32.mrf.mxu0
  %v5751 = vpop.f32.mrf.mxu0
  %5752 = vdwg.mxu0
  %v5753 = vadd.f32 %v5539, %v5748
  %v5754 = vpack.c.bf16 %v3081, %v3081
  %s5755 = scalar_lea.vmem %s10, 768
  %v5756 = vld [vmem:[%s5755] sm:$0xf]
  %v5757 = vld [vmem:[%s5755 + $0x4] sm:$0xf]
  %v5758 = vld [vmem:[%s5755 + $0x8] sm:$0xf]
  %v5759 = vld [vmem:[%s5755 + $0xc] sm:$0xf]
  %v5760 = vld [vmem:[%s5755 + $0x10] sm:$0xf]
  %v5761 = vld [vmem:[%s5755 + $0x14] sm:$0xf]
  %v5762 = vld [vmem:[%s5755 + $0x18] sm:$0xf]
  %v5763 = vld [vmem:[%s5755 + $0x1c] sm:$0xf]
  %v5764 = vld [vmem:[%s5755 + $0x20] sm:$0xf]
  %v5765 = vld [vmem:[%s5755 + $0x24] sm:$0xf]
  %v5766 = vld [vmem:[%s5755 + $0x28] sm:$0xf]
  %v5767 = vld [vmem:[%s5755 + $0x2c] sm:$0xf]
  %v5768 = vld [vmem:[%s5755 + $0x30] sm:$0xf]
  %v5769 = vld [vmem:[%s5755 + $0x34] sm:$0xf]
  %v5770 = vld [vmem:[%s5755 + $0x38] sm:$0xf]
  %v5771 = vld [vmem:[%s5755 + $0x3c] sm:$0xf]
  %v5788 = vunpack.c.l.b16 %v5756
  %v5789 = vunpack.c.l.b16 %v5757
  %v5790 = vunpack.c.l.b16 %v5758
  %v5791 = vunpack.c.l.b16 %v5759
  %v5792 = vunpack.c.l.b16 %v5760
  %v5793 = vunpack.c.l.b16 %v5761
  %v5794 = vunpack.c.l.b16 %v5762
  %v5795 = vunpack.c.l.b16 %v5763
  %v5796 = vunpack.c.l.b16 %v5764
  %v5797 = vunpack.c.l.b16 %v5765
  %v5798 = vunpack.c.l.b16 %v5766
  %v5799 = vunpack.c.l.b16 %v5767
  %v5800 = vunpack.c.l.b16 %v5768
  %v5801 = vunpack.c.l.b16 %v5769
  %v5802 = vunpack.c.l.b16 %v5770
  %v5803 = vunpack.c.l.b16 %v5771
  %v5804 = vpack.c.b16 %v5789, %v5788
  %v5805 = vpack.c.b16 %v5791, %v5790
  %v5806 = vpack.c.b16 %v5793, %v5792
  %v5807 = vpack.c.b16 %v5795, %v5794
  %v5808 = vpack.c.b16 %v5797, %v5796
  %v5809 = vpack.c.b16 %v5799, %v5798
  %v5810 = vpack.c.b16 %v5801, %v5800
  %v5811 = vpack.c.b16 %v5803, %v5802
  %5820 = vmatprep.subr.bf16.mxu0 0
  %5821 = vmatpush1.bf16.msra.mxu0 %v5811
  %5822 = vmatprep.subr.bf16.mxu0 0
  %5823 = vmatpush1.bf16.msra.mxu0 %v5810
  %5824 = vmatprep.subr.bf16.mxu0 0
  %5825 = vmatpush1.bf16.msra.mxu0 %v5809
  %5826 = vmatprep.subr.bf16.mxu0 0
  %5827 = vmatpush1.bf16.msra.mxu0 %v5808
  %5828 = vmatprep.subr.bf16.mxu0 0
  %5829 = vmatpush1.bf16.msra.mxu0 %v5807
  %5830 = vmatprep.subr.bf16.mxu0 0
  %5831 = vmatpush1.bf16.msra.mxu0 %v5806
  %5832 = vmatprep.subr.bf16.mxu0 0
  %5833 = vmatpush1.bf16.msra.mxu0 %v5805
  %5834 = vmatprep.subr.bf16.mxu0 0
  %5835 = vmatpush1.bf16.msra.mxu0 %v5804
  %5836 = vmatprep.subr.bf16.mxu0 0
  %5837 = vmatpush2.bf16.msra.mxu0 0
  %5838 = vmatprep.subr.bf16.mxu0 0
  %5839 = vmatpush2.bf16.msra.mxu0 0
  %5840 = vmatprep.subr.bf16.mxu0 0
  %5841 = vmatpush2.bf16.msra.mxu0 0
  %5842 = vmatprep.subr.bf16.mxu0 0
  %5843 = vmatpush2.bf16.msra.mxu0 0
  %5844 = vmatprep.subr.bf16.mxu0 0
  %5845 = vmatpush2.bf16.msra.mxu0 0
  %5846 = vmatprep.subr.bf16.mxu0 0
  %5847 = vmatpush2.bf16.msra.mxu0 0
  %5848 = vmatprep.subr.bf16.mxu0 0
  %5849 = vmatpush2.bf16.msra.mxu0 0
  %5850 = vmatprep.subr.bf16.mxu0 0
  %5851 = vmatpush2.bf16.msra.mxu0 0
  %5852 = vmatprep.mubr.bf16.mxu0 0
  %5853 = vmatmul.mubr.bf16.gmra.mxu0 %v5754
  %v5854 = vpop.f32.mrf.mxu0
  %v5855 = vadd.f32 0.0, %v5854
  %v5856 = vpop.f32.mrf.mxu0
  %v5857 = vpop.f32.mrf.mxu0
  %v5858 = vpop.f32.mrf.mxu0
  %5859 = vdwg.mxu0
  %v5860 = vadd.f32 %v5646, %v5855
  %v5861 = vpack.c.bf16 %v2424, %v2424
  %s5862 = scalar_lea.vmem %s9, 832
  %v5863 = vld [vmem:[%s5862] sm:$0xf]
  %v5864 = vld [vmem:[%s5862 + $0x4] sm:$0xf]
  %v5865 = vld [vmem:[%s5862 + $0x8] sm:$0xf]
  %v5866 = vld [vmem:[%s5862 + $0xc] sm:$0xf]
  %v5867 = vld [vmem:[%s5862 + $0x10] sm:$0xf]
  %v5868 = vld [vmem:[%s5862 + $0x14] sm:$0xf]
  %v5869 = vld [vmem:[%s5862 + $0x18] sm:$0xf]
  %v5870 = vld [vmem:[%s5862 + $0x1c] sm:$0xf]
  %v5871 = vld [vmem:[%s5862 + $0x20] sm:$0xf]
  %v5872 = vld [vmem:[%s5862 + $0x24] sm:$0xf]
  %v5873 = vld [vmem:[%s5862 + $0x28] sm:$0xf]
  %v5874 = vld [vmem:[%s5862 + $0x2c] sm:$0xf]
  %v5875 = vld [vmem:[%s5862 + $0x30] sm:$0xf]
  %v5876 = vld [vmem:[%s5862 + $0x34] sm:$0xf]
  %v5877 = vld [vmem:[%s5862 + $0x38] sm:$0xf]
  %v5878 = vld [vmem:[%s5862 + $0x3c] sm:$0xf]
  %v5895 = vunpack.c.l.b16 %v5863
  %v5896 = vunpack.c.l.b16 %v5864
  %v5897 = vunpack.c.l.b16 %v5865
  %v5898 = vunpack.c.l.b16 %v5866
  %v5899 = vunpack.c.l.b16 %v5867
  %v5900 = vunpack.c.l.b16 %v5868
  %v5901 = vunpack.c.l.b16 %v5869
  %v5902 = vunpack.c.l.b16 %v5870
  %v5903 = vunpack.c.l.b16 %v5871
  %v5904 = vunpack.c.l.b16 %v5872
  %v5905 = vunpack.c.l.b16 %v5873
  %v5906 = vunpack.c.l.b16 %v5874
  %v5907 = vunpack.c.l.b16 %v5875
  %v5908 = vunpack.c.l.b16 %v5876
  %v5909 = vunpack.c.l.b16 %v5877
  %v5910 = vunpack.c.l.b16 %v5878
  %v5911 = vpack.c.b16 %v5896, %v5895
  %v5912 = vpack.c.b16 %v5898, %v5897
  %v5913 = vpack.c.b16 %v5900, %v5899
  %v5914 = vpack.c.b16 %v5902, %v5901
  %v5915 = vpack.c.b16 %v5904, %v5903
  %v5916 = vpack.c.b16 %v5906, %v5905
  %v5917 = vpack.c.b16 %v5908, %v5907
  %v5918 = vpack.c.b16 %v5910, %v5909
  %5927 = vmatprep.subr.bf16.mxu0 0
  %5928 = vmatpush1.bf16.msra.mxu0 %v5918
  %5929 = vmatprep.subr.bf16.mxu0 0
  %5930 = vmatpush1.bf16.msra.mxu0 %v5917
  %5931 = vmatprep.subr.bf16.mxu0 0
  %5932 = vmatpush1.bf16.msra.mxu0 %v5916
  %5933 = vmatprep.subr.bf16.mxu0 0
  %5934 = vmatpush1.bf16.msra.mxu0 %v5915
  %5935 = vmatprep.subr.bf16.mxu0 0
  %5936 = vmatpush1.bf16.msra.mxu0 %v5914
  %5937 = vmatprep.subr.bf16.mxu0 0
  %5938 = vmatpush1.bf16.msra.mxu0 %v5913
  %5939 = vmatprep.subr.bf16.mxu0 0
  %5940 = vmatpush1.bf16.msra.mxu0 %v5912
  %5941 = vmatprep.subr.bf16.mxu0 0
  %5942 = vmatpush1.bf16.msra.mxu0 %v5911
  %5943 = vmatprep.subr.bf16.mxu0 0
  %5944 = vmatpush2.bf16.msra.mxu0 0
  %5945 = vmatprep.subr.bf16.mxu0 0
  %5946 = vmatpush2.bf16.msra.mxu0 0
  %5947 = vmatprep.subr.bf16.mxu0 0
  %5948 = vmatpush2.bf16.msra.mxu0 0
  %5949 = vmatprep.subr.bf16.mxu0 0
  %5950 = vmatpush2.bf16.msra.mxu0 0
  %5951 = vmatprep.subr.bf16.mxu0 0
  %5952 = vmatpush2.bf16.msra.mxu0 0
  %5953 = vmatprep.subr.bf16.mxu0 0
  %5954 = vmatpush2.bf16.msra.mxu0 0
  %5955 = vmatprep.subr.bf16.mxu0 0
  %5956 = vmatpush2.bf16.msra.mxu0 0
  %5957 = vmatprep.subr.bf16.mxu0 0
  %5958 = vmatpush2.bf16.msra.mxu0 0
  %5959 = vmatprep.mubr.bf16.mxu0 0
  %5960 = vmatmul.mubr.bf16.gmra.mxu0 %v5861
  %v5961 = vpop.f32.mrf.mxu0
  %v5962 = vadd.f32 0.0, %v5961
  %v5963 = vpop.f32.mrf.mxu0
  %v5964 = vpop.f32.mrf.mxu0
  %v5965 = vpop.f32.mrf.mxu0
  %5966 = vdwg.mxu0
  %v5967 = vadd.f32 %v5753, %v5962
  %v5968 = vpack.c.bf16 %v3082, %v3082
  %s5969 = scalar_lea.vmem %s10, 832
  %v5970 = vld [vmem:[%s5969] sm:$0xf]
  %v5971 = vld [vmem:[%s5969 + $0x4] sm:$0xf]
  %v5972 = vld [vmem:[%s5969 + $0x8] sm:$0xf]
  %v5973 = vld [vmem:[%s5969 + $0xc] sm:$0xf]
  %v5974 = vld [vmem:[%s5969 + $0x10] sm:$0xf]
  %v5975 = vld [vmem:[%s5969 + $0x14] sm:$0xf]
  %v5976 = vld [vmem:[%s5969 + $0x18] sm:$0xf]
  %v5977 = vld [vmem:[%s5969 + $0x1c] sm:$0xf]
  %v5978 = vld [vmem:[%s5969 + $0x20] sm:$0xf]
  %v5979 = vld [vmem:[%s5969 + $0x24] sm:$0xf]
  %v5980 = vld [vmem:[%s5969 + $0x28] sm:$0xf]
  %v5981 = vld [vmem:[%s5969 + $0x2c] sm:$0xf]
  %v5982 = vld [vmem:[%s5969 + $0x30] sm:$0xf]
  %v5983 = vld [vmem:[%s5969 + $0x34] sm:$0xf]
  %v5984 = vld [vmem:[%s5969 + $0x38] sm:$0xf]
  %v5985 = vld [vmem:[%s5969 + $0x3c] sm:$0xf]
  %v6002 = vunpack.c.l.b16 %v5970
  %v6003 = vunpack.c.l.b16 %v5971
  %v6004 = vunpack.c.l.b16 %v5972
  %v6005 = vunpack.c.l.b16 %v5973
  %v6006 = vunpack.c.l.b16 %v5974
  %v6007 = vunpack.c.l.b16 %v5975
  %v6008 = vunpack.c.l.b16 %v5976
  %v6009 = vunpack.c.l.b16 %v5977
  %v6010 = vunpack.c.l.b16 %v5978
  %v6011 = vunpack.c.l.b16 %v5979
  %v6012 = vunpack.c.l.b16 %v5980
  %v6013 = vunpack.c.l.b16 %v5981
  %v6014 = vunpack.c.l.b16 %v5982
  %v6015 = vunpack.c.l.b16 %v5983
  %v6016 = vunpack.c.l.b16 %v5984
  %v6017 = vunpack.c.l.b16 %v5985
  %v6018 = vpack.c.b16 %v6003, %v6002
  %v6019 = vpack.c.b16 %v6005, %v6004
  %v6020 = vpack.c.b16 %v6007, %v6006
  %v6021 = vpack.c.b16 %v6009, %v6008
  %v6022 = vpack.c.b16 %v6011, %v6010
  %v6023 = vpack.c.b16 %v6013, %v6012
  %v6024 = vpack.c.b16 %v6015, %v6014
  %v6025 = vpack.c.b16 %v6017, %v6016
  %6034 = vmatprep.subr.bf16.mxu0 0
  %6035 = vmatpush1.bf16.msra.mxu0 %v6025
  %6036 = vmatprep.subr.bf16.mxu0 0
  %6037 = vmatpush1.bf16.msra.mxu0 %v6024
  %6038 = vmatprep.subr.bf16.mxu0 0
  %6039 = vmatpush1.bf16.msra.mxu0 %v6023
  %6040 = vmatprep.subr.bf16.mxu0 0
  %6041 = vmatpush1.bf16.msra.mxu0 %v6022
  %6042 = vmatprep.subr.bf16.mxu0 0
  %6043 = vmatpush1.bf16.msra.mxu0 %v6021
  %6044 = vmatprep.subr.bf16.mxu0 0
  %6045 = vmatpush1.bf16.msra.mxu0 %v6020
  %6046 = vmatprep.subr.bf16.mxu0 0
  %6047 = vmatpush1.bf16.msra.mxu0 %v6019
  %6048 = vmatprep.subr.bf16.mxu0 0
  %6049 = vmatpush1.bf16.msra.mxu0 %v6018
  %6050 = vmatprep.subr.bf16.mxu0 0
  %6051 = vmatpush2.bf16.msra.mxu0 0
  %6052 = vmatprep.subr.bf16.mxu0 0
  %6053 = vmatpush2.bf16.msra.mxu0 0
  %6054 = vmatprep.subr.bf16.mxu0 0
  %6055 = vmatpush2.bf16.msra.mxu0 0
  %6056 = vmatprep.subr.bf16.mxu0 0
  %6057 = vmatpush2.bf16.msra.mxu0 0
  %6058 = vmatprep.subr.bf16.mxu0 0
  %6059 = vmatpush2.bf16.msra.mxu0 0
  %6060 = vmatprep.subr.bf16.mxu0 0
  %6061 = vmatpush2.bf16.msra.mxu0 0
  %6062 = vmatprep.subr.bf16.mxu0 0
  %6063 = vmatpush2.bf16.msra.mxu0 0
  %6064 = vmatprep.subr.bf16.mxu0 0
  %6065 = vmatpush2.bf16.msra.mxu0 0
  %6066 = vmatprep.mubr.bf16.mxu0 0
  %6067 = vmatmul.mubr.bf16.gmra.mxu0 %v5968
  %v6068 = vpop.f32.mrf.mxu0
  %v6069 = vadd.f32 0.0, %v6068
  %v6070 = vpop.f32.mrf.mxu0
  %v6071 = vpop.f32.mrf.mxu0
  %v6072 = vpop.f32.mrf.mxu0
  %6073 = vdwg.mxu0
  %v6074 = vadd.f32 %v5860, %v6069
  %v6075 = vpack.c.bf16 %v2425, %v2425
  %s6076 = scalar_lea.vmem %s9, 896
  %v6077 = vld [vmem:[%s6076] sm:$0xf]
  %v6078 = vld [vmem:[%s6076 + $0x4] sm:$0xf]
  %v6079 = vld [vmem:[%s6076 + $0x8] sm:$0xf]
  %v6080 = vld [vmem:[%s6076 + $0xc] sm:$0xf]
  %v6081 = vld [vmem:[%s6076 + $0x10] sm:$0xf]
  %v6082 = vld [vmem:[%s6076 + $0x14] sm:$0xf]
  %v6083 = vld [vmem:[%s6076 + $0x18] sm:$0xf]
  %v6084 = vld [vmem:[%s6076 + $0x1c] sm:$0xf]
  %v6085 = vld [vmem:[%s6076 + $0x20] sm:$0xf]
  %v6086 = vld [vmem:[%s6076 + $0x24] sm:$0xf]
  %v6087 = vld [vmem:[%s6076 + $0x28] sm:$0xf]
  %v6088 = vld [vmem:[%s6076 + $0x2c] sm:$0xf]
  %v6089 = vld [vmem:[%s6076 + $0x30] sm:$0xf]
  %v6090 = vld [vmem:[%s6076 + $0x34] sm:$0xf]
  %v6091 = vld [vmem:[%s6076 + $0x38] sm:$0xf]
  %v6092 = vld [vmem:[%s6076 + $0x3c] sm:$0xf]
  %v6109 = vunpack.c.l.b16 %v6077
  %v6110 = vunpack.c.l.b16 %v6078
  %v6111 = vunpack.c.l.b16 %v6079
  %v6112 = vunpack.c.l.b16 %v6080
  %v6113 = vunpack.c.l.b16 %v6081
  %v6114 = vunpack.c.l.b16 %v6082
  %v6115 = vunpack.c.l.b16 %v6083
  %v6116 = vunpack.c.l.b16 %v6084
  %v6117 = vunpack.c.l.b16 %v6085
  %v6118 = vunpack.c.l.b16 %v6086
  %v6119 = vunpack.c.l.b16 %v6087
  %v6120 = vunpack.c.l.b16 %v6088
  %v6121 = vunpack.c.l.b16 %v6089
  %v6122 = vunpack.c.l.b16 %v6090
  %v6123 = vunpack.c.l.b16 %v6091
  %v6124 = vunpack.c.l.b16 %v6092
  %v6125 = vpack.c.b16 %v6110, %v6109
  %v6126 = vpack.c.b16 %v6112, %v6111
  %v6127 = vpack.c.b16 %v6114, %v6113
  %v6128 = vpack.c.b16 %v6116, %v6115
  %v6129 = vpack.c.b16 %v6118, %v6117
  %v6130 = vpack.c.b16 %v6120, %v6119
  %v6131 = vpack.c.b16 %v6122, %v6121
  %v6132 = vpack.c.b16 %v6124, %v6123
  %6141 = vmatprep.subr.bf16.mxu0 0
  %6142 = vmatpush1.bf16.msra.mxu0 %v6132
  %6143 = vmatprep.subr.bf16.mxu0 0
  %6144 = vmatpush1.bf16.msra.mxu0 %v6131
  %6145 = vmatprep.subr.bf16.mxu0 0
  %6146 = vmatpush1.bf16.msra.mxu0 %v6130
  %6147 = vmatprep.subr.bf16.mxu0 0
  %6148 = vmatpush1.bf16.msra.mxu0 %v6129
  %6149 = vmatprep.subr.bf16.mxu0 0
  %6150 = vmatpush1.bf16.msra.mxu0 %v6128
  %6151 = vmatprep.subr.bf16.mxu0 0
  %6152 = vmatpush1.bf16.msra.mxu0 %v6127
  %6153 = vmatprep.subr.bf16.mxu0 0
  %6154 = vmatpush1.bf16.msra.mxu0 %v6126
  %6155 = vmatprep.subr.bf16.mxu0 0
  %6156 = vmatpush1.bf16.msra.mxu0 %v6125
  %6157 = vmatprep.subr.bf16.mxu0 0
  %6158 = vmatpush2.bf16.msra.mxu0 0
  %6159 = vmatprep.subr.bf16.mxu0 0
  %6160 = vmatpush2.bf16.msra.mxu0 0
  %6161 = vmatprep.subr.bf16.mxu0 0
  %6162 = vmatpush2.bf16.msra.mxu0 0
  %6163 = vmatprep.subr.bf16.mxu0 0
  %6164 = vmatpush2.bf16.msra.mxu0 0
  %6165 = vmatprep.subr.bf16.mxu0 0
  %6166 = vmatpush2.bf16.msra.mxu0 0
  %6167 = vmatprep.subr.bf16.mxu0 0
  %6168 = vmatpush2.bf16.msra.mxu0 0
  %6169 = vmatprep.subr.bf16.mxu0 0
  %6170 = vmatpush2.bf16.msra.mxu0 0
  %6171 = vmatprep.subr.bf16.mxu0 0
  %6172 = vmatpush2.bf16.msra.mxu0 0
  %6173 = vmatprep.mubr.bf16.mxu0 0
  %6174 = vmatmul.mubr.bf16.gmra.mxu0 %v6075
  %v6175 = vpop.f32.mrf.mxu0
  %v6176 = vadd.f32 0.0, %v6175
  %v6177 = vpop.f32.mrf.mxu0
  %v6178 = vpop.f32.mrf.mxu0
  %v6179 = vpop.f32.mrf.mxu0
  %6180 = vdwg.mxu0
  %v6181 = vadd.f32 %v5967, %v6176
  %v6182 = vpack.c.bf16 %v3083, %v3083
  %s6183 = scalar_lea.vmem %s10, 896
  %v6184 = vld [vmem:[%s6183] sm:$0xf]
  %v6185 = vld [vmem:[%s6183 + $0x4] sm:$0xf]
  %v6186 = vld [vmem:[%s6183 + $0x8] sm:$0xf]
  %v6187 = vld [vmem:[%s6183 + $0xc] sm:$0xf]
  %v6188 = vld [vmem:[%s6183 + $0x10] sm:$0xf]
  %v6189 = vld [vmem:[%s6183 + $0x14] sm:$0xf]
  %v6190 = vld [vmem:[%s6183 + $0x18] sm:$0xf]
  %v6191 = vld [vmem:[%s6183 + $0x1c] sm:$0xf]
  %v6192 = vld [vmem:[%s6183 + $0x20] sm:$0xf]
  %v6193 = vld [vmem:[%s6183 + $0x24] sm:$0xf]
  %v6194 = vld [vmem:[%s6183 + $0x28] sm:$0xf]
  %v6195 = vld [vmem:[%s6183 + $0x2c] sm:$0xf]
  %v6196 = vld [vmem:[%s6183 + $0x30] sm:$0xf]
  %v6197 = vld [vmem:[%s6183 + $0x34] sm:$0xf]
  %v6198 = vld [vmem:[%s6183 + $0x38] sm:$0xf]
  %v6199 = vld [vmem:[%s6183 + $0x3c] sm:$0xf]
  %v6216 = vunpack.c.l.b16 %v6184
  %v6217 = vunpack.c.l.b16 %v6185
  %v6218 = vunpack.c.l.b16 %v6186
  %v6219 = vunpack.c.l.b16 %v6187
  %v6220 = vunpack.c.l.b16 %v6188
  %v6221 = vunpack.c.l.b16 %v6189
  %v6222 = vunpack.c.l.b16 %v6190
  %v6223 = vunpack.c.l.b16 %v6191
  %v6224 = vunpack.c.l.b16 %v6192
  %v6225 = vunpack.c.l.b16 %v6193
  %v6226 = vunpack.c.l.b16 %v6194
  %v6227 = vunpack.c.l.b16 %v6195
  %v6228 = vunpack.c.l.b16 %v6196
  %v6229 = vunpack.c.l.b16 %v6197
  %v6230 = vunpack.c.l.b16 %v6198
  %v6231 = vunpack.c.l.b16 %v6199
  %v6232 = vpack.c.b16 %v6217, %v6216
  %v6233 = vpack.c.b16 %v6219, %v6218
  %v6234 = vpack.c.b16 %v6221, %v6220
  %v6235 = vpack.c.b16 %v6223, %v6222
  %v6236 = vpack.c.b16 %v6225, %v6224
  %v6237 = vpack.c.b16 %v6227, %v6226
  %v6238 = vpack.c.b16 %v6229, %v6228
  %v6239 = vpack.c.b16 %v6231, %v6230
  %6248 = vmatprep.subr.bf16.mxu0 0
  %6249 = vmatpush1.bf16.msra.mxu0 %v6239
  %6250 = vmatprep.subr.bf16.mxu0 0
  %6251 = vmatpush1.bf16.msra.mxu0 %v6238
  %6252 = vmatprep.subr.bf16.mxu0 0
  %6253 = vmatpush1.bf16.msra.mxu0 %v6237
  %6254 = vmatprep.subr.bf16.mxu0 0
  %6255 = vmatpush1.bf16.msra.mxu0 %v6236
  %6256 = vmatprep.subr.bf16.mxu0 0
  %6257 = vmatpush1.bf16.msra.mxu0 %v6235
  %6258 = vmatprep.subr.bf16.mxu0 0
  %6259 = vmatpush1.bf16.msra.mxu0 %v6234
  %6260 = vmatprep.subr.bf16.mxu0 0
  %6261 = vmatpush1.bf16.msra.mxu0 %v6233
  %6262 = vmatprep.subr.bf16.mxu0 0
  %6263 = vmatpush1.bf16.msra.mxu0 %v6232
  %6264 = vmatprep.subr.bf16.mxu0 0
  %6265 = vmatpush2.bf16.msra.mxu0 0
  %6266 = vmatprep.subr.bf16.mxu0 0
  %6267 = vmatpush2.bf16.msra.mxu0 0
  %6268 = vmatprep.subr.bf16.mxu0 0
  %6269 = vmatpush2.bf16.msra.mxu0 0
  %6270 = vmatprep.subr.bf16.mxu0 0
  %6271 = vmatpush2.bf16.msra.mxu0 0
  %6272 = vmatprep.subr.bf16.mxu0 0
  %6273 = vmatpush2.bf16.msra.mxu0 0
  %6274 = vmatprep.subr.bf16.mxu0 0
  %6275 = vmatpush2.bf16.msra.mxu0 0
  %6276 = vmatprep.subr.bf16.mxu0 0
  %6277 = vmatpush2.bf16.msra.mxu0 0
  %6278 = vmatprep.subr.bf16.mxu0 0
  %6279 = vmatpush2.bf16.msra.mxu0 0
  %6280 = vmatprep.mubr.bf16.mxu0 0
  %6281 = vmatmul.mubr.bf16.gmra.mxu0 %v6182
  %v6282 = vpop.f32.mrf.mxu0
  %v6283 = vadd.f32 0.0, %v6282
  %v6284 = vpop.f32.mrf.mxu0
  %v6285 = vpop.f32.mrf.mxu0
  %v6286 = vpop.f32.mrf.mxu0
  %6287 = vdwg.mxu0
  %v6288 = vadd.f32 %v6074, %v6283
  %v6289 = vpack.c.bf16 %v2426, %v2426
  %s6290 = scalar_lea.vmem %s9, 960
  %v6291 = vld [vmem:[%s6290] sm:$0xf]
  %v6292 = vld [vmem:[%s6290 + $0x4] sm:$0xf]
  %v6293 = vld [vmem:[%s6290 + $0x8] sm:$0xf]
  %v6294 = vld [vmem:[%s6290 + $0xc] sm:$0xf]
  %v6295 = vld [vmem:[%s6290 + $0x10] sm:$0xf]
  %v6296 = vld [vmem:[%s6290 + $0x14] sm:$0xf]
  %v6297 = vld [vmem:[%s6290 + $0x18] sm:$0xf]
  %v6298 = vld [vmem:[%s6290 + $0x1c] sm:$0xf]
  %v6299 = vld [vmem:[%s6290 + $0x20] sm:$0xf]
  %v6300 = vld [vmem:[%s6290 + $0x24] sm:$0xf]
  %v6301 = vld [vmem:[%s6290 + $0x28] sm:$0xf]
  %v6302 = vld [vmem:[%s6290 + $0x2c] sm:$0xf]
  %v6303 = vld [vmem:[%s6290 + $0x30] sm:$0xf]
  %v6304 = vld [vmem:[%s6290 + $0x34] sm:$0xf]
  %v6305 = vld [vmem:[%s6290 + $0x38] sm:$0xf]
  %v6306 = vld [vmem:[%s6290 + $0x3c] sm:$0xf]
  %v6323 = vunpack.c.l.b16 %v6291
  %v6324 = vunpack.c.l.b16 %v6292
  %v6325 = vunpack.c.l.b16 %v6293
  %v6326 = vunpack.c.l.b16 %v6294
  %v6327 = vunpack.c.l.b16 %v6295
  %v6328 = vunpack.c.l.b16 %v6296
  %v6329 = vunpack.c.l.b16 %v6297
  %v6330 = vunpack.c.l.b16 %v6298
  %v6331 = vunpack.c.l.b16 %v6299
  %v6332 = vunpack.c.l.b16 %v6300
  %v6333 = vunpack.c.l.b16 %v6301
  %v6334 = vunpack.c.l.b16 %v6302
  %v6335 = vunpack.c.l.b16 %v6303
  %v6336 = vunpack.c.l.b16 %v6304
  %v6337 = vunpack.c.l.b16 %v6305
  %v6338 = vunpack.c.l.b16 %v6306
  %v6339 = vpack.c.b16 %v6324, %v6323
  %v6340 = vpack.c.b16 %v6326, %v6325
  %v6341 = vpack.c.b16 %v6328, %v6327
  %v6342 = vpack.c.b16 %v6330, %v6329
  %v6343 = vpack.c.b16 %v6332, %v6331
  %v6344 = vpack.c.b16 %v6334, %v6333
  %v6345 = vpack.c.b16 %v6336, %v6335
  %v6346 = vpack.c.b16 %v6338, %v6337
  %6355 = vmatprep.subr.bf16.mxu0 0
  %6356 = vmatpush1.bf16.msra.mxu0 %v6346
  %6357 = vmatprep.subr.bf16.mxu0 0
  %6358 = vmatpush1.bf16.msra.mxu0 %v6345
  %6359 = vmatprep.subr.bf16.mxu0 0
  %6360 = vmatpush1.bf16.msra.mxu0 %v6344
  %6361 = vmatprep.subr.bf16.mxu0 0
  %6362 = vmatpush1.bf16.msra.mxu0 %v6343
  %6363 = vmatprep.subr.bf16.mxu0 0
  %6364 = vmatpush1.bf16.msra.mxu0 %v6342
  %6365 = vmatprep.subr.bf16.mxu0 0
  %6366 = vmatpush1.bf16.msra.mxu0 %v6341
  %6367 = vmatprep.subr.bf16.mxu0 0
  %6368 = vmatpush1.bf16.msra.mxu0 %v6340
  %6369 = vmatprep.subr.bf16.mxu0 0
  %6370 = vmatpush1.bf16.msra.mxu0 %v6339
  %6371 = vmatprep.subr.bf16.mxu0 0
  %6372 = vmatpush2.bf16.msra.mxu0 0
  %6373 = vmatprep.subr.bf16.mxu0 0
  %6374 = vmatpush2.bf16.msra.mxu0 0
  %6375 = vmatprep.subr.bf16.mxu0 0
  %6376 = vmatpush2.bf16.msra.mxu0 0
  %6377 = vmatprep.subr.bf16.mxu0 0
  %6378 = vmatpush2.bf16.msra.mxu0 0
  %6379 = vmatprep.subr.bf16.mxu0 0
  %6380 = vmatpush2.bf16.msra.mxu0 0
  %6381 = vmatprep.subr.bf16.mxu0 0
  %6382 = vmatpush2.bf16.msra.mxu0 0
  %6383 = vmatprep.subr.bf16.mxu0 0
  %6384 = vmatpush2.bf16.msra.mxu0 0
  %6385 = vmatprep.subr.bf16.mxu0 0
  %6386 = vmatpush2.bf16.msra.mxu0 0
  %6387 = vmatprep.mubr.bf16.mxu0 0
  %6388 = vmatmul.mubr.bf16.gmra.mxu0 %v6289
  %v6389 = vpop.f32.mrf.mxu0
  %v6390 = vadd.f32 0.0, %v6389
  %v6391 = vpop.f32.mrf.mxu0
  %v6392 = vpop.f32.mrf.mxu0
  %v6393 = vpop.f32.mrf.mxu0
  %6394 = vdwg.mxu0
  %v6395 = vadd.f32 %v6181, %v6390
  %v6396 = vpack.c.bf16 %v3084, %v3084
  %s6397 = scalar_lea.vmem %s10, 960
  %v6398 = vld [vmem:[%s6397] sm:$0xf]
  %v6399 = vld [vmem:[%s6397 + $0x4] sm:$0xf]
  %v6400 = vld [vmem:[%s6397 + $0x8] sm:$0xf]
  %v6401 = vld [vmem:[%s6397 + $0xc] sm:$0xf]
  %v6402 = vld [vmem:[%s6397 + $0x10] sm:$0xf]
  %v6403 = vld [vmem:[%s6397 + $0x14] sm:$0xf]
  %v6404 = vld [vmem:[%s6397 + $0x18] sm:$0xf]
  %v6405 = vld [vmem:[%s6397 + $0x1c] sm:$0xf]
  %v6406 = vld [vmem:[%s6397 + $0x20] sm:$0xf]
  %v6407 = vld [vmem:[%s6397 + $0x24] sm:$0xf]
  %v6408 = vld [vmem:[%s6397 + $0x28] sm:$0xf]
  %v6409 = vld [vmem:[%s6397 + $0x2c] sm:$0xf]
  %v6410 = vld [vmem:[%s6397 + $0x30] sm:$0xf]
  %v6411 = vld [vmem:[%s6397 + $0x34] sm:$0xf]
  %v6412 = vld [vmem:[%s6397 + $0x38] sm:$0xf]
  %v6413 = vld [vmem:[%s6397 + $0x3c] sm:$0xf]
  %v6430 = vunpack.c.l.b16 %v6398
  %v6431 = vunpack.c.l.b16 %v6399
  %v6432 = vunpack.c.l.b16 %v6400
  %v6433 = vunpack.c.l.b16 %v6401
  %v6434 = vunpack.c.l.b16 %v6402
  %v6435 = vunpack.c.l.b16 %v6403
  %v6436 = vunpack.c.l.b16 %v6404
  %v6437 = vunpack.c.l.b16 %v6405
  %v6438 = vunpack.c.l.b16 %v6406
  %v6439 = vunpack.c.l.b16 %v6407
  %v6440 = vunpack.c.l.b16 %v6408
  %v6441 = vunpack.c.l.b16 %v6409
  %v6442 = vunpack.c.l.b16 %v6410
  %v6443 = vunpack.c.l.b16 %v6411
  %v6444 = vunpack.c.l.b16 %v6412
  %v6445 = vunpack.c.l.b16 %v6413
  %v6446 = vpack.c.b16 %v6431, %v6430
  %v6447 = vpack.c.b16 %v6433, %v6432
  %v6448 = vpack.c.b16 %v6435, %v6434
  %v6449 = vpack.c.b16 %v6437, %v6436
  %v6450 = vpack.c.b16 %v6439, %v6438
  %v6451 = vpack.c.b16 %v6441, %v6440
  %v6452 = vpack.c.b16 %v6443, %v6442
  %v6453 = vpack.c.b16 %v6445, %v6444
  %6462 = vmatprep.subr.bf16.mxu0 0
  %6463 = vmatpush1.bf16.msra.mxu0 %v6453
  %6464 = vmatprep.subr.bf16.mxu0 0
  %6465 = vmatpush1.bf16.msra.mxu0 %v6452
  %6466 = vmatprep.subr.bf16.mxu0 0
  %6467 = vmatpush1.bf16.msra.mxu0 %v6451
  %6468 = vmatprep.subr.bf16.mxu0 0
  %6469 = vmatpush1.bf16.msra.mxu0 %v6450
  %6470 = vmatprep.subr.bf16.mxu0 0
  %6471 = vmatpush1.bf16.msra.mxu0 %v6449
  %6472 = vmatprep.subr.bf16.mxu0 0
  %6473 = vmatpush1.bf16.msra.mxu0 %v6448
  %6474 = vmatprep.subr.bf16.mxu0 0
  %6475 = vmatpush1.bf16.msra.mxu0 %v6447
  %6476 = vmatprep.subr.bf16.mxu0 0
  %6477 = vmatpush1.bf16.msra.mxu0 %v6446
  %6478 = vmatprep.subr.bf16.mxu0 0
  %6479 = vmatpush2.bf16.msra.mxu0 0
  %6480 = vmatprep.subr.bf16.mxu0 0
  %6481 = vmatpush2.bf16.msra.mxu0 0
  %6482 = vmatprep.subr.bf16.mxu0 0
  %6483 = vmatpush2.bf16.msra.mxu0 0
  %6484 = vmatprep.subr.bf16.mxu0 0
  %6485 = vmatpush2.bf16.msra.mxu0 0
  %6486 = vmatprep.subr.bf16.mxu0 0
  %6487 = vmatpush2.bf16.msra.mxu0 0
  %6488 = vmatprep.subr.bf16.mxu0 0
  %6489 = vmatpush2.bf16.msra.mxu0 0
  %6490 = vmatprep.subr.bf16.mxu0 0
  %6491 = vmatpush2.bf16.msra.mxu0 0
  %6492 = vmatprep.subr.bf16.mxu0 0
  %6493 = vmatpush2.bf16.msra.mxu0 0
  %6494 = vmatprep.mubr.bf16.mxu0 0
  %6495 = vmatmul.mubr.bf16.gmra.mxu0 %v6396
  %v6496 = vpop.f32.mrf.mxu0
  %v6497 = vadd.f32 0.0, %v6496
  %v6498 = vpop.f32.mrf.mxu0
  %v6499 = vpop.f32.mrf.mxu0
  %v6500 = vpop.f32.mrf.mxu0
  %6501 = vdwg.mxu0
  %v6502 = vadd.f32 %v6288, %v6497
  %v6503 = vld [vmem:[%s11] sm:$0x1]
  %v6505 = vlaneseq
  %v6506 = vshrl.u32 %v6505, 7
  %v6507 = vsub.s32 0, %v6506
  %v6508 = vrot.slane %v6503, %v6507
  %v6510 = vadd.f32 %v6395, %v6508
  %vm6511 = vcmp.ge.f32.partialorder %v6510, 0.0
  %v6512 = vmul.f32 %v6510, 0.2
  %v6513 = vsel %vm6511, %v6510, %v6512
  %v6514 = vld [vmem:[%s12] sm:$0x1]
  %v6516 = vlaneseq
  %v6517 = vshrl.u32 %v6516, 7
  %v6518 = vsub.s32 0, %v6517
  %v6519 = vrot.slane %v6514, %v6518
  %v6521 = vadd.f32 %v6502, %v6519
  %vm6522 = vcmp.ge.f32.partialorder %v6521, 0.0
  %v6523 = vmul.f32 %v6521, 0.2
  %v6524 = vsel %vm6522, %v6521, %v6523
  %v6525 = vpack.c.bf16 %v6513, %v6513
  %v6526 = vld [vmem:[%s13] sm:$0xf]
  %v6527 = vld [vmem:[%s13 + $0x4] sm:$0xf]
  %v6528 = vld [vmem:[%s13 + $0x8] sm:$0xf]
  %v6529 = vld [vmem:[%s13 + $0xc] sm:$0xf]
  %v6530 = vld [vmem:[%s13 + $0x10] sm:$0xf]
  %v6531 = vld [vmem:[%s13 + $0x14] sm:$0xf]
  %v6532 = vld [vmem:[%s13 + $0x18] sm:$0xf]
  %v6533 = vld [vmem:[%s13 + $0x1c] sm:$0xf]
  %v6534 = vld [vmem:[%s13 + $0x20] sm:$0xf]
  %v6535 = vld [vmem:[%s13 + $0x24] sm:$0xf]
  %v6536 = vld [vmem:[%s13 + $0x28] sm:$0xf]
  %v6537 = vld [vmem:[%s13 + $0x2c] sm:$0xf]
  %v6538 = vld [vmem:[%s13 + $0x30] sm:$0xf]
  %v6539 = vld [vmem:[%s13 + $0x34] sm:$0xf]
  %v6540 = vld [vmem:[%s13 + $0x38] sm:$0xf]
  %v6541 = vld [vmem:[%s13 + $0x3c] sm:$0xf]
  %v6542 = vpack.c.bf16 %v6524, %v6524
  %v6543 = vld [vmem:[%s14] sm:$0xf]
  %v6544 = vld [vmem:[%s14 + $0x4] sm:$0xf]
  %v6545 = vld [vmem:[%s14 + $0x8] sm:$0xf]
  %v6546 = vld [vmem:[%s14 + $0xc] sm:$0xf]
  %v6547 = vld [vmem:[%s14 + $0x10] sm:$0xf]
  %v6548 = vld [vmem:[%s14 + $0x14] sm:$0xf]
  %v6549 = vld [vmem:[%s14 + $0x18] sm:$0xf]
  %v6550 = vld [vmem:[%s14 + $0x1c] sm:$0xf]
  %v6551 = vld [vmem:[%s14 + $0x20] sm:$0xf]
  %v6552 = vld [vmem:[%s14 + $0x24] sm:$0xf]
  %v6553 = vld [vmem:[%s14 + $0x28] sm:$0xf]
  %v6554 = vld [vmem:[%s14 + $0x2c] sm:$0xf]
  %v6555 = vld [vmem:[%s14 + $0x30] sm:$0xf]
  %v6556 = vld [vmem:[%s14 + $0x34] sm:$0xf]
  %v6557 = vld [vmem:[%s14 + $0x38] sm:$0xf]
  %v6558 = vld [vmem:[%s14 + $0x3c] sm:$0xf]
  %v6575 = vunpack.c.l.b16 %v6543
  %v6576 = vunpack.c.l.b16 %v6544
  %v6577 = vunpack.c.l.b16 %v6545
  %v6578 = vunpack.c.l.b16 %v6546
  %v6579 = vunpack.c.l.b16 %v6547
  %v6580 = vunpack.c.l.b16 %v6548
  %v6581 = vunpack.c.l.b16 %v6549
  %v6582 = vunpack.c.l.b16 %v6550
  %v6583 = vunpack.c.l.b16 %v6551
  %v6584 = vunpack.c.l.b16 %v6552
  %v6585 = vunpack.c.l.b16 %v6553
  %v6586 = vunpack.c.l.b16 %v6554
  %v6587 = vunpack.c.l.b16 %v6555
  %v6588 = vunpack.c.l.b16 %v6556
  %v6589 = vunpack.c.l.b16 %v6557
  %v6590 = vunpack.c.l.b16 %v6558
  %v6591 = vpack.c.b16 %v6576, %v6575
  %v6592 = vpack.c.b16 %v6578, %v6577
  %v6593 = vpack.c.b16 %v6580, %v6579
  %v6594 = vpack.c.b16 %v6582, %v6581
  %v6595 = vpack.c.b16 %v6584, %v6583
  %v6596 = vpack.c.b16 %v6586, %v6585
  %v6597 = vpack.c.b16 %v6588, %v6587
  %v6598 = vpack.c.b16 %v6590, %v6589
  %6607 = vmatprep.subr.bf16.mxu0 0
  %6608 = vmatpush1.bf16.msra.mxu0 %v6598
  %6609 = vmatprep.subr.bf16.mxu0 0
  %6610 = vmatpush1.bf16.msra.mxu0 %v6597
  %6611 = vmatprep.subr.bf16.mxu0 0
  %6612 = vmatpush1.bf16.msra.mxu0 %v6596
  %6613 = vmatprep.subr.bf16.mxu0 0
  %6614 = vmatpush1.bf16.msra.mxu0 %v6595
  %6615 = vmatprep.subr.bf16.mxu0 0
  %6616 = vmatpush1.bf16.msra.mxu0 %v6594
  %6617 = vmatprep.subr.bf16.mxu0 0
  %6618 = vmatpush1.bf16.msra.mxu0 %v6593
  %6619 = vmatprep.subr.bf16.mxu0 0
  %6620 = vmatpush1.bf16.msra.mxu0 %v6592
  %6621 = vmatprep.subr.bf16.mxu0 0
  %6622 = vmatpush1.bf16.msra.mxu0 %v6591
  %6623 = vmatprep.subr.bf16.mxu0 0
  %6624 = vmatpush2.bf16.msra.mxu0 0
  %6625 = vmatprep.subr.bf16.mxu0 0
  %6626 = vmatpush2.bf16.msra.mxu0 0
  %6627 = vmatprep.subr.bf16.mxu0 0
  %6628 = vmatpush2.bf16.msra.mxu0 0
  %6629 = vmatprep.subr.bf16.mxu0 0
  %6630 = vmatpush2.bf16.msra.mxu0 0
  %6631 = vmatprep.subr.bf16.mxu0 0
  %6632 = vmatpush2.bf16.msra.mxu0 0
  %6633 = vmatprep.subr.bf16.mxu0 0
  %6634 = vmatpush2.bf16.msra.mxu0 0
  %6635 = vmatprep.subr.bf16.mxu0 0
  %6636 = vmatpush2.bf16.msra.mxu0 0
  %6637 = vmatprep.subr.bf16.mxu0 0
  %6638 = vmatpush2.bf16.msra.mxu0 0
  %6639 = vmatprep.mubr.bf16.mxu0 0
  %6640 = vmatmul.mubr.bf16.gmra.mxu0 %v6542
  %v6641 = vpop.f32.mrf.mxu0
  %v6642 = vadd.f32 0.0, %v6641
  %v6643 = vpop.f32.mrf.mxu0
  %v6644 = vpop.f32.mrf.mxu0
  %v6645 = vpop.f32.mrf.mxu0
  %6646 = vdwg.mxu0
  %v6663 = vunpack.c.l.b16 %v6526
  %v6664 = vunpack.c.l.b16 %v6527
  %v6665 = vunpack.c.l.b16 %v6528
  %v6666 = vunpack.c.l.b16 %v6529
  %v6667 = vunpack.c.l.b16 %v6530
  %v6668 = vunpack.c.l.b16 %v6531
  %v6669 = vunpack.c.l.b16 %v6532
  %v6670 = vunpack.c.l.b16 %v6533
  %v6671 = vunpack.c.l.b16 %v6534
  %v6672 = vunpack.c.l.b16 %v6535
  %v6673 = vunpack.c.l.b16 %v6536
  %v6674 = vunpack.c.l.b16 %v6537
  %v6675 = vunpack.c.l.b16 %v6538
  %v6676 = vunpack.c.l.b16 %v6539
  %v6677 = vunpack.c.l.b16 %v6540
  %v6678 = vunpack.c.l.b16 %v6541
  %v6679 = vpack.c.b16 %v6664, %v6663
  %v6680 = vpack.c.b16 %v6666, %v6665
  %v6681 = vpack.c.b16 %v6668, %v6667
  %v6682 = vpack.c.b16 %v6670, %v6669
  %v6683 = vpack.c.b16 %v6672, %v6671
  %v6684 = vpack.c.b16 %v6674, %v6673
  %v6685 = vpack.c.b16 %v6676, %v6675
  %v6686 = vpack.c.b16 %v6678, %v6677
  %6695 = vmatprep.subr.bf16.mxu0 0
  %6696 = vmatpush1.bf16.msra.mxu0 %v6686
  %6697 = vmatprep.subr.bf16.mxu0 0
  %6698 = vmatpush1.bf16.msra.mxu0 %v6685
  %6699 = vmatprep.subr.bf16.mxu0 0
  %6700 = vmatpush1.bf16.msra.mxu0 %v6684
  %6701 = vmatprep.subr.bf16.mxu0 0
  %6702 = vmatpush1.bf16.msra.mxu0 %v6683
  %6703 = vmatprep.subr.bf16.mxu0 0
  %6704 = vmatpush1.bf16.msra.mxu0 %v6682
  %6705 = vmatprep.subr.bf16.mxu0 0
  %6706 = vmatpush1.bf16.msra.mxu0 %v6681
  %6707 = vmatprep.subr.bf16.mxu0 0
  %6708 = vmatpush1.bf16.msra.mxu0 %v6680
  %6709 = vmatprep.subr.bf16.mxu0 0
  %6710 = vmatpush1.bf16.msra.mxu0 %v6679
  %6711 = vmatprep.subr.bf16.mxu0 0
  %6712 = vmatpush2.bf16.msra.mxu0 0
  %6713 = vmatprep.subr.bf16.mxu0 0
  %6714 = vmatpush2.bf16.msra.mxu0 0
  %6715 = vmatprep.subr.bf16.mxu0 0
  %6716 = vmatpush2.bf16.msra.mxu0 0
  %6717 = vmatprep.subr.bf16.mxu0 0
  %6718 = vmatpush2.bf16.msra.mxu0 0
  %6719 = vmatprep.subr.bf16.mxu0 0
  %6720 = vmatpush2.bf16.msra.mxu0 0
  %6721 = vmatprep.subr.bf16.mxu0 0
  %6722 = vmatpush2.bf16.msra.mxu0 0
  %6723 = vmatprep.subr.bf16.mxu0 0
  %6724 = vmatpush2.bf16.msra.mxu0 0
  %6725 = vmatprep.subr.bf16.mxu0 0
  %6726 = vmatpush2.bf16.msra.mxu0 0
  %6727 = vmatprep.mubr.bf16.mxu0 0
  %6728 = vmatmul.mubr.bf16.gmra.mxu0 %v6525
  %v6729 = vpop.f32.mrf.mxu0
  %v6730 = vadd.f32 %v6642, %v6729
  %v6731 = vpop.f32.mrf.mxu0
  %v6732 = vpop.f32.mrf.mxu0
  %v6733 = vpop.f32.mrf.mxu0
  %6734 = vdwg.mxu0
  %v6735 = vld [vmem:[%s15] sm:$0x1]
  %v6737 = vlaneseq
  %v6738 = vshrl.u32 %v6737, 7
  %v6739 = vsub.s32 0, %v6738
  %v6740 = vrot.slane %v6735, %v6739
  %v6742 = vadd.f32 %v6730, %v6740
  %6743 = vst [vmem:[%s16] sm:$0xff] %v6742
  // Predicated region
  $region66: #{discriminator_forward_packed.1} parent=0 // pred_check
    _
  $region67: #{discriminator_forward_packed.1} parent=0 // pred_check_branch
    %6745 = sbr.rel (0) target = $region69
  $region68: #{discriminator_forward_packed.1} parent=0 // pred_region
    _
  $region69: #{discriminator_forward_packed.1} parent=0 // pred_fallthru
    _
  // Predicated region
  $region70: #{discriminator_forward_packed.1} parent=0 // pred_check
    _
  $region71: #{discriminator_forward_packed.1} parent=0 // pred_check_branch
    %6747 = sbr.rel (0) target = $region73
  $region72: #{discriminator_forward_packed.1} parent=0 // pred_region
    _
  $region73: #{discriminator_forward_packed.1} parent=0 // pred_fallthru
    _

</llo_original>
